<compile_context>
chip_gen: v6e
topology: v6e:2x2x1
jax: 0.10.0
libtpu: 0.0.40
codegen_flags: <defaults>
</compile_context>

<pallas_src>
import jax
import jax.numpy as jnp
from jax.experimental import pallas as pl
from jax.experimental.pallas import tpu as pltpu

EEG_CHANNELS = 14
EEG_T = 256
K1 = 7                     # conv1 temporal kernel
C1 = 32                    # conv1 out channels
C2 = 64                    # conv2 out channels
POOL_OUT = 32              # AdaptiveAvgPool2d -> (1, 32); 256/32 = 8 exact
POOL_W = EEG_T // POOL_OUT
FEAT = C2 * POOL_OUT       # 2048
HID = 512
LATENT = 128
DEC2 = 1024
IMG = 28
IMG_FLAT = IMG * IMG       # 784
IMG_PAD = 896              # 7*128, lane-dense image output

RB = 16                    # rows per conv1-out-channel block (14 -> 16 aligned)
KB = 16                    # rows per im2col tap block        (14 -> 16 aligned)
SK = 128                   # im2col rows (7*16 = 112, padded to 128)
ENC_BB_MAX = 16            # encoder batch block cap (review: 16-32)
MLP_BB_MAX = 256           # MLP batch block cap (fills MXU M on v6e/v7x)


def _round_up(n, m):
    return ((n + m - 1) // m) * m


# -----------------------------------------------------------------------------
# Kernel A: conv(1->32,(1,7)) + ReLU + conv(32->64,(14,1)) + ReLU + avgpool.
# Three MXU matmuls per batch block, bf16 operands, f32 accumulation, no
# scratch, lane-dense output slab.
# -----------------------------------------------------------------------------
def encoder_kernel(s_ref, w1_ref, b1_ref, w2_ref, b2_ref, pool_ref, out_ref):
    # s_ref   : (128, Bb*256)     bf16 im2col slab, [k*16+h, b*256+t]
    # w1_ref  : (512, 128)        bf16 block-sparse conv1 weight
    # b1_ref  : (512, 1)          f32
    # w2_ref  : (64, 512)         bf16 conv2 weight (h padded to 16)
    # b2_ref  : (64, 1)           f32
    # pool_ref: (Bb*256, Bb*32)   bf16 block-diagonal block-mean matrix
    # out_ref : (64, Bb*32)       bf16 lane-dense pooled slab
    c1 = jnp.dot(w1_ref[...], s_ref[...],
                 preferred_element_type=jnp.float32)              # (512, Bb*256)
    c1 = jnp.maximum(c1 + b1_ref[...], 0.0).astype(jnp.bfloat16)
    c2 = jnp.dot(w2_ref[...], c1,
                 preferred_element_type=jnp.float32)              # (64, Bb*256)
    c2 = jnp.maximum(c2 + b2_ref[...], 0.0).astype(jnp.bfloat16)
    out_ref[...] = jnp.dot(c2, pool_ref[...],
                           preferred_element_type=jnp.float32
                           ).astype(out_ref.dtype)                # (64, Bb*32)


def _build_im2col(x, bp):
    """S[k*16+h, b*256+t] = xpad[b, h, t+k]; rows padded 112 -> 128; bf16."""
    b = x.shape[0]
    xpad = jnp.pad(x, ((0, bp - b), (0, 0), (K1 // 2, K1 // 2)))    # (bp,14,262)
    taps = jnp.stack([xpad[:, :, k:k + EEG_T] for k in range(K1)], 0)
    taps = jnp.pad(taps, ((0, 0), (0, 0), (0, KB - EEG_CHANNELS), (0, 0)))
    s = taps.transpose(0, 2, 1, 3).reshape(K1 * KB, bp * EEG_T)     # (112,bp*256)
    s = jnp.pad(s, ((0, SK - K1 * KB), (0, 0)))
    return s.astype(jnp.bfloat16)


def encoder_conv(x, kp):
    B = x.shape[0]
    enc_bb = min(ENC_BB_MAX, B)
    BP = _round_up(B, enc_bb)
    s = _build_im2col(x, BP)

    # Block-diagonal block-mean matrix for one batch block; entries are 0 or
    # 1/8 (exact in bf16).  Constant under jit (shape-only dependence).
    t = jnp.arange(enc_bb * EEG_T)
    q = jnp.arange(enc_bb * POOL_OUT)
    pool = ((t[:, None] // POOL_W) == q[None, :]).astype(jnp.bfloat16) / POOL_W

    const = lambda i: (0, 0)
    pooled = pl.pallas_call(
        encoder_kernel,
        out_shape=jax.ShapeDtypeStruct((C2, BP * POOL_OUT), jnp.bfloat16),
        grid=(BP // enc_bb,),
        in_specs=[
            pl.BlockSpec((SK, enc_bb * EEG_T), lambda i: (0, i)),
            pl.BlockSpec((C1 * RB, SK), const),
            pl.BlockSpec((C1 * RB, 1), const),
            pl.BlockSpec((C2, C1 * RB), const),
            pl.BlockSpec((C2, 1), const),
            pl.BlockSpec((enc_bb * EEG_T, enc_bb * POOL_OUT), const),
        ],
        out_specs=pl.BlockSpec((C2, enc_bb * POOL_OUT), lambda i: (0, i)),
        compiler_params=pltpu.CompilerParams(
            dimension_semantics=("parallel",),
            # headroom for the (512, Bb*256) f32 conv1 intermediate at
            # ENC_BB=16; still below v7x's 64 MiB physical VMEM.
            vmem_limit_bytes=48 * 1024 * 1024),
    )(s, kp['w1big'], kp['b1col'], kp['w2pad'], kp['b2col'], pool)

    # (64, BP*32) -> (B, 64, 32) -> (B, 2048) in torch Flatten order; this
    # small permutation is cheap XLA glue (bf16, lane-dense source).
    feat = (pooled.reshape(C2, BP, POOL_OUT).transpose(1, 0, 2)[:B]
            .reshape(B, FEAT))
    return feat


# -----------------------------------------------------------------------------
# Kernel B: fc1+ReLU, fc_mu/fc_logvar, reparameterize, decoder MLP + Sigmoid.
# Batch-gridded (block up to 256 rows); resident pre-transposed bf16 weights
# with f32 accumulation; f32 bias/ReLU/exp/sigmoid/reparam.
# -----------------------------------------------------------------------------
def mlp_kernel(feat_ref, eps_ref,
               wfc_ref, bfc_ref, wmu_ref, bmu_ref, wlv_ref, blv_ref,
               wd1_ref, bd1_ref, wd2_ref, bd2_ref, wd3_ref, bd3_ref,
               mu_ref, lv_ref, img_ref):
    def lin(v, w_ref, b_ref):
        return (jnp.dot(v.astype(jnp.bfloat16), w_ref[...],
                        preferred_element_type=jnp.float32) + b_ref[...])

    h = jnp.maximum(lin(feat_ref[...], wfc_ref, bfc_ref), 0.0)      # (Bm, 512)
    mu = lin(h, wmu_ref, bmu_ref)                                   # (Bm, 128)
    lv = lin(h, wlv_ref, blv_ref)                                   # (Bm, 128)
    mu_ref[...] = mu
    lv_ref[...] = lv
    z = mu + eps_ref[...] * jnp.exp(0.5 * lv)                       # f32 reparam
    d1 = jnp.maximum(lin(z, wd1_ref, bd1_ref), 0.0)                 # (Bm, 512)
    d2 = jnp.maximum(lin(d1, wd2_ref, bd2_ref), 0.0)                # (Bm, 1024)
    img_ref[...] = jax.nn.sigmoid(lin(d2, wd3_ref, bd3_ref))        # (Bm, 896)


def vae_mlp(feat, eps, kp):
    B = feat.shape[0]
    mlp_bb = min(MLP_BB_MAX, _round_up(B, 8))
    BP = _round_up(B, mlp_bb)
    featp = jnp.pad(feat, ((0, BP - B), (0, 0)))
    epsp = jnp.pad(eps, ((0, BP - B), (0, 0)))
    const = lambda i: (0, 0)
    blk = lambda i: (i, 0)
    mu, lv, img = pl.pallas_call(
        mlp_kernel,
        out_shape=(jax.ShapeDtypeStruct((BP, LATENT), jnp.float32),
                   jax.ShapeDtypeStruct((BP, LATENT), jnp.float32),
                   jax.ShapeDtypeStruct((BP, IMG_PAD), jnp.float32)),
        grid=(BP // mlp_bb,),
        in_specs=[
            pl.BlockSpec((mlp_bb, FEAT), blk),
            pl.BlockSpec((mlp_bb, LATENT), blk),
            pl.BlockSpec((FEAT, HID), const), pl.BlockSpec((1, HID), const),
            pl.BlockSpec((HID, LATENT), const), pl.BlockSpec((1, LATENT), const),
            pl.BlockSpec((HID, LATENT), const), pl.BlockSpec((1, LATENT), const),
            pl.BlockSpec((LATENT, HID), const), pl.BlockSpec((1, HID), const),
            pl.BlockSpec((HID, DEC2), const), pl.BlockSpec((1, DEC2), const),
            pl.BlockSpec((DEC2, IMG_PAD), const), pl.BlockSpec((1, IMG_PAD), const),
        ],
        out_specs=(pl.BlockSpec((mlp_bb, LATENT), blk),
                   pl.BlockSpec((mlp_bb, LATENT), blk),
                   pl.BlockSpec((mlp_bb, IMG_PAD), blk)),
        compiler_params=pltpu.CompilerParams(
            dimension_semantics=("parallel",),
            vmem_limit_bytes=32 * 1024 * 1024),
    )(featp, epsp,
      kp['wfc'], kp['bfc'], kp['wmu'], kp['bmu'], kp['wlv'], kp['blv'],
      kp['wd1'], kp['bd1'], kp['wd2'], kp['bd2'], kp['wd3'], kp['bd3'])
    return mu[:B], lv[:B], img[:B]


# -----------------------------------------------------------------------------
# One-time parameter repack (outside jit): bf16 block-sparse conv1 weight,
# aligned bf16 conv2 weight, pre-transposed bf16 MLP weights, lane-dense dec3.
# -----------------------------------------------------------------------------
def prepare_params(params):
    w1 = params['conv1_w'][:, 0, 0, :].astype(jnp.float32)            # (32, 7)
    co = jnp.arange(C1)[:, None, None]
    h = jnp.arange(EEG_CHANNELS)[None, :, None]
    k = jnp.arange(K1)[None, None, :]
    rows = co * RB + h                                                 # (32,14,1)
    cols = k * KB + h                                                  # (1,14,7)
    vals = jnp.broadcast_to(w1[:, None, :], (C1, EEG_CHANNELS, K1))
    w1big = jnp.zeros((C1 * RB, SK), jnp.float32).at[rows, cols].set(vals)

    b1col = (jnp.zeros((C1, RB), jnp.float32)
             .at[:, :EEG_CHANNELS].set(params['conv1_b'][:, None])
             .reshape(C1 * RB, 1))

    w2 = params['conv2_w'][..., 0]                                     # (64,32,14)
    w2pad = (jnp.zeros((C2, C1, RB), jnp.float32)
             .at[:, :, :EEG_CHANNELS].set(w2)
             .reshape(C2, C1 * RB))
    b2col = params['conv2_b'].reshape(C2, 1)

    wd3 = (jnp.zeros((DEC2, IMG_PAD), jnp.float32)
           .at[:, :IMG_FLAT].set(params['dec3_w'].T))
    bd3 = (jnp.zeros((1, IMG_PAD), jnp.float32)
           .at[:, :IMG_FLAT].set(params['dec3_b'][None, :]))

    bf = lambda a: a.astype(jnp.bfloat16)
    return {
        'w1big': bf(w1big), 'b1col': b1col, 'w2pad': bf(w2pad), 'b2col': b2col,
        'wfc': bf(params['fc1_w'].T), 'bfc': params['fc1_b'].reshape(1, -1),
        'wmu': bf(params['mu_w'].T), 'bmu': params['mu_b'].reshape(1, -1),
        'wlv': bf(params['lv_w'].T), 'blv': params['lv_b'].reshape(1, -1),
        'wd1': bf(params['dec1_w'].T), 'bd1': params['dec1_b'].reshape(1, -1),
        'wd2': bf(params['dec2_w'].T), 'bd2': params['dec2_b'].reshape(1, -1),
        'wd3': bf(wd3), 'bd3': bd3,
    }


# -----------------------------------------------------------------------------
# Full forward (glue = im2col build, padding / slicing / cheap reshapes only)
# -----------------------------------------------------------------------------
def eeg_image_vae_forward(x, kp, eps):
    B = x.shape[0]
    feat = encoder_conv(x, kp)                # (B, 2048) bf16
    mu, logvar, img = vae_mlp(feat, eps, kp)
    return img[:, :IMG_FLAT].reshape(B, 1, IMG, IMG), mu, logvar


# -----------------------------------------------------------------------------
# Deterministic synthetic parameters (same shapes as the PyTorch module)
# -----------------------------------------------------------------------------
def init_params(key):
    ks = jax.random.split(key, 16)
    def dense(k, shape, scale):
        return jax.random.normal(k, shape, jnp.float32) * scale
    return {
        'conv1_w': dense(ks[0], (C1, 1, 1, K1), K1 ** -0.5),
        'conv1_b': dense(ks[1], (C1,), 0.01),
        'conv2_w': dense(ks[2], (C2, C1, EEG_CHANNELS, 1), (C1 * EEG_CHANNELS) ** -0.5),
        'conv2_b': dense(ks[3], (C2,), 0.01),
        'fc1_w':  dense(ks[4], (HID, FEAT), FEAT ** -0.5),
        'fc1_b':  dense(ks[5], (HID,), 0.01),
        'mu_w':   dense(ks[6], (LATENT, HID), HID ** -0.5),
        'mu_b':   dense(ks[7], (LATENT,), 0.01),
        'lv_w':   dense(ks[8], (LATENT, HID), HID ** -0.5),
        'lv_b':   dense(ks[9], (LATENT,), 0.01),
        'dec1_w': dense(ks[10], (HID, LATENT), LATENT ** -0.5),
        'dec1_b': dense(ks[11], (HID,), 0.01),
        'dec2_w': dense(ks[12], (DEC2, HID), HID ** -0.5),
        'dec2_b': dense(ks[13], (DEC2,), 0.01),
        'dec3_w': dense(ks[14], (IMG_FLAT, DEC2), DEC2 ** -0.5),
        'dec3_b': dense(ks[15], (IMG_FLAT,), 0.01),
    }


# -----------------------------------------------------------------------------
# Pure-JAX f32 reference (same math as the PyTorch forward)
# -----------------------------------------------------------------------------
def reference_forward(x, params, eps):
    hp = jax.lax.Precision.HIGHEST
    B = x.shape[0]
    xp = jnp.pad(x, ((0, 0), (0, 0), (K1 // 2, K1 // 2)))
    w1 = params['conv1_w'][:, 0, 0, :]
    windows = jnp.stack([xp[:, :, k:k + EEG_T] for k in range(K1)], axis=-1)
    c1 = jnp.einsum('bhtk,ok->boht', windows, w1, precision=hp)
    c1 = jnp.maximum(c1 + params['conv1_b'][None, :, None, None], 0.0)
    w2 = params['conv2_w'][..., 0]
    c2 = jnp.einsum('bcht,och->bot', c1, w2, precision=hp)
    c2 = jnp.maximum(c2 + params['conv2_b'][None, :, None], 0.0)
    pooled = c2.reshape(B, C2, POOL_OUT, POOL_W).mean(-1)
    feat = pooled.reshape(B, FEAT)

    def lin(v, w, b):
        return jnp.dot(v, w.T, precision=hp) + b

    h = jnp.maximum(lin(feat, params['fc1_w'], params['fc1_b']), 0.0)
    mu = lin(h, params['mu_w'], params['mu_b'])
    lv = lin(h, params['lv_w'], params['lv_b'])
    z = mu + eps * jnp.exp(0.5 * lv)
    d1 = jnp.maximum(lin(z, params['dec1_w'], params['dec1_b']), 0.0)
    d2 = jnp.maximum(lin(d1, params['dec2_w'], params['dec2_b']), 0.0)
    img = jax.nn.sigmoid(lin(d2, params['dec3_w'], params['dec3_b']))
    return img.reshape(B, 1, IMG, IMG), mu, lv


if __name__ == "__main__":
    key = jax.random.PRNGKey(0)
    kx, keps, kparam = jax.random.split(key, 3)

    B = 2
    x = jax.random.normal(kx, (B, EEG_CHANNELS, EEG_T), jnp.float32)
    # torch.randn_like(std) in reparameterize -> deterministic eps generated here
    eps = jax.random.normal(keps, (B, LATENT), jnp.float32)
    params = init_params(kparam)
    kparams = prepare_params(params)      # one-time repack, outside jit

    fwd = jax.jit(eeg_image_vae_forward)
    img, mu, logvar = fwd(x, kparams, eps)
    jax.block_until_ready((img, mu, logvar))

    assert img.shape == (B, 1, IMG, IMG)
    assert mu.shape == (B, LATENT) and logvar.shape == (B, LATENT)
    assert bool(jnp.all(jnp.isfinite(img)))
    assert bool(jnp.all(jnp.isfinite(mu))) and bool(jnp.all(jnp.isfinite(logvar)))

    ref_img, ref_mu, ref_lv = reference_forward(x, params, eps)
    # The whole compute path (conv + MLP weights, activations, feat) is bf16
    # with f32 accumulation, so mu/logvar carry a few e-2 of quantization error
    # vs. the f32 reference; the sigmoid-compressed image is tighter.
    tol_img = 5e-2
    tol_stats = 1e-1
    assert float(jnp.max(jnp.abs(img - ref_img))) < tol_img
    assert float(jnp.max(jnp.abs(mu - ref_mu))) < tol_stats
    assert float(jnp.max(jnp.abs(logvar - ref_lv))) < tol_stats

    print("KERNEL_OK")
</pallas_src>

<mosaic_0001>
module attributes {stable_mosaic.version = 11 : i64} {
  func.func @encoder_kernel(%arg0: i32, %arg1: memref<128x512xbf16, #tpu.memory_space<vmem>>, %arg2: memref<512x128xbf16, #tpu.memory_space<vmem>>, %arg3: memref<512x1xf32, #tpu.memory_space<vmem>>, %arg4: memref<64x512xbf16, #tpu.memory_space<vmem>>, %arg5: memref<64x1xf32, #tpu.memory_space<vmem>>, %arg6: memref<512x64xbf16, #tpu.memory_space<vmem>>, %arg7: memref<64x64xbf16, #tpu.memory_space<vmem>>) attributes {dimension_semantics = [#tpu.dimension_semantics<parallel>], iteration_bounds = array<i64: 1>, scalar_prefetch = 0 : i64, scratch_operands = 0 : i64, tpu.core_type = #tpu.core_type<tc>, window_params = [{transform_indices = @transform_0, window_bounds = array<i64: 128, 512>}, {pipeline_mode = #tpu.pipeline_mode<synchronous>, transform_indices = @transform_1, window_bounds = array<i64: 512, 128>}, {pipeline_mode = #tpu.pipeline_mode<synchronous>, transform_indices = @transform_2, window_bounds = array<i64: 512, 1>}, {pipeline_mode = #tpu.pipeline_mode<synchronous>, transform_indices = @transform_3, window_bounds = array<i64: 64, 512>}, {pipeline_mode = #tpu.pipeline_mode<synchronous>, transform_indices = @transform_4, window_bounds = array<i64: 64, 1>}, {pipeline_mode = #tpu.pipeline_mode<synchronous>, transform_indices = @transform_5, window_bounds = array<i64: 512, 64>}, {transform_indices = @transform_6, window_bounds = array<i64: 64, 64>}]} {
    %c0 = arith.constant 0 : index
    %c0_0 = arith.constant 0 : index
    %0 = vector.load %arg2[%c0, %c0_0] : memref<512x128xbf16, #tpu.memory_space<vmem>>, vector<512x128xbf16>
    %c0_1 = arith.constant 0 : index
    %c0_2 = arith.constant 0 : index
    %1 = vector.load %arg1[%c0_1, %c0_2] : memref<128x512xbf16, #tpu.memory_space<vmem>>, vector<128x512xbf16>
    %cst = arith.constant dense<0.000000e+00> : vector<512x512xf32>
    %2 = tpu.matmul %0, %1, %cst {dimension_numbers = #tpu.dot_dimension_numbers<[1], [0], [0], [1], [0, 0, 1, 1], [], []>} : vector<512x128xbf16>, vector<128x512xbf16>, vector<512x512xf32> -> vector<512x512xf32>
    %c0_3 = arith.constant 0 : index
    %c0_4 = arith.constant 0 : index
    %3 = vector.load %arg3[%c0_3, %c0_4] : memref<512x1xf32, #tpu.memory_space<vmem>>, vector<512x1xf32>
    %4 = vector.broadcast %3 : vector<512x1xf32> to vector<512x512xf32>
    %5 = arith.addf %2, %4 : vector<512x512xf32>
    %cst_5 = arith.constant 0.000000e+00 : f32
    %6 = vector.broadcast %cst_5 : f32 to vector<512x512xf32>
    %7 = arith.maximumf %5, %6 : vector<512x512xf32>
    %8 = arith.truncf %7 : vector<512x512xf32> to vector<512x512xbf16>
    %c0_6 = arith.constant 0 : index
    %c0_7 = arith.constant 0 : index
    %9 = vector.load %arg4[%c0_6, %c0_7] : memref<64x512xbf16, #tpu.memory_space<vmem>>, vector<64x512xbf16>
    %cst_8 = arith.constant dense<0.000000e+00> : vector<64x512xf32>
    %10 = tpu.matmul %9, %8, %cst_8 {dimension_numbers = #tpu.dot_dimension_numbers<[1], [0], [0], [1], [0, 0, 1, 1], [], []>} : vector<64x512xbf16>, vector<512x512xbf16>, vector<64x512xf32> -> vector<64x512xf32>
    %c0_9 = arith.constant 0 : index
    %c0_10 = arith.constant 0 : index
    %11 = vector.load %arg5[%c0_9, %c0_10] : memref<64x1xf32, #tpu.memory_space<vmem>>, vector<64x1xf32>
    %12 = vector.broadcast %11 : vector<64x1xf32> to vector<64x512xf32>
    %13 = arith.addf %10, %12 : vector<64x512xf32>
    %cst_11 = arith.constant 0.000000e+00 : f32
    %14 = vector.broadcast %cst_11 : f32 to vector<64x512xf32>
    %15 = arith.maximumf %13, %14 : vector<64x512xf32>
    %16 = arith.truncf %15 : vector<64x512xf32> to vector<64x512xbf16>
    %c0_12 = arith.constant 0 : index
    %c0_13 = arith.constant 0 : index
    %17 = vector.load %arg6[%c0_12, %c0_13] : memref<512x64xbf16, #tpu.memory_space<vmem>>, vector<512x64xbf16>
    %cst_14 = arith.constant dense<0.000000e+00> : vector<64x64xf32>
    %18 = tpu.matmul %16, %17, %cst_14 {dimension_numbers = #tpu.dot_dimension_numbers<[1], [0], [0], [1], [0, 0, 1, 1], [], []>} : vector<64x512xbf16>, vector<512x64xbf16>, vector<64x64xf32> -> vector<64x64xf32>
    %19 = arith.truncf %18 : vector<64x64xf32> to vector<64x64xbf16>
    %c0_15 = arith.constant 0 : index
    %c0_16 = arith.constant 0 : index
    %20 = vector.load %arg7[%c0_15, %c0_16] : memref<64x64xbf16, #tpu.memory_space<vmem>>, vector<64x64xbf16>
    tpu.vector_store %arg7[%c0_15, %c0_16], %19 {strides = array<i32>} : memref<64x64xbf16, #tpu.memory_space<vmem>>, vector<64x64xbf16>,
    return
  }
  func.func @transform_0(%arg0: i32) -> (i32, i32) {
    %c0_i32 = arith.constant 0 : i32
    %c0_i32_0 = arith.constant 0 : i32
    return %c0_i32, %arg0 : i32, i32
  }
  func.func @transform_1(%arg0: i32) -> (i32, i32) {
    %c0_i32 = arith.constant 0 : i32
    %c0_i32_0 = arith.constant 0 : i32
    %c0_i32_1 = arith.constant 0 : i32
    return %c0_i32, %c0_i32_0 : i32, i32
  }
  func.func @transform_2(%arg0: i32) -> (i32, i32) {
    %c0_i32 = arith.constant 0 : i32
    %c0_i32_0 = arith.constant 0 : i32
    %c0_i32_1 = arith.constant 0 : i32
    return %c0_i32, %c0_i32_0 : i32, i32
  }
  func.func @transform_3(%arg0: i32) -> (i32, i32) {
    %c0_i32 = arith.constant 0 : i32
    %c0_i32_0 = arith.constant 0 : i32
    %c0_i32_1 = arith.constant 0 : i32
    return %c0_i32, %c0_i32_0 : i32, i32
  }
  func.func @transform_4(%arg0: i32) -> (i32, i32) {
    %c0_i32 = arith.constant 0 : i32
    %c0_i32_0 = arith.constant 0 : i32
    %c0_i32_1 = arith.constant 0 : i32
    return %c0_i32, %c0_i32_0 : i32, i32
  }
  func.func @transform_5(%arg0: i32) -> (i32, i32) {
    %c0_i32 = arith.constant 0 : i32
    %c0_i32_0 = arith.constant 0 : i32
    %c0_i32_1 = arith.constant 0 : i32
    return %c0_i32, %c0_i32_0 : i32, i32
  }
  func.func @transform_6(%arg0: i32) -> (i32, i32) {
    %c0_i32 = arith.constant 0 : i32
    %c0_i32_0 = arith.constant 0 : i32
    return %c0_i32, %arg0 : i32, i32
  }
}

module attributes {stable_mosaic.version = 11 : i64} {
  func.func @mlp_kernel(%arg0: i32, %arg1: memref<8x2048xbf16, #tpu.memory_space<vmem>>, %arg2: memref<8x128xf32, #tpu.memory_space<vmem>>, %arg3: memref<2048x512xbf16, #tpu.memory_space<vmem>>, %arg4: memref<1x512xf32, #tpu.memory_space<vmem>>, %arg5: memref<512x128xbf16, #tpu.memory_space<vmem>>, %arg6: memref<1x128xf32, #tpu.memory_space<vmem>>, %arg7: memref<512x128xbf16, #tpu.memory_space<vmem>>, %arg8: memref<1x128xf32, #tpu.memory_space<vmem>>, %arg9: memref<128x512xbf16, #tpu.memory_space<vmem>>, %arg10: memref<1x512xf32, #tpu.memory_space<vmem>>, %arg11: memref<512x1024xbf16, #tpu.memory_space<vmem>>, %arg12: memref<1x1024xf32, #tpu.memory_space<vmem>>, %arg13: memref<1024x896xbf16, #tpu.memory_space<vmem>>, %arg14: memref<1x896xf32, #tpu.memory_space<vmem>>, %arg15: memref<8x128xf32, #tpu.memory_space<vmem>>, %arg16: memref<8x128xf32, #tpu.memory_space<vmem>>, %arg17: memref<8x896xf32, #tpu.memory_space<vmem>>) attributes {dimension_semantics = [#tpu.dimension_semantics<parallel>], iteration_bounds = array<i64: 1>, scalar_prefetch = 0 : i64, scratch_operands = 0 : i64, tpu.core_type = #tpu.core_type<tc>, window_params = [{transform_indices = @transform_0, window_bounds = array<i64: 8, 2048>}, {transform_indices = @transform_1, window_bounds = array<i64: 8, 128>}, {pipeline_mode = #tpu.pipeline_mode<synchronous>, transform_indices = @transform_2, window_bounds = array<i64: 2048, 512>}, {pipeline_mode = #tpu.pipeline_mode<synchronous>, transform_indices = @transform_3, window_bounds = array<i64: 1, 512>}, {pipeline_mode = #tpu.pipeline_mode<synchronous>, transform_indices = @transform_4, window_bounds = array<i64: 512, 128>}, {pipeline_mode = #tpu.pipeline_mode<synchronous>, transform_indices = @transform_5, window_bounds = array<i64: 1, 128>}, {pipeline_mode = #tpu.pipeline_mode<synchronous>, transform_indices = @transform_6, window_bounds = array<i64: 512, 128>}, {pipeline_mode = #tpu.pipeline_mode<synchronous>, transform_indices = @transform_7, window_bounds = array<i64: 1, 128>}, {pipeline_mode = #tpu.pipeline_mode<synchronous>, transform_indices = @transform_8, window_bounds = array<i64: 128, 512>}, {pipeline_mode = #tpu.pipeline_mode<synchronous>, transform_indices = @transform_9, window_bounds = array<i64: 1, 512>}, {pipeline_mode = #tpu.pipeline_mode<synchronous>, transform_indices = @transform_10, window_bounds = array<i64: 512, 1024>}, {pipeline_mode = #tpu.pipeline_mode<synchronous>, transform_indices = @transform_11, window_bounds = array<i64: 1, 1024>}, {pipeline_mode = #tpu.pipeline_mode<synchronous>, transform_indices = @transform_12, window_bounds = array<i64: 1024, 896>}, {pipeline_mode = #tpu.pipeline_mode<synchronous>, transform_indices = @transform_13, window_bounds = array<i64: 1, 896>}, {transform_indices = @transform_14, window_bounds = array<i64: 8, 128>}, {transform_indices = @transform_15, window_bounds = array<i64: 8, 128>}, {transform_indices = @transform_16, window_bounds = array<i64: 8, 896>}]} {
    %c0 = arith.constant 0 : index
    %c0_0 = arith.constant 0 : index
    %0 = vector.load %arg1[%c0, %c0_0] : memref<8x2048xbf16, #tpu.memory_space<vmem>>, vector<8x2048xbf16>
    %c0_1 = arith.constant 0 : index
    %c0_2 = arith.constant 0 : index
    %1 = vector.load %arg3[%c0_1, %c0_2] : memref<2048x512xbf16, #tpu.memory_space<vmem>>, vector<2048x512xbf16>
    %cst = arith.constant dense<0.000000e+00> : vector<8x512xf32>
    %2 = tpu.matmul %0, %1, %cst {dimension_numbers = #tpu.dot_dimension_numbers<[1], [0], [0], [1], [0, 0, 1, 1], [], []>} : vector<8x2048xbf16>, vector<2048x512xbf16>, vector<8x512xf32> -> vector<8x512xf32>
    %c0_3 = arith.constant 0 : index
    %c0_4 = arith.constant 0 : index
    %3 = vector.load %arg4[%c0_3, %c0_4] : memref<1x512xf32, #tpu.memory_space<vmem>>, vector<1x512xf32>
    %4 = vector.broadcast %3 : vector<1x512xf32> to vector<8x512xf32>
    %5 = arith.addf %2, %4 : vector<8x512xf32>
    %cst_5 = arith.constant 0.000000e+00 : f32
    %6 = vector.broadcast %cst_5 : f32 to vector<8x512xf32>
    %7 = arith.maximumf %5, %6 : vector<8x512xf32>
    %8 = arith.truncf %7 : vector<8x512xf32> to vector<8x512xbf16>
    %c0_6 = arith.constant 0 : index
    %c0_7 = arith.constant 0 : index
    %9 = vector.load %arg5[%c0_6, %c0_7] : memref<512x128xbf16, #tpu.memory_space<vmem>>, vector<512x128xbf16>
    %cst_8 = arith.constant dense<0.000000e+00> : vector<8x128xf32>
    %10 = tpu.matmul %8, %9, %cst_8 {dimension_numbers = #tpu.dot_dimension_numbers<[1], [0], [0], [1], [0, 0, 1, 1], [], []>} : vector<8x512xbf16>, vector<512x128xbf16>, vector<8x128xf32> -> vector<8x128xf32>
    %c0_9 = arith.constant 0 : index
    %c0_10 = arith.constant 0 : index
    %11 = vector.load %arg6[%c0_9, %c0_10] : memref<1x128xf32, #tpu.memory_space<vmem>>, vector<1x128xf32>
    %12 = vector.broadcast %11 : vector<1x128xf32> to vector<8x128xf32>
    %13 = arith.addf %10, %12 : vector<8x128xf32>
    %14 = arith.truncf %7 : vector<8x512xf32> to vector<8x512xbf16>
    %c0_11 = arith.constant 0 : index
    %c0_12 = arith.constant 0 : index
    %15 = vector.load %arg7[%c0_11, %c0_12] : memref<512x128xbf16, #tpu.memory_space<vmem>>, vector<512x128xbf16>
    %cst_13 = arith.constant dense<0.000000e+00> : vector<8x128xf32>
    %16 = tpu.matmul %14, %15, %cst_13 {dimension_numbers = #tpu.dot_dimension_numbers<[1], [0], [0], [1], [0, 0, 1, 1], [], []>} : vector<8x512xbf16>, vector<512x128xbf16>, vector<8x128xf32> -> vector<8x128xf32>
    %c0_14 = arith.constant 0 : index
    %c0_15 = arith.constant 0 : index
    %17 = vector.load %arg8[%c0_14, %c0_15] : memref<1x128xf32, #tpu.memory_space<vmem>>, vector<1x128xf32>
    %18 = vector.broadcast %17 : vector<1x128xf32> to vector<8x128xf32>
    %19 = arith.addf %16, %18 : vector<8x128xf32>
    %c0_16 = arith.constant 0 : index
    %c0_17 = arith.constant 0 : index
    %20 = vector.load %arg15[%c0_16, %c0_17] : memref<8x128xf32, #tpu.memory_space<vmem>>, vector<8x128xf32>
    tpu.vector_store %arg15[%c0_16, %c0_17], %13 {strides = array<i32>} : memref<8x128xf32, #tpu.memory_space<vmem>>, vector<8x128xf32>,
    %c0_18 = arith.constant 0 : index
    %c0_19 = arith.constant 0 : index
    %21 = vector.load %arg16[%c0_18, %c0_19] : memref<8x128xf32, #tpu.memory_space<vmem>>, vector<8x128xf32>
    tpu.vector_store %arg16[%c0_18, %c0_19], %19 {strides = array<i32>} : memref<8x128xf32, #tpu.memory_space<vmem>>, vector<8x128xf32>,
    %c0_20 = arith.constant 0 : index
    %c0_21 = arith.constant 0 : index
    %22 = vector.load %arg2[%c0_20, %c0_21] : memref<8x128xf32, #tpu.memory_space<vmem>>, vector<8x128xf32>
    %cst_22 = arith.constant 5.000000e-01 : f32
    %23 = vector.broadcast %cst_22 : f32 to vector<8x128xf32>
    %24 = arith.mulf %23, %19 : vector<8x128xf32>
    %25 = math.exp %24 : vector<8x128xf32>
    %26 = arith.mulf %22, %25 : vector<8x128xf32>
    %27 = arith.addf %13, %26 : vector<8x128xf32>
    %28 = arith.truncf %27 : vector<8x128xf32> to vector<8x128xbf16>
    %c0_23 = arith.constant 0 : index
    %c0_24 = arith.constant 0 : index
    %29 = vector.load %arg9[%c0_23, %c0_24] : memref<128x512xbf16, #tpu.memory_space<vmem>>, vector<128x512xbf16>
    %cst_25 = arith.constant dense<0.000000e+00> : vector<8x512xf32>
    %30 = tpu.matmul %28, %29, %cst_25 {dimension_numbers = #tpu.dot_dimension_numbers<[1], [0], [0], [1], [0, 0, 1, 1], [], []>} : vector<8x128xbf16>, vector<128x512xbf16>, vector<8x512xf32> -> vector<8x512xf32>
    %c0_26 = arith.constant 0 : index
    %c0_27 = arith.constant 0 : index
    %31 = vector.load %arg10[%c0_26, %c0_27] : memref<1x512xf32, #tpu.memory_space<vmem>>, vector<1x512xf32>
    %32 = vector.broadcast %31 : vector<1x512xf32> to vector<8x512xf32>
    %33 = arith.addf %30, %32 : vector<8x512xf32>
    %cst_28 = arith.constant 0.000000e+00 : f32
    %34 = vector.broadcast %cst_28 : f32 to vector<8x512xf32>
    %35 = arith.maximumf %33, %34 : vector<8x512xf32>
    %36 = arith.truncf %35 : vector<8x512xf32> to vector<8x512xbf16>
    %c0_29 = arith.constant 0 : index
    %c0_30 = arith.constant 0 : index
    %37 = vector.load %arg11[%c0_29, %c0_30] : memref<512x1024xbf16, #tpu.memory_space<vmem>>, vector<512x1024xbf16>
    %cst_31 = arith.constant dense<0.000000e+00> : vector<8x1024xf32>
    %38 = tpu.matmul %36, %37, %cst_31 {dimension_numbers = #tpu.dot_dimension_numbers<[1], [0], [0], [1], [0, 0, 1, 1], [], []>} : vector<8x512xbf16>, vector<512x1024xbf16>, vector<8x1024xf32> -> vector<8x1024xf32>
    %c0_32 = arith.constant 0 : index
    %c0_33 = arith.constant 0 : index
    %39 = vector.load %arg12[%c0_32, %c0_33] : memref<1x1024xf32, #tpu.memory_space<vmem>>, vector<1x1024xf32>
    %40 = vector.broadcast %39 : vector<1x1024xf32> to vector<8x1024xf32>
    %41 = arith.addf %38, %40 : vector<8x1024xf32>
    %cst_34 = arith.constant 0.000000e+00 : f32
    %42 = vector.broadcast %cst_34 : f32 to vector<8x1024xf32>
    %43 = arith.maximumf %41, %42 : vector<8x1024xf32>
    %44 = arith.truncf %43 : vector<8x1024xf32> to vector<8x1024xbf16>
    %c0_35 = arith.constant 0 : index
    %c0_36 = arith.constant 0 : index
    %45 = vector.load %arg13[%c0_35, %c0_36] : memref<1024x896xbf16, #tpu.memory_space<vmem>>, vector<1024x896xbf16>
    %cst_37 = arith.constant dense<0.000000e+00> : vector<8x896xf32>
    %46 = tpu.matmul %44, %45, %cst_37 {dimension_numbers = #tpu.dot_dimension_numbers<[1], [0], [0], [1], [0, 0, 1, 1], [], []>} : vector<8x1024xbf16>, vector<1024x896xbf16>, vector<8x896xf32> -> vector<8x896xf32>
    %c0_38 = arith.constant 0 : index
    %c0_39 = arith.constant 0 : index
    %47 = vector.load %arg14[%c0_38, %c0_39] : memref<1x896xf32, #tpu.memory_space<vmem>>, vector<1x896xf32>
    %48 = vector.broadcast %47 : vector<1x896xf32> to vector<8x896xf32>
    %49 = arith.addf %46, %48 : vector<8x896xf32>
    %50 = arith.negf %49 : vector<8x896xf32>
    %51 = math.exp %50 : vector<8x896xf32>
    %cst_40 = arith.constant 1.000000e+00 : f32
    %52 = vector.broadcast %cst_40 : f32 to vector<8x896xf32>
    %53 = arith.addf %52, %51 : vector<8x896xf32>
    %54 = arith.divf %52, %53 : vector<8x896xf32>
    %c0_41 = arith.constant 0 : index
    %c0_42 = arith.constant 0 : index
    %55 = vector.load %arg17[%c0_41, %c0_42] : memref<8x896xf32, #tpu.memory_space<vmem>>, vector<8x896xf32>
    tpu.vector_store %arg17[%c0_41, %c0_42], %54 {strides = array<i32>} : memref<8x896xf32, #tpu.memory_space<vmem>>, vector<8x896xf32>,
    return
  }
  func.func @transform_0(%arg0: i32) -> (i32, i32) {
    %c0_i32 = arith.constant 0 : i32
    %c0_i32_0 = arith.constant 0 : i32
    return %arg0, %c0_i32 : i32, i32
  }
  func.func @transform_1(%arg0: i32) -> (i32, i32) {
    %c0_i32 = arith.constant 0 : i32
    %c0_i32_0 = arith.constant 0 : i32
    return %arg0, %c0_i32 : i32, i32
  }
  func.func @transform_2(%arg0: i32) -> (i32, i32) {
    %c0_i32 = arith.constant 0 : i32
    %c0_i32_0 = arith.constant 0 : i32
    %c0_i32_1 = arith.constant 0 : i32
    return %c0_i32, %c0_i32_0 : i32, i32
  }
  func.func @transform_3(%arg0: i32) -> (i32, i32) {
    %c0_i32 = arith.constant 0 : i32
    %c0_i32_0 = arith.constant 0 : i32
    %c0_i32_1 = arith.constant 0 : i32
    return %c0_i32, %c0_i32_0 : i32, i32
  }
  func.func @transform_4(%arg0: i32) -> (i32, i32) {
    %c0_i32 = arith.constant 0 : i32
    %c0_i32_0 = arith.constant 0 : i32
    %c0_i32_1 = arith.constant 0 : i32
    return %c0_i32, %c0_i32_0 : i32, i32
  }
  func.func @transform_5(%arg0: i32) -> (i32, i32) {
    %c0_i32 = arith.constant 0 : i32
    %c0_i32_0 = arith.constant 0 : i32
    %c0_i32_1 = arith.constant 0 : i32
    return %c0_i32, %c0_i32_0 : i32, i32
  }
  func.func @transform_6(%arg0: i32) -> (i32, i32) {
    %c0_i32 = arith.constant 0 : i32
    %c0_i32_0 = arith.constant 0 : i32
    %c0_i32_1 = arith.constant 0 : i32
    return %c0_i32, %c0_i32_0 : i32, i32
  }
  func.func @transform_7(%arg0: i32) -> (i32, i32) {
    %c0_i32 = arith.constant 0 : i32
    %c0_i32_0 = arith.constant 0 : i32
    %c0_i32_1 = arith.constant 0 : i32
    return %c0_i32, %c0_i32_0 : i32, i32
  }
  func.func @transform_8(%arg0: i32) -> (i32, i32) {
    %c0_i32 = arith.constant 0 : i32
    %c0_i32_0 = arith.constant 0 : i32
    %c0_i32_1 = arith.constant 0 : i32
    return %c0_i32, %c0_i32_0 : i32, i32
  }
  func.func @transform_9(%arg0: i32) -> (i32, i32) {
    %c0_i32 = arith.constant 0 : i32
    %c0_i32_0 = arith.constant 0 : i32
    %c0_i32_1 = arith.constant 0 : i32
    return %c0_i32, %c0_i32_0 : i32, i32
  }
  func.func @transform_10(%arg0: i32) -> (i32, i32) {
    %c0_i32 = arith.constant 0 : i32
    %c0_i32_0 = arith.constant 0 : i32
    %c0_i32_1 = arith.constant 0 : i32
    return %c0_i32, %c0_i32_0 : i32, i32
  }
  func.func @transform_11(%arg0: i32) -> (i32, i32) {
    %c0_i32 = arith.constant 0 : i32
    %c0_i32_0 = arith.constant 0 : i32
    %c0_i32_1 = arith.constant 0 : i32
    return %c0_i32, %c0_i32_0 : i32, i32
  }
  func.func @transform_12(%arg0: i32) -> (i32, i32) {
    %c0_i32 = arith.constant 0 : i32
    %c0_i32_0 = arith.constant 0 : i32
    %c0_i32_1 = arith.constant 0 : i32
    return %c0_i32, %c0_i32_0 : i32, i32
  }
  func.func @transform_13(%arg0: i32) -> (i32, i32) {
    %c0_i32 = arith.constant 0 : i32
    %c0_i32_0 = arith.constant 0 : i32
    %c0_i32_1 = arith.constant 0 : i32
    return %c0_i32, %c0_i32_0 : i32, i32
  }
  func.func @transform_14(%arg0: i32) -> (i32, i32) {
    %c0_i32 = arith.constant 0 : i32
    %c0_i32_0 = arith.constant 0 : i32
    return %arg0, %c0_i32 : i32, i32
  }
  func.func @transform_15(%arg0: i32) -> (i32, i32) {
    %c0_i32 = arith.constant 0 : i32
    %c0_i32_0 = arith.constant 0 : i32
    return %arg0, %c0_i32 : i32, i32
  }
  func.func @transform_16(%arg0: i32) -> (i32, i32) {
    %c0_i32 = arith.constant 0 : i32
    %c0_i32_0 = arith.constant 0 : i32
    return %arg0, %c0_i32 : i32, i32
  }
}

</mosaic_0001>

<llo_original>
// kernel: eeg_image_vae_forward.2
$region0: #{eeg_image_vae_forward.2}
  #allocation0 [shape = 'u32[]', space=smem, size = 0x4, offset = 0x4, fixed_abs, tag = 'smem constant byte address 0x4 - core index']
  #allocation1 [shape = 'u32[144,128]{1,0:T(1,128)}', space=vmem, size = 0x12000, scoped, tag = 'internal scratch']
  %s0 = inlined_call_operand.vmem [shape: bf16[128,512], index: 0, kind: input, shape index: {}]
  %s1 = inlined_call_operand.hbm [shape: bf16[512,128], index: 1, kind: input, shape index: {}]
  %s2 = inlined_call_operand.vmem [shape: f32[512,1], index: 2, kind: input, shape index: {}]
  %s3 = inlined_call_operand.hbm [shape: bf16[64,512], index: 3, kind: input, shape index: {}]
  %s4 = inlined_call_operand.vmem [shape: f32[64,1], index: 4, kind: input, shape index: {}]
  %s5 = inlined_call_operand.vmem [shape: bf16[512,64], index: 5, kind: input, shape index: {}]
  %s6 = inlined_call_operand.vmem [shape: bf16[64,64], index: 6, kind: output, shape index: {}]
  %s7 = sld [smem:[#allocation0]]
  $region42: #{eeg_image_vae_forward.2} parent=0
    _
  %s9 = ssub.s32 1, %s7
  %s10 = scalar_select 0, %s9, %s7
  $region1: #{eeg_image_vae_forward.2} parent=0
    #allocation2 [shape = 'u8[131072]{0}', space=vmem, size = 0x20000, scoped, tag = 'input window, operand 1, single buffered']
    #allocation3 [shape = 's32[1]{0}', space=sflag, size = 0x4, scoped, tag = 'scoped memory for eeg_image_vae_forward.2']
    #allocation4 [shape = 'u8[65536]{0}', space=vmem, size = 0x10000, scoped, tag = 'input window, operand 3, single buffered']
    #allocation5 [shape = 's32[1]{0}', space=sflag, size = 0x4, scoped, tag = 'scoped memory for eeg_image_vae_forward.2']
    %11 = vsyncpa [#allocation3], 0
    %12 = vsyncpa [#allocation5], 0
    // Predicated region
    $region2: #{eeg_image_vae_forward.2} parent=1 // pred_check
      _
    $region3: #{eeg_image_vae_forward.2} parent=1 // pred_check_branch
      %14 = sbr.rel (0) target = $region5
    $region4: #{eeg_image_vae_forward.2} parent=1 // pred_region
      _
    $region5: #{eeg_image_vae_forward.2} parent=1 // pred_fallthru
      _
    // Predicated region
    $region6: #{eeg_image_vae_forward.2} parent=1 // pred_check
      _
    $region7: #{eeg_image_vae_forward.2} parent=1 // pred_check_branch
      %16 = sbr.rel (0) target = $region9
    $region8: #{eeg_image_vae_forward.2} parent=1 // pred_region
      %s18 = ssub.s32 4096, 4096
      %19 = vsyncadd [#allocation3], %s18
      %s20 = sshll.u32 [#allocation2], 4
      %s21 = int_to_ptr.vmem [resolvable:$true] %s20
      %26 = dma.hbm_to_vmem [thread:$0]  %s1, 4096, %s21, [#allocation3], 64, 64, 4
    $region9: #{eeg_image_vae_forward.2} parent=1 // pred_fallthru
      _
    // Predicated region
    $region10: #{eeg_image_vae_forward.2} parent=1 // pred_check
      _
    $region11: #{eeg_image_vae_forward.2} parent=1 // pred_check_branch
      %28 = sbr.rel (0) target = $region13
    $region12: #{eeg_image_vae_forward.2} parent=1 // pred_region
      _
    $region13: #{eeg_image_vae_forward.2} parent=1 // pred_fallthru
      _
    // Predicated region
    $region14: #{eeg_image_vae_forward.2} parent=1 // pred_check
      _
    $region15: #{eeg_image_vae_forward.2} parent=1 // pred_check_branch
      %30 = sbr.rel (0) target = $region17
    $region16: #{eeg_image_vae_forward.2} parent=1 // pred_region
      %s32 = ssub.s32 2048, 2048
      %33 = vsyncadd [#allocation5], %s32
      %s34 = sshll.u32 [#allocation4], 4
      %s35 = int_to_ptr.vmem [resolvable:$true] %s34
      %40 = dma.hbm_to_vmem [thread:$0]  %s3, 2048, %s35, [#allocation5], 256, 256, 16
    $region17: #{eeg_image_vae_forward.2} parent=1 // pred_fallthru
      _
    // Predicated region
    $region18: #{eeg_image_vae_forward.2} parent=1 // pred_check
      _
    $region19: #{eeg_image_vae_forward.2} parent=1 // pred_check_branch
      %42 = sbr.rel (0) target = $region21
    $region20: #{eeg_image_vae_forward.2} parent=1 // pred_region
      _
    $region21: #{eeg_image_vae_forward.2} parent=1 // pred_fallthru
      _
    // Predicated region
    $region22: #{eeg_image_vae_forward.2} parent=1 // pred_check
      _
    $region23: #{eeg_image_vae_forward.2} parent=1 // pred_check_branch
      %44 = sbr.rel (0) target = $region25
    $region24: #{eeg_image_vae_forward.2} parent=1 // pred_region
      _
    $region25: #{eeg_image_vae_forward.2} parent=1 // pred_fallthru
      _
    // Predicated region
    $region26: #{eeg_image_vae_forward.2} parent=1 // pred_check
      _
    $region27: #{eeg_image_vae_forward.2} parent=1 // pred_check_branch
      %46 = sbr.rel (0) target = $region29
    $region28: #{eeg_image_vae_forward.2} parent=1 // pred_region
      %47 = dma.done [#allocation3], 4096
    $region29: #{eeg_image_vae_forward.2} parent=1 // pred_fallthru
      _
    // Predicated region
    $region30: #{eeg_image_vae_forward.2} parent=1 // pred_check
      _
    $region31: #{eeg_image_vae_forward.2} parent=1 // pred_check_branch
      %49 = sbr.rel (0) target = $region33
    $region32: #{eeg_image_vae_forward.2} parent=1 // pred_region
      %50 = dma.done [#allocation5], 2048
    $region33: #{eeg_image_vae_forward.2} parent=1 // pred_fallthru
      _
    %v52 = vld [vmem:[#allocation2] sm:$0xf]
    %v53 = vld [vmem:[#allocation2 + $0x4] sm:$0xf]
    %v54 = vld [vmem:[#allocation2 + $0x8] sm:$0xf]
    %v55 = vld [vmem:[#allocation2 + $0xc] sm:$0xf]
    %v56 = vld [vmem:[#allocation2 + $0x10] sm:$0xf]
    %v57 = vld [vmem:[#allocation2 + $0x14] sm:$0xf]
    %v58 = vld [vmem:[#allocation2 + $0x18] sm:$0xf]
    %v59 = vld [vmem:[#allocation2 + $0x1c] sm:$0xf]
    %v60 = vld [vmem:[#allocation2 + $0x20] sm:$0xf]
    %v61 = vld [vmem:[#allocation2 + $0x24] sm:$0xf]
    %v62 = vld [vmem:[#allocation2 + $0x28] sm:$0xf]
    %v63 = vld [vmem:[#allocation2 + $0x2c] sm:$0xf]
    %v64 = vld [vmem:[#allocation2 + $0x30] sm:$0xf]
    %v65 = vld [vmem:[#allocation2 + $0x34] sm:$0xf]
    %v66 = vld [vmem:[#allocation2 + $0x38] sm:$0xf]
    %v67 = vld [vmem:[#allocation2 + $0x3c] sm:$0xf]
    %v68 = vld [vmem:[#allocation2 + $0x40] sm:$0xf]
    %v69 = vld [vmem:[#allocation2 + $0x44] sm:$0xf]
    %v70 = vld [vmem:[#allocation2 + $0x48] sm:$0xf]
    %v71 = vld [vmem:[#allocation2 + $0x4c] sm:$0xf]
    %v72 = vld [vmem:[#allocation2 + $0x50] sm:$0xf]
    %v73 = vld [vmem:[#allocation2 + $0x54] sm:$0xf]
    %v74 = vld [vmem:[#allocation2 + $0x58] sm:$0xf]
    %v75 = vld [vmem:[#allocation2 + $0x5c] sm:$0xf]
    %v76 = vld [vmem:[#allocation2 + $0x60] sm:$0xf]
    %v77 = vld [vmem:[#allocation2 + $0x64] sm:$0xf]
    %v78 = vld [vmem:[#allocation2 + $0x68] sm:$0xf]
    %v79 = vld [vmem:[#allocation2 + $0x6c] sm:$0xf]
    %v80 = vld [vmem:[#allocation2 + $0x70] sm:$0xf]
    %v81 = vld [vmem:[#allocation2 + $0x74] sm:$0xf]
    %v82 = vld [vmem:[#allocation2 + $0x78] sm:$0xf]
    %v83 = vld [vmem:[#allocation2 + $0x7c] sm:$0xf]
    %v84 = vld [vmem:[#allocation2 + $0x80] sm:$0xf]
    %v85 = vld [vmem:[#allocation2 + $0x84] sm:$0xf]
    %v86 = vld [vmem:[#allocation2 + $0x88] sm:$0xf]
    %v87 = vld [vmem:[#allocation2 + $0x8c] sm:$0xf]
    %v88 = vld [vmem:[#allocation2 + $0x90] sm:$0xf]
    %v89 = vld [vmem:[#allocation2 + $0x94] sm:$0xf]
    %v90 = vld [vmem:[#allocation2 + $0x98] sm:$0xf]
    %v91 = vld [vmem:[#allocation2 + $0x9c] sm:$0xf]
    %v92 = vld [vmem:[#allocation2 + $0xa0] sm:$0xf]
    %v93 = vld [vmem:[#allocation2 + $0xa4] sm:$0xf]
    %v94 = vld [vmem:[#allocation2 + $0xa8] sm:$0xf]
    %v95 = vld [vmem:[#allocation2 + $0xac] sm:$0xf]
    %v96 = vld [vmem:[#allocation2 + $0xb0] sm:$0xf]
    %v97 = vld [vmem:[#allocation2 + $0xb4] sm:$0xf]
    %v98 = vld [vmem:[#allocation2 + $0xb8] sm:$0xf]
    %v99 = vld [vmem:[#allocation2 + $0xbc] sm:$0xf]
    %v100 = vld [vmem:[#allocation2 + $0xc0] sm:$0xf]
    %v101 = vld [vmem:[#allocation2 + $0xc4] sm:$0xf]
    %v102 = vld [vmem:[#allocation2 + $0xc8] sm:$0xf]
    %v103 = vld [vmem:[#allocation2 + $0xcc] sm:$0xf]
    %v104 = vld [vmem:[#allocation2 + $0xd0] sm:$0xf]
    %v105 = vld [vmem:[#allocation2 + $0xd4] sm:$0xf]
    %v106 = vld [vmem:[#allocation2 + $0xd8] sm:$0xf]
    %v107 = vld [vmem:[#allocation2 + $0xdc] sm:$0xf]
    %v108 = vld [vmem:[#allocation2 + $0xe0] sm:$0xf]
    %v109 = vld [vmem:[#allocation2 + $0xe4] sm:$0xf]
    %v110 = vld [vmem:[#allocation2 + $0xe8] sm:$0xf]
    %v111 = vld [vmem:[#allocation2 + $0xec] sm:$0xf]
    %v112 = vld [vmem:[#allocation2 + $0xf0] sm:$0xf]
    %v113 = vld [vmem:[#allocation2 + $0xf4] sm:$0xf]
    %v114 = vld [vmem:[#allocation2 + $0xf8] sm:$0xf]
    %v115 = vld [vmem:[#allocation2 + $0xfc] sm:$0xf]
    %v116 = vld [vmem:[%s0] sm:$0xff]
    %v117 = vld [vmem:[%s0 + $0x8] sm:$0xff]
    %v118 = vld [vmem:[%s0 + $0x10] sm:$0xff]
    %v119 = vld [vmem:[%s0 + $0x18] sm:$0xff]
    %v120 = vld [vmem:[%s0 + $0x20] sm:$0xff]
    %v121 = vld [vmem:[%s0 + $0x28] sm:$0xff]
    %v122 = vld [vmem:[%s0 + $0x30] sm:$0xff]
    %v123 = vld [vmem:[%s0 + $0x38] sm:$0xff]
    %v124 = vld [vmem:[%s0 + $0x40] sm:$0xff]
    %v125 = vld [vmem:[%s0 + $0x48] sm:$0xff]
    %v126 = vld [vmem:[%s0 + $0x50] sm:$0xff]
    %v127 = vld [vmem:[%s0 + $0x58] sm:$0xff]
    %v128 = vld [vmem:[%s0 + $0x60] sm:$0xff]
    %v129 = vld [vmem:[%s0 + $0x68] sm:$0xff]
    %v130 = vld [vmem:[%s0 + $0x70] sm:$0xff]
    %v131 = vld [vmem:[%s0 + $0x78] sm:$0xff]
    %v132 = vld [vmem:[%s0 + $0x80] sm:$0xff]
    %v133 = vld [vmem:[%s0 + $0x88] sm:$0xff]
    %v134 = vld [vmem:[%s0 + $0x90] sm:$0xff]
    %v135 = vld [vmem:[%s0 + $0x98] sm:$0xff]
    %v136 = vld [vmem:[%s0 + $0xa0] sm:$0xff]
    %v137 = vld [vmem:[%s0 + $0xa8] sm:$0xff]
    %v138 = vld [vmem:[%s0 + $0xb0] sm:$0xff]
    %v139 = vld [vmem:[%s0 + $0xb8] sm:$0xff]
    %v140 = vld [vmem:[%s0 + $0xc0] sm:$0xff]
    %v141 = vld [vmem:[%s0 + $0xc8] sm:$0xff]
    %v142 = vld [vmem:[%s0 + $0xd0] sm:$0xff]
    %v143 = vld [vmem:[%s0 + $0xd8] sm:$0xff]
    %v144 = vld [vmem:[%s0 + $0xe0] sm:$0xff]
    %v145 = vld [vmem:[%s0 + $0xe8] sm:$0xff]
    %v146 = vld [vmem:[%s0 + $0xf0] sm:$0xff]
    %v147 = vld [vmem:[%s0 + $0xf8] sm:$0xff]
    %v148 = vld [vmem:[%s2] sm:$0xff]
    %v149 = vld [vmem:[%s2 + $0x8] sm:$0xff]
    %v150 = vld [vmem:[%s2 + $0x10] sm:$0xff]
    %v151 = vld [vmem:[%s2 + $0x18] sm:$0xff]
    %v152 = vld [vmem:[%s2 + $0x20] sm:$0xff]
    %v153 = vld [vmem:[%s2 + $0x28] sm:$0xff]
    %v154 = vld [vmem:[%s2 + $0x30] sm:$0xff]
    %v155 = vld [vmem:[%s2 + $0x38] sm:$0xff]
    %v156 = vld [vmem:[%s2 + $0x40] sm:$0xff]
    %v157 = vld [vmem:[%s2 + $0x48] sm:$0xff]
    %v158 = vld [vmem:[%s2 + $0x50] sm:$0xff]
    %v159 = vld [vmem:[%s2 + $0x58] sm:$0xff]
    %v160 = vld [vmem:[%s2 + $0x60] sm:$0xff]
    %v161 = vld [vmem:[%s2 + $0x68] sm:$0xff]
    %v162 = vld [vmem:[%s2 + $0x70] sm:$0xff]
    %v163 = vld [vmem:[%s2 + $0x78] sm:$0xff]
    %v164 = vld [vmem:[%s2 + $0x80] sm:$0xff]
    %v165 = vld [vmem:[%s2 + $0x88] sm:$0xff]
    %v166 = vld [vmem:[%s2 + $0x90] sm:$0xff]
    %v167 = vld [vmem:[%s2 + $0x98] sm:$0xff]
    %v168 = vld [vmem:[%s2 + $0xa0] sm:$0xff]
    %v169 = vld [vmem:[%s2 + $0xa8] sm:$0xff]
    %v170 = vld [vmem:[%s2 + $0xb0] sm:$0xff]
    %v171 = vld [vmem:[%s2 + $0xb8] sm:$0xff]
    %v172 = vld [vmem:[%s2 + $0xc0] sm:$0xff]
    %v173 = vld [vmem:[%s2 + $0xc8] sm:$0xff]
    %v174 = vld [vmem:[%s2 + $0xd0] sm:$0xff]
    %v175 = vld [vmem:[%s2 + $0xd8] sm:$0xff]
    %v176 = vld [vmem:[%s2 + $0xe0] sm:$0xff]
    %v177 = vld [vmem:[%s2 + $0xe8] sm:$0xff]
    %v178 = vld [vmem:[%s2 + $0xf0] sm:$0xff]
    %v179 = vld [vmem:[%s2 + $0xf8] sm:$0xff]
    %v180 = vld [vmem:[%s2 + $0x100] sm:$0xff]
    %v181 = vld [vmem:[%s2 + $0x108] sm:$0xff]
    %v182 = vld [vmem:[%s2 + $0x110] sm:$0xff]
    %v183 = vld [vmem:[%s2 + $0x118] sm:$0xff]
    %v184 = vld [vmem:[%s2 + $0x120] sm:$0xff]
    %v185 = vld [vmem:[%s2 + $0x128] sm:$0xff]
    %v186 = vld [vmem:[%s2 + $0x130] sm:$0xff]
    %v187 = vld [vmem:[%s2 + $0x138] sm:$0xff]
    %v188 = vld [vmem:[%s2 + $0x140] sm:$0xff]
    %v189 = vld [vmem:[%s2 + $0x148] sm:$0xff]
    %v190 = vld [vmem:[%s2 + $0x150] sm:$0xff]
    %v191 = vld [vmem:[%s2 + $0x158] sm:$0xff]
    %v192 = vld [vmem:[%s2 + $0x160] sm:$0xff]
    %v193 = vld [vmem:[%s2 + $0x168] sm:$0xff]
    %v194 = vld [vmem:[%s2 + $0x170] sm:$0xff]
    %v195 = vld [vmem:[%s2 + $0x178] sm:$0xff]
    %v196 = vld [vmem:[%s2 + $0x180] sm:$0xff]
    %v197 = vld [vmem:[%s2 + $0x188] sm:$0xff]
    %v198 = vld [vmem:[%s2 + $0x190] sm:$0xff]
    %v199 = vld [vmem:[%s2 + $0x198] sm:$0xff]
    %v200 = vld [vmem:[%s2 + $0x1a0] sm:$0xff]
    %v201 = vld [vmem:[%s2 + $0x1a8] sm:$0xff]
    %v202 = vld [vmem:[%s2 + $0x1b0] sm:$0xff]
    %v203 = vld [vmem:[%s2 + $0x1b8] sm:$0xff]
    %v204 = vld [vmem:[%s2 + $0x1c0] sm:$0xff]
    %v205 = vld [vmem:[%s2 + $0x1c8] sm:$0xff]
    %v206 = vld [vmem:[%s2 + $0x1d0] sm:$0xff]
    %v207 = vld [vmem:[%s2 + $0x1d8] sm:$0xff]
    %v208 = vld [vmem:[%s2 + $0x1e0] sm:$0xff]
    %v209 = vld [vmem:[%s2 + $0x1e8] sm:$0xff]
    %v210 = vld [vmem:[%s2 + $0x1f0] sm:$0xff]
    %v211 = vld [vmem:[%s2 + $0x1f8] sm:$0xff]
    %213 = vset.pattern.permute.xlu0 0
    %214 = vperm.xlu0 %213, %v148
    %v215 = vpop.permute.xlu0 %214
    %218 = vset.pattern.permute.xlu0 0
    %219 = vperm.xlu0 %218, %v149
    %v220 = vpop.permute.xlu0 %219
    %223 = vset.pattern.permute.xlu0 0
    %224 = vperm.xlu0 %223, %v150
    %v225 = vpop.permute.xlu0 %224
    %228 = vset.pattern.permute.xlu0 0
    %229 = vperm.xlu0 %228, %v151
    %v230 = vpop.permute.xlu0 %229
    %233 = vset.pattern.permute.xlu0 0
    %234 = vperm.xlu0 %233, %v152
    %v235 = vpop.permute.xlu0 %234
    %238 = vset.pattern.permute.xlu0 0
    %239 = vperm.xlu0 %238, %v153
    %v240 = vpop.permute.xlu0 %239
    %243 = vset.pattern.permute.xlu0 0
    %244 = vperm.xlu0 %243, %v154
    %v245 = vpop.permute.xlu0 %244
    %248 = vset.pattern.permute.xlu0 0
    %249 = vperm.xlu0 %248, %v155
    %v250 = vpop.permute.xlu0 %249
    %253 = vset.pattern.permute.xlu0 0
    %254 = vperm.xlu0 %253, %v156
    %v255 = vpop.permute.xlu0 %254
    %258 = vset.pattern.permute.xlu0 0
    %259 = vperm.xlu0 %258, %v157
    %v260 = vpop.permute.xlu0 %259
    %263 = vset.pattern.permute.xlu0 0
    %264 = vperm.xlu0 %263, %v158
    %v265 = vpop.permute.xlu0 %264
    %268 = vset.pattern.permute.xlu0 0
    %269 = vperm.xlu0 %268, %v159
    %v270 = vpop.permute.xlu0 %269
    %273 = vset.pattern.permute.xlu0 0
    %274 = vperm.xlu0 %273, %v160
    %v275 = vpop.permute.xlu0 %274
    %278 = vset.pattern.permute.xlu0 0
    %279 = vperm.xlu0 %278, %v161
    %v280 = vpop.permute.xlu0 %279
    %283 = vset.pattern.permute.xlu0 0
    %284 = vperm.xlu0 %283, %v162
    %v285 = vpop.permute.xlu0 %284
    %288 = vset.pattern.permute.xlu0 0
    %289 = vperm.xlu0 %288, %v163
    %v290 = vpop.permute.xlu0 %289
    %293 = vset.pattern.permute.xlu0 0
    %294 = vperm.xlu0 %293, %v164
    %v295 = vpop.permute.xlu0 %294
    %298 = vset.pattern.permute.xlu0 0
    %299 = vperm.xlu0 %298, %v165
    %v300 = vpop.permute.xlu0 %299
    %303 = vset.pattern.permute.xlu0 0
    %304 = vperm.xlu0 %303, %v166
    %v305 = vpop.permute.xlu0 %304
    %308 = vset.pattern.permute.xlu0 0
    %309 = vperm.xlu0 %308, %v167
    %v310 = vpop.permute.xlu0 %309
    %313 = vset.pattern.permute.xlu0 0
    %314 = vperm.xlu0 %313, %v168
    %v315 = vpop.permute.xlu0 %314
    %318 = vset.pattern.permute.xlu0 0
    %319 = vperm.xlu0 %318, %v169
    %v320 = vpop.permute.xlu0 %319
    %323 = vset.pattern.permute.xlu0 0
    %324 = vperm.xlu0 %323, %v170
    %v325 = vpop.permute.xlu0 %324
    %328 = vset.pattern.permute.xlu0 0
    %329 = vperm.xlu0 %328, %v171
    %v330 = vpop.permute.xlu0 %329
    %333 = vset.pattern.permute.xlu0 0
    %334 = vperm.xlu0 %333, %v172
    %v335 = vpop.permute.xlu0 %334
    %338 = vset.pattern.permute.xlu0 0
    %339 = vperm.xlu0 %338, %v173
    %v340 = vpop.permute.xlu0 %339
    %343 = vset.pattern.permute.xlu0 0
    %344 = vperm.xlu0 %343, %v174
    %v345 = vpop.permute.xlu0 %344
    %348 = vset.pattern.permute.xlu0 0
    %349 = vperm.xlu0 %348, %v175
    %v350 = vpop.permute.xlu0 %349
    %353 = vset.pattern.permute.xlu0 0
    %354 = vperm.xlu0 %353, %v176
    %v355 = vpop.permute.xlu0 %354
    %358 = vset.pattern.permute.xlu0 0
    %359 = vperm.xlu0 %358, %v177
    %v360 = vpop.permute.xlu0 %359
    %363 = vset.pattern.permute.xlu0 0
    %364 = vperm.xlu0 %363, %v178
    %v365 = vpop.permute.xlu0 %364
    %368 = vset.pattern.permute.xlu0 0
    %369 = vperm.xlu0 %368, %v179
    %v370 = vpop.permute.xlu0 %369
    %373 = vset.pattern.permute.xlu0 0
    %374 = vperm.xlu0 %373, %v180
    %v375 = vpop.permute.xlu0 %374
    %378 = vset.pattern.permute.xlu0 0
    %379 = vperm.xlu0 %378, %v181
    %v380 = vpop.permute.xlu0 %379
    %383 = vset.pattern.permute.xlu0 0
    %384 = vperm.xlu0 %383, %v182
    %v385 = vpop.permute.xlu0 %384
    %388 = vset.pattern.permute.xlu0 0
    %389 = vperm.xlu0 %388, %v183
    %v390 = vpop.permute.xlu0 %389
    %393 = vset.pattern.permute.xlu0 0
    %394 = vperm.xlu0 %393, %v184
    %v395 = vpop.permute.xlu0 %394
    %398 = vset.pattern.permute.xlu0 0
    %399 = vperm.xlu0 %398, %v185
    %v400 = vpop.permute.xlu0 %399
    %403 = vset.pattern.permute.xlu0 0
    %404 = vperm.xlu0 %403, %v186
    %v405 = vpop.permute.xlu0 %404
    %408 = vset.pattern.permute.xlu0 0
    %409 = vperm.xlu0 %408, %v187
    %v410 = vpop.permute.xlu0 %409
    %413 = vset.pattern.permute.xlu0 0
    %414 = vperm.xlu0 %413, %v188
    %v415 = vpop.permute.xlu0 %414
    %418 = vset.pattern.permute.xlu0 0
    %419 = vperm.xlu0 %418, %v189
    %v420 = vpop.permute.xlu0 %419
    %423 = vset.pattern.permute.xlu0 0
    %424 = vperm.xlu0 %423, %v190
    %v425 = vpop.permute.xlu0 %424
    %428 = vset.pattern.permute.xlu0 0
    %429 = vperm.xlu0 %428, %v191
    %v430 = vpop.permute.xlu0 %429
    %433 = vset.pattern.permute.xlu0 0
    %434 = vperm.xlu0 %433, %v192
    %v435 = vpop.permute.xlu0 %434
    %438 = vset.pattern.permute.xlu0 0
    %439 = vperm.xlu0 %438, %v193
    %v440 = vpop.permute.xlu0 %439
    %443 = vset.pattern.permute.xlu0 0
    %444 = vperm.xlu0 %443, %v194
    %v445 = vpop.permute.xlu0 %444
    %448 = vset.pattern.permute.xlu0 0
    %449 = vperm.xlu0 %448, %v195
    %v450 = vpop.permute.xlu0 %449
    %453 = vset.pattern.permute.xlu0 0
    %454 = vperm.xlu0 %453, %v196
    %v455 = vpop.permute.xlu0 %454
    %458 = vset.pattern.permute.xlu0 0
    %459 = vperm.xlu0 %458, %v197
    %v460 = vpop.permute.xlu0 %459
    %463 = vset.pattern.permute.xlu0 0
    %464 = vperm.xlu0 %463, %v198
    %v465 = vpop.permute.xlu0 %464
    %468 = vset.pattern.permute.xlu0 0
    %469 = vperm.xlu0 %468, %v199
    %v470 = vpop.permute.xlu0 %469
    %473 = vset.pattern.permute.xlu0 0
    %474 = vperm.xlu0 %473, %v200
    %v475 = vpop.permute.xlu0 %474
    %478 = vset.pattern.permute.xlu0 0
    %479 = vperm.xlu0 %478, %v201
    %v480 = vpop.permute.xlu0 %479
    %483 = vset.pattern.permute.xlu0 0
    %484 = vperm.xlu0 %483, %v202
    %v485 = vpop.permute.xlu0 %484
    %488 = vset.pattern.permute.xlu0 0
    %489 = vperm.xlu0 %488, %v203
    %v490 = vpop.permute.xlu0 %489
    %493 = vset.pattern.permute.xlu0 0
    %494 = vperm.xlu0 %493, %v204
    %v495 = vpop.permute.xlu0 %494
    %498 = vset.pattern.permute.xlu0 0
    %499 = vperm.xlu0 %498, %v205
    %v500 = vpop.permute.xlu0 %499
    %503 = vset.pattern.permute.xlu0 0
    %504 = vperm.xlu0 %503, %v206
    %v505 = vpop.permute.xlu0 %504
    %508 = vset.pattern.permute.xlu0 0
    %509 = vperm.xlu0 %508, %v207
    %v510 = vpop.permute.xlu0 %509
    %513 = vset.pattern.permute.xlu0 0
    %514 = vperm.xlu0 %513, %v208
    %v515 = vpop.permute.xlu0 %514
    %518 = vset.pattern.permute.xlu0 0
    %519 = vperm.xlu0 %518, %v209
    %v520 = vpop.permute.xlu0 %519
    %523 = vset.pattern.permute.xlu0 0
    %524 = vperm.xlu0 %523, %v210
    %v525 = vpop.permute.xlu0 %524
    %528 = vset.pattern.permute.xlu0 0
    %529 = vperm.xlu0 %528, %v211
    %v530 = vpop.permute.xlu0 %529
    %v596 = vunpack.c.l.b16 %v52
    %v597 = vunpack.c.l.b16 %v53
    %v598 = vunpack.c.l.b16 %v54
    %v599 = vunpack.c.l.b16 %v55
    %v600 = vunpack.c.l.b16 %v56
    %v601 = vunpack.c.l.b16 %v57
    %v602 = vunpack.c.l.b16 %v58
    %v603 = vunpack.c.l.b16 %v59
    %v604 = vunpack.c.l.b16 %v60
    %v605 = vunpack.c.l.b16 %v61
    %v606 = vunpack.c.l.b16 %v62
    %v607 = vunpack.c.l.b16 %v63
    %v608 = vunpack.c.l.b16 %v64
    %v609 = vunpack.c.l.b16 %v65
    %v610 = vunpack.c.l.b16 %v66
    %v611 = vunpack.c.l.b16 %v67
    %v612 = vunpack.c.l.b16 %v68
    %v613 = vunpack.c.l.b16 %v69
    %v614 = vunpack.c.l.b16 %v70
    %v615 = vunpack.c.l.b16 %v71
    %v616 = vunpack.c.l.b16 %v72
    %v617 = vunpack.c.l.b16 %v73
    %v618 = vunpack.c.l.b16 %v74
    %v619 = vunpack.c.l.b16 %v75
    %v620 = vunpack.c.l.b16 %v76
    %v621 = vunpack.c.l.b16 %v77
    %v622 = vunpack.c.l.b16 %v78
    %v623 = vunpack.c.l.b16 %v79
    %v624 = vunpack.c.l.b16 %v80
    %v625 = vunpack.c.l.b16 %v81
    %v626 = vunpack.c.l.b16 %v82
    %v627 = vunpack.c.l.b16 %v83
    %v628 = vunpack.c.l.b16 %v84
    %v629 = vunpack.c.l.b16 %v85
    %v630 = vunpack.c.l.b16 %v86
    %v631 = vunpack.c.l.b16 %v87
    %v632 = vunpack.c.l.b16 %v88
    %v633 = vunpack.c.l.b16 %v89
    %v634 = vunpack.c.l.b16 %v90
    %v635 = vunpack.c.l.b16 %v91
    %v636 = vunpack.c.l.b16 %v92
    %v637 = vunpack.c.l.b16 %v93
    %v638 = vunpack.c.l.b16 %v94
    %v639 = vunpack.c.l.b16 %v95
    %v640 = vunpack.c.l.b16 %v96
    %v641 = vunpack.c.l.b16 %v97
    %v642 = vunpack.c.l.b16 %v98
    %v643 = vunpack.c.l.b16 %v99
    %v644 = vunpack.c.l.b16 %v100
    %v645 = vunpack.c.l.b16 %v101
    %v646 = vunpack.c.l.b16 %v102
    %v647 = vunpack.c.l.b16 %v103
    %v648 = vunpack.c.l.b16 %v104
    %v649 = vunpack.c.l.b16 %v105
    %v650 = vunpack.c.l.b16 %v106
    %v651 = vunpack.c.l.b16 %v107
    %v652 = vunpack.c.l.b16 %v108
    %v653 = vunpack.c.l.b16 %v109
    %v654 = vunpack.c.l.b16 %v110
    %v655 = vunpack.c.l.b16 %v111
    %v656 = vunpack.c.l.b16 %v112
    %v657 = vunpack.c.l.b16 %v113
    %v658 = vunpack.c.l.b16 %v114
    %v659 = vunpack.c.l.b16 %v115
    %v660 = vpack.c.b16 %v597, %v596
    %v661 = vpack.c.b16 %v599, %v598
    %v662 = vpack.c.b16 %v601, %v600
    %v663 = vpack.c.b16 %v603, %v602
    %v664 = vpack.c.b16 %v605, %v604
    %v665 = vpack.c.b16 %v607, %v606
    %v666 = vpack.c.b16 %v609, %v608
    %v667 = vpack.c.b16 %v611, %v610
    %v668 = vpack.c.b16 %v613, %v612
    %v669 = vpack.c.b16 %v615, %v614
    %v670 = vpack.c.b16 %v617, %v616
    %v671 = vpack.c.b16 %v619, %v618
    %v672 = vpack.c.b16 %v621, %v620
    %v673 = vpack.c.b16 %v623, %v622
    %v674 = vpack.c.b16 %v625, %v624
    %v675 = vpack.c.b16 %v627, %v626
    %v676 = vpack.c.b16 %v629, %v628
    %v677 = vpack.c.b16 %v631, %v630
    %v678 = vpack.c.b16 %v633, %v632
    %v679 = vpack.c.b16 %v635, %v634
    %v680 = vpack.c.b16 %v637, %v636
    %v681 = vpack.c.b16 %v639, %v638
    %v682 = vpack.c.b16 %v641, %v640
    %v683 = vpack.c.b16 %v643, %v642
    %v684 = vpack.c.b16 %v645, %v644
    %v685 = vpack.c.b16 %v647, %v646
    %v686 = vpack.c.b16 %v649, %v648
    %v687 = vpack.c.b16 %v651, %v650
    %v688 = vpack.c.b16 %v653, %v652
    %v689 = vpack.c.b16 %v655, %v654
    %v690 = vpack.c.b16 %v657, %v656
    %v691 = vpack.c.b16 %v659, %v658
    %v756 = vunpack.c.l.b16 %v116
    %v757 = vunpack.c.h.b16 %v116
    %v758 = vunpack.c.l.b16 %v117
    %v759 = vunpack.c.h.b16 %v117
    %v760 = vunpack.c.l.b16 %v118
    %v761 = vunpack.c.h.b16 %v118
    %v762 = vunpack.c.l.b16 %v119
    %v763 = vunpack.c.h.b16 %v119
    %v764 = vunpack.c.l.b16 %v120
    %v765 = vunpack.c.h.b16 %v120
    %v766 = vunpack.c.l.b16 %v121
    %v767 = vunpack.c.h.b16 %v121
    %v768 = vunpack.c.l.b16 %v122
    %v769 = vunpack.c.h.b16 %v122
    %v770 = vunpack.c.l.b16 %v123
    %v771 = vunpack.c.h.b16 %v123
    %v772 = vunpack.c.l.b16 %v124
    %v773 = vunpack.c.h.b16 %v124
    %v774 = vunpack.c.l.b16 %v125
    %v775 = vunpack.c.h.b16 %v125
    %v776 = vunpack.c.l.b16 %v126
    %v777 = vunpack.c.h.b16 %v126
    %v778 = vunpack.c.l.b16 %v127
    %v779 = vunpack.c.h.b16 %v127
    %v780 = vunpack.c.l.b16 %v128
    %v781 = vunpack.c.h.b16 %v128
    %v782 = vunpack.c.l.b16 %v129
    %v783 = vunpack.c.h.b16 %v129
    %v784 = vunpack.c.l.b16 %v130
    %v785 = vunpack.c.h.b16 %v130
    %v786 = vunpack.c.l.b16 %v131
    %v787 = vunpack.c.h.b16 %v131
    %v788 = vunpack.c.l.b16 %v132
    %v789 = vunpack.c.h.b16 %v132
    %v790 = vunpack.c.l.b16 %v133
    %v791 = vunpack.c.h.b16 %v133
    %v792 = vunpack.c.l.b16 %v134
    %v793 = vunpack.c.h.b16 %v134
    %v794 = vunpack.c.l.b16 %v135
    %v795 = vunpack.c.h.b16 %v135
    %v796 = vunpack.c.l.b16 %v136
    %v797 = vunpack.c.h.b16 %v136
    %v798 = vunpack.c.l.b16 %v137
    %v799 = vunpack.c.h.b16 %v137
    %v800 = vunpack.c.l.b16 %v138
    %v801 = vunpack.c.h.b16 %v138
    %v802 = vunpack.c.l.b16 %v139
    %v803 = vunpack.c.h.b16 %v139
    %v804 = vunpack.c.l.b16 %v140
    %v805 = vunpack.c.h.b16 %v140
    %v806 = vunpack.c.l.b16 %v141
    %v807 = vunpack.c.h.b16 %v141
    %v808 = vunpack.c.l.b16 %v142
    %v809 = vunpack.c.h.b16 %v142
    %v810 = vunpack.c.l.b16 %v143
    %v811 = vunpack.c.h.b16 %v143
    %v812 = vunpack.c.l.b16 %v144
    %v813 = vunpack.c.h.b16 %v144
    %v814 = vunpack.c.l.b16 %v145
    %v815 = vunpack.c.h.b16 %v145
    %v816 = vunpack.c.l.b16 %v146
    %v817 = vunpack.c.h.b16 %v146
    %v818 = vunpack.c.l.b16 %v147
    %v819 = vunpack.c.h.b16 %v147
    %v820 = vpack.c.b16 %v760, %v756
    %v821 = vpack.c.b16 %v761, %v757
    %v822 = vpack.c.b16 %v762, %v758
    %v823 = vpack.c.b16 %v763, %v759
    %v824 = vpack.c.b16 %v768, %v764
    %v825 = vpack.c.b16 %v769, %v765
    %v826 = vpack.c.b16 %v770, %v766
    %v827 = vpack.c.b16 %v771, %v767
    %v828 = vpack.c.b16 %v776, %v772
    %v829 = vpack.c.b16 %v777, %v773
    %v830 = vpack.c.b16 %v778, %v774
    %v831 = vpack.c.b16 %v779, %v775
    %v832 = vpack.c.b16 %v784, %v780
    %v833 = vpack.c.b16 %v785, %v781
    %v834 = vpack.c.b16 %v786, %v782
    %v835 = vpack.c.b16 %v787, %v783
    %v836 = vpack.c.b16 %v792, %v788
    %v837 = vpack.c.b16 %v793, %v789
    %v838 = vpack.c.b16 %v794, %v790
    %v839 = vpack.c.b16 %v795, %v791
    %v840 = vpack.c.b16 %v800, %v796
    %v841 = vpack.c.b16 %v801, %v797
    %v842 = vpack.c.b16 %v802, %v798
    %v843 = vpack.c.b16 %v803, %v799
    %v844 = vpack.c.b16 %v808, %v804
    %v845 = vpack.c.b16 %v809, %v805
    %v846 = vpack.c.b16 %v810, %v806
    %v847 = vpack.c.b16 %v811, %v807
    %v848 = vpack.c.b16 %v816, %v812
    %v849 = vpack.c.b16 %v817, %v813
    %v850 = vpack.c.b16 %v818, %v814
    %v851 = vpack.c.b16 %v819, %v815
    %884 = vmatprep.subr.bf16.mxu0 %v849
    %885 = vmatpush1.bf16.msra.mxu0 %v848
    %886 = vmatprep.subr.bf16.mxu0 %v845
    %887 = vmatpush1.bf16.msra.mxu0 %v844
    %888 = vmatprep.subr.bf16.mxu0 %v841
    %889 = vmatpush1.bf16.msra.mxu0 %v840
    %890 = vmatprep.subr.bf16.mxu0 %v837
    %891 = vmatpush1.bf16.msra.mxu0 %v836
    %892 = vmatprep.subr.bf16.mxu0 %v833
    %893 = vmatpush1.bf16.msra.mxu0 %v832
    %894 = vmatprep.subr.bf16.mxu0 %v829
    %895 = vmatpush1.bf16.msra.mxu0 %v828
    %896 = vmatprep.subr.bf16.mxu0 %v825
    %897 = vmatpush1.bf16.msra.mxu0 %v824
    %898 = vmatprep.subr.bf16.mxu0 %v821
    %899 = vmatpush1.bf16.msra.mxu0 %v820
    %900 = vmatprep.subr.bf16.mxu0 0
    %901 = vmatpush2.bf16.msra.mxu0 0
    %902 = vmatprep.subr.bf16.mxu0 0
    %903 = vmatpush2.bf16.msra.mxu0 0
    %904 = vmatprep.subr.bf16.mxu0 0
    %905 = vmatpush2.bf16.msra.mxu0 0
    %906 = vmatprep.subr.bf16.mxu0 0
    %907 = vmatpush2.bf16.msra.mxu0 0
    %908 = vmatprep.subr.bf16.mxu0 0
    %909 = vmatpush2.bf16.msra.mxu0 0
    %910 = vmatprep.subr.bf16.mxu0 0
    %911 = vmatpush2.bf16.msra.mxu0 0
    %912 = vmatprep.subr.bf16.mxu0 0
    %913 = vmatpush2.bf16.msra.mxu0 0
    %914 = vmatprep.subr.bf16.mxu0 0
    %915 = vmatpush2.bf16.msra.mxu0 0
    %916 = vmatprep.mubr.bf16.mxu0 0
    %917 = vmatmul.mubr.bf16.gmra.mxu0 %v660
    %v918 = vpop.f32.mrf.mxu0
    %v919 = vadd.f32 %v215, %v918
    %v920 = vpop.f32.mrf.mxu0
    %v921 = vadd.f32 %v215, %v920
    %v922 = vpop.f32.mrf.mxu0
    %v923 = vadd.f32 %v220, %v922
    %v924 = vpop.f32.mrf.mxu0
    %v925 = vadd.f32 %v220, %v924
    %926 = vmatprep.mubr.bf16.mxu0 0
    %927 = vmatmul.mubr.bf16.gmra.mxu0 %v661
    %v928 = vpop.f32.mrf.mxu0
    %v929 = vadd.f32 %v225, %v928
    %v930 = vpop.f32.mrf.mxu0
    %v931 = vadd.f32 %v225, %v930
    %v932 = vpop.f32.mrf.mxu0
    %v933 = vadd.f32 %v230, %v932
    %v934 = vpop.f32.mrf.mxu0
    %v935 = vadd.f32 %v230, %v934
    %936 = vmatprep.mubr.bf16.mxu0 0
    %937 = vmatmul.mubr.bf16.gmra.mxu0 %v662
    %v938 = vpop.f32.mrf.mxu0
    %v939 = vadd.f32 %v235, %v938
    %v940 = vpop.f32.mrf.mxu0
    %v941 = vadd.f32 %v235, %v940
    %v942 = vpop.f32.mrf.mxu0
    %v943 = vadd.f32 %v240, %v942
    %v944 = vpop.f32.mrf.mxu0
    %v945 = vadd.f32 %v240, %v944
    %946 = vmatprep.mubr.bf16.mxu0 0
    %947 = vmatmul.mubr.bf16.gmra.mxu0 %v663
    %v948 = vpop.f32.mrf.mxu0
    %v949 = vadd.f32 %v245, %v948
    %v950 = vpop.f32.mrf.mxu0
    %v951 = vadd.f32 %v245, %v950
    %v952 = vpop.f32.mrf.mxu0
    %v953 = vadd.f32 %v250, %v952
    %v954 = vpop.f32.mrf.mxu0
    %v955 = vadd.f32 %v250, %v954
    %956 = vmatprep.mubr.bf16.mxu0 0
    %957 = vmatmul.mubr.bf16.gmra.mxu0 %v664
    %v958 = vpop.f32.mrf.mxu0
    %v959 = vadd.f32 %v255, %v958
    %v960 = vpop.f32.mrf.mxu0
    %v961 = vadd.f32 %v255, %v960
    %v962 = vpop.f32.mrf.mxu0
    %v963 = vadd.f32 %v260, %v962
    %v964 = vpop.f32.mrf.mxu0
    %v965 = vadd.f32 %v260, %v964
    %966 = vmatprep.mubr.bf16.mxu0 0
    %967 = vmatmul.mubr.bf16.gmra.mxu0 %v665
    %v968 = vpop.f32.mrf.mxu0
    %v969 = vadd.f32 %v265, %v968
    %v970 = vpop.f32.mrf.mxu0
    %v971 = vadd.f32 %v265, %v970
    %v972 = vpop.f32.mrf.mxu0
    %v973 = vadd.f32 %v270, %v972
    %v974 = vpop.f32.mrf.mxu0
    %v975 = vadd.f32 %v270, %v974
    %976 = vmatprep.mubr.bf16.mxu0 0
    %977 = vmatmul.mubr.bf16.gmra.mxu0 %v666
    %v978 = vpop.f32.mrf.mxu0
    %v979 = vadd.f32 %v275, %v978
    %v980 = vpop.f32.mrf.mxu0
    %v981 = vadd.f32 %v275, %v980
    %v982 = vpop.f32.mrf.mxu0
    %v983 = vadd.f32 %v280, %v982
    %v984 = vpop.f32.mrf.mxu0
    %v985 = vadd.f32 %v280, %v984
    %986 = vmatprep.mubr.bf16.mxu0 0
    %987 = vmatmul.mubr.bf16.gmra.mxu0 %v667
    %v988 = vpop.f32.mrf.mxu0
    %v989 = vadd.f32 %v285, %v988
    %v990 = vpop.f32.mrf.mxu0
    %v991 = vadd.f32 %v285, %v990
    %v992 = vpop.f32.mrf.mxu0
    %v993 = vadd.f32 %v290, %v992
    %v994 = vpop.f32.mrf.mxu0
    %v995 = vadd.f32 %v290, %v994
    %996 = vmatprep.mubr.bf16.mxu0 0
    %997 = vmatmul.mubr.bf16.gmra.mxu0 %v668
    %v998 = vpop.f32.mrf.mxu0
    %v999 = vadd.f32 %v295, %v998
    %v1000 = vpop.f32.mrf.mxu0
    %v1001 = vadd.f32 %v295, %v1000
    %v1002 = vpop.f32.mrf.mxu0
    %v1003 = vadd.f32 %v300, %v1002
    %v1004 = vpop.f32.mrf.mxu0
    %v1005 = vadd.f32 %v300, %v1004
    %1006 = vmatprep.mubr.bf16.mxu0 0
    %1007 = vmatmul.mubr.bf16.gmra.mxu0 %v669
    %v1008 = vpop.f32.mrf.mxu0
    %v1009 = vadd.f32 %v305, %v1008
    %v1010 = vpop.f32.mrf.mxu0
    %v1011 = vadd.f32 %v305, %v1010
    %v1012 = vpop.f32.mrf.mxu0
    %v1013 = vadd.f32 %v310, %v1012
    %v1014 = vpop.f32.mrf.mxu0
    %v1015 = vadd.f32 %v310, %v1014
    %1016 = vmatprep.mubr.bf16.mxu0 0
    %1017 = vmatmul.mubr.bf16.gmra.mxu0 %v670
    %v1018 = vpop.f32.mrf.mxu0
    %v1019 = vadd.f32 %v315, %v1018
    %v1020 = vpop.f32.mrf.mxu0
    %v1021 = vadd.f32 %v315, %v1020
    %v1022 = vpop.f32.mrf.mxu0
    %v1023 = vadd.f32 %v320, %v1022
    %v1024 = vpop.f32.mrf.mxu0
    %v1025 = vadd.f32 %v320, %v1024
    %1026 = vmatprep.mubr.bf16.mxu0 0
    %1027 = vmatmul.mubr.bf16.gmra.mxu0 %v671
    %v1028 = vpop.f32.mrf.mxu0
    %v1029 = vadd.f32 %v325, %v1028
    %v1030 = vpop.f32.mrf.mxu0
    %v1031 = vadd.f32 %v325, %v1030
    %v1032 = vpop.f32.mrf.mxu0
    %v1033 = vadd.f32 %v330, %v1032
    %v1034 = vpop.f32.mrf.mxu0
    %v1035 = vadd.f32 %v330, %v1034
    %1036 = vmatprep.mubr.bf16.mxu0 0
    %1037 = vmatmul.mubr.bf16.gmra.mxu0 %v672
    %v1038 = vpop.f32.mrf.mxu0
    %v1039 = vadd.f32 %v335, %v1038
    %v1040 = vpop.f32.mrf.mxu0
    %v1041 = vadd.f32 %v335, %v1040
    %v1042 = vpop.f32.mrf.mxu0
    %v1043 = vadd.f32 %v340, %v1042
    %v1044 = vpop.f32.mrf.mxu0
    %v1045 = vadd.f32 %v340, %v1044
    %1046 = vmatprep.mubr.bf16.mxu0 0
    %1047 = vmatmul.mubr.bf16.gmra.mxu0 %v673
    %v1048 = vpop.f32.mrf.mxu0
    %v1049 = vadd.f32 %v345, %v1048
    %v1050 = vpop.f32.mrf.mxu0
    %v1051 = vadd.f32 %v345, %v1050
    %v1052 = vpop.f32.mrf.mxu0
    %v1053 = vadd.f32 %v350, %v1052
    %v1054 = vpop.f32.mrf.mxu0
    %v1055 = vadd.f32 %v350, %v1054
    %1056 = vmatprep.mubr.bf16.mxu0 0
    %1057 = vmatmul.mubr.bf16.gmra.mxu0 %v674
    %v1058 = vpop.f32.mrf.mxu0
    %v1059 = vadd.f32 %v355, %v1058
    %v1060 = vpop.f32.mrf.mxu0
    %v1061 = vadd.f32 %v355, %v1060
    %v1062 = vpop.f32.mrf.mxu0
    %v1063 = vadd.f32 %v360, %v1062
    %v1064 = vpop.f32.mrf.mxu0
    %v1065 = vadd.f32 %v360, %v1064
    %1066 = vmatprep.mubr.bf16.mxu0 0
    %1067 = vmatmul.mubr.bf16.gmra.mxu0 %v675
    %v1068 = vpop.f32.mrf.mxu0
    %v1069 = vadd.f32 %v365, %v1068
    %v1070 = vpop.f32.mrf.mxu0
    %v1071 = vadd.f32 %v365, %v1070
    %v1072 = vpop.f32.mrf.mxu0
    %v1073 = vadd.f32 %v370, %v1072
    %v1074 = vpop.f32.mrf.mxu0
    %v1075 = vadd.f32 %v370, %v1074
    %1076 = vmatprep.mubr.bf16.mxu0 0
    %1077 = vmatmul.mubr.bf16.gmra.mxu0 %v676
    %v1078 = vpop.f32.mrf.mxu0
    %v1079 = vadd.f32 %v375, %v1078
    %v1080 = vpop.f32.mrf.mxu0
    %v1081 = vadd.f32 %v375, %v1080
    %v1082 = vpop.f32.mrf.mxu0
    %v1083 = vadd.f32 %v380, %v1082
    %v1084 = vpop.f32.mrf.mxu0
    %v1085 = vadd.f32 %v380, %v1084
    %1086 = vmatprep.mubr.bf16.mxu0 0
    %1087 = vmatmul.mubr.bf16.gmra.mxu0 %v677
    %v1088 = vpop.f32.mrf.mxu0
    %v1089 = vadd.f32 %v385, %v1088
    %v1090 = vpop.f32.mrf.mxu0
    %v1091 = vadd.f32 %v385, %v1090
    %v1092 = vpop.f32.mrf.mxu0
    %v1093 = vadd.f32 %v390, %v1092
    %v1094 = vpop.f32.mrf.mxu0
    %v1095 = vadd.f32 %v390, %v1094
    %1096 = vmatprep.mubr.bf16.mxu0 0
    %1097 = vmatmul.mubr.bf16.gmra.mxu0 %v678
    %v1098 = vpop.f32.mrf.mxu0
    %v1099 = vadd.f32 %v395, %v1098
    %v1100 = vpop.f32.mrf.mxu0
    %v1101 = vadd.f32 %v395, %v1100
    %v1102 = vpop.f32.mrf.mxu0
    %v1103 = vadd.f32 %v400, %v1102
    %v1104 = vpop.f32.mrf.mxu0
    %v1105 = vadd.f32 %v400, %v1104
    %1106 = vmatprep.mubr.bf16.mxu0 0
    %1107 = vmatmul.mubr.bf16.gmra.mxu0 %v679
    %v1108 = vpop.f32.mrf.mxu0
    %v1109 = vadd.f32 %v405, %v1108
    %v1110 = vpop.f32.mrf.mxu0
    %v1111 = vadd.f32 %v405, %v1110
    %v1112 = vpop.f32.mrf.mxu0
    %v1113 = vadd.f32 %v410, %v1112
    %v1114 = vpop.f32.mrf.mxu0
    %v1115 = vadd.f32 %v410, %v1114
    %1116 = vmatprep.mubr.bf16.mxu0 0
    %1117 = vmatmul.mubr.bf16.gmra.mxu0 %v680
    %v1118 = vpop.f32.mrf.mxu0
    %v1119 = vadd.f32 %v415, %v1118
    %v1120 = vpop.f32.mrf.mxu0
    %v1121 = vadd.f32 %v415, %v1120
    %v1122 = vpop.f32.mrf.mxu0
    %v1123 = vadd.f32 %v420, %v1122
    %v1124 = vpop.f32.mrf.mxu0
    %v1125 = vadd.f32 %v420, %v1124
    %1126 = vmatprep.mubr.bf16.mxu0 0
    %1127 = vmatmul.mubr.bf16.gmra.mxu0 %v681
    %v1128 = vpop.f32.mrf.mxu0
    %v1129 = vadd.f32 %v425, %v1128
    %v1130 = vpop.f32.mrf.mxu0
    %v1131 = vadd.f32 %v425, %v1130
    %v1132 = vpop.f32.mrf.mxu0
    %v1133 = vadd.f32 %v430, %v1132
    %v1134 = vpop.f32.mrf.mxu0
    %v1135 = vadd.f32 %v430, %v1134
    %1136 = vmatprep.mubr.bf16.mxu0 0
    %1137 = vmatmul.mubr.bf16.gmra.mxu0 %v682
    %v1138 = vpop.f32.mrf.mxu0
    %v1139 = vadd.f32 %v435, %v1138
    %v1140 = vpop.f32.mrf.mxu0
    %v1141 = vadd.f32 %v435, %v1140
    %v1142 = vpop.f32.mrf.mxu0
    %v1143 = vadd.f32 %v440, %v1142
    %v1144 = vpop.f32.mrf.mxu0
    %v1145 = vadd.f32 %v440, %v1144
    %1146 = vmatprep.mubr.bf16.mxu0 0
    %1147 = vmatmul.mubr.bf16.gmra.mxu0 %v683
    %v1148 = vpop.f32.mrf.mxu0
    %v1149 = vadd.f32 %v445, %v1148
    %v1150 = vpop.f32.mrf.mxu0
    %v1151 = vadd.f32 %v445, %v1150
    %v1152 = vpop.f32.mrf.mxu0
    %v1153 = vadd.f32 %v450, %v1152
    %v1154 = vpop.f32.mrf.mxu0
    %v1155 = vadd.f32 %v450, %v1154
    %1156 = vmatprep.mubr.bf16.mxu0 0
    %1157 = vmatmul.mubr.bf16.gmra.mxu0 %v684
    %v1158 = vpop.f32.mrf.mxu0
    %v1159 = vadd.f32 %v455, %v1158
    %v1160 = vpop.f32.mrf.mxu0
    %v1161 = vadd.f32 %v455, %v1160
    %v1162 = vpop.f32.mrf.mxu0
    %v1163 = vadd.f32 %v460, %v1162
    %v1164 = vpop.f32.mrf.mxu0
    %v1165 = vadd.f32 %v460, %v1164
    %1166 = vmatprep.mubr.bf16.mxu0 0
    %1167 = vmatmul.mubr.bf16.gmra.mxu0 %v685
    %v1168 = vpop.f32.mrf.mxu0
    %v1169 = vadd.f32 %v465, %v1168
    %v1170 = vpop.f32.mrf.mxu0
    %v1171 = vadd.f32 %v465, %v1170
    %v1172 = vpop.f32.mrf.mxu0
    %v1173 = vadd.f32 %v470, %v1172
    %v1174 = vpop.f32.mrf.mxu0
    %v1175 = vadd.f32 %v470, %v1174
    %1176 = vmatprep.mubr.bf16.mxu0 0
    %1177 = vmatmul.mubr.bf16.gmra.mxu0 %v686
    %v1178 = vpop.f32.mrf.mxu0
    %v1179 = vadd.f32 %v475, %v1178
    %v1180 = vpop.f32.mrf.mxu0
    %v1181 = vadd.f32 %v475, %v1180
    %v1182 = vpop.f32.mrf.mxu0
    %v1183 = vadd.f32 %v480, %v1182
    %v1184 = vpop.f32.mrf.mxu0
    %v1185 = vadd.f32 %v480, %v1184
    %1186 = vmatprep.mubr.bf16.mxu0 0
    %1187 = vmatmul.mubr.bf16.gmra.mxu0 %v687
    %v1188 = vpop.f32.mrf.mxu0
    %v1189 = vadd.f32 %v485, %v1188
    %v1190 = vpop.f32.mrf.mxu0
    %v1191 = vadd.f32 %v485, %v1190
    %v1192 = vpop.f32.mrf.mxu0
    %v1193 = vadd.f32 %v490, %v1192
    %v1194 = vpop.f32.mrf.mxu0
    %v1195 = vadd.f32 %v490, %v1194
    %1196 = vmatprep.mubr.bf16.mxu0 0
    %1197 = vmatmul.mubr.bf16.gmra.mxu0 %v688
    %v1198 = vpop.f32.mrf.mxu0
    %v1199 = vadd.f32 %v495, %v1198
    %v1200 = vpop.f32.mrf.mxu0
    %v1201 = vadd.f32 %v495, %v1200
    %v1202 = vpop.f32.mrf.mxu0
    %v1203 = vadd.f32 %v500, %v1202
    %v1204 = vpop.f32.mrf.mxu0
    %v1205 = vadd.f32 %v500, %v1204
    %1206 = vmatprep.mubr.bf16.mxu0 0
    %1207 = vmatmul.mubr.bf16.gmra.mxu0 %v689
    %v1208 = vpop.f32.mrf.mxu0
    %v1209 = vadd.f32 %v505, %v1208
    %v1210 = vpop.f32.mrf.mxu0
    %v1211 = vadd.f32 %v505, %v1210
    %v1212 = vpop.f32.mrf.mxu0
    %v1213 = vadd.f32 %v510, %v1212
    %v1214 = vpop.f32.mrf.mxu0
    %v1215 = vadd.f32 %v510, %v1214
    %1216 = vmatprep.mubr.bf16.mxu0 0
    %1217 = vmatmul.mubr.bf16.gmra.mxu0 %v690
    %v1218 = vpop.f32.mrf.mxu0
    %v1219 = vadd.f32 %v515, %v1218
    %v1220 = vpop.f32.mrf.mxu0
    %v1221 = vadd.f32 %v515, %v1220
    %v1222 = vpop.f32.mrf.mxu0
    %v1223 = vadd.f32 %v520, %v1222
    %v1224 = vpop.f32.mrf.mxu0
    %v1225 = vadd.f32 %v520, %v1224
    %1226 = vmatprep.mubr.bf16.mxu0 0
    %1227 = vmatmul.mubr.bf16.gmra.mxu0 %v691
    %v1228 = vpop.f32.mrf.mxu0
    %v1229 = vadd.f32 %v525, %v1228
    %v1230 = vpop.f32.mrf.mxu0
    %v1231 = vadd.f32 %v525, %v1230
    %v1232 = vpop.f32.mrf.mxu0
    %v1233 = vadd.f32 %v530, %v1232
    %v1234 = vpop.f32.mrf.mxu0
    %v1235 = vadd.f32 %v530, %v1234
    %1236 = vdwg.mxu0
    %1237 = vmatprep.subr.bf16.mxu0 %v851
    %1238 = vmatpush1.bf16.msra.mxu0 %v850
    %1239 = vmatprep.subr.bf16.mxu0 %v847
    %1240 = vmatpush1.bf16.msra.mxu0 %v846
    %1241 = vmatprep.subr.bf16.mxu0 %v843
    %1242 = vmatpush1.bf16.msra.mxu0 %v842
    %1243 = vmatprep.subr.bf16.mxu0 %v839
    %1244 = vmatpush1.bf16.msra.mxu0 %v838
    %1245 = vmatprep.subr.bf16.mxu0 %v835
    %1246 = vmatpush1.bf16.msra.mxu0 %v834
    %1247 = vmatprep.subr.bf16.mxu0 %v831
    %1248 = vmatpush1.bf16.msra.mxu0 %v830
    %1249 = vmatprep.subr.bf16.mxu0 %v827
    %1250 = vmatpush1.bf16.msra.mxu0 %v826
    %1251 = vmatprep.subr.bf16.mxu0 %v823
    %1252 = vmatpush1.bf16.msra.mxu0 %v822
    %1253 = vmatprep.subr.bf16.mxu0 0
    %1254 = vmatpush2.bf16.msra.mxu0 0
    %1255 = vmatprep.subr.bf16.mxu0 0
    %1256 = vmatpush2.bf16.msra.mxu0 0
    %1257 = vmatprep.subr.bf16.mxu0 0
    %1258 = vmatpush2.bf16.msra.mxu0 0
    %1259 = vmatprep.subr.bf16.mxu0 0
    %1260 = vmatpush2.bf16.msra.mxu0 0
    %1261 = vmatprep.subr.bf16.mxu0 0
    %1262 = vmatpush2.bf16.msra.mxu0 0
    %1263 = vmatprep.subr.bf16.mxu0 0
    %1264 = vmatpush2.bf16.msra.mxu0 0
    %1265 = vmatprep.subr.bf16.mxu0 0
    %1266 = vmatpush2.bf16.msra.mxu0 0
    %1267 = vmatprep.subr.bf16.mxu0 0
    %1268 = vmatpush2.bf16.msra.mxu0 0
    %1269 = vmatprep.mubr.bf16.mxu0 0
    %1270 = vmatmul.mubr.bf16.gmra.mxu0 %v660
    %v1271 = vpop.f32.mrf.mxu0
    %v1272 = vadd.f32 %v215, %v1271
    %v1273 = vpop.f32.mrf.mxu0
    %v1274 = vadd.f32 %v215, %v1273
    %v1275 = vpop.f32.mrf.mxu0
    %v1276 = vadd.f32 %v220, %v1275
    %v1277 = vpop.f32.mrf.mxu0
    %v1278 = vadd.f32 %v220, %v1277
    %1279 = vmatprep.mubr.bf16.mxu0 0
    %1280 = vmatmul.mubr.bf16.gmra.mxu0 %v661
    %v1281 = vpop.f32.mrf.mxu0
    %v1282 = vadd.f32 %v225, %v1281
    %v1283 = vpop.f32.mrf.mxu0
    %v1284 = vadd.f32 %v225, %v1283
    %v1285 = vpop.f32.mrf.mxu0
    %v1286 = vadd.f32 %v230, %v1285
    %v1287 = vpop.f32.mrf.mxu0
    %v1288 = vadd.f32 %v230, %v1287
    %1289 = vmatprep.mubr.bf16.mxu0 0
    %1290 = vmatmul.mubr.bf16.gmra.mxu0 %v662
    %v1291 = vpop.f32.mrf.mxu0
    %v1292 = vadd.f32 %v235, %v1291
    %v1293 = vpop.f32.mrf.mxu0
    %v1294 = vadd.f32 %v235, %v1293
    %v1295 = vpop.f32.mrf.mxu0
    %v1296 = vadd.f32 %v240, %v1295
    %v1297 = vpop.f32.mrf.mxu0
    %v1298 = vadd.f32 %v240, %v1297
    %1299 = vmatprep.mubr.bf16.mxu0 0
    %1300 = vmatmul.mubr.bf16.gmra.mxu0 %v663
    %v1301 = vpop.f32.mrf.mxu0
    %v1302 = vadd.f32 %v245, %v1301
    %v1303 = vpop.f32.mrf.mxu0
    %v1304 = vadd.f32 %v245, %v1303
    %v1305 = vpop.f32.mrf.mxu0
    %v1306 = vadd.f32 %v250, %v1305
    %v1307 = vpop.f32.mrf.mxu0
    %v1308 = vadd.f32 %v250, %v1307
    %1309 = vmatprep.mubr.bf16.mxu0 0
    %1310 = vmatmul.mubr.bf16.gmra.mxu0 %v664
    %v1311 = vpop.f32.mrf.mxu0
    %v1312 = vadd.f32 %v255, %v1311
    %v1313 = vpop.f32.mrf.mxu0
    %v1314 = vadd.f32 %v255, %v1313
    %v1315 = vpop.f32.mrf.mxu0
    %v1316 = vadd.f32 %v260, %v1315
    %v1317 = vpop.f32.mrf.mxu0
    %v1318 = vadd.f32 %v260, %v1317
    %1319 = vmatprep.mubr.bf16.mxu0 0
    %1320 = vmatmul.mubr.bf16.gmra.mxu0 %v665
    %v1321 = vpop.f32.mrf.mxu0
    %v1322 = vadd.f32 %v265, %v1321
    %v1323 = vpop.f32.mrf.mxu0
    %v1324 = vadd.f32 %v265, %v1323
    %v1325 = vpop.f32.mrf.mxu0
    %v1326 = vadd.f32 %v270, %v1325
    %v1327 = vpop.f32.mrf.mxu0
    %v1328 = vadd.f32 %v270, %v1327
    %1329 = vmatprep.mubr.bf16.mxu0 0
    %1330 = vmatmul.mubr.bf16.gmra.mxu0 %v666
    %v1331 = vpop.f32.mrf.mxu0
    %v1332 = vadd.f32 %v275, %v1331
    %v1333 = vpop.f32.mrf.mxu0
    %v1334 = vadd.f32 %v275, %v1333
    %v1335 = vpop.f32.mrf.mxu0
    %v1336 = vadd.f32 %v280, %v1335
    %v1337 = vpop.f32.mrf.mxu0
    %v1338 = vadd.f32 %v280, %v1337
    %1339 = vmatprep.mubr.bf16.mxu0 0
    %1340 = vmatmul.mubr.bf16.gmra.mxu0 %v667
    %v1341 = vpop.f32.mrf.mxu0
    %v1342 = vadd.f32 %v285, %v1341
    %v1343 = vpop.f32.mrf.mxu0
    %v1344 = vadd.f32 %v285, %v1343
    %v1345 = vpop.f32.mrf.mxu0
    %v1346 = vadd.f32 %v290, %v1345
    %v1347 = vpop.f32.mrf.mxu0
    %v1348 = vadd.f32 %v290, %v1347
    %1349 = vmatprep.mubr.bf16.mxu0 0
    %1350 = vmatmul.mubr.bf16.gmra.mxu0 %v668
    %v1351 = vpop.f32.mrf.mxu0
    %v1352 = vadd.f32 %v295, %v1351
    %v1353 = vpop.f32.mrf.mxu0
    %v1354 = vadd.f32 %v295, %v1353
    %v1355 = vpop.f32.mrf.mxu0
    %v1356 = vadd.f32 %v300, %v1355
    %v1357 = vpop.f32.mrf.mxu0
    %v1358 = vadd.f32 %v300, %v1357
    %1359 = vmatprep.mubr.bf16.mxu0 0
    %1360 = vmatmul.mubr.bf16.gmra.mxu0 %v669
    %v1361 = vpop.f32.mrf.mxu0
    %v1362 = vadd.f32 %v305, %v1361
    %v1363 = vpop.f32.mrf.mxu0
    %v1364 = vadd.f32 %v305, %v1363
    %v1365 = vpop.f32.mrf.mxu0
    %v1366 = vadd.f32 %v310, %v1365
    %v1367 = vpop.f32.mrf.mxu0
    %v1368 = vadd.f32 %v310, %v1367
    %1369 = vmatprep.mubr.bf16.mxu0 0
    %1370 = vmatmul.mubr.bf16.gmra.mxu0 %v670
    %v1371 = vpop.f32.mrf.mxu0
    %v1372 = vadd.f32 %v315, %v1371
    %v1373 = vpop.f32.mrf.mxu0
    %v1374 = vadd.f32 %v315, %v1373
    %v1375 = vpop.f32.mrf.mxu0
    %v1376 = vadd.f32 %v320, %v1375
    %v1377 = vpop.f32.mrf.mxu0
    %v1378 = vadd.f32 %v320, %v1377
    %1379 = vmatprep.mubr.bf16.mxu0 0
    %1380 = vmatmul.mubr.bf16.gmra.mxu0 %v671
    %v1381 = vpop.f32.mrf.mxu0
    %v1382 = vadd.f32 %v325, %v1381
    %v1383 = vpop.f32.mrf.mxu0
    %v1384 = vadd.f32 %v325, %v1383
    %v1385 = vpop.f32.mrf.mxu0
    %v1386 = vadd.f32 %v330, %v1385
    %v1387 = vpop.f32.mrf.mxu0
    %v1388 = vadd.f32 %v330, %v1387
    %1389 = vmatprep.mubr.bf16.mxu0 0
    %1390 = vmatmul.mubr.bf16.gmra.mxu0 %v672
    %v1391 = vpop.f32.mrf.mxu0
    %v1392 = vadd.f32 %v335, %v1391
    %v1393 = vpop.f32.mrf.mxu0
    %v1394 = vadd.f32 %v335, %v1393
    %v1395 = vpop.f32.mrf.mxu0
    %v1396 = vadd.f32 %v340, %v1395
    %v1397 = vpop.f32.mrf.mxu0
    %v1398 = vadd.f32 %v340, %v1397
    %1399 = vmatprep.mubr.bf16.mxu0 0
    %1400 = vmatmul.mubr.bf16.gmra.mxu0 %v673
    %v1401 = vpop.f32.mrf.mxu0
    %v1402 = vadd.f32 %v345, %v1401
    %v1403 = vpop.f32.mrf.mxu0
    %v1404 = vadd.f32 %v345, %v1403
    %v1405 = vpop.f32.mrf.mxu0
    %v1406 = vadd.f32 %v350, %v1405
    %v1407 = vpop.f32.mrf.mxu0
    %v1408 = vadd.f32 %v350, %v1407
    %1409 = vmatprep.mubr.bf16.mxu0 0
    %1410 = vmatmul.mubr.bf16.gmra.mxu0 %v674
    %v1411 = vpop.f32.mrf.mxu0
    %v1412 = vadd.f32 %v355, %v1411
    %v1413 = vpop.f32.mrf.mxu0
    %v1414 = vadd.f32 %v355, %v1413
    %v1415 = vpop.f32.mrf.mxu0
    %v1416 = vadd.f32 %v360, %v1415
    %v1417 = vpop.f32.mrf.mxu0
    %v1418 = vadd.f32 %v360, %v1417
    %1419 = vmatprep.mubr.bf16.mxu0 0
    %1420 = vmatmul.mubr.bf16.gmra.mxu0 %v675
    %v1421 = vpop.f32.mrf.mxu0
    %v1422 = vadd.f32 %v365, %v1421
    %v1423 = vpop.f32.mrf.mxu0
    %v1424 = vadd.f32 %v365, %v1423
    %v1425 = vpop.f32.mrf.mxu0
    %v1426 = vadd.f32 %v370, %v1425
    %v1427 = vpop.f32.mrf.mxu0
    %v1428 = vadd.f32 %v370, %v1427
    %1429 = vmatprep.mubr.bf16.mxu0 0
    %1430 = vmatmul.mubr.bf16.gmra.mxu0 %v676
    %v1431 = vpop.f32.mrf.mxu0
    %v1432 = vadd.f32 %v375, %v1431
    %v1433 = vpop.f32.mrf.mxu0
    %v1434 = vadd.f32 %v375, %v1433
    %v1435 = vpop.f32.mrf.mxu0
    %v1436 = vadd.f32 %v380, %v1435
    %v1437 = vpop.f32.mrf.mxu0
    %v1438 = vadd.f32 %v380, %v1437
    %1439 = vmatprep.mubr.bf16.mxu0 0
    %1440 = vmatmul.mubr.bf16.gmra.mxu0 %v677
    %v1441 = vpop.f32.mrf.mxu0
    %v1442 = vadd.f32 %v385, %v1441
    %v1443 = vpop.f32.mrf.mxu0
    %v1444 = vadd.f32 %v385, %v1443
    %v1445 = vpop.f32.mrf.mxu0
    %v1446 = vadd.f32 %v390, %v1445
    %v1447 = vpop.f32.mrf.mxu0
    %v1448 = vadd.f32 %v390, %v1447
    %1449 = vmatprep.mubr.bf16.mxu0 0
    %1450 = vmatmul.mubr.bf16.gmra.mxu0 %v678
    %v1451 = vpop.f32.mrf.mxu0
    %v1452 = vadd.f32 %v395, %v1451
    %v1453 = vpop.f32.mrf.mxu0
    %v1454 = vadd.f32 %v395, %v1453
    %v1455 = vpop.f32.mrf.mxu0
    %v1456 = vadd.f32 %v400, %v1455
    %v1457 = vpop.f32.mrf.mxu0
    %v1458 = vadd.f32 %v400, %v1457
    %1459 = vmatprep.mubr.bf16.mxu0 0
    %1460 = vmatmul.mubr.bf16.gmra.mxu0 %v679
    %v1461 = vpop.f32.mrf.mxu0
    %v1462 = vadd.f32 %v405, %v1461
    %v1463 = vpop.f32.mrf.mxu0
    %v1464 = vadd.f32 %v405, %v1463
    %v1465 = vpop.f32.mrf.mxu0
    %v1466 = vadd.f32 %v410, %v1465
    %v1467 = vpop.f32.mrf.mxu0
    %v1468 = vadd.f32 %v410, %v1467
    %1469 = vmatprep.mubr.bf16.mxu0 0
    %1470 = vmatmul.mubr.bf16.gmra.mxu0 %v680
    %v1471 = vpop.f32.mrf.mxu0
    %v1472 = vadd.f32 %v415, %v1471
    %v1473 = vpop.f32.mrf.mxu0
    %v1474 = vadd.f32 %v415, %v1473
    %v1475 = vpop.f32.mrf.mxu0
    %v1476 = vadd.f32 %v420, %v1475
    %v1477 = vpop.f32.mrf.mxu0
    %v1478 = vadd.f32 %v420, %v1477
    %1479 = vmatprep.mubr.bf16.mxu0 0
    %1480 = vmatmul.mubr.bf16.gmra.mxu0 %v681
    %v1481 = vpop.f32.mrf.mxu0
    %v1482 = vadd.f32 %v425, %v1481
    %v1483 = vpop.f32.mrf.mxu0
    %v1484 = vadd.f32 %v425, %v1483
    %v1485 = vpop.f32.mrf.mxu0
    %v1486 = vadd.f32 %v430, %v1485
    %v1487 = vpop.f32.mrf.mxu0
    %v1488 = vadd.f32 %v430, %v1487
    %1489 = vmatprep.mubr.bf16.mxu0 0
    %1490 = vmatmul.mubr.bf16.gmra.mxu0 %v682
    %v1491 = vpop.f32.mrf.mxu0
    %v1492 = vadd.f32 %v435, %v1491
    %v1493 = vpop.f32.mrf.mxu0
    %v1494 = vadd.f32 %v435, %v1493
    %v1495 = vpop.f32.mrf.mxu0
    %v1496 = vadd.f32 %v440, %v1495
    %v1497 = vpop.f32.mrf.mxu0
    %v1498 = vadd.f32 %v440, %v1497
    %1499 = vmatprep.mubr.bf16.mxu0 0
    %1500 = vmatmul.mubr.bf16.gmra.mxu0 %v683
    %v1501 = vpop.f32.mrf.mxu0
    %v1502 = vadd.f32 %v445, %v1501
    %v1503 = vpop.f32.mrf.mxu0
    %v1504 = vadd.f32 %v445, %v1503
    %v1505 = vpop.f32.mrf.mxu0
    %v1506 = vadd.f32 %v450, %v1505
    %v1507 = vpop.f32.mrf.mxu0
    %v1508 = vadd.f32 %v450, %v1507
    %1509 = vmatprep.mubr.bf16.mxu0 0
    %1510 = vmatmul.mubr.bf16.gmra.mxu0 %v684
    %v1511 = vpop.f32.mrf.mxu0
    %v1512 = vadd.f32 %v455, %v1511
    %v1513 = vpop.f32.mrf.mxu0
    %v1514 = vadd.f32 %v455, %v1513
    %v1515 = vpop.f32.mrf.mxu0
    %v1516 = vadd.f32 %v460, %v1515
    %v1517 = vpop.f32.mrf.mxu0
    %v1518 = vadd.f32 %v460, %v1517
    %1519 = vmatprep.mubr.bf16.mxu0 0
    %1520 = vmatmul.mubr.bf16.gmra.mxu0 %v685
    %v1521 = vpop.f32.mrf.mxu0
    %v1522 = vadd.f32 %v465, %v1521
    %v1523 = vpop.f32.mrf.mxu0
    %v1524 = vadd.f32 %v465, %v1523
    %v1525 = vpop.f32.mrf.mxu0
    %v1526 = vadd.f32 %v470, %v1525
    %v1527 = vpop.f32.mrf.mxu0
    %v1528 = vadd.f32 %v470, %v1527
    %1529 = vmatprep.mubr.bf16.mxu0 0
    %1530 = vmatmul.mubr.bf16.gmra.mxu0 %v686
    %v1531 = vpop.f32.mrf.mxu0
    %v1532 = vadd.f32 %v475, %v1531
    %v1533 = vpop.f32.mrf.mxu0
    %v1534 = vadd.f32 %v475, %v1533
    %v1535 = vpop.f32.mrf.mxu0
    %v1536 = vadd.f32 %v480, %v1535
    %v1537 = vpop.f32.mrf.mxu0
    %v1538 = vadd.f32 %v480, %v1537
    %1539 = vmatprep.mubr.bf16.mxu0 0
    %1540 = vmatmul.mubr.bf16.gmra.mxu0 %v687
    %v1541 = vpop.f32.mrf.mxu0
    %v1542 = vadd.f32 %v485, %v1541
    %v1543 = vpop.f32.mrf.mxu0
    %v1544 = vadd.f32 %v485, %v1543
    %v1545 = vpop.f32.mrf.mxu0
    %v1546 = vadd.f32 %v490, %v1545
    %v1547 = vpop.f32.mrf.mxu0
    %v1548 = vadd.f32 %v490, %v1547
    %1549 = vmatprep.mubr.bf16.mxu0 0
    %1550 = vmatmul.mubr.bf16.gmra.mxu0 %v688
    %v1551 = vpop.f32.mrf.mxu0
    %v1552 = vadd.f32 %v495, %v1551
    %v1553 = vpop.f32.mrf.mxu0
    %v1554 = vadd.f32 %v495, %v1553
    %v1555 = vpop.f32.mrf.mxu0
    %v1556 = vadd.f32 %v500, %v1555
    %v1557 = vpop.f32.mrf.mxu0
    %v1558 = vadd.f32 %v500, %v1557
    %1559 = vmatprep.mubr.bf16.mxu0 0
    %1560 = vmatmul.mubr.bf16.gmra.mxu0 %v689
    %v1561 = vpop.f32.mrf.mxu0
    %v1562 = vadd.f32 %v505, %v1561
    %v1563 = vpop.f32.mrf.mxu0
    %v1564 = vadd.f32 %v505, %v1563
    %v1565 = vpop.f32.mrf.mxu0
    %v1566 = vadd.f32 %v510, %v1565
    %v1567 = vpop.f32.mrf.mxu0
    %v1568 = vadd.f32 %v510, %v1567
    %1569 = vmatprep.mubr.bf16.mxu0 0
    %1570 = vmatmul.mubr.bf16.gmra.mxu0 %v690
    %v1571 = vpop.f32.mrf.mxu0
    %v1572 = vadd.f32 %v515, %v1571
    %v1573 = vpop.f32.mrf.mxu0
    %v1574 = vadd.f32 %v515, %v1573
    %v1575 = vpop.f32.mrf.mxu0
    %v1576 = vadd.f32 %v520, %v1575
    %v1577 = vpop.f32.mrf.mxu0
    %v1578 = vadd.f32 %v520, %v1577
    %1579 = vmatprep.mubr.bf16.mxu0 0
    %1580 = vmatmul.mubr.bf16.gmra.mxu0 %v691
    %v1581 = vpop.f32.mrf.mxu0
    %v1582 = vadd.f32 %v525, %v1581
    %v1583 = vpop.f32.mrf.mxu0
    %v1584 = vadd.f32 %v525, %v1583
    %v1585 = vpop.f32.mrf.mxu0
    %v1586 = vadd.f32 %v530, %v1585
    %v1587 = vpop.f32.mrf.mxu0
    %v1588 = vadd.f32 %v530, %v1587
    %1589 = vdwg.mxu0
    %v1590 = vmax.f32 %v919, 0.0
    %v1591 = vmax.f32 %v921, 0.0
    %v1592 = vmax.f32 %v1272, 0.0
    %v1593 = vmax.f32 %v1274, 0.0
    %v1594 = vmax.f32 %v923, 0.0
    %v1595 = vmax.f32 %v925, 0.0
    %v1596 = vmax.f32 %v1276, 0.0
    %v1597 = vmax.f32 %v1278, 0.0
    %v1598 = vmax.f32 %v929, 0.0
    %v1599 = vmax.f32 %v931, 0.0
    %v1600 = vmax.f32 %v1282, 0.0
    %v1601 = vmax.f32 %v1284, 0.0
    %v1602 = vmax.f32 %v933, 0.0
    %v1603 = vmax.f32 %v935, 0.0
    %v1604 = vmax.f32 %v1286, 0.0
    %v1605 = vmax.f32 %v1288, 0.0
    %v1606 = vmax.f32 %v939, 0.0
    %v1607 = vmax.f32 %v941, 0.0
    %v1608 = vmax.f32 %v1292, 0.0
    %v1609 = vmax.f32 %v1294, 0.0
    %v1610 = vmax.f32 %v943, 0.0
    %v1611 = vmax.f32 %v945, 0.0
    %v1612 = vmax.f32 %v1296, 0.0
    %v1613 = vmax.f32 %v1298, 0.0
    %v1614 = vmax.f32 %v949, 0.0
    %v1615 = vmax.f32 %v951, 0.0
    %v1616 = vmax.f32 %v1302, 0.0
    %v1617 = vmax.f32 %v1304, 0.0
    %v1618 = vmax.f32 %v953, 0.0
    %v1619 = vmax.f32 %v955, 0.0
    %v1620 = vmax.f32 %v1306, 0.0
    %v1621 = vmax.f32 %v1308, 0.0
    %v1622 = vmax.f32 %v959, 0.0
    %v1623 = vmax.f32 %v961, 0.0
    %v1624 = vmax.f32 %v1312, 0.0
    %v1625 = vmax.f32 %v1314, 0.0
    %v1626 = vmax.f32 %v963, 0.0
    %v1627 = vmax.f32 %v965, 0.0
    %v1628 = vmax.f32 %v1316, 0.0
    %v1629 = vmax.f32 %v1318, 0.0
    %v1630 = vmax.f32 %v969, 0.0
    %v1631 = vmax.f32 %v971, 0.0
    %v1632 = vmax.f32 %v1322, 0.0
    %v1633 = vmax.f32 %v1324, 0.0
    %v1634 = vmax.f32 %v973, 0.0
    %v1635 = vmax.f32 %v975, 0.0
    %v1636 = vmax.f32 %v1326, 0.0
    %v1637 = vmax.f32 %v1328, 0.0
    %v1638 = vmax.f32 %v979, 0.0
    %v1639 = vmax.f32 %v981, 0.0
    %v1640 = vmax.f32 %v1332, 0.0
    %v1641 = vmax.f32 %v1334, 0.0
    %v1642 = vmax.f32 %v983, 0.0
    %v1643 = vmax.f32 %v985, 0.0
    %v1644 = vmax.f32 %v1336, 0.0
    %v1645 = vmax.f32 %v1338, 0.0
    %v1646 = vmax.f32 %v989, 0.0
    %v1647 = vmax.f32 %v991, 0.0
    %v1648 = vmax.f32 %v1342, 0.0
    %v1649 = vmax.f32 %v1344, 0.0
    %v1650 = vmax.f32 %v993, 0.0
    %v1651 = vmax.f32 %v995, 0.0
    %v1652 = vmax.f32 %v1346, 0.0
    %v1653 = vmax.f32 %v1348, 0.0
    %v1654 = vmax.f32 %v999, 0.0
    %v1655 = vmax.f32 %v1001, 0.0
    %v1656 = vmax.f32 %v1352, 0.0
    %v1657 = vmax.f32 %v1354, 0.0
    %v1658 = vmax.f32 %v1003, 0.0
    %v1659 = vmax.f32 %v1005, 0.0
    %v1660 = vmax.f32 %v1356, 0.0
    %v1661 = vmax.f32 %v1358, 0.0
    %v1662 = vmax.f32 %v1009, 0.0
    %v1663 = vmax.f32 %v1011, 0.0
    %v1664 = vmax.f32 %v1362, 0.0
    %v1665 = vmax.f32 %v1364, 0.0
    %v1666 = vmax.f32 %v1013, 0.0
    %v1667 = vmax.f32 %v1015, 0.0
    %v1668 = vmax.f32 %v1366, 0.0
    %v1669 = vmax.f32 %v1368, 0.0
    %v1670 = vmax.f32 %v1019, 0.0
    %v1671 = vmax.f32 %v1021, 0.0
    %v1672 = vmax.f32 %v1372, 0.0
    %v1673 = vmax.f32 %v1374, 0.0
    %v1674 = vmax.f32 %v1023, 0.0
    %v1675 = vmax.f32 %v1025, 0.0
    %v1676 = vmax.f32 %v1376, 0.0
    %v1677 = vmax.f32 %v1378, 0.0
    %v1678 = vmax.f32 %v1029, 0.0
    %v1679 = vmax.f32 %v1031, 0.0
    %v1680 = vmax.f32 %v1382, 0.0
    %v1681 = vmax.f32 %v1384, 0.0
    %v1682 = vmax.f32 %v1033, 0.0
    %v1683 = vmax.f32 %v1035, 0.0
    %v1684 = vmax.f32 %v1386, 0.0
    %v1685 = vmax.f32 %v1388, 0.0
    %v1686 = vmax.f32 %v1039, 0.0
    %v1687 = vmax.f32 %v1041, 0.0
    %v1688 = vmax.f32 %v1392, 0.0
    %v1689 = vmax.f32 %v1394, 0.0
    %v1690 = vmax.f32 %v1043, 0.0
    %v1691 = vmax.f32 %v1045, 0.0
    %v1692 = vmax.f32 %v1396, 0.0
    %v1693 = vmax.f32 %v1398, 0.0
    %v1694 = vmax.f32 %v1049, 0.0
    %v1695 = vmax.f32 %v1051, 0.0
    %v1696 = vmax.f32 %v1402, 0.0
    %v1697 = vmax.f32 %v1404, 0.0
    %v1698 = vmax.f32 %v1053, 0.0
    %v1699 = vmax.f32 %v1055, 0.0
    %v1700 = vmax.f32 %v1406, 0.0
    %v1701 = vmax.f32 %v1408, 0.0
    %v1702 = vmax.f32 %v1059, 0.0
    %v1703 = vmax.f32 %v1061, 0.0
    %v1704 = vmax.f32 %v1412, 0.0
    %v1705 = vmax.f32 %v1414, 0.0
    %v1706 = vmax.f32 %v1063, 0.0
    %v1707 = vmax.f32 %v1065, 0.0
    %v1708 = vmax.f32 %v1416, 0.0
    %v1709 = vmax.f32 %v1418, 0.0
    %v1710 = vmax.f32 %v1069, 0.0
    %v1711 = vmax.f32 %v1071, 0.0
    %v1712 = vmax.f32 %v1422, 0.0
    %v1713 = vmax.f32 %v1424, 0.0
    %v1714 = vmax.f32 %v1073, 0.0
    %v1715 = vmax.f32 %v1075, 0.0
    %v1716 = vmax.f32 %v1426, 0.0
    %v1717 = vmax.f32 %v1428, 0.0
    %v1718 = vmax.f32 %v1079, 0.0
    %v1719 = vmax.f32 %v1081, 0.0
    %v1720 = vmax.f32 %v1432, 0.0
    %v1721 = vmax.f32 %v1434, 0.0
    %v1722 = vmax.f32 %v1083, 0.0
    %v1723 = vmax.f32 %v1085, 0.0
    %v1724 = vmax.f32 %v1436, 0.0
    %v1725 = vmax.f32 %v1438, 0.0
    %v1726 = vmax.f32 %v1089, 0.0
    %v1727 = vmax.f32 %v1091, 0.0
    %v1728 = vmax.f32 %v1442, 0.0
    %v1729 = vmax.f32 %v1444, 0.0
    %v1730 = vmax.f32 %v1093, 0.0
    %v1731 = vmax.f32 %v1095, 0.0
    %v1732 = vmax.f32 %v1446, 0.0
    %v1733 = vmax.f32 %v1448, 0.0
    %v1734 = vmax.f32 %v1099, 0.0
    %v1735 = vmax.f32 %v1101, 0.0
    %v1736 = vmax.f32 %v1452, 0.0
    %v1737 = vmax.f32 %v1454, 0.0
    %v1738 = vmax.f32 %v1103, 0.0
    %v1739 = vmax.f32 %v1105, 0.0
    %v1740 = vmax.f32 %v1456, 0.0
    %v1741 = vmax.f32 %v1458, 0.0
    %v1742 = vmax.f32 %v1109, 0.0
    %v1743 = vmax.f32 %v1111, 0.0
    %v1744 = vmax.f32 %v1462, 0.0
    %v1745 = vmax.f32 %v1464, 0.0
    %v1746 = vmax.f32 %v1113, 0.0
    %v1747 = vmax.f32 %v1115, 0.0
    %v1748 = vmax.f32 %v1466, 0.0
    %v1749 = vmax.f32 %v1468, 0.0
    %v1750 = vmax.f32 %v1119, 0.0
    %v1751 = vmax.f32 %v1121, 0.0
    %v1752 = vmax.f32 %v1472, 0.0
    %v1753 = vmax.f32 %v1474, 0.0
    %v1754 = vmax.f32 %v1123, 0.0
    %v1755 = vmax.f32 %v1125, 0.0
    %v1756 = vmax.f32 %v1476, 0.0
    %v1757 = vmax.f32 %v1478, 0.0
    %v1758 = vmax.f32 %v1129, 0.0
    %v1759 = vmax.f32 %v1131, 0.0
    %v1760 = vmax.f32 %v1482, 0.0
    %v1761 = vmax.f32 %v1484, 0.0
    %v1762 = vmax.f32 %v1133, 0.0
    %v1763 = vmax.f32 %v1135, 0.0
    %v1764 = vmax.f32 %v1486, 0.0
    %v1765 = vmax.f32 %v1488, 0.0
    %v1766 = vmax.f32 %v1139, 0.0
    %v1767 = vmax.f32 %v1141, 0.0
    %v1768 = vmax.f32 %v1492, 0.0
    %v1769 = vmax.f32 %v1494, 0.0
    %v1770 = vmax.f32 %v1143, 0.0
    %v1771 = vmax.f32 %v1145, 0.0
    %v1772 = vmax.f32 %v1496, 0.0
    %v1773 = vmax.f32 %v1498, 0.0
    %v1774 = vmax.f32 %v1149, 0.0
    %v1775 = vmax.f32 %v1151, 0.0
    %v1776 = vmax.f32 %v1502, 0.0
    %v1777 = vmax.f32 %v1504, 0.0
    %v1778 = vmax.f32 %v1153, 0.0
    %v1779 = vmax.f32 %v1155, 0.0
    %v1780 = vmax.f32 %v1506, 0.0
    %v1781 = vmax.f32 %v1508, 0.0
    %v1782 = vmax.f32 %v1159, 0.0
    %v1783 = vmax.f32 %v1161, 0.0
    %v1784 = vmax.f32 %v1512, 0.0
    %v1785 = vmax.f32 %v1514, 0.0
    %v1786 = vmax.f32 %v1163, 0.0
    %v1787 = vmax.f32 %v1165, 0.0
    %v1788 = vmax.f32 %v1516, 0.0
    %v1789 = vmax.f32 %v1518, 0.0
    %v1790 = vmax.f32 %v1169, 0.0
    %v1791 = vmax.f32 %v1171, 0.0
    %v1792 = vmax.f32 %v1522, 0.0
    %v1793 = vmax.f32 %v1524, 0.0
    %v1794 = vmax.f32 %v1173, 0.0
    %v1795 = vmax.f32 %v1175, 0.0
    %v1796 = vmax.f32 %v1526, 0.0
    %v1797 = vmax.f32 %v1528, 0.0
    %v1798 = vmax.f32 %v1179, 0.0
    %v1799 = vmax.f32 %v1181, 0.0
    %v1800 = vmax.f32 %v1532, 0.0
    %v1801 = vmax.f32 %v1534, 0.0
    %v1802 = vmax.f32 %v1183, 0.0
    %v1803 = vmax.f32 %v1185, 0.0
    %v1804 = vmax.f32 %v1536, 0.0
    %v1805 = vmax.f32 %v1538, 0.0
    %v1806 = vmax.f32 %v1189, 0.0
    %v1807 = vmax.f32 %v1191, 0.0
    %v1808 = vmax.f32 %v1542, 0.0
    %v1809 = vmax.f32 %v1544, 0.0
    %v1810 = vmax.f32 %v1193, 0.0
    %v1811 = vmax.f32 %v1195, 0.0
    %v1812 = vmax.f32 %v1546, 0.0
    %v1813 = vmax.f32 %v1548, 0.0
    %v1814 = vmax.f32 %v1199, 0.0
    %v1815 = vmax.f32 %v1201, 0.0
    %v1816 = vmax.f32 %v1552, 0.0
    %v1817 = vmax.f32 %v1554, 0.0
    %v1818 = vmax.f32 %v1203, 0.0
    %v1819 = vmax.f32 %v1205, 0.0
    %v1820 = vmax.f32 %v1556, 0.0
    %v1821 = vmax.f32 %v1558, 0.0
    %v1822 = vmax.f32 %v1209, 0.0
    %v1823 = vmax.f32 %v1211, 0.0
    %v1824 = vmax.f32 %v1562, 0.0
    %v1825 = vmax.f32 %v1564, 0.0
    %v1826 = vmax.f32 %v1213, 0.0
    %v1827 = vmax.f32 %v1215, 0.0
    %v1828 = vmax.f32 %v1566, 0.0
    %v1829 = vmax.f32 %v1568, 0.0
    %v1830 = vmax.f32 %v1219, 0.0
    %v1831 = vmax.f32 %v1221, 0.0
    %v1832 = vmax.f32 %v1572, 0.0
    %v1833 = vmax.f32 %v1574, 0.0
    %v1834 = vmax.f32 %v1223, 0.0
    %v1835 = vmax.f32 %v1225, 0.0
    %v1836 = vmax.f32 %v1576, 0.0
    %v1837 = vmax.f32 %v1578, 0.0
    %v1838 = vmax.f32 %v1229, 0.0
    %v1839 = vmax.f32 %v1231, 0.0
    %v1840 = vmax.f32 %v1582, 0.0
    %v1841 = vmax.f32 %v1584, 0.0
    %v1842 = vmax.f32 %v1233, 0.0
    %v1843 = vmax.f32 %v1235, 0.0
    %v1844 = vmax.f32 %v1586, 0.0
    %v1845 = vmax.f32 %v1588, 0.0
    %v1846 = vpack.c.bf16 %v1594, %v1590
    %v1847 = vpack.c.bf16 %v1595, %v1591
    %v1848 = vpack.c.bf16 %v1596, %v1592
    %v1849 = vpack.c.bf16 %v1597, %v1593
    %v1850 = vpack.c.bf16 %v1602, %v1598
    %v1851 = vpack.c.bf16 %v1603, %v1599
    %v1852 = vpack.c.bf16 %v1604, %v1600
    %v1853 = vpack.c.bf16 %v1605, %v1601
    %v1854 = vpack.c.bf16 %v1610, %v1606
    %v1855 = vpack.c.bf16 %v1611, %v1607
    %v1856 = vpack.c.bf16 %v1612, %v1608
    %v1857 = vpack.c.bf16 %v1613, %v1609
    %v1858 = vpack.c.bf16 %v1618, %v1614
    %v1859 = vpack.c.bf16 %v1619, %v1615
    %v1860 = vpack.c.bf16 %v1620, %v1616
    %v1861 = vpack.c.bf16 %v1621, %v1617
    %v1862 = vpack.c.bf16 %v1626, %v1622
    %v1863 = vpack.c.bf16 %v1627, %v1623
    %v1864 = vpack.c.bf16 %v1628, %v1624
    %v1865 = vpack.c.bf16 %v1629, %v1625
    %v1866 = vpack.c.bf16 %v1634, %v1630
    %v1867 = vpack.c.bf16 %v1635, %v1631
    %v1868 = vpack.c.bf16 %v1636, %v1632
    %v1869 = vpack.c.bf16 %v1637, %v1633
    %v1870 = vpack.c.bf16 %v1642, %v1638
    %v1871 = vpack.c.bf16 %v1643, %v1639
    %v1872 = vpack.c.bf16 %v1644, %v1640
    %v1873 = vpack.c.bf16 %v1645, %v1641
    %v1874 = vpack.c.bf16 %v1650, %v1646
    %v1875 = vpack.c.bf16 %v1651, %v1647
    %v1876 = vpack.c.bf16 %v1652, %v1648
    %v1877 = vpack.c.bf16 %v1653, %v1649
    %v1878 = vpack.c.bf16 %v1658, %v1654
    %v1879 = vpack.c.bf16 %v1659, %v1655
    %v1880 = vpack.c.bf16 %v1660, %v1656
    %v1881 = vpack.c.bf16 %v1661, %v1657
    %v1882 = vpack.c.bf16 %v1666, %v1662
    %v1883 = vpack.c.bf16 %v1667, %v1663
    %v1884 = vpack.c.bf16 %v1668, %v1664
    %v1885 = vpack.c.bf16 %v1669, %v1665
    %v1886 = vpack.c.bf16 %v1674, %v1670
    %v1887 = vpack.c.bf16 %v1675, %v1671
    %v1888 = vpack.c.bf16 %v1676, %v1672
    %v1889 = vpack.c.bf16 %v1677, %v1673
    %v1890 = vpack.c.bf16 %v1682, %v1678
    %v1891 = vpack.c.bf16 %v1683, %v1679
    %v1892 = vpack.c.bf16 %v1684, %v1680
    %v1893 = vpack.c.bf16 %v1685, %v1681
    %v1894 = vpack.c.bf16 %v1690, %v1686
    %v1895 = vpack.c.bf16 %v1691, %v1687
    %v1896 = vpack.c.bf16 %v1692, %v1688
    %v1897 = vpack.c.bf16 %v1693, %v1689
    %v1898 = vpack.c.bf16 %v1698, %v1694
    %v1899 = vpack.c.bf16 %v1699, %v1695
    %v1900 = vpack.c.bf16 %v1700, %v1696
    %v1901 = vpack.c.bf16 %v1701, %v1697
    %v1902 = vpack.c.bf16 %v1706, %v1702
    %v1903 = vpack.c.bf16 %v1707, %v1703
    %v1904 = vpack.c.bf16 %v1708, %v1704
    %v1905 = vpack.c.bf16 %v1709, %v1705
    %v1906 = vpack.c.bf16 %v1714, %v1710
    %v1907 = vpack.c.bf16 %v1715, %v1711
    %v1908 = vpack.c.bf16 %v1716, %v1712
    %v1909 = vpack.c.bf16 %v1717, %v1713
    %v1910 = vpack.c.bf16 %v1722, %v1718
    %v1911 = vpack.c.bf16 %v1723, %v1719
    %v1912 = vpack.c.bf16 %v1724, %v1720
    %v1913 = vpack.c.bf16 %v1725, %v1721
    %v1914 = vpack.c.bf16 %v1730, %v1726
    %v1915 = vpack.c.bf16 %v1731, %v1727
    %v1916 = vpack.c.bf16 %v1732, %v1728
    %v1917 = vpack.c.bf16 %v1733, %v1729
    %v1918 = vpack.c.bf16 %v1738, %v1734
    %v1919 = vpack.c.bf16 %v1739, %v1735
    %v1920 = vpack.c.bf16 %v1740, %v1736
    %v1921 = vpack.c.bf16 %v1741, %v1737
    %v1922 = vpack.c.bf16 %v1746, %v1742
    %v1923 = vpack.c.bf16 %v1747, %v1743
    %v1924 = vpack.c.bf16 %v1748, %v1744
    %v1925 = vpack.c.bf16 %v1749, %v1745
    %v1926 = vpack.c.bf16 %v1754, %v1750
    %v1927 = vpack.c.bf16 %v1755, %v1751
    %v1928 = vpack.c.bf16 %v1756, %v1752
    %v1929 = vpack.c.bf16 %v1757, %v1753
    %v1930 = vpack.c.bf16 %v1762, %v1758
    %v1931 = vpack.c.bf16 %v1763, %v1759
    %v1932 = vpack.c.bf16 %v1764, %v1760
    %v1933 = vpack.c.bf16 %v1765, %v1761
    %v1934 = vpack.c.bf16 %v1770, %v1766
    %v1935 = vpack.c.bf16 %v1771, %v1767
    %v1936 = vpack.c.bf16 %v1772, %v1768
    %v1937 = vpack.c.bf16 %v1773, %v1769
    %v1938 = vpack.c.bf16 %v1778, %v1774
    %v1939 = vpack.c.bf16 %v1779, %v1775
    %v1940 = vpack.c.bf16 %v1780, %v1776
    %v1941 = vpack.c.bf16 %v1781, %v1777
    %v1942 = vpack.c.bf16 %v1786, %v1782
    %v1943 = vpack.c.bf16 %v1787, %v1783
    %v1944 = vpack.c.bf16 %v1788, %v1784
    %v1945 = vpack.c.bf16 %v1789, %v1785
    %v1946 = vpack.c.bf16 %v1794, %v1790
    %v1947 = vpack.c.bf16 %v1795, %v1791
    %v1948 = vpack.c.bf16 %v1796, %v1792
    %v1949 = vpack.c.bf16 %v1797, %v1793
    %v1950 = vpack.c.bf16 %v1802, %v1798
    %v1951 = vpack.c.bf16 %v1803, %v1799
    %v1952 = vpack.c.bf16 %v1804, %v1800
    %v1953 = vpack.c.bf16 %v1805, %v1801
    %v1954 = vpack.c.bf16 %v1810, %v1806
    %v1955 = vpack.c.bf16 %v1811, %v1807
    %v1956 = vpack.c.bf16 %v1812, %v1808
    %v1957 = vpack.c.bf16 %v1813, %v1809
    %v1958 = vpack.c.bf16 %v1818, %v1814
    %v1959 = vpack.c.bf16 %v1819, %v1815
    %v1960 = vpack.c.bf16 %v1820, %v1816
    %v1961 = vpack.c.bf16 %v1821, %v1817
    %v1962 = vpack.c.bf16 %v1826, %v1822
    %v1963 = vpack.c.bf16 %v1827, %v1823
    %v1964 = vpack.c.bf16 %v1828, %v1824
    %v1965 = vpack.c.bf16 %v1829, %v1825
    %v1966 = vpack.c.bf16 %v1834, %v1830
    %v1967 = vpack.c.bf16 %v1835, %v1831
    %v1968 = vpack.c.bf16 %v1836, %v1832
    %v1969 = vpack.c.bf16 %v1837, %v1833
    %v1970 = vpack.c.bf16 %v1842, %v1838
    %v1971 = vpack.c.bf16 %v1843, %v1839
    %v1972 = vpack.c.bf16 %v1844, %v1840
    %v1973 = vpack.c.bf16 %v1845, %v1841
    %v1974 = vld [vmem:[#allocation4] sm:$0xff]
    %v1975 = vld [vmem:[#allocation4 + $0x8] sm:$0xff]
    %v1976 = vld [vmem:[#allocation4 + $0x10] sm:$0xff]
    %v1977 = vld [vmem:[#allocation4 + $0x18] sm:$0xff]
    %v1978 = vld [vmem:[#allocation4 + $0x20] sm:$0xff]
    %v1979 = vld [vmem:[#allocation4 + $0x28] sm:$0xff]
    %v1980 = vld [vmem:[#allocation4 + $0x30] sm:$0xff]
    %v1981 = vld [vmem:[#allocation4 + $0x38] sm:$0xff]
    %v1982 = vld [vmem:[#allocation4 + $0x40] sm:$0xff]
    %v1983 = vld [vmem:[#allocation4 + $0x48] sm:$0xff]
    %v1984 = vld [vmem:[#allocation4 + $0x50] sm:$0xff]
    %v1985 = vld [vmem:[#allocation4 + $0x58] sm:$0xff]
    %v1986 = vld [vmem:[#allocation4 + $0x60] sm:$0xff]
    %v1987 = vld [vmem:[#allocation4 + $0x68] sm:$0xff]
    %v1988 = vld [vmem:[#allocation4 + $0x70] sm:$0xff]
    %v1989 = vld [vmem:[#allocation4 + $0x78] sm:$0xff]
    %v1990 = vld [vmem:[%s4] sm:$0xff]
    %v1991 = vld [vmem:[%s4 + $0x8] sm:$0xff]
    %v1992 = vld [vmem:[%s4 + $0x10] sm:$0xff]
    %v1993 = vld [vmem:[%s4 + $0x18] sm:$0xff]
    %v1994 = vld [vmem:[%s4 + $0x20] sm:$0xff]
    %v1995 = vld [vmem:[%s4 + $0x28] sm:$0xff]
    %v1996 = vld [vmem:[%s4 + $0x30] sm:$0xff]
    %v1997 = vld [vmem:[%s4 + $0x38] sm:$0xff]
    %1999 = vset.pattern.permute.xlu0 0
    %2000 = vperm.xlu0 %1999, %v1990
    %v2001 = vpop.permute.xlu0 %2000
    %2004 = vset.pattern.permute.xlu0 0
    %2005 = vperm.xlu0 %2004, %v1991
    %v2006 = vpop.permute.xlu0 %2005
    %2009 = vset.pattern.permute.xlu0 0
    %2010 = vperm.xlu0 %2009, %v1992
    %v2011 = vpop.permute.xlu0 %2010
    %2014 = vset.pattern.permute.xlu0 0
    %2015 = vperm.xlu0 %2014, %v1993
    %v2016 = vpop.permute.xlu0 %2015
    %2019 = vset.pattern.permute.xlu0 0
    %2020 = vperm.xlu0 %2019, %v1994
    %v2021 = vpop.permute.xlu0 %2020
    %2024 = vset.pattern.permute.xlu0 0
    %2025 = vperm.xlu0 %2024, %v1995
    %v2026 = vpop.permute.xlu0 %2025
    %2029 = vset.pattern.permute.xlu0 0
    %2030 = vperm.xlu0 %2029, %v1996
    %v2031 = vpop.permute.xlu0 %2030
    %2034 = vset.pattern.permute.xlu0 0
    %2035 = vperm.xlu0 %2034, %v1997
    %v2036 = vpop.permute.xlu0 %2035
    %v2054 = vunpack.c.l.b16 %v1974
    %v2055 = vunpack.c.h.b16 %v1974
    %v2056 = vunpack.c.l.b16 %v1975
    %v2057 = vunpack.c.h.b16 %v1975
    %v2058 = vunpack.c.l.b16 %v1976
    %v2059 = vunpack.c.h.b16 %v1976
    %v2060 = vunpack.c.l.b16 %v1977
    %v2061 = vunpack.c.h.b16 %v1977
    %v2062 = vunpack.c.l.b16 %v1978
    %v2063 = vunpack.c.h.b16 %v1978
    %v2064 = vunpack.c.l.b16 %v1979
    %v2065 = vunpack.c.h.b16 %v1979
    %v2066 = vunpack.c.l.b16 %v1980
    %v2067 = vunpack.c.h.b16 %v1980
    %v2068 = vunpack.c.l.b16 %v1981
    %v2069 = vunpack.c.h.b16 %v1981
    %v2070 = vunpack.c.l.b16 %v1982
    %v2071 = vunpack.c.h.b16 %v1982
    %v2072 = vunpack.c.l.b16 %v1983
    %v2073 = vunpack.c.h.b16 %v1983
    %v2074 = vunpack.c.l.b16 %v1984
    %v2075 = vunpack.c.h.b16 %v1984
    %v2076 = vunpack.c.l.b16 %v1985
    %v2077 = vunpack.c.h.b16 %v1985
    %v2078 = vunpack.c.l.b16 %v1986
    %v2079 = vunpack.c.h.b16 %v1986
    %v2080 = vunpack.c.l.b16 %v1987
    %v2081 = vunpack.c.h.b16 %v1987
    %v2082 = vunpack.c.l.b16 %v1988
    %v2083 = vunpack.c.h.b16 %v1988
    %v2084 = vunpack.c.l.b16 %v1989
    %v2085 = vunpack.c.h.b16 %v1989
    %v2086 = vpack.c.b16 %v2058, %v2054
    %v2087 = vpack.c.b16 %v2059, %v2055
    %v2088 = vpack.c.b16 %v2060, %v2056
    %v2089 = vpack.c.b16 %v2061, %v2057
    %v2090 = vpack.c.b16 %v2066, %v2062
    %v2091 = vpack.c.b16 %v2067, %v2063
    %v2092 = vpack.c.b16 %v2068, %v2064
    %v2093 = vpack.c.b16 %v2069, %v2065
    %v2094 = vpack.c.b16 %v2074, %v2070
    %v2095 = vpack.c.b16 %v2075, %v2071
    %v2096 = vpack.c.b16 %v2076, %v2072
    %v2097 = vpack.c.b16 %v2077, %v2073
    %v2098 = vpack.c.b16 %v2082, %v2078
    %v2099 = vpack.c.b16 %v2083, %v2079
    %v2100 = vpack.c.b16 %v2084, %v2080
    %v2101 = vpack.c.b16 %v2085, %v2081
    %2118 = vmatprep.subr.bf16.mxu0 %v1875
    %2119 = vmatpush1.bf16.msra.mxu0 %v1874
    %2120 = vmatprep.subr.bf16.mxu0 %v1871
    %2121 = vmatpush1.bf16.msra.mxu0 %v1870
    %2122 = vmatprep.subr.bf16.mxu0 %v1867
    %2123 = vmatpush1.bf16.msra.mxu0 %v1866
    %2124 = vmatprep.subr.bf16.mxu0 %v1863
    %2125 = vmatpush1.bf16.msra.mxu0 %v1862
    %2126 = vmatprep.subr.bf16.mxu0 %v1859
    %2127 = vmatpush1.bf16.msra.mxu0 %v1858
    %2128 = vmatprep.subr.bf16.mxu0 %v1855
    %2129 = vmatpush1.bf16.msra.mxu0 %v1854
    %2130 = vmatprep.subr.bf16.mxu0 %v1851
    %2131 = vmatpush1.bf16.msra.mxu0 %v1850
    %2132 = vmatprep.subr.bf16.mxu0 %v1847
    %2133 = vmatpush1.bf16.msra.mxu0 %v1846
    %2134 = vmatprep.subr.bf16.mxu0 %v1907
    %2135 = vmatpush2.bf16.msra.mxu0 %v1906
    %2136 = vmatprep.subr.bf16.mxu0 %v1903
    %2137 = vmatpush2.bf16.msra.mxu0 %v1902
    %2138 = vmatprep.subr.bf16.mxu0 %v1899
    %2139 = vmatpush2.bf16.msra.mxu0 %v1898
    %2140 = vmatprep.subr.bf16.mxu0 %v1895
    %2141 = vmatpush2.bf16.msra.mxu0 %v1894
    %2142 = vmatprep.subr.bf16.mxu0 %v1891
    %2143 = vmatpush2.bf16.msra.mxu0 %v1890
    %2144 = vmatprep.subr.bf16.mxu0 %v1887
    %2145 = vmatpush2.bf16.msra.mxu0 %v1886
    %2146 = vmatprep.subr.bf16.mxu0 %v1883
    %2147 = vmatpush2.bf16.msra.mxu0 %v1882
    %2148 = vmatprep.subr.bf16.mxu0 %v1879
    %2149 = vmatpush2.bf16.msra.mxu0 %v1878
    %2150 = vmatprep.mubr.bf16.mxu0 %v2087
    %2151 = vmatmul.mubr.bf16.gmra.mxu0 %v2086
    %v2152 = vpop.f32.mrf.mxu0
    %v2153 = vadd.f32 %v2001, %v2152
    %v2154 = vpop.f32.mrf.mxu0
    %v2155 = vadd.f32 %v2001, %v2154
    %v2156 = vpop.f32.mrf.mxu0
    %v2157 = vadd.f32 %v2006, %v2156
    %v2158 = vpop.f32.mrf.mxu0
    %v2159 = vadd.f32 %v2006, %v2158
    %2160 = vmatprep.mubr.bf16.mxu0 %v2091
    %2161 = vmatmul.mubr.bf16.gmra.mxu0 %v2090
    %v2162 = vpop.f32.mrf.mxu0
    %v2163 = vadd.f32 %v2011, %v2162
    %v2164 = vpop.f32.mrf.mxu0
    %v2165 = vadd.f32 %v2011, %v2164
    %v2166 = vpop.f32.mrf.mxu0
    %v2167 = vadd.f32 %v2016, %v2166
    %v2168 = vpop.f32.mrf.mxu0
    %v2169 = vadd.f32 %v2016, %v2168
    %2170 = vmatprep.mubr.bf16.mxu0 %v2095
    %2171 = vmatmul.mubr.bf16.gmra.mxu0 %v2094
    %v2172 = vpop.f32.mrf.mxu0
    %v2173 = vadd.f32 %v2021, %v2172
    %v2174 = vpop.f32.mrf.mxu0
    %v2175 = vadd.f32 %v2021, %v2174
    %v2176 = vpop.f32.mrf.mxu0
    %v2177 = vadd.f32 %v2026, %v2176
    %v2178 = vpop.f32.mrf.mxu0
    %v2179 = vadd.f32 %v2026, %v2178
    %2180 = vmatprep.mubr.bf16.mxu0 %v2099
    %2181 = vmatmul.mubr.bf16.gmra.mxu0 %v2098
    %v2182 = vpop.f32.mrf.mxu0
    %v2183 = vadd.f32 %v2031, %v2182
    %v2184 = vpop.f32.mrf.mxu0
    %v2185 = vadd.f32 %v2031, %v2184
    %v2186 = vpop.f32.mrf.mxu0
    %v2187 = vadd.f32 %v2036, %v2186
    %v2188 = vpop.f32.mrf.mxu0
    %v2189 = vadd.f32 %v2036, %v2188
    %2190 = vdwg.mxu0
    %2191 = vmatprep.subr.bf16.mxu0 %v1939
    %2192 = vmatpush1.bf16.msra.mxu0 %v1938
    %2193 = vmatprep.subr.bf16.mxu0 %v1935
    %2194 = vmatpush1.bf16.msra.mxu0 %v1934
    %2195 = vmatprep.subr.bf16.mxu0 %v1931
    %2196 = vmatpush1.bf16.msra.mxu0 %v1930
    %2197 = vmatprep.subr.bf16.mxu0 %v1927
    %2198 = vmatpush1.bf16.msra.mxu0 %v1926
    %2199 = vmatprep.subr.bf16.mxu0 %v1923
    %2200 = vmatpush1.bf16.msra.mxu0 %v1922
    %2201 = vmatprep.subr.bf16.mxu0 %v1919
    %2202 = vmatpush1.bf16.msra.mxu0 %v1918
    %2203 = vmatprep.subr.bf16.mxu0 %v1915
    %2204 = vmatpush1.bf16.msra.mxu0 %v1914
    %2205 = vmatprep.subr.bf16.mxu0 %v1911
    %2206 = vmatpush1.bf16.msra.mxu0 %v1910
    %2207 = vmatprep.subr.bf16.mxu0 %v1971
    %2208 = vmatpush2.bf16.msra.mxu0 %v1970
    %2209 = vmatprep.subr.bf16.mxu0 %v1967
    %2210 = vmatpush2.bf16.msra.mxu0 %v1966
    %2211 = vmatprep.subr.bf16.mxu0 %v1963
    %2212 = vmatpush2.bf16.msra.mxu0 %v1962
    %2213 = vmatprep.subr.bf16.mxu0 %v1959
    %2214 = vmatpush2.bf16.msra.mxu0 %v1958
    %2215 = vmatprep.subr.bf16.mxu0 %v1955
    %2216 = vmatpush2.bf16.msra.mxu0 %v1954
    %2217 = vmatprep.subr.bf16.mxu0 %v1951
    %2218 = vmatpush2.bf16.msra.mxu0 %v1950
    %2219 = vmatprep.subr.bf16.mxu0 %v1947
    %2220 = vmatpush2.bf16.msra.mxu0 %v1946
    %2221 = vmatprep.subr.bf16.mxu0 %v1943
    %2222 = vmatpush2.bf16.msra.mxu0 %v1942
    %2223 = vmatprep.mubr.bf16.mxu0 %v2089
    %2224 = vmatmul.mubr.bf16.gmra.mxu0 %v2088
    %v2225 = vpop.f32.mrf.mxu0
    %v2226 = vadd.f32 %v2153, %v2225
    %v2227 = vpop.f32.mrf.mxu0
    %v2228 = vadd.f32 %v2155, %v2227
    %v2229 = vpop.f32.mrf.mxu0
    %v2230 = vadd.f32 %v2157, %v2229
    %v2231 = vpop.f32.mrf.mxu0
    %v2232 = vadd.f32 %v2159, %v2231
    %2233 = vmatprep.mubr.bf16.mxu0 %v2093
    %2234 = vmatmul.mubr.bf16.gmra.mxu0 %v2092
    %v2235 = vpop.f32.mrf.mxu0
    %v2236 = vadd.f32 %v2163, %v2235
    %v2237 = vpop.f32.mrf.mxu0
    %v2238 = vadd.f32 %v2165, %v2237
    %v2239 = vpop.f32.mrf.mxu0
    %v2240 = vadd.f32 %v2167, %v2239
    %v2241 = vpop.f32.mrf.mxu0
    %v2242 = vadd.f32 %v2169, %v2241
    %2243 = vmatprep.mubr.bf16.mxu0 %v2097
    %2244 = vmatmul.mubr.bf16.gmra.mxu0 %v2096
    %v2245 = vpop.f32.mrf.mxu0
    %v2246 = vadd.f32 %v2173, %v2245
    %v2247 = vpop.f32.mrf.mxu0
    %v2248 = vadd.f32 %v2175, %v2247
    %v2249 = vpop.f32.mrf.mxu0
    %v2250 = vadd.f32 %v2177, %v2249
    %v2251 = vpop.f32.mrf.mxu0
    %v2252 = vadd.f32 %v2179, %v2251
    %2253 = vmatprep.mubr.bf16.mxu0 %v2101
    %2254 = vmatmul.mubr.bf16.gmra.mxu0 %v2100
    %v2255 = vpop.f32.mrf.mxu0
    %v2256 = vadd.f32 %v2183, %v2255
    %v2257 = vpop.f32.mrf.mxu0
    %v2258 = vadd.f32 %v2185, %v2257
    %v2259 = vpop.f32.mrf.mxu0
    %v2260 = vadd.f32 %v2187, %v2259
    %v2261 = vpop.f32.mrf.mxu0
    %v2262 = vadd.f32 %v2189, %v2261
    %2263 = vdwg.mxu0
    %2264 = vmatprep.subr.bf16.mxu0 %v1877
    %2265 = vmatpush1.bf16.msra.mxu0 %v1876
    %2266 = vmatprep.subr.bf16.mxu0 %v1873
    %2267 = vmatpush1.bf16.msra.mxu0 %v1872
    %2268 = vmatprep.subr.bf16.mxu0 %v1869
    %2269 = vmatpush1.bf16.msra.mxu0 %v1868
    %2270 = vmatprep.subr.bf16.mxu0 %v1865
    %2271 = vmatpush1.bf16.msra.mxu0 %v1864
    %2272 = vmatprep.subr.bf16.mxu0 %v1861
    %2273 = vmatpush1.bf16.msra.mxu0 %v1860
    %2274 = vmatprep.subr.bf16.mxu0 %v1857
    %2275 = vmatpush1.bf16.msra.mxu0 %v1856
    %2276 = vmatprep.subr.bf16.mxu0 %v1853
    %2277 = vmatpush1.bf16.msra.mxu0 %v1852
    %2278 = vmatprep.subr.bf16.mxu0 %v1849
    %2279 = vmatpush1.bf16.msra.mxu0 %v1848
    %2280 = vmatprep.subr.bf16.mxu0 %v1909
    %2281 = vmatpush2.bf16.msra.mxu0 %v1908
    %2282 = vmatprep.subr.bf16.mxu0 %v1905
    %2283 = vmatpush2.bf16.msra.mxu0 %v1904
    %2284 = vmatprep.subr.bf16.mxu0 %v1901
    %2285 = vmatpush2.bf16.msra.mxu0 %v1900
    %2286 = vmatprep.subr.bf16.mxu0 %v1897
    %2287 = vmatpush2.bf16.msra.mxu0 %v1896
    %2288 = vmatprep.subr.bf16.mxu0 %v1893
    %2289 = vmatpush2.bf16.msra.mxu0 %v1892
    %2290 = vmatprep.subr.bf16.mxu0 %v1889
    %2291 = vmatpush2.bf16.msra.mxu0 %v1888
    %2292 = vmatprep.subr.bf16.mxu0 %v1885
    %2293 = vmatpush2.bf16.msra.mxu0 %v1884
    %2294 = vmatprep.subr.bf16.mxu0 %v1881
    %2295 = vmatpush2.bf16.msra.mxu0 %v1880
    %2296 = vmatprep.mubr.bf16.mxu0 %v2087
    %2297 = vmatmul.mubr.bf16.gmra.mxu0 %v2086
    %v2298 = vpop.f32.mrf.mxu0
    %v2299 = vadd.f32 %v2001, %v2298
    %v2300 = vpop.f32.mrf.mxu0
    %v2301 = vadd.f32 %v2001, %v2300
    %v2302 = vpop.f32.mrf.mxu0
    %v2303 = vadd.f32 %v2006, %v2302
    %v2304 = vpop.f32.mrf.mxu0
    %v2305 = vadd.f32 %v2006, %v2304
    %2306 = vmatprep.mubr.bf16.mxu0 %v2091
    %2307 = vmatmul.mubr.bf16.gmra.mxu0 %v2090
    %v2308 = vpop.f32.mrf.mxu0
    %v2309 = vadd.f32 %v2011, %v2308
    %v2310 = vpop.f32.mrf.mxu0
    %v2311 = vadd.f32 %v2011, %v2310
    %v2312 = vpop.f32.mrf.mxu0
    %v2313 = vadd.f32 %v2016, %v2312
    %v2314 = vpop.f32.mrf.mxu0
    %v2315 = vadd.f32 %v2016, %v2314
    %2316 = vmatprep.mubr.bf16.mxu0 %v2095
    %2317 = vmatmul.mubr.bf16.gmra.mxu0 %v2094
    %v2318 = vpop.f32.mrf.mxu0
    %v2319 = vadd.f32 %v2021, %v2318
    %v2320 = vpop.f32.mrf.mxu0
    %v2321 = vadd.f32 %v2021, %v2320
    %v2322 = vpop.f32.mrf.mxu0
    %v2323 = vadd.f32 %v2026, %v2322
    %v2324 = vpop.f32.mrf.mxu0
    %v2325 = vadd.f32 %v2026, %v2324
    %2326 = vmatprep.mubr.bf16.mxu0 %v2099
    %2327 = vmatmul.mubr.bf16.gmra.mxu0 %v2098
    %v2328 = vpop.f32.mrf.mxu0
    %v2329 = vadd.f32 %v2031, %v2328
    %v2330 = vpop.f32.mrf.mxu0
    %v2331 = vadd.f32 %v2031, %v2330
    %v2332 = vpop.f32.mrf.mxu0
    %v2333 = vadd.f32 %v2036, %v2332
    %v2334 = vpop.f32.mrf.mxu0
    %v2335 = vadd.f32 %v2036, %v2334
    %2336 = vdwg.mxu0
    %2337 = vmatprep.subr.bf16.mxu0 %v1941
    %2338 = vmatpush1.bf16.msra.mxu0 %v1940
    %2339 = vmatprep.subr.bf16.mxu0 %v1937
    %2340 = vmatpush1.bf16.msra.mxu0 %v1936
    %2341 = vmatprep.subr.bf16.mxu0 %v1933
    %2342 = vmatpush1.bf16.msra.mxu0 %v1932
    %2343 = vmatprep.subr.bf16.mxu0 %v1929
    %2344 = vmatpush1.bf16.msra.mxu0 %v1928
    %2345 = vmatprep.subr.bf16.mxu0 %v1925
    %2346 = vmatpush1.bf16.msra.mxu0 %v1924
    %2347 = vmatprep.subr.bf16.mxu0 %v1921
    %2348 = vmatpush1.bf16.msra.mxu0 %v1920
    %2349 = vmatprep.subr.bf16.mxu0 %v1917
    %2350 = vmatpush1.bf16.msra.mxu0 %v1916
    %2351 = vmatprep.subr.bf16.mxu0 %v1913
    %2352 = vmatpush1.bf16.msra.mxu0 %v1912
    %2353 = vmatprep.subr.bf16.mxu0 %v1973
    %2354 = vmatpush2.bf16.msra.mxu0 %v1972
    %2355 = vmatprep.subr.bf16.mxu0 %v1969
    %2356 = vmatpush2.bf16.msra.mxu0 %v1968
    %2357 = vmatprep.subr.bf16.mxu0 %v1965
    %2358 = vmatpush2.bf16.msra.mxu0 %v1964
    %2359 = vmatprep.subr.bf16.mxu0 %v1961
    %2360 = vmatpush2.bf16.msra.mxu0 %v1960
    %2361 = vmatprep.subr.bf16.mxu0 %v1957
    %2362 = vmatpush2.bf16.msra.mxu0 %v1956
    %2363 = vmatprep.subr.bf16.mxu0 %v1953
    %2364 = vmatpush2.bf16.msra.mxu0 %v1952
    %2365 = vmatprep.subr.bf16.mxu0 %v1949
    %2366 = vmatpush2.bf16.msra.mxu0 %v1948
    %2367 = vmatprep.subr.bf16.mxu0 %v1945
    %2368 = vmatpush2.bf16.msra.mxu0 %v1944
    %2369 = vmatprep.mubr.bf16.mxu0 %v2089
    %2370 = vmatmul.mubr.bf16.gmra.mxu0 %v2088
    %v2371 = vpop.f32.mrf.mxu0
    %v2372 = vadd.f32 %v2299, %v2371
    %v2373 = vpop.f32.mrf.mxu0
    %v2374 = vadd.f32 %v2301, %v2373
    %v2375 = vpop.f32.mrf.mxu0
    %v2376 = vadd.f32 %v2303, %v2375
    %v2377 = vpop.f32.mrf.mxu0
    %v2378 = vadd.f32 %v2305, %v2377
    %2379 = vmatprep.mubr.bf16.mxu0 %v2093
    %2380 = vmatmul.mubr.bf16.gmra.mxu0 %v2092
    %v2381 = vpop.f32.mrf.mxu0
    %v2382 = vadd.f32 %v2309, %v2381
    %v2383 = vpop.f32.mrf.mxu0
    %v2384 = vadd.f32 %v2311, %v2383
    %v2385 = vpop.f32.mrf.mxu0
    %v2386 = vadd.f32 %v2313, %v2385
    %v2387 = vpop.f32.mrf.mxu0
    %v2388 = vadd.f32 %v2315, %v2387
    %2389 = vmatprep.mubr.bf16.mxu0 %v2097
    %2390 = vmatmul.mubr.bf16.gmra.mxu0 %v2096
    %v2391 = vpop.f32.mrf.mxu0
    %v2392 = vadd.f32 %v2319, %v2391
    %v2393 = vpop.f32.mrf.mxu0
    %v2394 = vadd.f32 %v2321, %v2393
    %v2395 = vpop.f32.mrf.mxu0
    %v2396 = vadd.f32 %v2323, %v2395
    %v2397 = vpop.f32.mrf.mxu0
    %v2398 = vadd.f32 %v2325, %v2397
    %2399 = vmatprep.mubr.bf16.mxu0 %v2101
    %2400 = vmatmul.mubr.bf16.gmra.mxu0 %v2100
    %v2401 = vpop.f32.mrf.mxu0
    %v2402 = vadd.f32 %v2329, %v2401
    %v2403 = vpop.f32.mrf.mxu0
    %v2404 = vadd.f32 %v2331, %v2403
    %v2405 = vpop.f32.mrf.mxu0
    %v2406 = vadd.f32 %v2333, %v2405
    %v2407 = vpop.f32.mrf.mxu0
    %v2408 = vadd.f32 %v2335, %v2407
    %2409 = vdwg.mxu0
    %v2410 = vmax.f32 %v2226, 0.0
    %v2411 = vmax.f32 %v2228, 0.0
    %v2412 = vmax.f32 %v2372, 0.0
    %v2413 = vmax.f32 %v2374, 0.0
    %v2414 = vmax.f32 %v2230, 0.0
    %v2415 = vmax.f32 %v2232, 0.0
    %v2416 = vmax.f32 %v2376, 0.0
    %v2417 = vmax.f32 %v2378, 0.0
    %v2418 = vmax.f32 %v2236, 0.0
    %v2419 = vmax.f32 %v2238, 0.0
    %v2420 = vmax.f32 %v2382, 0.0
    %v2421 = vmax.f32 %v2384, 0.0
    %v2422 = vmax.f32 %v2240, 0.0
    %v2423 = vmax.f32 %v2242, 0.0
    %v2424 = vmax.f32 %v2386, 0.0
    %v2425 = vmax.f32 %v2388, 0.0
    %v2426 = vmax.f32 %v2246, 0.0
    %v2427 = vmax.f32 %v2248, 0.0
    %v2428 = vmax.f32 %v2392, 0.0
    %v2429 = vmax.f32 %v2394, 0.0
    %v2430 = vmax.f32 %v2250, 0.0
    %v2431 = vmax.f32 %v2252, 0.0
    %v2432 = vmax.f32 %v2396, 0.0
    %v2433 = vmax.f32 %v2398, 0.0
    %v2434 = vmax.f32 %v2256, 0.0
    %v2435 = vmax.f32 %v2258, 0.0
    %v2436 = vmax.f32 %v2402, 0.0
    %v2437 = vmax.f32 %v2404, 0.0
    %v2438 = vmax.f32 %v2260, 0.0
    %v2439 = vmax.f32 %v2262, 0.0
    %v2440 = vmax.f32 %v2406, 0.0
    %v2441 = vmax.f32 %v2408, 0.0
    %v2442 = vpack.c.bf16 %v2414, %v2410
    %v2443 = vpack.c.bf16 %v2415, %v2411
    %v2444 = vpack.c.bf16 %v2416, %v2412
    %v2445 = vpack.c.bf16 %v2417, %v2413
    %v2446 = vpack.c.bf16 %v2422, %v2418
    %v2447 = vpack.c.bf16 %v2423, %v2419
    %v2448 = vpack.c.bf16 %v2424, %v2420
    %v2449 = vpack.c.bf16 %v2425, %v2421
    %v2450 = vpack.c.bf16 %v2430, %v2426
    %v2451 = vpack.c.bf16 %v2431, %v2427
    %v2452 = vpack.c.bf16 %v2432, %v2428
    %v2453 = vpack.c.bf16 %v2433, %v2429
    %v2454 = vpack.c.bf16 %v2438, %v2434
    %v2455 = vpack.c.bf16 %v2439, %v2435
    %v2456 = vpack.c.bf16 %v2440, %v2436
    %v2457 = vpack.c.bf16 %v2441, %v2437
    %v2458 = vld [vmem:[%s5] sm:$0xf]
    %v2459 = vld [vmem:[%s5 + $0x4] sm:$0xf]
    %v2460 = vld [vmem:[%s5 + $0x8] sm:$0xf]
    %v2461 = vld [vmem:[%s5 + $0xc] sm:$0xf]
    %v2462 = vld [vmem:[%s5 + $0x10] sm:$0xf]
    %v2463 = vld [vmem:[%s5 + $0x14] sm:$0xf]
    %v2464 = vld [vmem:[%s5 + $0x18] sm:$0xf]
    %v2465 = vld [vmem:[%s5 + $0x1c] sm:$0xf]
    %v2466 = vld [vmem:[%s5 + $0x20] sm:$0xf]
    %v2467 = vld [vmem:[%s5 + $0x24] sm:$0xf]
    %v2468 = vld [vmem:[%s5 + $0x28] sm:$0xf]
    %v2469 = vld [vmem:[%s5 + $0x2c] sm:$0xf]
    %v2470 = vld [vmem:[%s5 + $0x30] sm:$0xf]
    %v2471 = vld [vmem:[%s5 + $0x34] sm:$0xf]
    %v2472 = vld [vmem:[%s5 + $0x38] sm:$0xf]
    %v2473 = vld [vmem:[%s5 + $0x3c] sm:$0xf]
    %v2474 = vld [vmem:[%s5 + $0x40] sm:$0xf]
    %v2475 = vld [vmem:[%s5 + $0x44] sm:$0xf]
    %v2476 = vld [vmem:[%s5 + $0x48] sm:$0xf]
    %v2477 = vld [vmem:[%s5 + $0x4c] sm:$0xf]
    %v2478 = vld [vmem:[%s5 + $0x50] sm:$0xf]
    %v2479 = vld [vmem:[%s5 + $0x54] sm:$0xf]
    %v2480 = vld [vmem:[%s5 + $0x58] sm:$0xf]
    %v2481 = vld [vmem:[%s5 + $0x5c] sm:$0xf]
    %v2482 = vld [vmem:[%s5 + $0x60] sm:$0xf]
    %v2483 = vld [vmem:[%s5 + $0x64] sm:$0xf]
    %v2484 = vld [vmem:[%s5 + $0x68] sm:$0xf]
    %v2485 = vld [vmem:[%s5 + $0x6c] sm:$0xf]
    %v2486 = vld [vmem:[%s5 + $0x70] sm:$0xf]
    %v2487 = vld [vmem:[%s5 + $0x74] sm:$0xf]
    %v2488 = vld [vmem:[%s5 + $0x78] sm:$0xf]
    %v2489 = vld [vmem:[%s5 + $0x7c] sm:$0xf]
    %v2490 = vld [vmem:[%s5 + $0x80] sm:$0xf]
    %v2491 = vld [vmem:[%s5 + $0x84] sm:$0xf]
    %v2492 = vld [vmem:[%s5 + $0x88] sm:$0xf]
    %v2493 = vld [vmem:[%s5 + $0x8c] sm:$0xf]
    %v2494 = vld [vmem:[%s5 + $0x90] sm:$0xf]
    %v2495 = vld [vmem:[%s5 + $0x94] sm:$0xf]
    %v2496 = vld [vmem:[%s5 + $0x98] sm:$0xf]
    %v2497 = vld [vmem:[%s5 + $0x9c] sm:$0xf]
    %v2498 = vld [vmem:[%s5 + $0xa0] sm:$0xf]
    %v2499 = vld [vmem:[%s5 + $0xa4] sm:$0xf]
    %v2500 = vld [vmem:[%s5 + $0xa8] sm:$0xf]
    %v2501 = vld [vmem:[%s5 + $0xac] sm:$0xf]
    %v2502 = vld [vmem:[%s5 + $0xb0] sm:$0xf]
    %v2503 = vld [vmem:[%s5 + $0xb4] sm:$0xf]
    %v2504 = vld [vmem:[%s5 + $0xb8] sm:$0xf]
    %v2505 = vld [vmem:[%s5 + $0xbc] sm:$0xf]
    %v2506 = vld [vmem:[%s5 + $0xc0] sm:$0xf]
    %v2507 = vld [vmem:[%s5 + $0xc4] sm:$0xf]
    %v2508 = vld [vmem:[%s5 + $0xc8] sm:$0xf]
    %v2509 = vld [vmem:[%s5 + $0xcc] sm:$0xf]
    %v2510 = vld [vmem:[%s5 + $0xd0] sm:$0xf]
    %v2511 = vld [vmem:[%s5 + $0xd4] sm:$0xf]
    %v2512 = vld [vmem:[%s5 + $0xd8] sm:$0xf]
    %v2513 = vld [vmem:[%s5 + $0xdc] sm:$0xf]
    %v2514 = vld [vmem:[%s5 + $0xe0] sm:$0xf]
    %v2515 = vld [vmem:[%s5 + $0xe4] sm:$0xf]
    %v2516 = vld [vmem:[%s5 + $0xe8] sm:$0xf]
    %v2517 = vld [vmem:[%s5 + $0xec] sm:$0xf]
    %v2518 = vld [vmem:[%s5 + $0xf0] sm:$0xf]
    %v2519 = vld [vmem:[%s5 + $0xf4] sm:$0xf]
    %v2520 = vld [vmem:[%s5 + $0xf8] sm:$0xf]
    %v2521 = vld [vmem:[%s5 + $0xfc] sm:$0xf]
    %v2586 = vunpack.c.l.b16 %v2458
    %v2587 = vunpack.c.l.b16 %v2459
    %v2588 = vunpack.c.l.b16 %v2460
    %v2589 = vunpack.c.l.b16 %v2461
    %v2590 = vunpack.c.l.b16 %v2462
    %v2591 = vunpack.c.l.b16 %v2463
    %v2592 = vunpack.c.l.b16 %v2464
    %v2593 = vunpack.c.l.b16 %v2465
    %v2594 = vunpack.c.l.b16 %v2466
    %v2595 = vunpack.c.l.b16 %v2467
    %v2596 = vunpack.c.l.b16 %v2468
    %v2597 = vunpack.c.l.b16 %v2469
    %v2598 = vunpack.c.l.b16 %v2470
    %v2599 = vunpack.c.l.b16 %v2471
    %v2600 = vunpack.c.l.b16 %v2472
    %v2601 = vunpack.c.l.b16 %v2473
    %v2602 = vunpack.c.l.b16 %v2474
    %v2603 = vunpack.c.l.b16 %v2475
    %v2604 = vunpack.c.l.b16 %v2476
    %v2605 = vunpack.c.l.b16 %v2477
    %v2606 = vunpack.c.l.b16 %v2478
    %v2607 = vunpack.c.l.b16 %v2479
    %v2608 = vunpack.c.l.b16 %v2480
    %v2609 = vunpack.c.l.b16 %v2481
    %v2610 = vunpack.c.l.b16 %v2482
    %v2611 = vunpack.c.l.b16 %v2483
    %v2612 = vunpack.c.l.b16 %v2484
    %v2613 = vunpack.c.l.b16 %v2485
    %v2614 = vunpack.c.l.b16 %v2486
    %v2615 = vunpack.c.l.b16 %v2487
    %v2616 = vunpack.c.l.b16 %v2488
    %v2617 = vunpack.c.l.b16 %v2489
    %v2618 = vunpack.c.l.b16 %v2490
    %v2619 = vunpack.c.l.b16 %v2491
    %v2620 = vunpack.c.l.b16 %v2492
    %v2621 = vunpack.c.l.b16 %v2493
    %v2622 = vunpack.c.l.b16 %v2494
    %v2623 = vunpack.c.l.b16 %v2495
    %v2624 = vunpack.c.l.b16 %v2496
    %v2625 = vunpack.c.l.b16 %v2497
    %v2626 = vunpack.c.l.b16 %v2498
    %v2627 = vunpack.c.l.b16 %v2499
    %v2628 = vunpack.c.l.b16 %v2500
    %v2629 = vunpack.c.l.b16 %v2501
    %v2630 = vunpack.c.l.b16 %v2502
    %v2631 = vunpack.c.l.b16 %v2503
    %v2632 = vunpack.c.l.b16 %v2504
    %v2633 = vunpack.c.l.b16 %v2505
    %v2634 = vunpack.c.l.b16 %v2506
    %v2635 = vunpack.c.l.b16 %v2507
    %v2636 = vunpack.c.l.b16 %v2508
    %v2637 = vunpack.c.l.b16 %v2509
    %v2638 = vunpack.c.l.b16 %v2510
    %v2639 = vunpack.c.l.b16 %v2511
    %v2640 = vunpack.c.l.b16 %v2512
    %v2641 = vunpack.c.l.b16 %v2513
    %v2642 = vunpack.c.l.b16 %v2514
    %v2643 = vunpack.c.l.b16 %v2515
    %v2644 = vunpack.c.l.b16 %v2516
    %v2645 = vunpack.c.l.b16 %v2517
    %v2646 = vunpack.c.l.b16 %v2518
    %v2647 = vunpack.c.l.b16 %v2519
    %v2648 = vunpack.c.l.b16 %v2520
    %v2649 = vunpack.c.l.b16 %v2521
    %v2650 = vpack.c.b16 %v2587, %v2586
    %v2651 = vpack.c.b16 %v2589, %v2588
    %v2652 = vpack.c.b16 %v2591, %v2590
    %v2653 = vpack.c.b16 %v2593, %v2592
    %v2654 = vpack.c.b16 %v2595, %v2594
    %v2655 = vpack.c.b16 %v2597, %v2596
    %v2656 = vpack.c.b16 %v2599, %v2598
    %v2657 = vpack.c.b16 %v2601, %v2600
    %v2658 = vpack.c.b16 %v2603, %v2602
    %v2659 = vpack.c.b16 %v2605, %v2604
    %v2660 = vpack.c.b16 %v2607, %v2606
    %v2661 = vpack.c.b16 %v2609, %v2608
    %v2662 = vpack.c.b16 %v2611, %v2610
    %v2663 = vpack.c.b16 %v2613, %v2612
    %v2664 = vpack.c.b16 %v2615, %v2614
    %v2665 = vpack.c.b16 %v2617, %v2616
    %v2666 = vpack.c.b16 %v2619, %v2618
    %v2667 = vpack.c.b16 %v2621, %v2620
    %v2668 = vpack.c.b16 %v2623, %v2622
    %v2669 = vpack.c.b16 %v2625, %v2624
    %v2670 = vpack.c.b16 %v2627, %v2626
    %v2671 = vpack.c.b16 %v2629, %v2628
    %v2672 = vpack.c.b16 %v2631, %v2630
    %v2673 = vpack.c.b16 %v2633, %v2632
    %v2674 = vpack.c.b16 %v2635, %v2634
    %v2675 = vpack.c.b16 %v2637, %v2636
    %v2676 = vpack.c.b16 %v2639, %v2638
    %v2677 = vpack.c.b16 %v2641, %v2640
    %v2678 = vpack.c.b16 %v2643, %v2642
    %v2679 = vpack.c.b16 %v2645, %v2644
    %v2680 = vpack.c.b16 %v2647, %v2646
    %v2681 = vpack.c.b16 %v2649, %v2648
    %2714 = vmatprep.subr.bf16.mxu0 0
    %2715 = vmatpush1.bf16.msra.mxu0 %v2657
    %2716 = vmatprep.subr.bf16.mxu0 0
    %2717 = vmatpush1.bf16.msra.mxu0 %v2656
    %2718 = vmatprep.subr.bf16.mxu0 0
    %2719 = vmatpush1.bf16.msra.mxu0 %v2655
    %2720 = vmatprep.subr.bf16.mxu0 0
    %2721 = vmatpush1.bf16.msra.mxu0 %v2654
    %2722 = vmatprep.subr.bf16.mxu0 0
    %2723 = vmatpush1.bf16.msra.mxu0 %v2653
    %2724 = vmatprep.subr.bf16.mxu0 0
    %2725 = vmatpush1.bf16.msra.mxu0 %v2652
    %2726 = vmatprep.subr.bf16.mxu0 0
    %2727 = vmatpush1.bf16.msra.mxu0 %v2651
    %2728 = vmatprep.subr.bf16.mxu0 0
    %2729 = vmatpush1.bf16.msra.mxu0 %v2650
    %2730 = vmatprep.subr.bf16.mxu0 0
    %2731 = vmatpush2.bf16.msra.mxu0 %v2665
    %2732 = vmatprep.subr.bf16.mxu0 0
    %2733 = vmatpush2.bf16.msra.mxu0 %v2664
    %2734 = vmatprep.subr.bf16.mxu0 0
    %2735 = vmatpush2.bf16.msra.mxu0 %v2663
    %2736 = vmatprep.subr.bf16.mxu0 0
    %2737 = vmatpush2.bf16.msra.mxu0 %v2662
    %2738 = vmatprep.subr.bf16.mxu0 0
    %2739 = vmatpush2.bf16.msra.mxu0 %v2661
    %2740 = vmatprep.subr.bf16.mxu0 0
    %2741 = vmatpush2.bf16.msra.mxu0 %v2660
    %2742 = vmatprep.subr.bf16.mxu0 0
    %2743 = vmatpush2.bf16.msra.mxu0 %v2659
    %2744 = vmatprep.subr.bf16.mxu0 0
    %2745 = vmatpush2.bf16.msra.mxu0 %v2658
    %2746 = vmatprep.mubr.bf16.mxu0 %v2443
    %2747 = vmatmul.mubr.bf16.gmra.mxu0 %v2442
    %v2748 = vpop.f32.mrf.mxu0
    %v2749 = vadd.f32 0.0, %v2748
    %v2750 = vpop.f32.mrf.mxu0
    %v2751 = vpop.f32.mrf.mxu0
    %v2752 = vadd.f32 0.0, %v2751
    %v2753 = vpop.f32.mrf.mxu0
    %2754 = vmatprep.mubr.bf16.mxu0 %v2447
    %2755 = vmatmul.mubr.bf16.gmra.mxu0 %v2446
    %v2756 = vpop.f32.mrf.mxu0
    %v2757 = vadd.f32 0.0, %v2756
    %v2758 = vpop.f32.mrf.mxu0
    %v2759 = vpop.f32.mrf.mxu0
    %v2760 = vadd.f32 0.0, %v2759
    %v2761 = vpop.f32.mrf.mxu0
    %2762 = vmatprep.mubr.bf16.mxu0 %v2451
    %2763 = vmatmul.mubr.bf16.gmra.mxu0 %v2450
    %v2764 = vpop.f32.mrf.mxu0
    %v2765 = vadd.f32 0.0, %v2764
    %v2766 = vpop.f32.mrf.mxu0
    %v2767 = vpop.f32.mrf.mxu0
    %v2768 = vadd.f32 0.0, %v2767
    %v2769 = vpop.f32.mrf.mxu0
    %2770 = vmatprep.mubr.bf16.mxu0 %v2455
    %2771 = vmatmul.mubr.bf16.gmra.mxu0 %v2454
    %v2772 = vpop.f32.mrf.mxu0
    %v2773 = vadd.f32 0.0, %v2772
    %v2774 = vpop.f32.mrf.mxu0
    %v2775 = vpop.f32.mrf.mxu0
    %v2776 = vadd.f32 0.0, %v2775
    %v2777 = vpop.f32.mrf.mxu0
    %2778 = vdwg.mxu0
    %2779 = vmatprep.subr.bf16.mxu0 0
    %2780 = vmatpush1.bf16.msra.mxu0 %v2673
    %2781 = vmatprep.subr.bf16.mxu0 0
    %2782 = vmatpush1.bf16.msra.mxu0 %v2672
    %2783 = vmatprep.subr.bf16.mxu0 0
    %2784 = vmatpush1.bf16.msra.mxu0 %v2671
    %2785 = vmatprep.subr.bf16.mxu0 0
    %2786 = vmatpush1.bf16.msra.mxu0 %v2670
    %2787 = vmatprep.subr.bf16.mxu0 0
    %2788 = vmatpush1.bf16.msra.mxu0 %v2669
    %2789 = vmatprep.subr.bf16.mxu0 0
    %2790 = vmatpush1.bf16.msra.mxu0 %v2668
    %2791 = vmatprep.subr.bf16.mxu0 0
    %2792 = vmatpush1.bf16.msra.mxu0 %v2667
    %2793 = vmatprep.subr.bf16.mxu0 0
    %2794 = vmatpush1.bf16.msra.mxu0 %v2666
    %2795 = vmatprep.subr.bf16.mxu0 0
    %2796 = vmatpush2.bf16.msra.mxu0 %v2681
    %2797 = vmatprep.subr.bf16.mxu0 0
    %2798 = vmatpush2.bf16.msra.mxu0 %v2680
    %2799 = vmatprep.subr.bf16.mxu0 0
    %2800 = vmatpush2.bf16.msra.mxu0 %v2679
    %2801 = vmatprep.subr.bf16.mxu0 0
    %2802 = vmatpush2.bf16.msra.mxu0 %v2678
    %2803 = vmatprep.subr.bf16.mxu0 0
    %2804 = vmatpush2.bf16.msra.mxu0 %v2677
    %2805 = vmatprep.subr.bf16.mxu0 0
    %2806 = vmatpush2.bf16.msra.mxu0 %v2676
    %2807 = vmatprep.subr.bf16.mxu0 0
    %2808 = vmatpush2.bf16.msra.mxu0 %v2675
    %2809 = vmatprep.subr.bf16.mxu0 0
    %2810 = vmatpush2.bf16.msra.mxu0 %v2674
    %2811 = vmatprep.mubr.bf16.mxu0 %v2445
    %2812 = vmatmul.mubr.bf16.gmra.mxu0 %v2444
    %v2813 = vpop.f32.mrf.mxu0
    %v2814 = vadd.f32 %v2749, %v2813
    %v2815 = vpop.f32.mrf.mxu0
    %v2816 = vpop.f32.mrf.mxu0
    %v2817 = vadd.f32 %v2752, %v2816
    %v2818 = vpop.f32.mrf.mxu0
    %2819 = vmatprep.mubr.bf16.mxu0 %v2449
    %2820 = vmatmul.mubr.bf16.gmra.mxu0 %v2448
    %v2821 = vpop.f32.mrf.mxu0
    %v2822 = vadd.f32 %v2757, %v2821
    %v2823 = vpop.f32.mrf.mxu0
    %v2824 = vpop.f32.mrf.mxu0
    %v2825 = vadd.f32 %v2760, %v2824
    %v2826 = vpop.f32.mrf.mxu0
    %2827 = vmatprep.mubr.bf16.mxu0 %v2453
    %2828 = vmatmul.mubr.bf16.gmra.mxu0 %v2452
    %v2829 = vpop.f32.mrf.mxu0
    %v2830 = vadd.f32 %v2765, %v2829
    %v2831 = vpop.f32.mrf.mxu0
    %v2832 = vpop.f32.mrf.mxu0
    %v2833 = vadd.f32 %v2768, %v2832
    %v2834 = vpop.f32.mrf.mxu0
    %2835 = vmatprep.mubr.bf16.mxu0 %v2457
    %2836 = vmatmul.mubr.bf16.gmra.mxu0 %v2456
    %v2837 = vpop.f32.mrf.mxu0
    %v2838 = vadd.f32 %v2773, %v2837
    %v2839 = vpop.f32.mrf.mxu0
    %v2840 = vpop.f32.mrf.mxu0
    %v2841 = vadd.f32 %v2776, %v2840
    %v2842 = vpop.f32.mrf.mxu0
    %2843 = vdwg.mxu0
    %v2844 = vpack.c.bf16 %v2817, %v2814
    %v2845 = vpack.c.bf16 %v2825, %v2822
    %v2846 = vpack.c.bf16 %v2833, %v2830
    %v2847 = vpack.c.bf16 %v2841, %v2838
    %v2852 = vunpack.c.l.b16 %v2844
    %v2853 = vunpack.c.h.b16 %v2844
    %v2854 = vunpack.c.l.b16 %v2845
    %v2855 = vunpack.c.h.b16 %v2845
    %v2856 = vunpack.c.l.b16 %v2846
    %v2857 = vunpack.c.h.b16 %v2846
    %v2858 = vunpack.c.l.b16 %v2847
    %v2859 = vunpack.c.h.b16 %v2847
    %v2860 = vpack.c.b16 %v2852, %v2852
    %v2861 = vpack.c.b16 %v2853, %v2853
    %v2862 = vpack.c.b16 %v2854, %v2854
    %v2863 = vpack.c.b16 %v2855, %v2855
    %v2864 = vpack.c.b16 %v2856, %v2856
    %v2865 = vpack.c.b16 %v2857, %v2857
    %v2866 = vpack.c.b16 %v2858, %v2858
    %v2867 = vpack.c.b16 %v2859, %v2859
    %vm2876 = vcmask 519168
    %2877 = vst.msk [vmem:[%s6] sm:$0xf] %vm2876, %v2860
    %2878 = vst.msk [vmem:[%s6 + $0x4] sm:$0xf] %vm2876, %v2861
    %2879 = vst.msk [vmem:[%s6 + $0x8] sm:$0xf] %vm2876, %v2862
    %2880 = vst.msk [vmem:[%s6 + $0xc] sm:$0xf] %vm2876, %v2863
    %2881 = vst.msk [vmem:[%s6 + $0x10] sm:$0xf] %vm2876, %v2864
    %2882 = vst.msk [vmem:[%s6 + $0x14] sm:$0xf] %vm2876, %v2865
    %2883 = vst.msk [vmem:[%s6 + $0x18] sm:$0xf] %vm2876, %v2866
    %2884 = vst.msk [vmem:[%s6 + $0x1c] sm:$0xf] %vm2876, %v2867
    // Predicated region
    $region34: #{eeg_image_vae_forward.2} parent=1 // pred_check
      _
    $region35: #{eeg_image_vae_forward.2} parent=1 // pred_check_branch
      %2886 = sbr.rel (0) target = $region37
    $region36: #{eeg_image_vae_forward.2} parent=1 // pred_region
      _
    $region37: #{eeg_image_vae_forward.2} parent=1 // pred_fallthru
      _
    // Predicated region
    $region38: #{eeg_image_vae_forward.2} parent=1 // pred_check
      _
    $region39: #{eeg_image_vae_forward.2} parent=1 // pred_check_branch
      %2888 = sbr.rel (0) target = $region41
    $region40: #{eeg_image_vae_forward.2} parent=1 // pred_region
      _
    $region41: #{eeg_image_vae_forward.2} parent=1 // pred_fallthru
      _
    %2889 = vsyncpa [#allocation3], 1
    %2890 = vsyncpa [#allocation5], 1

// kernel: eeg_image_vae_forward.3
$region0: #{eeg_image_vae_forward.3}
  #allocation0 [shape = 'u32[]', space=smem, size = 0x4, offset = 0x4, fixed_abs, tag = 'smem constant byte address 0x4 - core index']
  #allocation1 [shape = 'u32[144,128]{1,0:T(1,128)}', space=vmem, size = 0x12000, scoped, tag = 'internal scratch']
  %s0 = inlined_call_operand.vmem [shape: bf16[8,2048], index: 0, kind: input, shape index: {}]
  %s1 = inlined_call_operand.vmem [shape: f32[8,128], index: 1, kind: input, shape index: {}]
  %s2 = inlined_call_operand.vmem [shape: bf16[2048,512], index: 2, kind: input, shape index: {}]
  %s3 = inlined_call_operand.vmem [shape: f32[1,512], index: 3, kind: input, shape index: {}]
  %s4 = inlined_call_operand.vmem [shape: bf16[512,128], index: 4, kind: input, shape index: {}]
  %s5 = inlined_call_operand.vmem [shape: f32[1,128], index: 5, kind: input, shape index: {}]
  %s6 = inlined_call_operand.hbm [shape: bf16[512,128], index: 6, kind: input, shape index: {}]
  %s7 = inlined_call_operand.vmem [shape: f32[1,128], index: 7, kind: input, shape index: {}]
  %s8 = inlined_call_operand.hbm [shape: bf16[128,512], index: 8, kind: input, shape index: {}]
  %s9 = inlined_call_operand.vmem [shape: f32[1,512], index: 9, kind: input, shape index: {}]
  %s10 = inlined_call_operand.hbm [shape: bf16[512,1024], index: 10, kind: input, shape index: {}]
  %s11 = inlined_call_operand.vmem [shape: f32[1,1024], index: 11, kind: input, shape index: {}]
  %s12 = inlined_call_operand.hbm [shape: bf16[1024,896], index: 12, kind: input, shape index: {}]
  %s13 = inlined_call_operand.vmem [shape: f32[1,896], index: 13, kind: input, shape index: {}]
  %s14 = inlined_call_operand.vmem [shape: f32[8,128], index: 14, kind: output, shape index: {0}]
  %s15 = inlined_call_operand.vmem [shape: f32[8,128], index: 15, kind: output, shape index: {1}]
  %s16 = inlined_call_operand.vmem [shape: f32[8,896], index: 16, kind: output, shape index: {2}]
  %17 = xla_tuple %s14, %s15, %s16
  %s18 = sld [smem:[#allocation0]]
  $region98: #{eeg_image_vae_forward.3} parent=0
    _
  %s20 = ssub.s32 1, %s18
  %s21 = scalar_select 0, %s20, %s18
  $region1: #{eeg_image_vae_forward.3} parent=0
    #allocation2 [shape = 'u8[131072]{0}', space=vmem, size = 0x20000, scoped, tag = 'input window, operand 6, single buffered']
    #allocation3 [shape = 's32[1]{0}', space=sflag, size = 0x4, scoped, tag = 'scoped memory for eeg_image_vae_forward.3']
    #allocation4 [shape = 'u8[131072]{0}', space=vmem, size = 0x20000, scoped, tag = 'input window, operand 8, single buffered']
    #allocation5 [shape = 's32[1]{0}', space=sflag, size = 0x4, scoped, tag = 'scoped memory for eeg_image_vae_forward.3']
    #allocation6 [shape = 'u8[1048576]{0}', space=vmem, size = 0x100000, scoped, tag = 'input window, operand 10, single buffered']
    #allocation7 [shape = 'u8[1835008]{0}', space=vmem, size = 0x1c0000, scoped, tag = 'input window, operand 12, single buffered']
    #allocation8 [shape = 's32[1]{0}', space=sflag, size = 0x4, scoped, tag = 'scoped memory for eeg_image_vae_forward.3']
    %22 = vsyncpa [#allocation3], 0
    %23 = vsyncpa [#allocation5], 0
    %24 = vsyncpa [#allocation8], 0
    // Predicated region
    $region2: #{eeg_image_vae_forward.3} parent=1 // pred_check
      _
    $region3: #{eeg_image_vae_forward.3} parent=1 // pred_check_branch
      %26 = sbr.rel (0) target = $region5
    $region4: #{eeg_image_vae_forward.3} parent=1 // pred_region
      _
    $region5: #{eeg_image_vae_forward.3} parent=1 // pred_fallthru
      _
    // Predicated region
    $region6: #{eeg_image_vae_forward.3} parent=1 // pred_check
      _
    $region7: #{eeg_image_vae_forward.3} parent=1 // pred_check_branch
      %28 = sbr.rel (0) target = $region9
    $region8: #{eeg_image_vae_forward.3} parent=1 // pred_region
      _
    $region9: #{eeg_image_vae_forward.3} parent=1 // pred_fallthru
      _
    // Predicated region
    $region10: #{eeg_image_vae_forward.3} parent=1 // pred_check
      _
    $region11: #{eeg_image_vae_forward.3} parent=1 // pred_check_branch
      %30 = sbr.rel (0) target = $region13
    $region12: #{eeg_image_vae_forward.3} parent=1 // pred_region
      _
    $region13: #{eeg_image_vae_forward.3} parent=1 // pred_fallthru
      _
    // Predicated region
    $region14: #{eeg_image_vae_forward.3} parent=1 // pred_check
      _
    $region15: #{eeg_image_vae_forward.3} parent=1 // pred_check_branch
      %32 = sbr.rel (0) target = $region17
    $region16: #{eeg_image_vae_forward.3} parent=1 // pred_region
      _
    $region17: #{eeg_image_vae_forward.3} parent=1 // pred_fallthru
      _
    // Predicated region
    $region18: #{eeg_image_vae_forward.3} parent=1 // pred_check
      _
    $region19: #{eeg_image_vae_forward.3} parent=1 // pred_check_branch
      %34 = sbr.rel (0) target = $region21
    $region20: #{eeg_image_vae_forward.3} parent=1 // pred_region
      _
    $region21: #{eeg_image_vae_forward.3} parent=1 // pred_fallthru
      _
    // Predicated region
    $region22: #{eeg_image_vae_forward.3} parent=1 // pred_check
      _
    $region23: #{eeg_image_vae_forward.3} parent=1 // pred_check_branch
      %36 = sbr.rel (0) target = $region25
    $region24: #{eeg_image_vae_forward.3} parent=1 // pred_region
      _
    $region25: #{eeg_image_vae_forward.3} parent=1 // pred_fallthru
      _
    // Predicated region
    $region26: #{eeg_image_vae_forward.3} parent=1 // pred_check
      _
    $region27: #{eeg_image_vae_forward.3} parent=1 // pred_check_branch
      %38 = sbr.rel (0) target = $region29
    $region28: #{eeg_image_vae_forward.3} parent=1 // pred_region
      %s40 = ssub.s32 4096, 4096
      %41 = vsyncadd [#allocation3], %s40
      %s42 = sshll.u32 [#allocation2], 4
      %s43 = int_to_ptr.vmem [resolvable:$true] %s42
      %48 = dma.hbm_to_vmem [thread:$0]  %s6, 4096, %s43, [#allocation3], 64, 64, 4
    $region29: #{eeg_image_vae_forward.3} parent=1 // pred_fallthru
      _
    // Predicated region
    $region30: #{eeg_image_vae_forward.3} parent=1 // pred_check
      _
    $region31: #{eeg_image_vae_forward.3} parent=1 // pred_check_branch
      %50 = sbr.rel (0) target = $region33
    $region32: #{eeg_image_vae_forward.3} parent=1 // pred_region
      _
    $region33: #{eeg_image_vae_forward.3} parent=1 // pred_fallthru
      _
    // Predicated region
    $region34: #{eeg_image_vae_forward.3} parent=1 // pred_check
      _
    $region35: #{eeg_image_vae_forward.3} parent=1 // pred_check_branch
      %52 = sbr.rel (0) target = $region37
    $region36: #{eeg_image_vae_forward.3} parent=1 // pred_region
      %s54 = ssub.s32 4096, 4096
      %55 = vsyncadd [#allocation5], %s54
      %s56 = sshll.u32 [#allocation4], 4
      %s57 = int_to_ptr.vmem [resolvable:$true] %s56
      %62 = dma.hbm_to_vmem [thread:$0]  %s8, 4096, %s57, [#allocation5], 256, 256, 16
    $region37: #{eeg_image_vae_forward.3} parent=1 // pred_fallthru
      _
    // Predicated region
    $region38: #{eeg_image_vae_forward.3} parent=1 // pred_check
      _
    $region39: #{eeg_image_vae_forward.3} parent=1 // pred_check_branch
      %64 = sbr.rel (0) target = $region41
    $region40: #{eeg_image_vae_forward.3} parent=1 // pred_region
      _
    $region41: #{eeg_image_vae_forward.3} parent=1 // pred_fallthru
      _
    // Predicated region
    $region42: #{eeg_image_vae_forward.3} parent=1 // pred_check
      _
    $region43: #{eeg_image_vae_forward.3} parent=1 // pred_check_branch
      %66 = sbr.rel (0) target = $region45
    $region44: #{eeg_image_vae_forward.3} parent=1 // pred_region
      %s68 = ssub.s32 32768, 32768
      %69 = vsyncadd [#allocation5], %s68
      %s70 = sshll.u32 [#allocation6], 4
      %s71 = int_to_ptr.vmem [resolvable:$true] %s70
      %76 = dma.hbm_to_vmem [thread:$0]  %s10, 32768, %s71, [#allocation5], 512, 512, 32
    $region45: #{eeg_image_vae_forward.3} parent=1 // pred_fallthru
      _
    // Predicated region
    $region46: #{eeg_image_vae_forward.3} parent=1 // pred_check
      _
    $region47: #{eeg_image_vae_forward.3} parent=1 // pred_check_branch
      %78 = sbr.rel (0) target = $region49
    $region48: #{eeg_image_vae_forward.3} parent=1 // pred_region
      _
    $region49: #{eeg_image_vae_forward.3} parent=1 // pred_fallthru
      _
    // Predicated region
    $region50: #{eeg_image_vae_forward.3} parent=1 // pred_check
      _
    $region51: #{eeg_image_vae_forward.3} parent=1 // pred_check_branch
      %80 = sbr.rel (0) target = $region53
    $region52: #{eeg_image_vae_forward.3} parent=1 // pred_region
      %s82 = ssub.s32 57344, 57344
      %83 = vsyncadd [#allocation8], %s82
      %s84 = sshll.u32 [#allocation7], 4
      %s85 = int_to_ptr.vmem [resolvable:$true] %s84
      %90 = dma.hbm_to_vmem [thread:$0]  %s12, 57344, %s85, [#allocation8], 448, 448, 28
    $region53: #{eeg_image_vae_forward.3} parent=1 // pred_fallthru
      _
    // Predicated region
    $region54: #{eeg_image_vae_forward.3} parent=1 // pred_check
      _
    $region55: #{eeg_image_vae_forward.3} parent=1 // pred_check_branch
      %92 = sbr.rel (0) target = $region57
    $region56: #{eeg_image_vae_forward.3} parent=1 // pred_region
      _
    $region57: #{eeg_image_vae_forward.3} parent=1 // pred_fallthru
      _
    // Predicated region
    $region58: #{eeg_image_vae_forward.3} parent=1 // pred_check
      _
    $region59: #{eeg_image_vae_forward.3} parent=1 // pred_check_branch
      %94 = sbr.rel (0) target = $region61
    $region60: #{eeg_image_vae_forward.3} parent=1 // pred_region
      %95 = dma.done [#allocation3], 4096
    $region61: #{eeg_image_vae_forward.3} parent=1 // pred_fallthru
      _
    // Predicated region
    $region62: #{eeg_image_vae_forward.3} parent=1 // pred_check
      _
    $region63: #{eeg_image_vae_forward.3} parent=1 // pred_check_branch
      %97 = sbr.rel (0) target = $region65
    $region64: #{eeg_image_vae_forward.3} parent=1 // pred_region
      %98 = dma.done [#allocation5], 4096
    $region65: #{eeg_image_vae_forward.3} parent=1 // pred_fallthru
      _
    // Predicated region
    $region66: #{eeg_image_vae_forward.3} parent=1 // pred_check
      _
    $region67: #{eeg_image_vae_forward.3} parent=1 // pred_check_branch
      %100 = sbr.rel (0) target = $region69
    $region68: #{eeg_image_vae_forward.3} parent=1 // pred_region
      %101 = dma.done [#allocation5], 32768
    $region69: #{eeg_image_vae_forward.3} parent=1 // pred_fallthru
      _
    // Predicated region
    $region70: #{eeg_image_vae_forward.3} parent=1 // pred_check
      _
    $region71: #{eeg_image_vae_forward.3} parent=1 // pred_check_branch
      %103 = sbr.rel (0) target = $region73
    $region72: #{eeg_image_vae_forward.3} parent=1 // pred_region
      %104 = dma.done [#allocation8], 57344
    $region73: #{eeg_image_vae_forward.3} parent=1 // pred_fallthru
      _
    %v106 = vld [vmem:[%s0] sm:$0xff]
    %v107 = vld [vmem:[%s0 + $0x8] sm:$0xff]
    %v108 = vld [vmem:[%s0 + $0x10] sm:$0xff]
    %v109 = vld [vmem:[%s0 + $0x18] sm:$0xff]
    %v110 = vld [vmem:[%s0 + $0x20] sm:$0xff]
    %v111 = vld [vmem:[%s0 + $0x28] sm:$0xff]
    %v112 = vld [vmem:[%s0 + $0x30] sm:$0xff]
    %v113 = vld [vmem:[%s0 + $0x38] sm:$0xff]
    %v114 = vld [vmem:[%s2] sm:$0xff]
    %v115 = vld [vmem:[%s2 + $0x8] sm:$0xff]
    %v116 = vld [vmem:[%s2 + $0x10] sm:$0xff]
    %v117 = vld [vmem:[%s2 + $0x18] sm:$0xff]
    %v118 = vld [vmem:[%s2 + $0x20] sm:$0xff]
    %v119 = vld [vmem:[%s2 + $0x28] sm:$0xff]
    %v120 = vld [vmem:[%s2 + $0x30] sm:$0xff]
    %v121 = vld [vmem:[%s2 + $0x38] sm:$0xff]
    %v122 = vld [vmem:[%s2 + $0x40] sm:$0xff]
    %v123 = vld [vmem:[%s2 + $0x48] sm:$0xff]
    %v124 = vld [vmem:[%s2 + $0x50] sm:$0xff]
    %v125 = vld [vmem:[%s2 + $0x58] sm:$0xff]
    %v126 = vld [vmem:[%s2 + $0x60] sm:$0xff]
    %v127 = vld [vmem:[%s2 + $0x68] sm:$0xff]
    %v128 = vld [vmem:[%s2 + $0x70] sm:$0xff]
    %v129 = vld [vmem:[%s2 + $0x78] sm:$0xff]
    %v130 = vld [vmem:[%s2 + $0x80] sm:$0xff]
    %v131 = vld [vmem:[%s2 + $0x88] sm:$0xff]
    %v132 = vld [vmem:[%s2 + $0x90] sm:$0xff]
    %v133 = vld [vmem:[%s2 + $0x98] sm:$0xff]
    %v134 = vld [vmem:[%s2 + $0xa0] sm:$0xff]
    %v135 = vld [vmem:[%s2 + $0xa8] sm:$0xff]
    %v136 = vld [vmem:[%s2 + $0xb0] sm:$0xff]
    %v137 = vld [vmem:[%s2 + $0xb8] sm:$0xff]
    %v138 = vld [vmem:[%s2 + $0xc0] sm:$0xff]
    %v139 = vld [vmem:[%s2 + $0xc8] sm:$0xff]
    %v140 = vld [vmem:[%s2 + $0xd0] sm:$0xff]
    %v141 = vld [vmem:[%s2 + $0xd8] sm:$0xff]
    %v142 = vld [vmem:[%s2 + $0xe0] sm:$0xff]
    %v143 = vld [vmem:[%s2 + $0xe8] sm:$0xff]
    %v144 = vld [vmem:[%s2 + $0xf0] sm:$0xff]
    %v145 = vld [vmem:[%s2 + $0xf8] sm:$0xff]
    %v146 = vld [vmem:[%s2 + $0x100] sm:$0xff]
    %v147 = vld [vmem:[%s2 + $0x108] sm:$0xff]
    %v148 = vld [vmem:[%s2 + $0x110] sm:$0xff]
    %v149 = vld [vmem:[%s2 + $0x118] sm:$0xff]
    %v150 = vld [vmem:[%s2 + $0x120] sm:$0xff]
    %v151 = vld [vmem:[%s2 + $0x128] sm:$0xff]
    %v152 = vld [vmem:[%s2 + $0x130] sm:$0xff]
    %v153 = vld [vmem:[%s2 + $0x138] sm:$0xff]
    %v154 = vld [vmem:[%s2 + $0x140] sm:$0xff]
    %v155 = vld [vmem:[%s2 + $0x148] sm:$0xff]
    %v156 = vld [vmem:[%s2 + $0x150] sm:$0xff]
    %v157 = vld [vmem:[%s2 + $0x158] sm:$0xff]
    %v158 = vld [vmem:[%s2 + $0x160] sm:$0xff]
    %v159 = vld [vmem:[%s2 + $0x168] sm:$0xff]
    %v160 = vld [vmem:[%s2 + $0x170] sm:$0xff]
    %v161 = vld [vmem:[%s2 + $0x178] sm:$0xff]
    %v162 = vld [vmem:[%s2 + $0x180] sm:$0xff]
    %v163 = vld [vmem:[%s2 + $0x188] sm:$0xff]
    %v164 = vld [vmem:[%s2 + $0x190] sm:$0xff]
    %v165 = vld [vmem:[%s2 + $0x198] sm:$0xff]
    %v166 = vld [vmem:[%s2 + $0x1a0] sm:$0xff]
    %v167 = vld [vmem:[%s2 + $0x1a8] sm:$0xff]
    %v168 = vld [vmem:[%s2 + $0x1b0] sm:$0xff]
    %v169 = vld [vmem:[%s2 + $0x1b8] sm:$0xff]
    %v170 = vld [vmem:[%s2 + $0x1c0] sm:$0xff]
    %v171 = vld [vmem:[%s2 + $0x1c8] sm:$0xff]
    %v172 = vld [vmem:[%s2 + $0x1d0] sm:$0xff]
    %v173 = vld [vmem:[%s2 + $0x1d8] sm:$0xff]
    %v174 = vld [vmem:[%s2 + $0x1e0] sm:$0xff]
    %v175 = vld [vmem:[%s2 + $0x1e8] sm:$0xff]
    %v176 = vld [vmem:[%s2 + $0x1f0] sm:$0xff]
    %v177 = vld [vmem:[%s2 + $0x1f8] sm:$0xff]
    %v178 = vld [vmem:[%s2 + $0x200] sm:$0xff]
    %v179 = vld [vmem:[%s2 + $0x208] sm:$0xff]
    %v180 = vld [vmem:[%s2 + $0x210] sm:$0xff]
    %v181 = vld [vmem:[%s2 + $0x218] sm:$0xff]
    %v182 = vld [vmem:[%s2 + $0x220] sm:$0xff]
    %v183 = vld [vmem:[%s2 + $0x228] sm:$0xff]
    %v184 = vld [vmem:[%s2 + $0x230] sm:$0xff]
    %v185 = vld [vmem:[%s2 + $0x238] sm:$0xff]
    %v186 = vld [vmem:[%s2 + $0x240] sm:$0xff]
    %v187 = vld [vmem:[%s2 + $0x248] sm:$0xff]
    %v188 = vld [vmem:[%s2 + $0x250] sm:$0xff]
    %v189 = vld [vmem:[%s2 + $0x258] sm:$0xff]
    %v190 = vld [vmem:[%s2 + $0x260] sm:$0xff]
    %v191 = vld [vmem:[%s2 + $0x268] sm:$0xff]
    %v192 = vld [vmem:[%s2 + $0x270] sm:$0xff]
    %v193 = vld [vmem:[%s2 + $0x278] sm:$0xff]
    %v194 = vld [vmem:[%s2 + $0x280] sm:$0xff]
    %v195 = vld [vmem:[%s2 + $0x288] sm:$0xff]
    %v196 = vld [vmem:[%s2 + $0x290] sm:$0xff]
    %v197 = vld [vmem:[%s2 + $0x298] sm:$0xff]
    %v198 = vld [vmem:[%s2 + $0x2a0] sm:$0xff]
    %v199 = vld [vmem:[%s2 + $0x2a8] sm:$0xff]
    %v200 = vld [vmem:[%s2 + $0x2b0] sm:$0xff]
    %v201 = vld [vmem:[%s2 + $0x2b8] sm:$0xff]
    %v202 = vld [vmem:[%s2 + $0x2c0] sm:$0xff]
    %v203 = vld [vmem:[%s2 + $0x2c8] sm:$0xff]
    %v204 = vld [vmem:[%s2 + $0x2d0] sm:$0xff]
    %v205 = vld [vmem:[%s2 + $0x2d8] sm:$0xff]
    %v206 = vld [vmem:[%s2 + $0x2e0] sm:$0xff]
    %v207 = vld [vmem:[%s2 + $0x2e8] sm:$0xff]
    %v208 = vld [vmem:[%s2 + $0x2f0] sm:$0xff]
    %v209 = vld [vmem:[%s2 + $0x2f8] sm:$0xff]
    %v210 = vld [vmem:[%s2 + $0x300] sm:$0xff]
    %v211 = vld [vmem:[%s2 + $0x308] sm:$0xff]
    %v212 = vld [vmem:[%s2 + $0x310] sm:$0xff]
    %v213 = vld [vmem:[%s2 + $0x318] sm:$0xff]
    %v214 = vld [vmem:[%s2 + $0x320] sm:$0xff]
    %v215 = vld [vmem:[%s2 + $0x328] sm:$0xff]
    %v216 = vld [vmem:[%s2 + $0x330] sm:$0xff]
    %v217 = vld [vmem:[%s2 + $0x338] sm:$0xff]
    %v218 = vld [vmem:[%s2 + $0x340] sm:$0xff]
    %v219 = vld [vmem:[%s2 + $0x348] sm:$0xff]
    %v220 = vld [vmem:[%s2 + $0x350] sm:$0xff]
    %v221 = vld [vmem:[%s2 + $0x358] sm:$0xff]
    %v222 = vld [vmem:[%s2 + $0x360] sm:$0xff]
    %v223 = vld [vmem:[%s2 + $0x368] sm:$0xff]
    %v224 = vld [vmem:[%s2 + $0x370] sm:$0xff]
    %v225 = vld [vmem:[%s2 + $0x378] sm:$0xff]
    %v226 = vld [vmem:[%s2 + $0x380] sm:$0xff]
    %v227 = vld [vmem:[%s2 + $0x388] sm:$0xff]
    %v228 = vld [vmem:[%s2 + $0x390] sm:$0xff]
    %v229 = vld [vmem:[%s2 + $0x398] sm:$0xff]
    %v230 = vld [vmem:[%s2 + $0x3a0] sm:$0xff]
    %v231 = vld [vmem:[%s2 + $0x3a8] sm:$0xff]
    %v232 = vld [vmem:[%s2 + $0x3b0] sm:$0xff]
    %v233 = vld [vmem:[%s2 + $0x3b8] sm:$0xff]
    %v234 = vld [vmem:[%s2 + $0x3c0] sm:$0xff]
    %v235 = vld [vmem:[%s2 + $0x3c8] sm:$0xff]
    %v236 = vld [vmem:[%s2 + $0x3d0] sm:$0xff]
    %v237 = vld [vmem:[%s2 + $0x3d8] sm:$0xff]
    %v238 = vld [vmem:[%s2 + $0x3e0] sm:$0xff]
    %v239 = vld [vmem:[%s2 + $0x3e8] sm:$0xff]
    %v240 = vld [vmem:[%s2 + $0x3f0] sm:$0xff]
    %v241 = vld [vmem:[%s2 + $0x3f8] sm:$0xff]
    %v242 = vld [vmem:[%s2 + $0x400] sm:$0xff]
    %v243 = vld [vmem:[%s2 + $0x408] sm:$0xff]
    %v244 = vld [vmem:[%s2 + $0x410] sm:$0xff]
    %v245 = vld [vmem:[%s2 + $0x418] sm:$0xff]
    %v246 = vld [vmem:[%s2 + $0x420] sm:$0xff]
    %v247 = vld [vmem:[%s2 + $0x428] sm:$0xff]
    %v248 = vld [vmem:[%s2 + $0x430] sm:$0xff]
    %v249 = vld [vmem:[%s2 + $0x438] sm:$0xff]
    %v250 = vld [vmem:[%s2 + $0x440] sm:$0xff]
    %v251 = vld [vmem:[%s2 + $0x448] sm:$0xff]
    %v252 = vld [vmem:[%s2 + $0x450] sm:$0xff]
    %v253 = vld [vmem:[%s2 + $0x458] sm:$0xff]
    %v254 = vld [vmem:[%s2 + $0x460] sm:$0xff]
    %v255 = vld [vmem:[%s2 + $0x468] sm:$0xff]
    %v256 = vld [vmem:[%s2 + $0x470] sm:$0xff]
    %v257 = vld [vmem:[%s2 + $0x478] sm:$0xff]
    %v258 = vld [vmem:[%s2 + $0x480] sm:$0xff]
    %v259 = vld [vmem:[%s2 + $0x488] sm:$0xff]
    %v260 = vld [vmem:[%s2 + $0x490] sm:$0xff]
    %v261 = vld [vmem:[%s2 + $0x498] sm:$0xff]
    %v262 = vld [vmem:[%s2 + $0x4a0] sm:$0xff]
    %v263 = vld [vmem:[%s2 + $0x4a8] sm:$0xff]
    %v264 = vld [vmem:[%s2 + $0x4b0] sm:$0xff]
    %v265 = vld [vmem:[%s2 + $0x4b8] sm:$0xff]
    %v266 = vld [vmem:[%s2 + $0x4c0] sm:$0xff]
    %v267 = vld [vmem:[%s2 + $0x4c8] sm:$0xff]
    %v268 = vld [vmem:[%s2 + $0x4d0] sm:$0xff]
    %v269 = vld [vmem:[%s2 + $0x4d8] sm:$0xff]
    %v270 = vld [vmem:[%s2 + $0x4e0] sm:$0xff]
    %v271 = vld [vmem:[%s2 + $0x4e8] sm:$0xff]
    %v272 = vld [vmem:[%s2 + $0x4f0] sm:$0xff]
    %v273 = vld [vmem:[%s2 + $0x4f8] sm:$0xff]
    %v274 = vld [vmem:[%s2 + $0x500] sm:$0xff]
    %v275 = vld [vmem:[%s2 + $0x508] sm:$0xff]
    %v276 = vld [vmem:[%s2 + $0x510] sm:$0xff]
    %v277 = vld [vmem:[%s2 + $0x518] sm:$0xff]
    %v278 = vld [vmem:[%s2 + $0x520] sm:$0xff]
    %v279 = vld [vmem:[%s2 + $0x528] sm:$0xff]
    %v280 = vld [vmem:[%s2 + $0x530] sm:$0xff]
    %v281 = vld [vmem:[%s2 + $0x538] sm:$0xff]
    %v282 = vld [vmem:[%s2 + $0x540] sm:$0xff]
    %v283 = vld [vmem:[%s2 + $0x548] sm:$0xff]
    %v284 = vld [vmem:[%s2 + $0x550] sm:$0xff]
    %v285 = vld [vmem:[%s2 + $0x558] sm:$0xff]
    %v286 = vld [vmem:[%s2 + $0x560] sm:$0xff]
    %v287 = vld [vmem:[%s2 + $0x568] sm:$0xff]
    %v288 = vld [vmem:[%s2 + $0x570] sm:$0xff]
    %v289 = vld [vmem:[%s2 + $0x578] sm:$0xff]
    %v290 = vld [vmem:[%s2 + $0x580] sm:$0xff]
    %v291 = vld [vmem:[%s2 + $0x588] sm:$0xff]
    %v292 = vld [vmem:[%s2 + $0x590] sm:$0xff]
    %v293 = vld [vmem:[%s2 + $0x598] sm:$0xff]
    %v294 = vld [vmem:[%s2 + $0x5a0] sm:$0xff]
    %v295 = vld [vmem:[%s2 + $0x5a8] sm:$0xff]
    %v296 = vld [vmem:[%s2 + $0x5b0] sm:$0xff]
    %v297 = vld [vmem:[%s2 + $0x5b8] sm:$0xff]
    %v298 = vld [vmem:[%s2 + $0x5c0] sm:$0xff]
    %v299 = vld [vmem:[%s2 + $0x5c8] sm:$0xff]
    %v300 = vld [vmem:[%s2 + $0x5d0] sm:$0xff]
    %v301 = vld [vmem:[%s2 + $0x5d8] sm:$0xff]
    %v302 = vld [vmem:[%s2 + $0x5e0] sm:$0xff]
    %v303 = vld [vmem:[%s2 + $0x5e8] sm:$0xff]
    %v304 = vld [vmem:[%s2 + $0x5f0] sm:$0xff]
    %v305 = vld [vmem:[%s2 + $0x5f8] sm:$0xff]
    %v306 = vld [vmem:[%s2 + $0x600] sm:$0xff]
    %v307 = vld [vmem:[%s2 + $0x608] sm:$0xff]
    %v308 = vld [vmem:[%s2 + $0x610] sm:$0xff]
    %v309 = vld [vmem:[%s2 + $0x618] sm:$0xff]
    %v310 = vld [vmem:[%s2 + $0x620] sm:$0xff]
    %v311 = vld [vmem:[%s2 + $0x628] sm:$0xff]
    %v312 = vld [vmem:[%s2 + $0x630] sm:$0xff]
    %v313 = vld [vmem:[%s2 + $0x638] sm:$0xff]
    %v314 = vld [vmem:[%s2 + $0x640] sm:$0xff]
    %v315 = vld [vmem:[%s2 + $0x648] sm:$0xff]
    %v316 = vld [vmem:[%s2 + $0x650] sm:$0xff]
    %v317 = vld [vmem:[%s2 + $0x658] sm:$0xff]
    %v318 = vld [vmem:[%s2 + $0x660] sm:$0xff]
    %v319 = vld [vmem:[%s2 + $0x668] sm:$0xff]
    %v320 = vld [vmem:[%s2 + $0x670] sm:$0xff]
    %v321 = vld [vmem:[%s2 + $0x678] sm:$0xff]
    %v322 = vld [vmem:[%s2 + $0x680] sm:$0xff]
    %v323 = vld [vmem:[%s2 + $0x688] sm:$0xff]
    %v324 = vld [vmem:[%s2 + $0x690] sm:$0xff]
    %v325 = vld [vmem:[%s2 + $0x698] sm:$0xff]
    %v326 = vld [vmem:[%s2 + $0x6a0] sm:$0xff]
    %v327 = vld [vmem:[%s2 + $0x6a8] sm:$0xff]
    %v328 = vld [vmem:[%s2 + $0x6b0] sm:$0xff]
    %v329 = vld [vmem:[%s2 + $0x6b8] sm:$0xff]
    %v330 = vld [vmem:[%s2 + $0x6c0] sm:$0xff]
    %v331 = vld [vmem:[%s2 + $0x6c8] sm:$0xff]
    %v332 = vld [vmem:[%s2 + $0x6d0] sm:$0xff]
    %v333 = vld [vmem:[%s2 + $0x6d8] sm:$0xff]
    %v334 = vld [vmem:[%s2 + $0x6e0] sm:$0xff]
    %v335 = vld [vmem:[%s2 + $0x6e8] sm:$0xff]
    %v336 = vld [vmem:[%s2 + $0x6f0] sm:$0xff]
    %v337 = vld [vmem:[%s2 + $0x6f8] sm:$0xff]
    %v338 = vld [vmem:[%s2 + $0x700] sm:$0xff]
    %v339 = vld [vmem:[%s2 + $0x708] sm:$0xff]
    %v340 = vld [vmem:[%s2 + $0x710] sm:$0xff]
    %v341 = vld [vmem:[%s2 + $0x718] sm:$0xff]
    %v342 = vld [vmem:[%s2 + $0x720] sm:$0xff]
    %v343 = vld [vmem:[%s2 + $0x728] sm:$0xff]
    %v344 = vld [vmem:[%s2 + $0x730] sm:$0xff]
    %v345 = vld [vmem:[%s2 + $0x738] sm:$0xff]
    %v346 = vld [vmem:[%s2 + $0x740] sm:$0xff]
    %v347 = vld [vmem:[%s2 + $0x748] sm:$0xff]
    %v348 = vld [vmem:[%s2 + $0x750] sm:$0xff]
    %v349 = vld [vmem:[%s2 + $0x758] sm:$0xff]
    %v350 = vld [vmem:[%s2 + $0x760] sm:$0xff]
    %v351 = vld [vmem:[%s2 + $0x768] sm:$0xff]
    %v352 = vld [vmem:[%s2 + $0x770] sm:$0xff]
    %v353 = vld [vmem:[%s2 + $0x778] sm:$0xff]
    %v354 = vld [vmem:[%s2 + $0x780] sm:$0xff]
    %v355 = vld [vmem:[%s2 + $0x788] sm:$0xff]
    %v356 = vld [vmem:[%s2 + $0x790] sm:$0xff]
    %v357 = vld [vmem:[%s2 + $0x798] sm:$0xff]
    %v358 = vld [vmem:[%s2 + $0x7a0] sm:$0xff]
    %v359 = vld [vmem:[%s2 + $0x7a8] sm:$0xff]
    %v360 = vld [vmem:[%s2 + $0x7b0] sm:$0xff]
    %v361 = vld [vmem:[%s2 + $0x7b8] sm:$0xff]
    %v362 = vld [vmem:[%s2 + $0x7c0] sm:$0xff]
    %v363 = vld [vmem:[%s2 + $0x7c8] sm:$0xff]
    %v364 = vld [vmem:[%s2 + $0x7d0] sm:$0xff]
    %v365 = vld [vmem:[%s2 + $0x7d8] sm:$0xff]
    %v366 = vld [vmem:[%s2 + $0x7e0] sm:$0xff]
    %v367 = vld [vmem:[%s2 + $0x7e8] sm:$0xff]
    %v368 = vld [vmem:[%s2 + $0x7f0] sm:$0xff]
    %v369 = vld [vmem:[%s2 + $0x7f8] sm:$0xff]
    %v370 = vld [vmem:[%s2 + $0x800] sm:$0xff]
    %v371 = vld [vmem:[%s2 + $0x808] sm:$0xff]
    %v372 = vld [vmem:[%s2 + $0x810] sm:$0xff]
    %v373 = vld [vmem:[%s2 + $0x818] sm:$0xff]
    %v374 = vld [vmem:[%s2 + $0x820] sm:$0xff]
    %v375 = vld [vmem:[%s2 + $0x828] sm:$0xff]
    %v376 = vld [vmem:[%s2 + $0x830] sm:$0xff]
    %v377 = vld [vmem:[%s2 + $0x838] sm:$0xff]
    %v378 = vld [vmem:[%s2 + $0x840] sm:$0xff]
    %v379 = vld [vmem:[%s2 + $0x848] sm:$0xff]
    %v380 = vld [vmem:[%s2 + $0x850] sm:$0xff]
    %v381 = vld [vmem:[%s2 + $0x858] sm:$0xff]
    %v382 = vld [vmem:[%s2 + $0x860] sm:$0xff]
    %v383 = vld [vmem:[%s2 + $0x868] sm:$0xff]
    %v384 = vld [vmem:[%s2 + $0x870] sm:$0xff]
    %v385 = vld [vmem:[%s2 + $0x878] sm:$0xff]
    %v386 = vld [vmem:[%s2 + $0x880] sm:$0xff]
    %v387 = vld [vmem:[%s2 + $0x888] sm:$0xff]
    %v388 = vld [vmem:[%s2 + $0x890] sm:$0xff]
    %v389 = vld [vmem:[%s2 + $0x898] sm:$0xff]
    %v390 = vld [vmem:[%s2 + $0x8a0] sm:$0xff]
    %v391 = vld [vmem:[%s2 + $0x8a8] sm:$0xff]
    %v392 = vld [vmem:[%s2 + $0x8b0] sm:$0xff]
    %v393 = vld [vmem:[%s2 + $0x8b8] sm:$0xff]
    %v394 = vld [vmem:[%s2 + $0x8c0] sm:$0xff]
    %v395 = vld [vmem:[%s2 + $0x8c8] sm:$0xff]
    %v396 = vld [vmem:[%s2 + $0x8d0] sm:$0xff]
    %v397 = vld [vmem:[%s2 + $0x8d8] sm:$0xff]
    %v398 = vld [vmem:[%s2 + $0x8e0] sm:$0xff]
    %v399 = vld [vmem:[%s2 + $0x8e8] sm:$0xff]
    %v400 = vld [vmem:[%s2 + $0x8f0] sm:$0xff]
    %v401 = vld [vmem:[%s2 + $0x8f8] sm:$0xff]
    %v402 = vld [vmem:[%s2 + $0x900] sm:$0xff]
    %v403 = vld [vmem:[%s2 + $0x908] sm:$0xff]
    %v404 = vld [vmem:[%s2 + $0x910] sm:$0xff]
    %v405 = vld [vmem:[%s2 + $0x918] sm:$0xff]
    %v406 = vld [vmem:[%s2 + $0x920] sm:$0xff]
    %v407 = vld [vmem:[%s2 + $0x928] sm:$0xff]
    %v408 = vld [vmem:[%s2 + $0x930] sm:$0xff]
    %v409 = vld [vmem:[%s2 + $0x938] sm:$0xff]
    %v410 = vld [vmem:[%s2 + $0x940] sm:$0xff]
    %v411 = vld [vmem:[%s2 + $0x948] sm:$0xff]
    %v412 = vld [vmem:[%s2 + $0x950] sm:$0xff]
    %v413 = vld [vmem:[%s2 + $0x958] sm:$0xff]
    %v414 = vld [vmem:[%s2 + $0x960] sm:$0xff]
    %v415 = vld [vmem:[%s2 + $0x968] sm:$0xff]
    %v416 = vld [vmem:[%s2 + $0x970] sm:$0xff]
    %v417 = vld [vmem:[%s2 + $0x978] sm:$0xff]
    %v418 = vld [vmem:[%s2 + $0x980] sm:$0xff]
    %v419 = vld [vmem:[%s2 + $0x988] sm:$0xff]
    %v420 = vld [vmem:[%s2 + $0x990] sm:$0xff]
    %v421 = vld [vmem:[%s2 + $0x998] sm:$0xff]
    %v422 = vld [vmem:[%s2 + $0x9a0] sm:$0xff]
    %v423 = vld [vmem:[%s2 + $0x9a8] sm:$0xff]
    %v424 = vld [vmem:[%s2 + $0x9b0] sm:$0xff]
    %v425 = vld [vmem:[%s2 + $0x9b8] sm:$0xff]
    %v426 = vld [vmem:[%s2 + $0x9c0] sm:$0xff]
    %v427 = vld [vmem:[%s2 + $0x9c8] sm:$0xff]
    %v428 = vld [vmem:[%s2 + $0x9d0] sm:$0xff]
    %v429 = vld [vmem:[%s2 + $0x9d8] sm:$0xff]
    %v430 = vld [vmem:[%s2 + $0x9e0] sm:$0xff]
    %v431 = vld [vmem:[%s2 + $0x9e8] sm:$0xff]
    %v432 = vld [vmem:[%s2 + $0x9f0] sm:$0xff]
    %v433 = vld [vmem:[%s2 + $0x9f8] sm:$0xff]
    %v434 = vld [vmem:[%s2 + $0xa00] sm:$0xff]
    %v435 = vld [vmem:[%s2 + $0xa08] sm:$0xff]
    %v436 = vld [vmem:[%s2 + $0xa10] sm:$0xff]
    %v437 = vld [vmem:[%s2 + $0xa18] sm:$0xff]
    %v438 = vld [vmem:[%s2 + $0xa20] sm:$0xff]
    %v439 = vld [vmem:[%s2 + $0xa28] sm:$0xff]
    %v440 = vld [vmem:[%s2 + $0xa30] sm:$0xff]
    %v441 = vld [vmem:[%s2 + $0xa38] sm:$0xff]
    %v442 = vld [vmem:[%s2 + $0xa40] sm:$0xff]
    %v443 = vld [vmem:[%s2 + $0xa48] sm:$0xff]
    %v444 = vld [vmem:[%s2 + $0xa50] sm:$0xff]
    %v445 = vld [vmem:[%s2 + $0xa58] sm:$0xff]
    %v446 = vld [vmem:[%s2 + $0xa60] sm:$0xff]
    %v447 = vld [vmem:[%s2 + $0xa68] sm:$0xff]
    %v448 = vld [vmem:[%s2 + $0xa70] sm:$0xff]
    %v449 = vld [vmem:[%s2 + $0xa78] sm:$0xff]
    %v450 = vld [vmem:[%s2 + $0xa80] sm:$0xff]
    %v451 = vld [vmem:[%s2 + $0xa88] sm:$0xff]
    %v452 = vld [vmem:[%s2 + $0xa90] sm:$0xff]
    %v453 = vld [vmem:[%s2 + $0xa98] sm:$0xff]
    %v454 = vld [vmem:[%s2 + $0xaa0] sm:$0xff]
    %v455 = vld [vmem:[%s2 + $0xaa8] sm:$0xff]
    %v456 = vld [vmem:[%s2 + $0xab0] sm:$0xff]
    %v457 = vld [vmem:[%s2 + $0xab8] sm:$0xff]
    %v458 = vld [vmem:[%s2 + $0xac0] sm:$0xff]
    %v459 = vld [vmem:[%s2 + $0xac8] sm:$0xff]
    %v460 = vld [vmem:[%s2 + $0xad0] sm:$0xff]
    %v461 = vld [vmem:[%s2 + $0xad8] sm:$0xff]
    %v462 = vld [vmem:[%s2 + $0xae0] sm:$0xff]
    %v463 = vld [vmem:[%s2 + $0xae8] sm:$0xff]
    %v464 = vld [vmem:[%s2 + $0xaf0] sm:$0xff]
    %v465 = vld [vmem:[%s2 + $0xaf8] sm:$0xff]
    %v466 = vld [vmem:[%s2 + $0xb00] sm:$0xff]
    %v467 = vld [vmem:[%s2 + $0xb08] sm:$0xff]
    %v468 = vld [vmem:[%s2 + $0xb10] sm:$0xff]
    %v469 = vld [vmem:[%s2 + $0xb18] sm:$0xff]
    %v470 = vld [vmem:[%s2 + $0xb20] sm:$0xff]
    %v471 = vld [vmem:[%s2 + $0xb28] sm:$0xff]
    %v472 = vld [vmem:[%s2 + $0xb30] sm:$0xff]
    %v473 = vld [vmem:[%s2 + $0xb38] sm:$0xff]
    %v474 = vld [vmem:[%s2 + $0xb40] sm:$0xff]
    %v475 = vld [vmem:[%s2 + $0xb48] sm:$0xff]
    %v476 = vld [vmem:[%s2 + $0xb50] sm:$0xff]
    %v477 = vld [vmem:[%s2 + $0xb58] sm:$0xff]
    %v478 = vld [vmem:[%s2 + $0xb60] sm:$0xff]
    %v479 = vld [vmem:[%s2 + $0xb68] sm:$0xff]
    %v480 = vld [vmem:[%s2 + $0xb70] sm:$0xff]
    %v481 = vld [vmem:[%s2 + $0xb78] sm:$0xff]
    %v482 = vld [vmem:[%s2 + $0xb80] sm:$0xff]
    %v483 = vld [vmem:[%s2 + $0xb88] sm:$0xff]
    %v484 = vld [vmem:[%s2 + $0xb90] sm:$0xff]
    %v485 = vld [vmem:[%s2 + $0xb98] sm:$0xff]
    %v486 = vld [vmem:[%s2 + $0xba0] sm:$0xff]
    %v487 = vld [vmem:[%s2 + $0xba8] sm:$0xff]
    %v488 = vld [vmem:[%s2 + $0xbb0] sm:$0xff]
    %v489 = vld [vmem:[%s2 + $0xbb8] sm:$0xff]
    %v490 = vld [vmem:[%s2 + $0xbc0] sm:$0xff]
    %v491 = vld [vmem:[%s2 + $0xbc8] sm:$0xff]
    %v492 = vld [vmem:[%s2 + $0xbd0] sm:$0xff]
    %v493 = vld [vmem:[%s2 + $0xbd8] sm:$0xff]
    %v494 = vld [vmem:[%s2 + $0xbe0] sm:$0xff]
    %v495 = vld [vmem:[%s2 + $0xbe8] sm:$0xff]
    %v496 = vld [vmem:[%s2 + $0xbf0] sm:$0xff]
    %v497 = vld [vmem:[%s2 + $0xbf8] sm:$0xff]
    %v498 = vld [vmem:[%s2 + $0xc00] sm:$0xff]
    %v499 = vld [vmem:[%s2 + $0xc08] sm:$0xff]
    %v500 = vld [vmem:[%s2 + $0xc10] sm:$0xff]
    %v501 = vld [vmem:[%s2 + $0xc18] sm:$0xff]
    %v502 = vld [vmem:[%s2 + $0xc20] sm:$0xff]
    %v503 = vld [vmem:[%s2 + $0xc28] sm:$0xff]
    %v504 = vld [vmem:[%s2 + $0xc30] sm:$0xff]
    %v505 = vld [vmem:[%s2 + $0xc38] sm:$0xff]
    %v506 = vld [vmem:[%s2 + $0xc40] sm:$0xff]
    %v507 = vld [vmem:[%s2 + $0xc48] sm:$0xff]
    %v508 = vld [vmem:[%s2 + $0xc50] sm:$0xff]
    %v509 = vld [vmem:[%s2 + $0xc58] sm:$0xff]
    %v510 = vld [vmem:[%s2 + $0xc60] sm:$0xff]
    %v511 = vld [vmem:[%s2 + $0xc68] sm:$0xff]
    %v512 = vld [vmem:[%s2 + $0xc70] sm:$0xff]
    %v513 = vld [vmem:[%s2 + $0xc78] sm:$0xff]
    %v514 = vld [vmem:[%s2 + $0xc80] sm:$0xff]
    %v515 = vld [vmem:[%s2 + $0xc88] sm:$0xff]
    %v516 = vld [vmem:[%s2 + $0xc90] sm:$0xff]
    %v517 = vld [vmem:[%s2 + $0xc98] sm:$0xff]
    %v518 = vld [vmem:[%s2 + $0xca0] sm:$0xff]
    %v519 = vld [vmem:[%s2 + $0xca8] sm:$0xff]
    %v520 = vld [vmem:[%s2 + $0xcb0] sm:$0xff]
    %v521 = vld [vmem:[%s2 + $0xcb8] sm:$0xff]
    %v522 = vld [vmem:[%s2 + $0xcc0] sm:$0xff]
    %v523 = vld [vmem:[%s2 + $0xcc8] sm:$0xff]
    %v524 = vld [vmem:[%s2 + $0xcd0] sm:$0xff]
    %v525 = vld [vmem:[%s2 + $0xcd8] sm:$0xff]
    %v526 = vld [vmem:[%s2 + $0xce0] sm:$0xff]
    %v527 = vld [vmem:[%s2 + $0xce8] sm:$0xff]
    %v528 = vld [vmem:[%s2 + $0xcf0] sm:$0xff]
    %v529 = vld [vmem:[%s2 + $0xcf8] sm:$0xff]
    %v530 = vld [vmem:[%s2 + $0xd00] sm:$0xff]
    %v531 = vld [vmem:[%s2 + $0xd08] sm:$0xff]
    %v532 = vld [vmem:[%s2 + $0xd10] sm:$0xff]
    %v533 = vld [vmem:[%s2 + $0xd18] sm:$0xff]
    %v534 = vld [vmem:[%s2 + $0xd20] sm:$0xff]
    %v535 = vld [vmem:[%s2 + $0xd28] sm:$0xff]
    %v536 = vld [vmem:[%s2 + $0xd30] sm:$0xff]
    %v537 = vld [vmem:[%s2 + $0xd38] sm:$0xff]
    %v538 = vld [vmem:[%s2 + $0xd40] sm:$0xff]
    %v539 = vld [vmem:[%s2 + $0xd48] sm:$0xff]
    %v540 = vld [vmem:[%s2 + $0xd50] sm:$0xff]
    %v541 = vld [vmem:[%s2 + $0xd58] sm:$0xff]
    %v542 = vld [vmem:[%s2 + $0xd60] sm:$0xff]
    %v543 = vld [vmem:[%s2 + $0xd68] sm:$0xff]
    %v544 = vld [vmem:[%s2 + $0xd70] sm:$0xff]
    %v545 = vld [vmem:[%s2 + $0xd78] sm:$0xff]
    %v546 = vld [vmem:[%s2 + $0xd80] sm:$0xff]
    %v547 = vld [vmem:[%s2 + $0xd88] sm:$0xff]
    %v548 = vld [vmem:[%s2 + $0xd90] sm:$0xff]
    %v549 = vld [vmem:[%s2 + $0xd98] sm:$0xff]
    %v550 = vld [vmem:[%s2 + $0xda0] sm:$0xff]
    %v551 = vld [vmem:[%s2 + $0xda8] sm:$0xff]
    %v552 = vld [vmem:[%s2 + $0xdb0] sm:$0xff]
    %v553 = vld [vmem:[%s2 + $0xdb8] sm:$0xff]
    %v554 = vld [vmem:[%s2 + $0xdc0] sm:$0xff]
    %v555 = vld [vmem:[%s2 + $0xdc8] sm:$0xff]
    %v556 = vld [vmem:[%s2 + $0xdd0] sm:$0xff]
    %v557 = vld [vmem:[%s2 + $0xdd8] sm:$0xff]
    %v558 = vld [vmem:[%s2 + $0xde0] sm:$0xff]
    %v559 = vld [vmem:[%s2 + $0xde8] sm:$0xff]
    %v560 = vld [vmem:[%s2 + $0xdf0] sm:$0xff]
    %v561 = vld [vmem:[%s2 + $0xdf8] sm:$0xff]
    %v562 = vld [vmem:[%s2 + $0xe00] sm:$0xff]
    %v563 = vld [vmem:[%s2 + $0xe08] sm:$0xff]
    %v564 = vld [vmem:[%s2 + $0xe10] sm:$0xff]
    %v565 = vld [vmem:[%s2 + $0xe18] sm:$0xff]
    %v566 = vld [vmem:[%s2 + $0xe20] sm:$0xff]
    %v567 = vld [vmem:[%s2 + $0xe28] sm:$0xff]
    %v568 = vld [vmem:[%s2 + $0xe30] sm:$0xff]
    %v569 = vld [vmem:[%s2 + $0xe38] sm:$0xff]
    %v570 = vld [vmem:[%s2 + $0xe40] sm:$0xff]
    %v571 = vld [vmem:[%s2 + $0xe48] sm:$0xff]
    %v572 = vld [vmem:[%s2 + $0xe50] sm:$0xff]
    %v573 = vld [vmem:[%s2 + $0xe58] sm:$0xff]
    %v574 = vld [vmem:[%s2 + $0xe60] sm:$0xff]
    %v575 = vld [vmem:[%s2 + $0xe68] sm:$0xff]
    %v576 = vld [vmem:[%s2 + $0xe70] sm:$0xff]
    %v577 = vld [vmem:[%s2 + $0xe78] sm:$0xff]
    %v578 = vld [vmem:[%s2 + $0xe80] sm:$0xff]
    %v579 = vld [vmem:[%s2 + $0xe88] sm:$0xff]
    %v580 = vld [vmem:[%s2 + $0xe90] sm:$0xff]
    %v581 = vld [vmem:[%s2 + $0xe98] sm:$0xff]
    %v582 = vld [vmem:[%s2 + $0xea0] sm:$0xff]
    %v583 = vld [vmem:[%s2 + $0xea8] sm:$0xff]
    %v584 = vld [vmem:[%s2 + $0xeb0] sm:$0xff]
    %v585 = vld [vmem:[%s2 + $0xeb8] sm:$0xff]
    %v586 = vld [vmem:[%s2 + $0xec0] sm:$0xff]
    %v587 = vld [vmem:[%s2 + $0xec8] sm:$0xff]
    %v588 = vld [vmem:[%s2 + $0xed0] sm:$0xff]
    %v589 = vld [vmem:[%s2 + $0xed8] sm:$0xff]
    %v590 = vld [vmem:[%s2 + $0xee0] sm:$0xff]
    %v591 = vld [vmem:[%s2 + $0xee8] sm:$0xff]
    %v592 = vld [vmem:[%s2 + $0xef0] sm:$0xff]
    %v593 = vld [vmem:[%s2 + $0xef8] sm:$0xff]
    %v594 = vld [vmem:[%s2 + $0xf00] sm:$0xff]
    %v595 = vld [vmem:[%s2 + $0xf08] sm:$0xff]
    %v596 = vld [vmem:[%s2 + $0xf10] sm:$0xff]
    %v597 = vld [vmem:[%s2 + $0xf18] sm:$0xff]
    %v598 = vld [vmem:[%s2 + $0xf20] sm:$0xff]
    %v599 = vld [vmem:[%s2 + $0xf28] sm:$0xff]
    %v600 = vld [vmem:[%s2 + $0xf30] sm:$0xff]
    %v601 = vld [vmem:[%s2 + $0xf38] sm:$0xff]
    %v602 = vld [vmem:[%s2 + $0xf40] sm:$0xff]
    %v603 = vld [vmem:[%s2 + $0xf48] sm:$0xff]
    %v604 = vld [vmem:[%s2 + $0xf50] sm:$0xff]
    %v605 = vld [vmem:[%s2 + $0xf58] sm:$0xff]
    %v606 = vld [vmem:[%s2 + $0xf60] sm:$0xff]
    %v607 = vld [vmem:[%s2 + $0xf68] sm:$0xff]
    %v608 = vld [vmem:[%s2 + $0xf70] sm:$0xff]
    %v609 = vld [vmem:[%s2 + $0xf78] sm:$0xff]
    %v610 = vld [vmem:[%s2 + $0xf80] sm:$0xff]
    %v611 = vld [vmem:[%s2 + $0xf88] sm:$0xff]
    %v612 = vld [vmem:[%s2 + $0xf90] sm:$0xff]
    %v613 = vld [vmem:[%s2 + $0xf98] sm:$0xff]
    %v614 = vld [vmem:[%s2 + $0xfa0] sm:$0xff]
    %v615 = vld [vmem:[%s2 + $0xfa8] sm:$0xff]
    %v616 = vld [vmem:[%s2 + $0xfb0] sm:$0xff]
    %v617 = vld [vmem:[%s2 + $0xfb8] sm:$0xff]
    %v618 = vld [vmem:[%s2 + $0xfc0] sm:$0xff]
    %v619 = vld [vmem:[%s2 + $0xfc8] sm:$0xff]
    %v620 = vld [vmem:[%s2 + $0xfd0] sm:$0xff]
    %v621 = vld [vmem:[%s2 + $0xfd8] sm:$0xff]
    %v622 = vld [vmem:[%s2 + $0xfe0] sm:$0xff]
    %v623 = vld [vmem:[%s2 + $0xfe8] sm:$0xff]
    %v624 = vld [vmem:[%s2 + $0xff0] sm:$0xff]
    %v625 = vld [vmem:[%s2 + $0xff8] sm:$0xff]
    %v626 = vld [vmem:[%s3] sm:$0xf]
    %v628 = vlaneseq
    %v629 = vshrl.u32 %v628, 7
    %v630 = vsub.s32 0, %v629
    %v631 = vrot.slane %v626, %v630
    %v632 = vlaneseq
    %v633 = vshrl.u32 %v632, 7
    %v634 = vsub.s32 1, %v633
    %v635 = vrot.slane %v626, %v634
    %v636 = vlaneseq
    %v637 = vshrl.u32 %v636, 7
    %v638 = vsub.s32 2, %v637
    %v639 = vrot.slane %v626, %v638
    %v640 = vlaneseq
    %v641 = vshrl.u32 %v640, 7
    %v642 = vsub.s32 3, %v641
    %v643 = vrot.slane %v626, %v642
    %v656 = vunpack.c.l.b16 %v106
    %v657 = vunpack.c.h.b16 %v106
    %v658 = vunpack.c.l.b16 %v107
    %v659 = vunpack.c.h.b16 %v107
    %v660 = vunpack.c.l.b16 %v108
    %v661 = vunpack.c.h.b16 %v108
    %v662 = vunpack.c.l.b16 %v109
    %v663 = vunpack.c.h.b16 %v109
    %v664 = vunpack.c.l.b16 %v110
    %v665 = vunpack.c.h.b16 %v110
    %v666 = vunpack.c.l.b16 %v111
    %v667 = vunpack.c.h.b16 %v111
    %v668 = vunpack.c.l.b16 %v112
    %v669 = vunpack.c.h.b16 %v112
    %v670 = vunpack.c.l.b16 %v113
    %v671 = vunpack.c.h.b16 %v113
    %v672 = vpack.c.b16 %v656, %v656
    %v673 = vpack.c.b16 %v657, %v657
    %v674 = vpack.c.b16 %v658, %v658
    %v675 = vpack.c.b16 %v659, %v659
    %v676 = vpack.c.b16 %v660, %v660
    %v677 = vpack.c.b16 %v661, %v661
    %v678 = vpack.c.b16 %v662, %v662
    %v679 = vpack.c.b16 %v663, %v663
    %v680 = vpack.c.b16 %v664, %v664
    %v681 = vpack.c.b16 %v665, %v665
    %v682 = vpack.c.b16 %v666, %v666
    %v683 = vpack.c.b16 %v667, %v667
    %v684 = vpack.c.b16 %v668, %v668
    %v685 = vpack.c.b16 %v669, %v669
    %v686 = vpack.c.b16 %v670, %v670
    %v687 = vpack.c.b16 %v671, %v671
    %v1216 = vunpack.c.l.b16 %v114
    %v1217 = vunpack.c.h.b16 %v114
    %v1218 = vunpack.c.l.b16 %v115
    %v1219 = vunpack.c.h.b16 %v115
    %v1220 = vunpack.c.l.b16 %v116
    %v1221 = vunpack.c.h.b16 %v116
    %v1222 = vunpack.c.l.b16 %v117
    %v1223 = vunpack.c.h.b16 %v117
    %v1224 = vunpack.c.l.b16 %v118
    %v1225 = vunpack.c.h.b16 %v118
    %v1226 = vunpack.c.l.b16 %v119
    %v1227 = vunpack.c.h.b16 %v119
    %v1228 = vunpack.c.l.b16 %v120
    %v1229 = vunpack.c.h.b16 %v120
    %v1230 = vunpack.c.l.b16 %v121
    %v1231 = vunpack.c.h.b16 %v121
    %v1232 = vunpack.c.l.b16 %v122
    %v1233 = vunpack.c.h.b16 %v122
    %v1234 = vunpack.c.l.b16 %v123
    %v1235 = vunpack.c.h.b16 %v123
    %v1236 = vunpack.c.l.b16 %v124
    %v1237 = vunpack.c.h.b16 %v124
    %v1238 = vunpack.c.l.b16 %v125
    %v1239 = vunpack.c.h.b16 %v125
    %v1240 = vunpack.c.l.b16 %v126
    %v1241 = vunpack.c.h.b16 %v126
    %v1242 = vunpack.c.l.b16 %v127
    %v1243 = vunpack.c.h.b16 %v127
    %v1244 = vunpack.c.l.b16 %v128
    %v1245 = vunpack.c.h.b16 %v128
    %v1246 = vunpack.c.l.b16 %v129
    %v1247 = vunpack.c.h.b16 %v129
    %v1248 = vunpack.c.l.b16 %v130
    %v1249 = vunpack.c.h.b16 %v130
    %v1250 = vunpack.c.l.b16 %v131
    %v1251 = vunpack.c.h.b16 %v131
    %v1252 = vunpack.c.l.b16 %v132
    %v1253 = vunpack.c.h.b16 %v132
    %v1254 = vunpack.c.l.b16 %v133
    %v1255 = vunpack.c.h.b16 %v133
    %v1256 = vunpack.c.l.b16 %v134
    %v1257 = vunpack.c.h.b16 %v134
    %v1258 = vunpack.c.l.b16 %v135
    %v1259 = vunpack.c.h.b16 %v135
    %v1260 = vunpack.c.l.b16 %v136
    %v1261 = vunpack.c.h.b16 %v136
    %v1262 = vunpack.c.l.b16 %v137
    %v1263 = vunpack.c.h.b16 %v137
    %v1264 = vunpack.c.l.b16 %v138
    %v1265 = vunpack.c.h.b16 %v138
    %v1266 = vunpack.c.l.b16 %v139
    %v1267 = vunpack.c.h.b16 %v139
    %v1268 = vunpack.c.l.b16 %v140
    %v1269 = vunpack.c.h.b16 %v140
    %v1270 = vunpack.c.l.b16 %v141
    %v1271 = vunpack.c.h.b16 %v141
    %v1272 = vunpack.c.l.b16 %v142
    %v1273 = vunpack.c.h.b16 %v142
    %v1274 = vunpack.c.l.b16 %v143
    %v1275 = vunpack.c.h.b16 %v143
    %v1276 = vunpack.c.l.b16 %v144
    %v1277 = vunpack.c.h.b16 %v144
    %v1278 = vunpack.c.l.b16 %v145
    %v1279 = vunpack.c.h.b16 %v145
    %v1280 = vunpack.c.l.b16 %v146
    %v1281 = vunpack.c.h.b16 %v146
    %v1282 = vunpack.c.l.b16 %v147
    %v1283 = vunpack.c.h.b16 %v147
    %v1284 = vunpack.c.l.b16 %v148
    %v1285 = vunpack.c.h.b16 %v148
    %v1286 = vunpack.c.l.b16 %v149
    %v1287 = vunpack.c.h.b16 %v149
    %v1288 = vunpack.c.l.b16 %v150
    %v1289 = vunpack.c.h.b16 %v150
    %v1290 = vunpack.c.l.b16 %v151
    %v1291 = vunpack.c.h.b16 %v151
    %v1292 = vunpack.c.l.b16 %v152
    %v1293 = vunpack.c.h.b16 %v152
    %v1294 = vunpack.c.l.b16 %v153
    %v1295 = vunpack.c.h.b16 %v153
    %v1296 = vunpack.c.l.b16 %v154
    %v1297 = vunpack.c.h.b16 %v154
    %v1298 = vunpack.c.l.b16 %v155
    %v1299 = vunpack.c.h.b16 %v155
    %v1300 = vunpack.c.l.b16 %v156
    %v1301 = vunpack.c.h.b16 %v156
    %v1302 = vunpack.c.l.b16 %v157
    %v1303 = vunpack.c.h.b16 %v157
    %v1304 = vunpack.c.l.b16 %v158
    %v1305 = vunpack.c.h.b16 %v158
    %v1306 = vunpack.c.l.b16 %v159
    %v1307 = vunpack.c.h.b16 %v159
    %v1308 = vunpack.c.l.b16 %v160
    %v1309 = vunpack.c.h.b16 %v160
    %v1310 = vunpack.c.l.b16 %v161
    %v1311 = vunpack.c.h.b16 %v161
    %v1312 = vunpack.c.l.b16 %v162
    %v1313 = vunpack.c.h.b16 %v162
    %v1314 = vunpack.c.l.b16 %v163
    %v1315 = vunpack.c.h.b16 %v163
    %v1316 = vunpack.c.l.b16 %v164
    %v1317 = vunpack.c.h.b16 %v164
    %v1318 = vunpack.c.l.b16 %v165
    %v1319 = vunpack.c.h.b16 %v165
    %v1320 = vunpack.c.l.b16 %v166
    %v1321 = vunpack.c.h.b16 %v166
    %v1322 = vunpack.c.l.b16 %v167
    %v1323 = vunpack.c.h.b16 %v167
    %v1324 = vunpack.c.l.b16 %v168
    %v1325 = vunpack.c.h.b16 %v168
    %v1326 = vunpack.c.l.b16 %v169
    %v1327 = vunpack.c.h.b16 %v169
    %v1328 = vunpack.c.l.b16 %v170
    %v1329 = vunpack.c.h.b16 %v170
    %v1330 = vunpack.c.l.b16 %v171
    %v1331 = vunpack.c.h.b16 %v171
    %v1332 = vunpack.c.l.b16 %v172
    %v1333 = vunpack.c.h.b16 %v172
    %v1334 = vunpack.c.l.b16 %v173
    %v1335 = vunpack.c.h.b16 %v173
    %v1336 = vunpack.c.l.b16 %v174
    %v1337 = vunpack.c.h.b16 %v174
    %v1338 = vunpack.c.l.b16 %v175
    %v1339 = vunpack.c.h.b16 %v175
    %v1340 = vunpack.c.l.b16 %v176
    %v1341 = vunpack.c.h.b16 %v176
    %v1342 = vunpack.c.l.b16 %v177
    %v1343 = vunpack.c.h.b16 %v177
    %v1344 = vunpack.c.l.b16 %v178
    %v1345 = vunpack.c.h.b16 %v178
    %v1346 = vunpack.c.l.b16 %v179
    %v1347 = vunpack.c.h.b16 %v179
    %v1348 = vunpack.c.l.b16 %v180
    %v1349 = vunpack.c.h.b16 %v180
    %v1350 = vunpack.c.l.b16 %v181
    %v1351 = vunpack.c.h.b16 %v181
    %v1352 = vunpack.c.l.b16 %v182
    %v1353 = vunpack.c.h.b16 %v182
    %v1354 = vunpack.c.l.b16 %v183
    %v1355 = vunpack.c.h.b16 %v183
    %v1356 = vunpack.c.l.b16 %v184
    %v1357 = vunpack.c.h.b16 %v184
    %v1358 = vunpack.c.l.b16 %v185
    %v1359 = vunpack.c.h.b16 %v185
    %v1360 = vunpack.c.l.b16 %v186
    %v1361 = vunpack.c.h.b16 %v186
    %v1362 = vunpack.c.l.b16 %v187
    %v1363 = vunpack.c.h.b16 %v187
    %v1364 = vunpack.c.l.b16 %v188
    %v1365 = vunpack.c.h.b16 %v188
    %v1366 = vunpack.c.l.b16 %v189
    %v1367 = vunpack.c.h.b16 %v189
    %v1368 = vunpack.c.l.b16 %v190
    %v1369 = vunpack.c.h.b16 %v190
    %v1370 = vunpack.c.l.b16 %v191
    %v1371 = vunpack.c.h.b16 %v191
    %v1372 = vunpack.c.l.b16 %v192
    %v1373 = vunpack.c.h.b16 %v192
    %v1374 = vunpack.c.l.b16 %v193
    %v1375 = vunpack.c.h.b16 %v193
    %v1376 = vunpack.c.l.b16 %v194
    %v1377 = vunpack.c.h.b16 %v194
    %v1378 = vunpack.c.l.b16 %v195
    %v1379 = vunpack.c.h.b16 %v195
    %v1380 = vunpack.c.l.b16 %v196
    %v1381 = vunpack.c.h.b16 %v196
    %v1382 = vunpack.c.l.b16 %v197
    %v1383 = vunpack.c.h.b16 %v197
    %v1384 = vunpack.c.l.b16 %v198
    %v1385 = vunpack.c.h.b16 %v198
    %v1386 = vunpack.c.l.b16 %v199
    %v1387 = vunpack.c.h.b16 %v199
    %v1388 = vunpack.c.l.b16 %v200
    %v1389 = vunpack.c.h.b16 %v200
    %v1390 = vunpack.c.l.b16 %v201
    %v1391 = vunpack.c.h.b16 %v201
    %v1392 = vunpack.c.l.b16 %v202
    %v1393 = vunpack.c.h.b16 %v202
    %v1394 = vunpack.c.l.b16 %v203
    %v1395 = vunpack.c.h.b16 %v203
    %v1396 = vunpack.c.l.b16 %v204
    %v1397 = vunpack.c.h.b16 %v204
    %v1398 = vunpack.c.l.b16 %v205
    %v1399 = vunpack.c.h.b16 %v205
    %v1400 = vunpack.c.l.b16 %v206
    %v1401 = vunpack.c.h.b16 %v206
    %v1402 = vunpack.c.l.b16 %v207
    %v1403 = vunpack.c.h.b16 %v207
    %v1404 = vunpack.c.l.b16 %v208
    %v1405 = vunpack.c.h.b16 %v208
    %v1406 = vunpack.c.l.b16 %v209
    %v1407 = vunpack.c.h.b16 %v209
    %v1408 = vunpack.c.l.b16 %v210
    %v1409 = vunpack.c.h.b16 %v210
    %v1410 = vunpack.c.l.b16 %v211
    %v1411 = vunpack.c.h.b16 %v211
    %v1412 = vunpack.c.l.b16 %v212
    %v1413 = vunpack.c.h.b16 %v212
    %v1414 = vunpack.c.l.b16 %v213
    %v1415 = vunpack.c.h.b16 %v213
    %v1416 = vunpack.c.l.b16 %v214
    %v1417 = vunpack.c.h.b16 %v214
    %v1418 = vunpack.c.l.b16 %v215
    %v1419 = vunpack.c.h.b16 %v215
    %v1420 = vunpack.c.l.b16 %v216
    %v1421 = vunpack.c.h.b16 %v216
    %v1422 = vunpack.c.l.b16 %v217
    %v1423 = vunpack.c.h.b16 %v217
    %v1424 = vunpack.c.l.b16 %v218
    %v1425 = vunpack.c.h.b16 %v218
    %v1426 = vunpack.c.l.b16 %v219
    %v1427 = vunpack.c.h.b16 %v219
    %v1428 = vunpack.c.l.b16 %v220
    %v1429 = vunpack.c.h.b16 %v220
    %v1430 = vunpack.c.l.b16 %v221
    %v1431 = vunpack.c.h.b16 %v221
    %v1432 = vunpack.c.l.b16 %v222
    %v1433 = vunpack.c.h.b16 %v222
    %v1434 = vunpack.c.l.b16 %v223
    %v1435 = vunpack.c.h.b16 %v223
    %v1436 = vunpack.c.l.b16 %v224
    %v1437 = vunpack.c.h.b16 %v224
    %v1438 = vunpack.c.l.b16 %v225
    %v1439 = vunpack.c.h.b16 %v225
    %v1440 = vunpack.c.l.b16 %v226
    %v1441 = vunpack.c.h.b16 %v226
    %v1442 = vunpack.c.l.b16 %v227
    %v1443 = vunpack.c.h.b16 %v227
    %v1444 = vunpack.c.l.b16 %v228
    %v1445 = vunpack.c.h.b16 %v228
    %v1446 = vunpack.c.l.b16 %v229
    %v1447 = vunpack.c.h.b16 %v229
    %v1448 = vunpack.c.l.b16 %v230
    %v1449 = vunpack.c.h.b16 %v230
    %v1450 = vunpack.c.l.b16 %v231
    %v1451 = vunpack.c.h.b16 %v231
    %v1452 = vunpack.c.l.b16 %v232
    %v1453 = vunpack.c.h.b16 %v232
    %v1454 = vunpack.c.l.b16 %v233
    %v1455 = vunpack.c.h.b16 %v233
    %v1456 = vunpack.c.l.b16 %v234
    %v1457 = vunpack.c.h.b16 %v234
    %v1458 = vunpack.c.l.b16 %v235
    %v1459 = vunpack.c.h.b16 %v235
    %v1460 = vunpack.c.l.b16 %v236
    %v1461 = vunpack.c.h.b16 %v236
    %v1462 = vunpack.c.l.b16 %v237
    %v1463 = vunpack.c.h.b16 %v237
    %v1464 = vunpack.c.l.b16 %v238
    %v1465 = vunpack.c.h.b16 %v238
    %v1466 = vunpack.c.l.b16 %v239
    %v1467 = vunpack.c.h.b16 %v239
    %v1468 = vunpack.c.l.b16 %v240
    %v1469 = vunpack.c.h.b16 %v240
    %v1470 = vunpack.c.l.b16 %v241
    %v1471 = vunpack.c.h.b16 %v241
    %v1472 = vunpack.c.l.b16 %v242
    %v1473 = vunpack.c.h.b16 %v242
    %v1474 = vunpack.c.l.b16 %v243
    %v1475 = vunpack.c.h.b16 %v243
    %v1476 = vunpack.c.l.b16 %v244
    %v1477 = vunpack.c.h.b16 %v244
    %v1478 = vunpack.c.l.b16 %v245
    %v1479 = vunpack.c.h.b16 %v245
    %v1480 = vunpack.c.l.b16 %v246
    %v1481 = vunpack.c.h.b16 %v246
    %v1482 = vunpack.c.l.b16 %v247
    %v1483 = vunpack.c.h.b16 %v247
    %v1484 = vunpack.c.l.b16 %v248
    %v1485 = vunpack.c.h.b16 %v248
    %v1486 = vunpack.c.l.b16 %v249
    %v1487 = vunpack.c.h.b16 %v249
    %v1488 = vunpack.c.l.b16 %v250
    %v1489 = vunpack.c.h.b16 %v250
    %v1490 = vunpack.c.l.b16 %v251
    %v1491 = vunpack.c.h.b16 %v251
    %v1492 = vunpack.c.l.b16 %v252
    %v1493 = vunpack.c.h.b16 %v252
    %v1494 = vunpack.c.l.b16 %v253
    %v1495 = vunpack.c.h.b16 %v253
    %v1496 = vunpack.c.l.b16 %v254
    %v1497 = vunpack.c.h.b16 %v254
    %v1498 = vunpack.c.l.b16 %v255
    %v1499 = vunpack.c.h.b16 %v255
    %v1500 = vunpack.c.l.b16 %v256
    %v1501 = vunpack.c.h.b16 %v256
    %v1502 = vunpack.c.l.b16 %v257
    %v1503 = vunpack.c.h.b16 %v257
    %v1504 = vunpack.c.l.b16 %v258
    %v1505 = vunpack.c.h.b16 %v258
    %v1506 = vunpack.c.l.b16 %v259
    %v1507 = vunpack.c.h.b16 %v259
    %v1508 = vunpack.c.l.b16 %v260
    %v1509 = vunpack.c.h.b16 %v260
    %v1510 = vunpack.c.l.b16 %v261
    %v1511 = vunpack.c.h.b16 %v261
    %v1512 = vunpack.c.l.b16 %v262
    %v1513 = vunpack.c.h.b16 %v262
    %v1514 = vunpack.c.l.b16 %v263
    %v1515 = vunpack.c.h.b16 %v263
    %v1516 = vunpack.c.l.b16 %v264
    %v1517 = vunpack.c.h.b16 %v264
    %v1518 = vunpack.c.l.b16 %v265
    %v1519 = vunpack.c.h.b16 %v265
    %v1520 = vunpack.c.l.b16 %v266
    %v1521 = vunpack.c.h.b16 %v266
    %v1522 = vunpack.c.l.b16 %v267
    %v1523 = vunpack.c.h.b16 %v267
    %v1524 = vunpack.c.l.b16 %v268
    %v1525 = vunpack.c.h.b16 %v268
    %v1526 = vunpack.c.l.b16 %v269
    %v1527 = vunpack.c.h.b16 %v269
    %v1528 = vunpack.c.l.b16 %v270
    %v1529 = vunpack.c.h.b16 %v270
    %v1530 = vunpack.c.l.b16 %v271
    %v1531 = vunpack.c.h.b16 %v271
    %v1532 = vunpack.c.l.b16 %v272
    %v1533 = vunpack.c.h.b16 %v272
    %v1534 = vunpack.c.l.b16 %v273
    %v1535 = vunpack.c.h.b16 %v273
    %v1536 = vunpack.c.l.b16 %v274
    %v1537 = vunpack.c.h.b16 %v274
    %v1538 = vunpack.c.l.b16 %v275
    %v1539 = vunpack.c.h.b16 %v275
    %v1540 = vunpack.c.l.b16 %v276
    %v1541 = vunpack.c.h.b16 %v276
    %v1542 = vunpack.c.l.b16 %v277
    %v1543 = vunpack.c.h.b16 %v277
    %v1544 = vunpack.c.l.b16 %v278
    %v1545 = vunpack.c.h.b16 %v278
    %v1546 = vunpack.c.l.b16 %v279
    %v1547 = vunpack.c.h.b16 %v279
    %v1548 = vunpack.c.l.b16 %v280
    %v1549 = vunpack.c.h.b16 %v280
    %v1550 = vunpack.c.l.b16 %v281
    %v1551 = vunpack.c.h.b16 %v281
    %v1552 = vunpack.c.l.b16 %v282
    %v1553 = vunpack.c.h.b16 %v282
    %v1554 = vunpack.c.l.b16 %v283
    %v1555 = vunpack.c.h.b16 %v283
    %v1556 = vunpack.c.l.b16 %v284
    %v1557 = vunpack.c.h.b16 %v284
    %v1558 = vunpack.c.l.b16 %v285
    %v1559 = vunpack.c.h.b16 %v285
    %v1560 = vunpack.c.l.b16 %v286
    %v1561 = vunpack.c.h.b16 %v286
    %v1562 = vunpack.c.l.b16 %v287
    %v1563 = vunpack.c.h.b16 %v287
    %v1564 = vunpack.c.l.b16 %v288
    %v1565 = vunpack.c.h.b16 %v288
    %v1566 = vunpack.c.l.b16 %v289
    %v1567 = vunpack.c.h.b16 %v289
    %v1568 = vunpack.c.l.b16 %v290
    %v1569 = vunpack.c.h.b16 %v290
    %v1570 = vunpack.c.l.b16 %v291
    %v1571 = vunpack.c.h.b16 %v291
    %v1572 = vunpack.c.l.b16 %v292
    %v1573 = vunpack.c.h.b16 %v292
    %v1574 = vunpack.c.l.b16 %v293
    %v1575 = vunpack.c.h.b16 %v293
    %v1576 = vunpack.c.l.b16 %v294
    %v1577 = vunpack.c.h.b16 %v294
    %v1578 = vunpack.c.l.b16 %v295
    %v1579 = vunpack.c.h.b16 %v295
    %v1580 = vunpack.c.l.b16 %v296
    %v1581 = vunpack.c.h.b16 %v296
    %v1582 = vunpack.c.l.b16 %v297
    %v1583 = vunpack.c.h.b16 %v297
    %v1584 = vunpack.c.l.b16 %v298
    %v1585 = vunpack.c.h.b16 %v298
    %v1586 = vunpack.c.l.b16 %v299
    %v1587 = vunpack.c.h.b16 %v299
    %v1588 = vunpack.c.l.b16 %v300
    %v1589 = vunpack.c.h.b16 %v300
    %v1590 = vunpack.c.l.b16 %v301
    %v1591 = vunpack.c.h.b16 %v301
    %v1592 = vunpack.c.l.b16 %v302
    %v1593 = vunpack.c.h.b16 %v302
    %v1594 = vunpack.c.l.b16 %v303
    %v1595 = vunpack.c.h.b16 %v303
    %v1596 = vunpack.c.l.b16 %v304
    %v1597 = vunpack.c.h.b16 %v304
    %v1598 = vunpack.c.l.b16 %v305
    %v1599 = vunpack.c.h.b16 %v305
    %v1600 = vunpack.c.l.b16 %v306
    %v1601 = vunpack.c.h.b16 %v306
    %v1602 = vunpack.c.l.b16 %v307
    %v1603 = vunpack.c.h.b16 %v307
    %v1604 = vunpack.c.l.b16 %v308
    %v1605 = vunpack.c.h.b16 %v308
    %v1606 = vunpack.c.l.b16 %v309
    %v1607 = vunpack.c.h.b16 %v309
    %v1608 = vunpack.c.l.b16 %v310
    %v1609 = vunpack.c.h.b16 %v310
    %v1610 = vunpack.c.l.b16 %v311
    %v1611 = vunpack.c.h.b16 %v311
    %v1612 = vunpack.c.l.b16 %v312
    %v1613 = vunpack.c.h.b16 %v312
    %v1614 = vunpack.c.l.b16 %v313
    %v1615 = vunpack.c.h.b16 %v313
    %v1616 = vunpack.c.l.b16 %v314
    %v1617 = vunpack.c.h.b16 %v314
    %v1618 = vunpack.c.l.b16 %v315
    %v1619 = vunpack.c.h.b16 %v315
    %v1620 = vunpack.c.l.b16 %v316
    %v1621 = vunpack.c.h.b16 %v316
    %v1622 = vunpack.c.l.b16 %v317
    %v1623 = vunpack.c.h.b16 %v317
    %v1624 = vunpack.c.l.b16 %v318
    %v1625 = vunpack.c.h.b16 %v318
    %v1626 = vunpack.c.l.b16 %v319
    %v1627 = vunpack.c.h.b16 %v319
    %v1628 = vunpack.c.l.b16 %v320
    %v1629 = vunpack.c.h.b16 %v320
    %v1630 = vunpack.c.l.b16 %v321
    %v1631 = vunpack.c.h.b16 %v321
    %v1632 = vunpack.c.l.b16 %v322
    %v1633 = vunpack.c.h.b16 %v322
    %v1634 = vunpack.c.l.b16 %v323
    %v1635 = vunpack.c.h.b16 %v323
    %v1636 = vunpack.c.l.b16 %v324
    %v1637 = vunpack.c.h.b16 %v324
    %v1638 = vunpack.c.l.b16 %v325
    %v1639 = vunpack.c.h.b16 %v325
    %v1640 = vunpack.c.l.b16 %v326
    %v1641 = vunpack.c.h.b16 %v326
    %v1642 = vunpack.c.l.b16 %v327
    %v1643 = vunpack.c.h.b16 %v327
    %v1644 = vunpack.c.l.b16 %v328
    %v1645 = vunpack.c.h.b16 %v328
    %v1646 = vunpack.c.l.b16 %v329
    %v1647 = vunpack.c.h.b16 %v329
    %v1648 = vunpack.c.l.b16 %v330
    %v1649 = vunpack.c.h.b16 %v330
    %v1650 = vunpack.c.l.b16 %v331
    %v1651 = vunpack.c.h.b16 %v331
    %v1652 = vunpack.c.l.b16 %v332
    %v1653 = vunpack.c.h.b16 %v332
    %v1654 = vunpack.c.l.b16 %v333
    %v1655 = vunpack.c.h.b16 %v333
    %v1656 = vunpack.c.l.b16 %v334
    %v1657 = vunpack.c.h.b16 %v334
    %v1658 = vunpack.c.l.b16 %v335
    %v1659 = vunpack.c.h.b16 %v335
    %v1660 = vunpack.c.l.b16 %v336
    %v1661 = vunpack.c.h.b16 %v336
    %v1662 = vunpack.c.l.b16 %v337
    %v1663 = vunpack.c.h.b16 %v337
    %v1664 = vunpack.c.l.b16 %v338
    %v1665 = vunpack.c.h.b16 %v338
    %v1666 = vunpack.c.l.b16 %v339
    %v1667 = vunpack.c.h.b16 %v339
    %v1668 = vunpack.c.l.b16 %v340
    %v1669 = vunpack.c.h.b16 %v340
    %v1670 = vunpack.c.l.b16 %v341
    %v1671 = vunpack.c.h.b16 %v341
    %v1672 = vunpack.c.l.b16 %v342
    %v1673 = vunpack.c.h.b16 %v342
    %v1674 = vunpack.c.l.b16 %v343
    %v1675 = vunpack.c.h.b16 %v343
    %v1676 = vunpack.c.l.b16 %v344
    %v1677 = vunpack.c.h.b16 %v344
    %v1678 = vunpack.c.l.b16 %v345
    %v1679 = vunpack.c.h.b16 %v345
    %v1680 = vunpack.c.l.b16 %v346
    %v1681 = vunpack.c.h.b16 %v346
    %v1682 = vunpack.c.l.b16 %v347
    %v1683 = vunpack.c.h.b16 %v347
    %v1684 = vunpack.c.l.b16 %v348
    %v1685 = vunpack.c.h.b16 %v348
    %v1686 = vunpack.c.l.b16 %v349
    %v1687 = vunpack.c.h.b16 %v349
    %v1688 = vunpack.c.l.b16 %v350
    %v1689 = vunpack.c.h.b16 %v350
    %v1690 = vunpack.c.l.b16 %v351
    %v1691 = vunpack.c.h.b16 %v351
    %v1692 = vunpack.c.l.b16 %v352
    %v1693 = vunpack.c.h.b16 %v352
    %v1694 = vunpack.c.l.b16 %v353
    %v1695 = vunpack.c.h.b16 %v353
    %v1696 = vunpack.c.l.b16 %v354
    %v1697 = vunpack.c.h.b16 %v354
    %v1698 = vunpack.c.l.b16 %v355
    %v1699 = vunpack.c.h.b16 %v355
    %v1700 = vunpack.c.l.b16 %v356
    %v1701 = vunpack.c.h.b16 %v356
    %v1702 = vunpack.c.l.b16 %v357
    %v1703 = vunpack.c.h.b16 %v357
    %v1704 = vunpack.c.l.b16 %v358
    %v1705 = vunpack.c.h.b16 %v358
    %v1706 = vunpack.c.l.b16 %v359
    %v1707 = vunpack.c.h.b16 %v359
    %v1708 = vunpack.c.l.b16 %v360
    %v1709 = vunpack.c.h.b16 %v360
    %v1710 = vunpack.c.l.b16 %v361
    %v1711 = vunpack.c.h.b16 %v361
    %v1712 = vunpack.c.l.b16 %v362
    %v1713 = vunpack.c.h.b16 %v362
    %v1714 = vunpack.c.l.b16 %v363
    %v1715 = vunpack.c.h.b16 %v363
    %v1716 = vunpack.c.l.b16 %v364
    %v1717 = vunpack.c.h.b16 %v364
    %v1718 = vunpack.c.l.b16 %v365
    %v1719 = vunpack.c.h.b16 %v365
    %v1720 = vunpack.c.l.b16 %v366
    %v1721 = vunpack.c.h.b16 %v366
    %v1722 = vunpack.c.l.b16 %v367
    %v1723 = vunpack.c.h.b16 %v367
    %v1724 = vunpack.c.l.b16 %v368
    %v1725 = vunpack.c.h.b16 %v368
    %v1726 = vunpack.c.l.b16 %v369
    %v1727 = vunpack.c.h.b16 %v369
    %v1728 = vunpack.c.l.b16 %v370
    %v1729 = vunpack.c.h.b16 %v370
    %v1730 = vunpack.c.l.b16 %v371
    %v1731 = vunpack.c.h.b16 %v371
    %v1732 = vunpack.c.l.b16 %v372
    %v1733 = vunpack.c.h.b16 %v372
    %v1734 = vunpack.c.l.b16 %v373
    %v1735 = vunpack.c.h.b16 %v373
    %v1736 = vunpack.c.l.b16 %v374
    %v1737 = vunpack.c.h.b16 %v374
    %v1738 = vunpack.c.l.b16 %v375
    %v1739 = vunpack.c.h.b16 %v375
    %v1740 = vunpack.c.l.b16 %v376
    %v1741 = vunpack.c.h.b16 %v376
    %v1742 = vunpack.c.l.b16 %v377
    %v1743 = vunpack.c.h.b16 %v377
    %v1744 = vunpack.c.l.b16 %v378
    %v1745 = vunpack.c.h.b16 %v378
    %v1746 = vunpack.c.l.b16 %v379
    %v1747 = vunpack.c.h.b16 %v379
    %v1748 = vunpack.c.l.b16 %v380
    %v1749 = vunpack.c.h.b16 %v380
    %v1750 = vunpack.c.l.b16 %v381
    %v1751 = vunpack.c.h.b16 %v381
    %v1752 = vunpack.c.l.b16 %v382
    %v1753 = vunpack.c.h.b16 %v382
    %v1754 = vunpack.c.l.b16 %v383
    %v1755 = vunpack.c.h.b16 %v383
    %v1756 = vunpack.c.l.b16 %v384
    %v1757 = vunpack.c.h.b16 %v384
    %v1758 = vunpack.c.l.b16 %v385
    %v1759 = vunpack.c.h.b16 %v385
    %v1760 = vunpack.c.l.b16 %v386
    %v1761 = vunpack.c.h.b16 %v386
    %v1762 = vunpack.c.l.b16 %v387
    %v1763 = vunpack.c.h.b16 %v387
    %v1764 = vunpack.c.l.b16 %v388
    %v1765 = vunpack.c.h.b16 %v388
    %v1766 = vunpack.c.l.b16 %v389
    %v1767 = vunpack.c.h.b16 %v389
    %v1768 = vunpack.c.l.b16 %v390
    %v1769 = vunpack.c.h.b16 %v390
    %v1770 = vunpack.c.l.b16 %v391
    %v1771 = vunpack.c.h.b16 %v391
    %v1772 = vunpack.c.l.b16 %v392
    %v1773 = vunpack.c.h.b16 %v392
    %v1774 = vunpack.c.l.b16 %v393
    %v1775 = vunpack.c.h.b16 %v393
    %v1776 = vunpack.c.l.b16 %v394
    %v1777 = vunpack.c.h.b16 %v394
    %v1778 = vunpack.c.l.b16 %v395
    %v1779 = vunpack.c.h.b16 %v395
    %v1780 = vunpack.c.l.b16 %v396
    %v1781 = vunpack.c.h.b16 %v396
    %v1782 = vunpack.c.l.b16 %v397
    %v1783 = vunpack.c.h.b16 %v397
    %v1784 = vunpack.c.l.b16 %v398
    %v1785 = vunpack.c.h.b16 %v398
    %v1786 = vunpack.c.l.b16 %v399
    %v1787 = vunpack.c.h.b16 %v399
    %v1788 = vunpack.c.l.b16 %v400
    %v1789 = vunpack.c.h.b16 %v400
    %v1790 = vunpack.c.l.b16 %v401
    %v1791 = vunpack.c.h.b16 %v401
    %v1792 = vunpack.c.l.b16 %v402
    %v1793 = vunpack.c.h.b16 %v402
    %v1794 = vunpack.c.l.b16 %v403
    %v1795 = vunpack.c.h.b16 %v403
    %v1796 = vunpack.c.l.b16 %v404
    %v1797 = vunpack.c.h.b16 %v404
    %v1798 = vunpack.c.l.b16 %v405
    %v1799 = vunpack.c.h.b16 %v405
    %v1800 = vunpack.c.l.b16 %v406
    %v1801 = vunpack.c.h.b16 %v406
    %v1802 = vunpack.c.l.b16 %v407
    %v1803 = vunpack.c.h.b16 %v407
    %v1804 = vunpack.c.l.b16 %v408
    %v1805 = vunpack.c.h.b16 %v408
    %v1806 = vunpack.c.l.b16 %v409
    %v1807 = vunpack.c.h.b16 %v409
    %v1808 = vunpack.c.l.b16 %v410
    %v1809 = vunpack.c.h.b16 %v410
    %v1810 = vunpack.c.l.b16 %v411
    %v1811 = vunpack.c.h.b16 %v411
    %v1812 = vunpack.c.l.b16 %v412
    %v1813 = vunpack.c.h.b16 %v412
    %v1814 = vunpack.c.l.b16 %v413
    %v1815 = vunpack.c.h.b16 %v413
    %v1816 = vunpack.c.l.b16 %v414
    %v1817 = vunpack.c.h.b16 %v414
    %v1818 = vunpack.c.l.b16 %v415
    %v1819 = vunpack.c.h.b16 %v415
    %v1820 = vunpack.c.l.b16 %v416
    %v1821 = vunpack.c.h.b16 %v416
    %v1822 = vunpack.c.l.b16 %v417
    %v1823 = vunpack.c.h.b16 %v417
    %v1824 = vunpack.c.l.b16 %v418
    %v1825 = vunpack.c.h.b16 %v418
    %v1826 = vunpack.c.l.b16 %v419
    %v1827 = vunpack.c.h.b16 %v419
    %v1828 = vunpack.c.l.b16 %v420
    %v1829 = vunpack.c.h.b16 %v420
    %v1830 = vunpack.c.l.b16 %v421
    %v1831 = vunpack.c.h.b16 %v421
    %v1832 = vunpack.c.l.b16 %v422
    %v1833 = vunpack.c.h.b16 %v422
    %v1834 = vunpack.c.l.b16 %v423
    %v1835 = vunpack.c.h.b16 %v423
    %v1836 = vunpack.c.l.b16 %v424
    %v1837 = vunpack.c.h.b16 %v424
    %v1838 = vunpack.c.l.b16 %v425
    %v1839 = vunpack.c.h.b16 %v425
    %v1840 = vunpack.c.l.b16 %v426
    %v1841 = vunpack.c.h.b16 %v426
    %v1842 = vunpack.c.l.b16 %v427
    %v1843 = vunpack.c.h.b16 %v427
    %v1844 = vunpack.c.l.b16 %v428
    %v1845 = vunpack.c.h.b16 %v428
    %v1846 = vunpack.c.l.b16 %v429
    %v1847 = vunpack.c.h.b16 %v429
    %v1848 = vunpack.c.l.b16 %v430
    %v1849 = vunpack.c.h.b16 %v430
    %v1850 = vunpack.c.l.b16 %v431
    %v1851 = vunpack.c.h.b16 %v431
    %v1852 = vunpack.c.l.b16 %v432
    %v1853 = vunpack.c.h.b16 %v432
    %v1854 = vunpack.c.l.b16 %v433
    %v1855 = vunpack.c.h.b16 %v433
    %v1856 = vunpack.c.l.b16 %v434
    %v1857 = vunpack.c.h.b16 %v434
    %v1858 = vunpack.c.l.b16 %v435
    %v1859 = vunpack.c.h.b16 %v435
    %v1860 = vunpack.c.l.b16 %v436
    %v1861 = vunpack.c.h.b16 %v436
    %v1862 = vunpack.c.l.b16 %v437
    %v1863 = vunpack.c.h.b16 %v437
    %v1864 = vunpack.c.l.b16 %v438
    %v1865 = vunpack.c.h.b16 %v438
    %v1866 = vunpack.c.l.b16 %v439
    %v1867 = vunpack.c.h.b16 %v439
    %v1868 = vunpack.c.l.b16 %v440
    %v1869 = vunpack.c.h.b16 %v440
    %v1870 = vunpack.c.l.b16 %v441
    %v1871 = vunpack.c.h.b16 %v441
    %v1872 = vunpack.c.l.b16 %v442
    %v1873 = vunpack.c.h.b16 %v442
    %v1874 = vunpack.c.l.b16 %v443
    %v1875 = vunpack.c.h.b16 %v443
    %v1876 = vunpack.c.l.b16 %v444
    %v1877 = vunpack.c.h.b16 %v444
    %v1878 = vunpack.c.l.b16 %v445
    %v1879 = vunpack.c.h.b16 %v445
    %v1880 = vunpack.c.l.b16 %v446
    %v1881 = vunpack.c.h.b16 %v446
    %v1882 = vunpack.c.l.b16 %v447
    %v1883 = vunpack.c.h.b16 %v447
    %v1884 = vunpack.c.l.b16 %v448
    %v1885 = vunpack.c.h.b16 %v448
    %v1886 = vunpack.c.l.b16 %v449
    %v1887 = vunpack.c.h.b16 %v449
    %v1888 = vunpack.c.l.b16 %v450
    %v1889 = vunpack.c.h.b16 %v450
    %v1890 = vunpack.c.l.b16 %v451
    %v1891 = vunpack.c.h.b16 %v451
    %v1892 = vunpack.c.l.b16 %v452
    %v1893 = vunpack.c.h.b16 %v452
    %v1894 = vunpack.c.l.b16 %v453
    %v1895 = vunpack.c.h.b16 %v453
    %v1896 = vunpack.c.l.b16 %v454
    %v1897 = vunpack.c.h.b16 %v454
    %v1898 = vunpack.c.l.b16 %v455
    %v1899 = vunpack.c.h.b16 %v455
    %v1900 = vunpack.c.l.b16 %v456
    %v1901 = vunpack.c.h.b16 %v456
    %v1902 = vunpack.c.l.b16 %v457
    %v1903 = vunpack.c.h.b16 %v457
    %v1904 = vunpack.c.l.b16 %v458
    %v1905 = vunpack.c.h.b16 %v458
    %v1906 = vunpack.c.l.b16 %v459
    %v1907 = vunpack.c.h.b16 %v459
    %v1908 = vunpack.c.l.b16 %v460
    %v1909 = vunpack.c.h.b16 %v460
    %v1910 = vunpack.c.l.b16 %v461
    %v1911 = vunpack.c.h.b16 %v461
    %v1912 = vunpack.c.l.b16 %v462
    %v1913 = vunpack.c.h.b16 %v462
    %v1914 = vunpack.c.l.b16 %v463
    %v1915 = vunpack.c.h.b16 %v463
    %v1916 = vunpack.c.l.b16 %v464
    %v1917 = vunpack.c.h.b16 %v464
    %v1918 = vunpack.c.l.b16 %v465
    %v1919 = vunpack.c.h.b16 %v465
    %v1920 = vunpack.c.l.b16 %v466
    %v1921 = vunpack.c.h.b16 %v466
    %v1922 = vunpack.c.l.b16 %v467
    %v1923 = vunpack.c.h.b16 %v467
    %v1924 = vunpack.c.l.b16 %v468
    %v1925 = vunpack.c.h.b16 %v468
    %v1926 = vunpack.c.l.b16 %v469
    %v1927 = vunpack.c.h.b16 %v469
    %v1928 = vunpack.c.l.b16 %v470
    %v1929 = vunpack.c.h.b16 %v470
    %v1930 = vunpack.c.l.b16 %v471
    %v1931 = vunpack.c.h.b16 %v471
    %v1932 = vunpack.c.l.b16 %v472
    %v1933 = vunpack.c.h.b16 %v472
    %v1934 = vunpack.c.l.b16 %v473
    %v1935 = vunpack.c.h.b16 %v473
    %v1936 = vunpack.c.l.b16 %v474
    %v1937 = vunpack.c.h.b16 %v474
    %v1938 = vunpack.c.l.b16 %v475
    %v1939 = vunpack.c.h.b16 %v475
    %v1940 = vunpack.c.l.b16 %v476
    %v1941 = vunpack.c.h.b16 %v476
    %v1942 = vunpack.c.l.b16 %v477
    %v1943 = vunpack.c.h.b16 %v477
    %v1944 = vunpack.c.l.b16 %v478
    %v1945 = vunpack.c.h.b16 %v478
    %v1946 = vunpack.c.l.b16 %v479
    %v1947 = vunpack.c.h.b16 %v479
    %v1948 = vunpack.c.l.b16 %v480
    %v1949 = vunpack.c.h.b16 %v480
    %v1950 = vunpack.c.l.b16 %v481
    %v1951 = vunpack.c.h.b16 %v481
    %v1952 = vunpack.c.l.b16 %v482
    %v1953 = vunpack.c.h.b16 %v482
    %v1954 = vunpack.c.l.b16 %v483
    %v1955 = vunpack.c.h.b16 %v483
    %v1956 = vunpack.c.l.b16 %v484
    %v1957 = vunpack.c.h.b16 %v484
    %v1958 = vunpack.c.l.b16 %v485
    %v1959 = vunpack.c.h.b16 %v485
    %v1960 = vunpack.c.l.b16 %v486
    %v1961 = vunpack.c.h.b16 %v486
    %v1962 = vunpack.c.l.b16 %v487
    %v1963 = vunpack.c.h.b16 %v487
    %v1964 = vunpack.c.l.b16 %v488
    %v1965 = vunpack.c.h.b16 %v488
    %v1966 = vunpack.c.l.b16 %v489
    %v1967 = vunpack.c.h.b16 %v489
    %v1968 = vunpack.c.l.b16 %v490
    %v1969 = vunpack.c.h.b16 %v490
    %v1970 = vunpack.c.l.b16 %v491
    %v1971 = vunpack.c.h.b16 %v491
    %v1972 = vunpack.c.l.b16 %v492
    %v1973 = vunpack.c.h.b16 %v492
    %v1974 = vunpack.c.l.b16 %v493
    %v1975 = vunpack.c.h.b16 %v493
    %v1976 = vunpack.c.l.b16 %v494
    %v1977 = vunpack.c.h.b16 %v494
    %v1978 = vunpack.c.l.b16 %v495
    %v1979 = vunpack.c.h.b16 %v495
    %v1980 = vunpack.c.l.b16 %v496
    %v1981 = vunpack.c.h.b16 %v496
    %v1982 = vunpack.c.l.b16 %v497
    %v1983 = vunpack.c.h.b16 %v497
    %v1984 = vunpack.c.l.b16 %v498
    %v1985 = vunpack.c.h.b16 %v498
    %v1986 = vunpack.c.l.b16 %v499
    %v1987 = vunpack.c.h.b16 %v499
    %v1988 = vunpack.c.l.b16 %v500
    %v1989 = vunpack.c.h.b16 %v500
    %v1990 = vunpack.c.l.b16 %v501
    %v1991 = vunpack.c.h.b16 %v501
    %v1992 = vunpack.c.l.b16 %v502
    %v1993 = vunpack.c.h.b16 %v502
    %v1994 = vunpack.c.l.b16 %v503
    %v1995 = vunpack.c.h.b16 %v503
    %v1996 = vunpack.c.l.b16 %v504
    %v1997 = vunpack.c.h.b16 %v504
    %v1998 = vunpack.c.l.b16 %v505
    %v1999 = vunpack.c.h.b16 %v505
    %v2000 = vunpack.c.l.b16 %v506
    %v2001 = vunpack.c.h.b16 %v506
    %v2002 = vunpack.c.l.b16 %v507
    %v2003 = vunpack.c.h.b16 %v507
    %v2004 = vunpack.c.l.b16 %v508
    %v2005 = vunpack.c.h.b16 %v508
    %v2006 = vunpack.c.l.b16 %v509
    %v2007 = vunpack.c.h.b16 %v509
    %v2008 = vunpack.c.l.b16 %v510
    %v2009 = vunpack.c.h.b16 %v510
    %v2010 = vunpack.c.l.b16 %v511
    %v2011 = vunpack.c.h.b16 %v511
    %v2012 = vunpack.c.l.b16 %v512
    %v2013 = vunpack.c.h.b16 %v512
    %v2014 = vunpack.c.l.b16 %v513
    %v2015 = vunpack.c.h.b16 %v513
    %v2016 = vunpack.c.l.b16 %v514
    %v2017 = vunpack.c.h.b16 %v514
    %v2018 = vunpack.c.l.b16 %v515
    %v2019 = vunpack.c.h.b16 %v515
    %v2020 = vunpack.c.l.b16 %v516
    %v2021 = vunpack.c.h.b16 %v516
    %v2022 = vunpack.c.l.b16 %v517
    %v2023 = vunpack.c.h.b16 %v517
    %v2024 = vunpack.c.l.b16 %v518
    %v2025 = vunpack.c.h.b16 %v518
    %v2026 = vunpack.c.l.b16 %v519
    %v2027 = vunpack.c.h.b16 %v519
    %v2028 = vunpack.c.l.b16 %v520
    %v2029 = vunpack.c.h.b16 %v520
    %v2030 = vunpack.c.l.b16 %v521
    %v2031 = vunpack.c.h.b16 %v521
    %v2032 = vunpack.c.l.b16 %v522
    %v2033 = vunpack.c.h.b16 %v522
    %v2034 = vunpack.c.l.b16 %v523
    %v2035 = vunpack.c.h.b16 %v523
    %v2036 = vunpack.c.l.b16 %v524
    %v2037 = vunpack.c.h.b16 %v524
    %v2038 = vunpack.c.l.b16 %v525
    %v2039 = vunpack.c.h.b16 %v525
    %v2040 = vunpack.c.l.b16 %v526
    %v2041 = vunpack.c.h.b16 %v526
    %v2042 = vunpack.c.l.b16 %v527
    %v2043 = vunpack.c.h.b16 %v527
    %v2044 = vunpack.c.l.b16 %v528
    %v2045 = vunpack.c.h.b16 %v528
    %v2046 = vunpack.c.l.b16 %v529
    %v2047 = vunpack.c.h.b16 %v529
    %v2048 = vunpack.c.l.b16 %v530
    %v2049 = vunpack.c.h.b16 %v530
    %v2050 = vunpack.c.l.b16 %v531
    %v2051 = vunpack.c.h.b16 %v531
    %v2052 = vunpack.c.l.b16 %v532
    %v2053 = vunpack.c.h.b16 %v532
    %v2054 = vunpack.c.l.b16 %v533
    %v2055 = vunpack.c.h.b16 %v533
    %v2056 = vunpack.c.l.b16 %v534
    %v2057 = vunpack.c.h.b16 %v534
    %v2058 = vunpack.c.l.b16 %v535
    %v2059 = vunpack.c.h.b16 %v535
    %v2060 = vunpack.c.l.b16 %v536
    %v2061 = vunpack.c.h.b16 %v536
    %v2062 = vunpack.c.l.b16 %v537
    %v2063 = vunpack.c.h.b16 %v537
    %v2064 = vunpack.c.l.b16 %v538
    %v2065 = vunpack.c.h.b16 %v538
    %v2066 = vunpack.c.l.b16 %v539
    %v2067 = vunpack.c.h.b16 %v539
    %v2068 = vunpack.c.l.b16 %v540
    %v2069 = vunpack.c.h.b16 %v540
    %v2070 = vunpack.c.l.b16 %v541
    %v2071 = vunpack.c.h.b16 %v541
    %v2072 = vunpack.c.l.b16 %v542
    %v2073 = vunpack.c.h.b16 %v542
    %v2074 = vunpack.c.l.b16 %v543
    %v2075 = vunpack.c.h.b16 %v543
    %v2076 = vunpack.c.l.b16 %v544
    %v2077 = vunpack.c.h.b16 %v544
    %v2078 = vunpack.c.l.b16 %v545
    %v2079 = vunpack.c.h.b16 %v545
    %v2080 = vunpack.c.l.b16 %v546
    %v2081 = vunpack.c.h.b16 %v546
    %v2082 = vunpack.c.l.b16 %v547
    %v2083 = vunpack.c.h.b16 %v547
    %v2084 = vunpack.c.l.b16 %v548
    %v2085 = vunpack.c.h.b16 %v548
    %v2086 = vunpack.c.l.b16 %v549
    %v2087 = vunpack.c.h.b16 %v549
    %v2088 = vunpack.c.l.b16 %v550
    %v2089 = vunpack.c.h.b16 %v550
    %v2090 = vunpack.c.l.b16 %v551
    %v2091 = vunpack.c.h.b16 %v551
    %v2092 = vunpack.c.l.b16 %v552
    %v2093 = vunpack.c.h.b16 %v552
    %v2094 = vunpack.c.l.b16 %v553
    %v2095 = vunpack.c.h.b16 %v553
    %v2096 = vunpack.c.l.b16 %v554
    %v2097 = vunpack.c.h.b16 %v554
    %v2098 = vunpack.c.l.b16 %v555
    %v2099 = vunpack.c.h.b16 %v555
    %v2100 = vunpack.c.l.b16 %v556
    %v2101 = vunpack.c.h.b16 %v556
    %v2102 = vunpack.c.l.b16 %v557
    %v2103 = vunpack.c.h.b16 %v557
    %v2104 = vunpack.c.l.b16 %v558
    %v2105 = vunpack.c.h.b16 %v558
    %v2106 = vunpack.c.l.b16 %v559
    %v2107 = vunpack.c.h.b16 %v559
    %v2108 = vunpack.c.l.b16 %v560
    %v2109 = vunpack.c.h.b16 %v560
    %v2110 = vunpack.c.l.b16 %v561
    %v2111 = vunpack.c.h.b16 %v561
    %v2112 = vunpack.c.l.b16 %v562
    %v2113 = vunpack.c.h.b16 %v562
    %v2114 = vunpack.c.l.b16 %v563
    %v2115 = vunpack.c.h.b16 %v563
    %v2116 = vunpack.c.l.b16 %v564
    %v2117 = vunpack.c.h.b16 %v564
    %v2118 = vunpack.c.l.b16 %v565
    %v2119 = vunpack.c.h.b16 %v565
    %v2120 = vunpack.c.l.b16 %v566
    %v2121 = vunpack.c.h.b16 %v566
    %v2122 = vunpack.c.l.b16 %v567
    %v2123 = vunpack.c.h.b16 %v567
    %v2124 = vunpack.c.l.b16 %v568
    %v2125 = vunpack.c.h.b16 %v568
    %v2126 = vunpack.c.l.b16 %v569
    %v2127 = vunpack.c.h.b16 %v569
    %v2128 = vunpack.c.l.b16 %v570
    %v2129 = vunpack.c.h.b16 %v570
    %v2130 = vunpack.c.l.b16 %v571
    %v2131 = vunpack.c.h.b16 %v571
    %v2132 = vunpack.c.l.b16 %v572
    %v2133 = vunpack.c.h.b16 %v572
    %v2134 = vunpack.c.l.b16 %v573
    %v2135 = vunpack.c.h.b16 %v573
    %v2136 = vunpack.c.l.b16 %v574
    %v2137 = vunpack.c.h.b16 %v574
    %v2138 = vunpack.c.l.b16 %v575
    %v2139 = vunpack.c.h.b16 %v575
    %v2140 = vunpack.c.l.b16 %v576
    %v2141 = vunpack.c.h.b16 %v576
    %v2142 = vunpack.c.l.b16 %v577
    %v2143 = vunpack.c.h.b16 %v577
    %v2144 = vunpack.c.l.b16 %v578
    %v2145 = vunpack.c.h.b16 %v578
    %v2146 = vunpack.c.l.b16 %v579
    %v2147 = vunpack.c.h.b16 %v579
    %v2148 = vunpack.c.l.b16 %v580
    %v2149 = vunpack.c.h.b16 %v580
    %v2150 = vunpack.c.l.b16 %v581
    %v2151 = vunpack.c.h.b16 %v581
    %v2152 = vunpack.c.l.b16 %v582
    %v2153 = vunpack.c.h.b16 %v582
    %v2154 = vunpack.c.l.b16 %v583
    %v2155 = vunpack.c.h.b16 %v583
    %v2156 = vunpack.c.l.b16 %v584
    %v2157 = vunpack.c.h.b16 %v584
    %v2158 = vunpack.c.l.b16 %v585
    %v2159 = vunpack.c.h.b16 %v585
    %v2160 = vunpack.c.l.b16 %v586
    %v2161 = vunpack.c.h.b16 %v586
    %v2162 = vunpack.c.l.b16 %v587
    %v2163 = vunpack.c.h.b16 %v587
    %v2164 = vunpack.c.l.b16 %v588
    %v2165 = vunpack.c.h.b16 %v588
    %v2166 = vunpack.c.l.b16 %v589
    %v2167 = vunpack.c.h.b16 %v589
    %v2168 = vunpack.c.l.b16 %v590
    %v2169 = vunpack.c.h.b16 %v590
    %v2170 = vunpack.c.l.b16 %v591
    %v2171 = vunpack.c.h.b16 %v591
    %v2172 = vunpack.c.l.b16 %v592
    %v2173 = vunpack.c.h.b16 %v592
    %v2174 = vunpack.c.l.b16 %v593
    %v2175 = vunpack.c.h.b16 %v593
    %v2176 = vunpack.c.l.b16 %v594
    %v2177 = vunpack.c.h.b16 %v594
    %v2178 = vunpack.c.l.b16 %v595
    %v2179 = vunpack.c.h.b16 %v595
    %v2180 = vunpack.c.l.b16 %v596
    %v2181 = vunpack.c.h.b16 %v596
    %v2182 = vunpack.c.l.b16 %v597
    %v2183 = vunpack.c.h.b16 %v597
    %v2184 = vunpack.c.l.b16 %v598
    %v2185 = vunpack.c.h.b16 %v598
    %v2186 = vunpack.c.l.b16 %v599
    %v2187 = vunpack.c.h.b16 %v599
    %v2188 = vunpack.c.l.b16 %v600
    %v2189 = vunpack.c.h.b16 %v600
    %v2190 = vunpack.c.l.b16 %v601
    %v2191 = vunpack.c.h.b16 %v601
    %v2192 = vunpack.c.l.b16 %v602
    %v2193 = vunpack.c.h.b16 %v602
    %v2194 = vunpack.c.l.b16 %v603
    %v2195 = vunpack.c.h.b16 %v603
    %v2196 = vunpack.c.l.b16 %v604
    %v2197 = vunpack.c.h.b16 %v604
    %v2198 = vunpack.c.l.b16 %v605
    %v2199 = vunpack.c.h.b16 %v605
    %v2200 = vunpack.c.l.b16 %v606
    %v2201 = vunpack.c.h.b16 %v606
    %v2202 = vunpack.c.l.b16 %v607
    %v2203 = vunpack.c.h.b16 %v607
    %v2204 = vunpack.c.l.b16 %v608
    %v2205 = vunpack.c.h.b16 %v608
    %v2206 = vunpack.c.l.b16 %v609
    %v2207 = vunpack.c.h.b16 %v609
    %v2208 = vunpack.c.l.b16 %v610
    %v2209 = vunpack.c.h.b16 %v610
    %v2210 = vunpack.c.l.b16 %v611
    %v2211 = vunpack.c.h.b16 %v611
    %v2212 = vunpack.c.l.b16 %v612
    %v2213 = vunpack.c.h.b16 %v612
    %v2214 = vunpack.c.l.b16 %v613
    %v2215 = vunpack.c.h.b16 %v613
    %v2216 = vunpack.c.l.b16 %v614
    %v2217 = vunpack.c.h.b16 %v614
    %v2218 = vunpack.c.l.b16 %v615
    %v2219 = vunpack.c.h.b16 %v615
    %v2220 = vunpack.c.l.b16 %v616
    %v2221 = vunpack.c.h.b16 %v616
    %v2222 = vunpack.c.l.b16 %v617
    %v2223 = vunpack.c.h.b16 %v617
    %v2224 = vunpack.c.l.b16 %v618
    %v2225 = vunpack.c.h.b16 %v618
    %v2226 = vunpack.c.l.b16 %v619
    %v2227 = vunpack.c.h.b16 %v619
    %v2228 = vunpack.c.l.b16 %v620
    %v2229 = vunpack.c.h.b16 %v620
    %v2230 = vunpack.c.l.b16 %v621
    %v2231 = vunpack.c.h.b16 %v621
    %v2232 = vunpack.c.l.b16 %v622
    %v2233 = vunpack.c.h.b16 %v622
    %v2234 = vunpack.c.l.b16 %v623
    %v2235 = vunpack.c.h.b16 %v623
    %v2236 = vunpack.c.l.b16 %v624
    %v2237 = vunpack.c.h.b16 %v624
    %v2238 = vunpack.c.l.b16 %v625
    %v2239 = vunpack.c.h.b16 %v625
    %v2240 = vpack.c.b16 %v1220, %v1216
    %v2241 = vpack.c.b16 %v1221, %v1217
    %v2242 = vpack.c.b16 %v1222, %v1218
    %v2243 = vpack.c.b16 %v1223, %v1219
    %v2244 = vpack.c.b16 %v1228, %v1224
    %v2245 = vpack.c.b16 %v1229, %v1225
    %v2246 = vpack.c.b16 %v1230, %v1226
    %v2247 = vpack.c.b16 %v1231, %v1227
    %v2248 = vpack.c.b16 %v1236, %v1232
    %v2249 = vpack.c.b16 %v1237, %v1233
    %v2250 = vpack.c.b16 %v1238, %v1234
    %v2251 = vpack.c.b16 %v1239, %v1235
    %v2252 = vpack.c.b16 %v1244, %v1240
    %v2253 = vpack.c.b16 %v1245, %v1241
    %v2254 = vpack.c.b16 %v1246, %v1242
    %v2255 = vpack.c.b16 %v1247, %v1243
    %v2256 = vpack.c.b16 %v1252, %v1248
    %v2257 = vpack.c.b16 %v1253, %v1249
    %v2258 = vpack.c.b16 %v1254, %v1250
    %v2259 = vpack.c.b16 %v1255, %v1251
    %v2260 = vpack.c.b16 %v1260, %v1256
    %v2261 = vpack.c.b16 %v1261, %v1257
    %v2262 = vpack.c.b16 %v1262, %v1258
    %v2263 = vpack.c.b16 %v1263, %v1259
    %v2264 = vpack.c.b16 %v1268, %v1264
    %v2265 = vpack.c.b16 %v1269, %v1265
    %v2266 = vpack.c.b16 %v1270, %v1266
    %v2267 = vpack.c.b16 %v1271, %v1267
    %v2268 = vpack.c.b16 %v1276, %v1272
    %v2269 = vpack.c.b16 %v1277, %v1273
    %v2270 = vpack.c.b16 %v1278, %v1274
    %v2271 = vpack.c.b16 %v1279, %v1275
    %v2272 = vpack.c.b16 %v1284, %v1280
    %v2273 = vpack.c.b16 %v1285, %v1281
    %v2274 = vpack.c.b16 %v1286, %v1282
    %v2275 = vpack.c.b16 %v1287, %v1283
    %v2276 = vpack.c.b16 %v1292, %v1288
    %v2277 = vpack.c.b16 %v1293, %v1289
    %v2278 = vpack.c.b16 %v1294, %v1290
    %v2279 = vpack.c.b16 %v1295, %v1291
    %v2280 = vpack.c.b16 %v1300, %v1296
    %v2281 = vpack.c.b16 %v1301, %v1297
    %v2282 = vpack.c.b16 %v1302, %v1298
    %v2283 = vpack.c.b16 %v1303, %v1299
    %v2284 = vpack.c.b16 %v1308, %v1304
    %v2285 = vpack.c.b16 %v1309, %v1305
    %v2286 = vpack.c.b16 %v1310, %v1306
    %v2287 = vpack.c.b16 %v1311, %v1307
    %v2288 = vpack.c.b16 %v1316, %v1312
    %v2289 = vpack.c.b16 %v1317, %v1313
    %v2290 = vpack.c.b16 %v1318, %v1314
    %v2291 = vpack.c.b16 %v1319, %v1315
    %v2292 = vpack.c.b16 %v1324, %v1320
    %v2293 = vpack.c.b16 %v1325, %v1321
    %v2294 = vpack.c.b16 %v1326, %v1322
    %v2295 = vpack.c.b16 %v1327, %v1323
    %v2296 = vpack.c.b16 %v1332, %v1328
    %v2297 = vpack.c.b16 %v1333, %v1329
    %v2298 = vpack.c.b16 %v1334, %v1330
    %v2299 = vpack.c.b16 %v1335, %v1331
    %v2300 = vpack.c.b16 %v1340, %v1336
    %v2301 = vpack.c.b16 %v1341, %v1337
    %v2302 = vpack.c.b16 %v1342, %v1338
    %v2303 = vpack.c.b16 %v1343, %v1339
    %v2304 = vpack.c.b16 %v1348, %v1344
    %v2305 = vpack.c.b16 %v1349, %v1345
    %v2306 = vpack.c.b16 %v1350, %v1346
    %v2307 = vpack.c.b16 %v1351, %v1347
    %v2308 = vpack.c.b16 %v1356, %v1352
    %v2309 = vpack.c.b16 %v1357, %v1353
    %v2310 = vpack.c.b16 %v1358, %v1354
    %v2311 = vpack.c.b16 %v1359, %v1355
    %v2312 = vpack.c.b16 %v1364, %v1360
    %v2313 = vpack.c.b16 %v1365, %v1361
    %v2314 = vpack.c.b16 %v1366, %v1362
    %v2315 = vpack.c.b16 %v1367, %v1363
    %v2316 = vpack.c.b16 %v1372, %v1368
    %v2317 = vpack.c.b16 %v1373, %v1369
    %v2318 = vpack.c.b16 %v1374, %v1370
    %v2319 = vpack.c.b16 %v1375, %v1371
    %v2320 = vpack.c.b16 %v1380, %v1376
    %v2321 = vpack.c.b16 %v1381, %v1377
    %v2322 = vpack.c.b16 %v1382, %v1378
    %v2323 = vpack.c.b16 %v1383, %v1379
    %v2324 = vpack.c.b16 %v1388, %v1384
    %v2325 = vpack.c.b16 %v1389, %v1385
    %v2326 = vpack.c.b16 %v1390, %v1386
    %v2327 = vpack.c.b16 %v1391, %v1387
    %v2328 = vpack.c.b16 %v1396, %v1392
    %v2329 = vpack.c.b16 %v1397, %v1393
    %v2330 = vpack.c.b16 %v1398, %v1394
    %v2331 = vpack.c.b16 %v1399, %v1395
    %v2332 = vpack.c.b16 %v1404, %v1400
    %v2333 = vpack.c.b16 %v1405, %v1401
    %v2334 = vpack.c.b16 %v1406, %v1402
    %v2335 = vpack.c.b16 %v1407, %v1403
    %v2336 = vpack.c.b16 %v1412, %v1408
    %v2337 = vpack.c.b16 %v1413, %v1409
    %v2338 = vpack.c.b16 %v1414, %v1410
    %v2339 = vpack.c.b16 %v1415, %v1411
    %v2340 = vpack.c.b16 %v1420, %v1416
    %v2341 = vpack.c.b16 %v1421, %v1417
    %v2342 = vpack.c.b16 %v1422, %v1418
    %v2343 = vpack.c.b16 %v1423, %v1419
    %v2344 = vpack.c.b16 %v1428, %v1424
    %v2345 = vpack.c.b16 %v1429, %v1425
    %v2346 = vpack.c.b16 %v1430, %v1426
    %v2347 = vpack.c.b16 %v1431, %v1427
    %v2348 = vpack.c.b16 %v1436, %v1432
    %v2349 = vpack.c.b16 %v1437, %v1433
    %v2350 = vpack.c.b16 %v1438, %v1434
    %v2351 = vpack.c.b16 %v1439, %v1435
    %v2352 = vpack.c.b16 %v1444, %v1440
    %v2353 = vpack.c.b16 %v1445, %v1441
    %v2354 = vpack.c.b16 %v1446, %v1442
    %v2355 = vpack.c.b16 %v1447, %v1443
    %v2356 = vpack.c.b16 %v1452, %v1448
    %v2357 = vpack.c.b16 %v1453, %v1449
    %v2358 = vpack.c.b16 %v1454, %v1450
    %v2359 = vpack.c.b16 %v1455, %v1451
    %v2360 = vpack.c.b16 %v1460, %v1456
    %v2361 = vpack.c.b16 %v1461, %v1457
    %v2362 = vpack.c.b16 %v1462, %v1458
    %v2363 = vpack.c.b16 %v1463, %v1459
    %v2364 = vpack.c.b16 %v1468, %v1464
    %v2365 = vpack.c.b16 %v1469, %v1465
    %v2366 = vpack.c.b16 %v1470, %v1466
    %v2367 = vpack.c.b16 %v1471, %v1467
    %v2368 = vpack.c.b16 %v1476, %v1472
    %v2369 = vpack.c.b16 %v1477, %v1473
    %v2370 = vpack.c.b16 %v1478, %v1474
    %v2371 = vpack.c.b16 %v1479, %v1475
    %v2372 = vpack.c.b16 %v1484, %v1480
    %v2373 = vpack.c.b16 %v1485, %v1481
    %v2374 = vpack.c.b16 %v1486, %v1482
    %v2375 = vpack.c.b16 %v1487, %v1483
    %v2376 = vpack.c.b16 %v1492, %v1488
    %v2377 = vpack.c.b16 %v1493, %v1489
    %v2378 = vpack.c.b16 %v1494, %v1490
    %v2379 = vpack.c.b16 %v1495, %v1491
    %v2380 = vpack.c.b16 %v1500, %v1496
    %v2381 = vpack.c.b16 %v1501, %v1497
    %v2382 = vpack.c.b16 %v1502, %v1498
    %v2383 = vpack.c.b16 %v1503, %v1499
    %v2384 = vpack.c.b16 %v1508, %v1504
    %v2385 = vpack.c.b16 %v1509, %v1505
    %v2386 = vpack.c.b16 %v1510, %v1506
    %v2387 = vpack.c.b16 %v1511, %v1507
    %v2388 = vpack.c.b16 %v1516, %v1512
    %v2389 = vpack.c.b16 %v1517, %v1513
    %v2390 = vpack.c.b16 %v1518, %v1514
    %v2391 = vpack.c.b16 %v1519, %v1515
    %v2392 = vpack.c.b16 %v1524, %v1520
    %v2393 = vpack.c.b16 %v1525, %v1521
    %v2394 = vpack.c.b16 %v1526, %v1522
    %v2395 = vpack.c.b16 %v1527, %v1523
    %v2396 = vpack.c.b16 %v1532, %v1528
    %v2397 = vpack.c.b16 %v1533, %v1529
    %v2398 = vpack.c.b16 %v1534, %v1530
    %v2399 = vpack.c.b16 %v1535, %v1531
    %v2400 = vpack.c.b16 %v1540, %v1536
    %v2401 = vpack.c.b16 %v1541, %v1537
    %v2402 = vpack.c.b16 %v1542, %v1538
    %v2403 = vpack.c.b16 %v1543, %v1539
    %v2404 = vpack.c.b16 %v1548, %v1544
    %v2405 = vpack.c.b16 %v1549, %v1545
    %v2406 = vpack.c.b16 %v1550, %v1546
    %v2407 = vpack.c.b16 %v1551, %v1547
    %v2408 = vpack.c.b16 %v1556, %v1552
    %v2409 = vpack.c.b16 %v1557, %v1553
    %v2410 = vpack.c.b16 %v1558, %v1554
    %v2411 = vpack.c.b16 %v1559, %v1555
    %v2412 = vpack.c.b16 %v1564, %v1560
    %v2413 = vpack.c.b16 %v1565, %v1561
    %v2414 = vpack.c.b16 %v1566, %v1562
    %v2415 = vpack.c.b16 %v1567, %v1563
    %v2416 = vpack.c.b16 %v1572, %v1568
    %v2417 = vpack.c.b16 %v1573, %v1569
    %v2418 = vpack.c.b16 %v1574, %v1570
    %v2419 = vpack.c.b16 %v1575, %v1571
    %v2420 = vpack.c.b16 %v1580, %v1576
    %v2421 = vpack.c.b16 %v1581, %v1577
    %v2422 = vpack.c.b16 %v1582, %v1578
    %v2423 = vpack.c.b16 %v1583, %v1579
    %v2424 = vpack.c.b16 %v1588, %v1584
    %v2425 = vpack.c.b16 %v1589, %v1585
    %v2426 = vpack.c.b16 %v1590, %v1586
    %v2427 = vpack.c.b16 %v1591, %v1587
    %v2428 = vpack.c.b16 %v1596, %v1592
    %v2429 = vpack.c.b16 %v1597, %v1593
    %v2430 = vpack.c.b16 %v1598, %v1594
    %v2431 = vpack.c.b16 %v1599, %v1595
    %v2432 = vpack.c.b16 %v1604, %v1600
    %v2433 = vpack.c.b16 %v1605, %v1601
    %v2434 = vpack.c.b16 %v1606, %v1602
    %v2435 = vpack.c.b16 %v1607, %v1603
    %v2436 = vpack.c.b16 %v1612, %v1608
    %v2437 = vpack.c.b16 %v1613, %v1609
    %v2438 = vpack.c.b16 %v1614, %v1610
    %v2439 = vpack.c.b16 %v1615, %v1611
    %v2440 = vpack.c.b16 %v1620, %v1616
    %v2441 = vpack.c.b16 %v1621, %v1617
    %v2442 = vpack.c.b16 %v1622, %v1618
    %v2443 = vpack.c.b16 %v1623, %v1619
    %v2444 = vpack.c.b16 %v1628, %v1624
    %v2445 = vpack.c.b16 %v1629, %v1625
    %v2446 = vpack.c.b16 %v1630, %v1626
    %v2447 = vpack.c.b16 %v1631, %v1627
    %v2448 = vpack.c.b16 %v1636, %v1632
    %v2449 = vpack.c.b16 %v1637, %v1633
    %v2450 = vpack.c.b16 %v1638, %v1634
    %v2451 = vpack.c.b16 %v1639, %v1635
    %v2452 = vpack.c.b16 %v1644, %v1640
    %v2453 = vpack.c.b16 %v1645, %v1641
    %v2454 = vpack.c.b16 %v1646, %v1642
    %v2455 = vpack.c.b16 %v1647, %v1643
    %v2456 = vpack.c.b16 %v1652, %v1648
    %v2457 = vpack.c.b16 %v1653, %v1649
    %v2458 = vpack.c.b16 %v1654, %v1650
    %v2459 = vpack.c.b16 %v1655, %v1651
    %v2460 = vpack.c.b16 %v1660, %v1656
    %v2461 = vpack.c.b16 %v1661, %v1657
    %v2462 = vpack.c.b16 %v1662, %v1658
    %v2463 = vpack.c.b16 %v1663, %v1659
    %v2464 = vpack.c.b16 %v1668, %v1664
    %v2465 = vpack.c.b16 %v1669, %v1665
    %v2466 = vpack.c.b16 %v1670, %v1666
    %v2467 = vpack.c.b16 %v1671, %v1667
    %v2468 = vpack.c.b16 %v1676, %v1672
    %v2469 = vpack.c.b16 %v1677, %v1673
    %v2470 = vpack.c.b16 %v1678, %v1674
    %v2471 = vpack.c.b16 %v1679, %v1675
    %v2472 = vpack.c.b16 %v1684, %v1680
    %v2473 = vpack.c.b16 %v1685, %v1681
    %v2474 = vpack.c.b16 %v1686, %v1682
    %v2475 = vpack.c.b16 %v1687, %v1683
    %v2476 = vpack.c.b16 %v1692, %v1688
    %v2477 = vpack.c.b16 %v1693, %v1689
    %v2478 = vpack.c.b16 %v1694, %v1690
    %v2479 = vpack.c.b16 %v1695, %v1691
    %v2480 = vpack.c.b16 %v1700, %v1696
    %v2481 = vpack.c.b16 %v1701, %v1697
    %v2482 = vpack.c.b16 %v1702, %v1698
    %v2483 = vpack.c.b16 %v1703, %v1699
    %v2484 = vpack.c.b16 %v1708, %v1704
    %v2485 = vpack.c.b16 %v1709, %v1705
    %v2486 = vpack.c.b16 %v1710, %v1706
    %v2487 = vpack.c.b16 %v1711, %v1707
    %v2488 = vpack.c.b16 %v1716, %v1712
    %v2489 = vpack.c.b16 %v1717, %v1713
    %v2490 = vpack.c.b16 %v1718, %v1714
    %v2491 = vpack.c.b16 %v1719, %v1715
    %v2492 = vpack.c.b16 %v1724, %v1720
    %v2493 = vpack.c.b16 %v1725, %v1721
    %v2494 = vpack.c.b16 %v1726, %v1722
    %v2495 = vpack.c.b16 %v1727, %v1723
    %v2496 = vpack.c.b16 %v1732, %v1728
    %v2497 = vpack.c.b16 %v1733, %v1729
    %v2498 = vpack.c.b16 %v1734, %v1730
    %v2499 = vpack.c.b16 %v1735, %v1731
    %v2500 = vpack.c.b16 %v1740, %v1736
    %v2501 = vpack.c.b16 %v1741, %v1737
    %v2502 = vpack.c.b16 %v1742, %v1738
    %v2503 = vpack.c.b16 %v1743, %v1739
    %v2504 = vpack.c.b16 %v1748, %v1744
    %v2505 = vpack.c.b16 %v1749, %v1745
    %v2506 = vpack.c.b16 %v1750, %v1746
    %v2507 = vpack.c.b16 %v1751, %v1747
    %v2508 = vpack.c.b16 %v1756, %v1752
    %v2509 = vpack.c.b16 %v1757, %v1753
    %v2510 = vpack.c.b16 %v1758, %v1754
    %v2511 = vpack.c.b16 %v1759, %v1755
    %v2512 = vpack.c.b16 %v1764, %v1760
    %v2513 = vpack.c.b16 %v1765, %v1761
    %v2514 = vpack.c.b16 %v1766, %v1762
    %v2515 = vpack.c.b16 %v1767, %v1763
    %v2516 = vpack.c.b16 %v1772, %v1768
    %v2517 = vpack.c.b16 %v1773, %v1769
    %v2518 = vpack.c.b16 %v1774, %v1770
    %v2519 = vpack.c.b16 %v1775, %v1771
    %v2520 = vpack.c.b16 %v1780, %v1776
    %v2521 = vpack.c.b16 %v1781, %v1777
    %v2522 = vpack.c.b16 %v1782, %v1778
    %v2523 = vpack.c.b16 %v1783, %v1779
    %v2524 = vpack.c.b16 %v1788, %v1784
    %v2525 = vpack.c.b16 %v1789, %v1785
    %v2526 = vpack.c.b16 %v1790, %v1786
    %v2527 = vpack.c.b16 %v1791, %v1787
    %v2528 = vpack.c.b16 %v1796, %v1792
    %v2529 = vpack.c.b16 %v1797, %v1793
    %v2530 = vpack.c.b16 %v1798, %v1794
    %v2531 = vpack.c.b16 %v1799, %v1795
    %v2532 = vpack.c.b16 %v1804, %v1800
    %v2533 = vpack.c.b16 %v1805, %v1801
    %v2534 = vpack.c.b16 %v1806, %v1802
    %v2535 = vpack.c.b16 %v1807, %v1803
    %v2536 = vpack.c.b16 %v1812, %v1808
    %v2537 = vpack.c.b16 %v1813, %v1809
    %v2538 = vpack.c.b16 %v1814, %v1810
    %v2539 = vpack.c.b16 %v1815, %v1811
    %v2540 = vpack.c.b16 %v1820, %v1816
    %v2541 = vpack.c.b16 %v1821, %v1817
    %v2542 = vpack.c.b16 %v1822, %v1818
    %v2543 = vpack.c.b16 %v1823, %v1819
    %v2544 = vpack.c.b16 %v1828, %v1824
    %v2545 = vpack.c.b16 %v1829, %v1825
    %v2546 = vpack.c.b16 %v1830, %v1826
    %v2547 = vpack.c.b16 %v1831, %v1827
    %v2548 = vpack.c.b16 %v1836, %v1832
    %v2549 = vpack.c.b16 %v1837, %v1833
    %v2550 = vpack.c.b16 %v1838, %v1834
    %v2551 = vpack.c.b16 %v1839, %v1835
    %v2552 = vpack.c.b16 %v1844, %v1840
    %v2553 = vpack.c.b16 %v1845, %v1841
    %v2554 = vpack.c.b16 %v1846, %v1842
    %v2555 = vpack.c.b16 %v1847, %v1843
    %v2556 = vpack.c.b16 %v1852, %v1848
    %v2557 = vpack.c.b16 %v1853, %v1849
    %v2558 = vpack.c.b16 %v1854, %v1850
    %v2559 = vpack.c.b16 %v1855, %v1851
    %v2560 = vpack.c.b16 %v1860, %v1856
    %v2561 = vpack.c.b16 %v1861, %v1857
    %v2562 = vpack.c.b16 %v1862, %v1858
    %v2563 = vpack.c.b16 %v1863, %v1859
    %v2564 = vpack.c.b16 %v1868, %v1864
    %v2565 = vpack.c.b16 %v1869, %v1865
    %v2566 = vpack.c.b16 %v1870, %v1866
    %v2567 = vpack.c.b16 %v1871, %v1867
    %v2568 = vpack.c.b16 %v1876, %v1872
    %v2569 = vpack.c.b16 %v1877, %v1873
    %v2570 = vpack.c.b16 %v1878, %v1874
    %v2571 = vpack.c.b16 %v1879, %v1875
    %v2572 = vpack.c.b16 %v1884, %v1880
    %v2573 = vpack.c.b16 %v1885, %v1881
    %v2574 = vpack.c.b16 %v1886, %v1882
    %v2575 = vpack.c.b16 %v1887, %v1883
    %v2576 = vpack.c.b16 %v1892, %v1888
    %v2577 = vpack.c.b16 %v1893, %v1889
    %v2578 = vpack.c.b16 %v1894, %v1890
    %v2579 = vpack.c.b16 %v1895, %v1891
    %v2580 = vpack.c.b16 %v1900, %v1896
    %v2581 = vpack.c.b16 %v1901, %v1897
    %v2582 = vpack.c.b16 %v1902, %v1898
    %v2583 = vpack.c.b16 %v1903, %v1899
    %v2584 = vpack.c.b16 %v1908, %v1904
    %v2585 = vpack.c.b16 %v1909, %v1905
    %v2586 = vpack.c.b16 %v1910, %v1906
    %v2587 = vpack.c.b16 %v1911, %v1907
    %v2588 = vpack.c.b16 %v1916, %v1912
    %v2589 = vpack.c.b16 %v1917, %v1913
    %v2590 = vpack.c.b16 %v1918, %v1914
    %v2591 = vpack.c.b16 %v1919, %v1915
    %v2592 = vpack.c.b16 %v1924, %v1920
    %v2593 = vpack.c.b16 %v1925, %v1921
    %v2594 = vpack.c.b16 %v1926, %v1922
    %v2595 = vpack.c.b16 %v1927, %v1923
    %v2596 = vpack.c.b16 %v1932, %v1928
    %v2597 = vpack.c.b16 %v1933, %v1929
    %v2598 = vpack.c.b16 %v1934, %v1930
    %v2599 = vpack.c.b16 %v1935, %v1931
    %v2600 = vpack.c.b16 %v1940, %v1936
    %v2601 = vpack.c.b16 %v1941, %v1937
    %v2602 = vpack.c.b16 %v1942, %v1938
    %v2603 = vpack.c.b16 %v1943, %v1939
    %v2604 = vpack.c.b16 %v1948, %v1944
    %v2605 = vpack.c.b16 %v1949, %v1945
    %v2606 = vpack.c.b16 %v1950, %v1946
    %v2607 = vpack.c.b16 %v1951, %v1947
    %v2608 = vpack.c.b16 %v1956, %v1952
    %v2609 = vpack.c.b16 %v1957, %v1953
    %v2610 = vpack.c.b16 %v1958, %v1954
    %v2611 = vpack.c.b16 %v1959, %v1955
    %v2612 = vpack.c.b16 %v1964, %v1960
    %v2613 = vpack.c.b16 %v1965, %v1961
    %v2614 = vpack.c.b16 %v1966, %v1962
    %v2615 = vpack.c.b16 %v1967, %v1963
    %v2616 = vpack.c.b16 %v1972, %v1968
    %v2617 = vpack.c.b16 %v1973, %v1969
    %v2618 = vpack.c.b16 %v1974, %v1970
    %v2619 = vpack.c.b16 %v1975, %v1971
    %v2620 = vpack.c.b16 %v1980, %v1976
    %v2621 = vpack.c.b16 %v1981, %v1977
    %v2622 = vpack.c.b16 %v1982, %v1978
    %v2623 = vpack.c.b16 %v1983, %v1979
    %v2624 = vpack.c.b16 %v1988, %v1984
    %v2625 = vpack.c.b16 %v1989, %v1985
    %v2626 = vpack.c.b16 %v1990, %v1986
    %v2627 = vpack.c.b16 %v1991, %v1987
    %v2628 = vpack.c.b16 %v1996, %v1992
    %v2629 = vpack.c.b16 %v1997, %v1993
    %v2630 = vpack.c.b16 %v1998, %v1994
    %v2631 = vpack.c.b16 %v1999, %v1995
    %v2632 = vpack.c.b16 %v2004, %v2000
    %v2633 = vpack.c.b16 %v2005, %v2001
    %v2634 = vpack.c.b16 %v2006, %v2002
    %v2635 = vpack.c.b16 %v2007, %v2003
    %v2636 = vpack.c.b16 %v2012, %v2008
    %v2637 = vpack.c.b16 %v2013, %v2009
    %v2638 = vpack.c.b16 %v2014, %v2010
    %v2639 = vpack.c.b16 %v2015, %v2011
    %v2640 = vpack.c.b16 %v2020, %v2016
    %v2641 = vpack.c.b16 %v2021, %v2017
    %v2642 = vpack.c.b16 %v2022, %v2018
    %v2643 = vpack.c.b16 %v2023, %v2019
    %v2644 = vpack.c.b16 %v2028, %v2024
    %v2645 = vpack.c.b16 %v2029, %v2025
    %v2646 = vpack.c.b16 %v2030, %v2026
    %v2647 = vpack.c.b16 %v2031, %v2027
    %v2648 = vpack.c.b16 %v2036, %v2032
    %v2649 = vpack.c.b16 %v2037, %v2033
    %v2650 = vpack.c.b16 %v2038, %v2034
    %v2651 = vpack.c.b16 %v2039, %v2035
    %v2652 = vpack.c.b16 %v2044, %v2040
    %v2653 = vpack.c.b16 %v2045, %v2041
    %v2654 = vpack.c.b16 %v2046, %v2042
    %v2655 = vpack.c.b16 %v2047, %v2043
    %v2656 = vpack.c.b16 %v2052, %v2048
    %v2657 = vpack.c.b16 %v2053, %v2049
    %v2658 = vpack.c.b16 %v2054, %v2050
    %v2659 = vpack.c.b16 %v2055, %v2051
    %v2660 = vpack.c.b16 %v2060, %v2056
    %v2661 = vpack.c.b16 %v2061, %v2057
    %v2662 = vpack.c.b16 %v2062, %v2058
    %v2663 = vpack.c.b16 %v2063, %v2059
    %v2664 = vpack.c.b16 %v2068, %v2064
    %v2665 = vpack.c.b16 %v2069, %v2065
    %v2666 = vpack.c.b16 %v2070, %v2066
    %v2667 = vpack.c.b16 %v2071, %v2067
    %v2668 = vpack.c.b16 %v2076, %v2072
    %v2669 = vpack.c.b16 %v2077, %v2073
    %v2670 = vpack.c.b16 %v2078, %v2074
    %v2671 = vpack.c.b16 %v2079, %v2075
    %v2672 = vpack.c.b16 %v2084, %v2080
    %v2673 = vpack.c.b16 %v2085, %v2081
    %v2674 = vpack.c.b16 %v2086, %v2082
    %v2675 = vpack.c.b16 %v2087, %v2083
    %v2676 = vpack.c.b16 %v2092, %v2088
    %v2677 = vpack.c.b16 %v2093, %v2089
    %v2678 = vpack.c.b16 %v2094, %v2090
    %v2679 = vpack.c.b16 %v2095, %v2091
    %v2680 = vpack.c.b16 %v2100, %v2096
    %v2681 = vpack.c.b16 %v2101, %v2097
    %v2682 = vpack.c.b16 %v2102, %v2098
    %v2683 = vpack.c.b16 %v2103, %v2099
    %v2684 = vpack.c.b16 %v2108, %v2104
    %v2685 = vpack.c.b16 %v2109, %v2105
    %v2686 = vpack.c.b16 %v2110, %v2106
    %v2687 = vpack.c.b16 %v2111, %v2107
    %v2688 = vpack.c.b16 %v2116, %v2112
    %v2689 = vpack.c.b16 %v2117, %v2113
    %v2690 = vpack.c.b16 %v2118, %v2114
    %v2691 = vpack.c.b16 %v2119, %v2115
    %v2692 = vpack.c.b16 %v2124, %v2120
    %v2693 = vpack.c.b16 %v2125, %v2121
    %v2694 = vpack.c.b16 %v2126, %v2122
    %v2695 = vpack.c.b16 %v2127, %v2123
    %v2696 = vpack.c.b16 %v2132, %v2128
    %v2697 = vpack.c.b16 %v2133, %v2129
    %v2698 = vpack.c.b16 %v2134, %v2130
    %v2699 = vpack.c.b16 %v2135, %v2131
    %v2700 = vpack.c.b16 %v2140, %v2136
    %v2701 = vpack.c.b16 %v2141, %v2137
    %v2702 = vpack.c.b16 %v2142, %v2138
    %v2703 = vpack.c.b16 %v2143, %v2139
    %v2704 = vpack.c.b16 %v2148, %v2144
    %v2705 = vpack.c.b16 %v2149, %v2145
    %v2706 = vpack.c.b16 %v2150, %v2146
    %v2707 = vpack.c.b16 %v2151, %v2147
    %v2708 = vpack.c.b16 %v2156, %v2152
    %v2709 = vpack.c.b16 %v2157, %v2153
    %v2710 = vpack.c.b16 %v2158, %v2154
    %v2711 = vpack.c.b16 %v2159, %v2155
    %v2712 = vpack.c.b16 %v2164, %v2160
    %v2713 = vpack.c.b16 %v2165, %v2161
    %v2714 = vpack.c.b16 %v2166, %v2162
    %v2715 = vpack.c.b16 %v2167, %v2163
    %v2716 = vpack.c.b16 %v2172, %v2168
    %v2717 = vpack.c.b16 %v2173, %v2169
    %v2718 = vpack.c.b16 %v2174, %v2170
    %v2719 = vpack.c.b16 %v2175, %v2171
    %v2720 = vpack.c.b16 %v2180, %v2176
    %v2721 = vpack.c.b16 %v2181, %v2177
    %v2722 = vpack.c.b16 %v2182, %v2178
    %v2723 = vpack.c.b16 %v2183, %v2179
    %v2724 = vpack.c.b16 %v2188, %v2184
    %v2725 = vpack.c.b16 %v2189, %v2185
    %v2726 = vpack.c.b16 %v2190, %v2186
    %v2727 = vpack.c.b16 %v2191, %v2187
    %v2728 = vpack.c.b16 %v2196, %v2192
    %v2729 = vpack.c.b16 %v2197, %v2193
    %v2730 = vpack.c.b16 %v2198, %v2194
    %v2731 = vpack.c.b16 %v2199, %v2195
    %v2732 = vpack.c.b16 %v2204, %v2200
    %v2733 = vpack.c.b16 %v2205, %v2201
    %v2734 = vpack.c.b16 %v2206, %v2202
    %v2735 = vpack.c.b16 %v2207, %v2203
    %v2736 = vpack.c.b16 %v2212, %v2208
    %v2737 = vpack.c.b16 %v2213, %v2209
    %v2738 = vpack.c.b16 %v2214, %v2210
    %v2739 = vpack.c.b16 %v2215, %v2211
    %v2740 = vpack.c.b16 %v2220, %v2216
    %v2741 = vpack.c.b16 %v2221, %v2217
    %v2742 = vpack.c.b16 %v2222, %v2218
    %v2743 = vpack.c.b16 %v2223, %v2219
    %v2744 = vpack.c.b16 %v2228, %v2224
    %v2745 = vpack.c.b16 %v2229, %v2225
    %v2746 = vpack.c.b16 %v2230, %v2226
    %v2747 = vpack.c.b16 %v2231, %v2227
    %v2748 = vpack.c.b16 %v2236, %v2232
    %v2749 = vpack.c.b16 %v2237, %v2233
    %v2750 = vpack.c.b16 %v2238, %v2234
    %v2751 = vpack.c.b16 %v2239, %v2235
    %3264 = vmatprep.subr.bf16.mxu0 %v2269
    %3265 = vmatpush1.bf16.msra.mxu0 %v2268
    %3266 = vmatprep.subr.bf16.mxu0 %v2265
    %3267 = vmatpush1.bf16.msra.mxu0 %v2264
    %3268 = vmatprep.subr.bf16.mxu0 %v2261
    %3269 = vmatpush1.bf16.msra.mxu0 %v2260
    %3270 = vmatprep.subr.bf16.mxu0 %v2257
    %3271 = vmatpush1.bf16.msra.mxu0 %v2256
    %3272 = vmatprep.subr.bf16.mxu0 %v2253
    %3273 = vmatpush1.bf16.msra.mxu0 %v2252
    %3274 = vmatprep.subr.bf16.mxu0 %v2249
    %3275 = vmatpush1.bf16.msra.mxu0 %v2248
    %3276 = vmatprep.subr.bf16.mxu0 %v2245
    %3277 = vmatpush1.bf16.msra.mxu0 %v2244
    %3278 = vmatprep.subr.bf16.mxu0 %v2241
    %3279 = vmatpush1.bf16.msra.mxu0 %v2240
    %3280 = vmatprep.subr.bf16.mxu0 %v2301
    %3281 = vmatpush2.bf16.msra.mxu0 %v2300
    %3282 = vmatprep.subr.bf16.mxu0 %v2297
    %3283 = vmatpush2.bf16.msra.mxu0 %v2296
    %3284 = vmatprep.subr.bf16.mxu0 %v2293
    %3285 = vmatpush2.bf16.msra.mxu0 %v2292
    %3286 = vmatprep.subr.bf16.mxu0 %v2289
    %3287 = vmatpush2.bf16.msra.mxu0 %v2288
    %3288 = vmatprep.subr.bf16.mxu0 %v2285
    %3289 = vmatpush2.bf16.msra.mxu0 %v2284
    %3290 = vmatprep.subr.bf16.mxu0 %v2281
    %3291 = vmatpush2.bf16.msra.mxu0 %v2280
    %3292 = vmatprep.subr.bf16.mxu0 %v2277
    %3293 = vmatpush2.bf16.msra.mxu0 %v2276
    %3294 = vmatprep.subr.bf16.mxu0 %v2273
    %3295 = vmatpush2.bf16.msra.mxu0 %v2272
    %3296 = vmatprep.mubr.bf16.mxu0 %v673
    %3297 = vmatmul.mubr.bf16.gmra.mxu0 %v672
    %v3298 = vpop.f32.mrf.mxu0
    %v3299 = vadd.f32 %v631, %v3298
    %v3300 = vpop.f32.mrf.mxu0
    %v3301 = vadd.f32 %v635, %v3300
    %v3302 = vpop.f32.mrf.mxu0
    %v3303 = vpop.f32.mrf.mxu0
    %3304 = vdwg.mxu0
    %3305 = vmatprep.subr.bf16.mxu0 %v2333
    %3306 = vmatpush1.bf16.msra.mxu0 %v2332
    %3307 = vmatprep.subr.bf16.mxu0 %v2329
    %3308 = vmatpush1.bf16.msra.mxu0 %v2328
    %3309 = vmatprep.subr.bf16.mxu0 %v2325
    %3310 = vmatpush1.bf16.msra.mxu0 %v2324
    %3311 = vmatprep.subr.bf16.mxu0 %v2321
    %3312 = vmatpush1.bf16.msra.mxu0 %v2320
    %3313 = vmatprep.subr.bf16.mxu0 %v2317
    %3314 = vmatpush1.bf16.msra.mxu0 %v2316
    %3315 = vmatprep.subr.bf16.mxu0 %v2313
    %3316 = vmatpush1.bf16.msra.mxu0 %v2312
    %3317 = vmatprep.subr.bf16.mxu0 %v2309
    %3318 = vmatpush1.bf16.msra.mxu0 %v2308
    %3319 = vmatprep.subr.bf16.mxu0 %v2305
    %3320 = vmatpush1.bf16.msra.mxu0 %v2304
    %3321 = vmatprep.subr.bf16.mxu0 %v2365
    %3322 = vmatpush2.bf16.msra.mxu0 %v2364
    %3323 = vmatprep.subr.bf16.mxu0 %v2361
    %3324 = vmatpush2.bf16.msra.mxu0 %v2360
    %3325 = vmatprep.subr.bf16.mxu0 %v2357
    %3326 = vmatpush2.bf16.msra.mxu0 %v2356
    %3327 = vmatprep.subr.bf16.mxu0 %v2353
    %3328 = vmatpush2.bf16.msra.mxu0 %v2352
    %3329 = vmatprep.subr.bf16.mxu0 %v2349
    %3330 = vmatpush2.bf16.msra.mxu0 %v2348
    %3331 = vmatprep.subr.bf16.mxu0 %v2345
    %3332 = vmatpush2.bf16.msra.mxu0 %v2344
    %3333 = vmatprep.subr.bf16.mxu0 %v2341
    %3334 = vmatpush2.bf16.msra.mxu0 %v2340
    %3335 = vmatprep.subr.bf16.mxu0 %v2337
    %3336 = vmatpush2.bf16.msra.mxu0 %v2336
    %3337 = vmatprep.mubr.bf16.mxu0 %v675
    %3338 = vmatmul.mubr.bf16.gmra.mxu0 %v674
    %v3339 = vpop.f32.mrf.mxu0
    %v3340 = vadd.f32 %v3299, %v3339
    %v3341 = vpop.f32.mrf.mxu0
    %v3342 = vadd.f32 %v3301, %v3341
    %v3343 = vpop.f32.mrf.mxu0
    %v3344 = vpop.f32.mrf.mxu0
    %3345 = vdwg.mxu0
    %3346 = vmatprep.subr.bf16.mxu0 %v2397
    %3347 = vmatpush1.bf16.msra.mxu0 %v2396
    %3348 = vmatprep.subr.bf16.mxu0 %v2393
    %3349 = vmatpush1.bf16.msra.mxu0 %v2392
    %3350 = vmatprep.subr.bf16.mxu0 %v2389
    %3351 = vmatpush1.bf16.msra.mxu0 %v2388
    %3352 = vmatprep.subr.bf16.mxu0 %v2385
    %3353 = vmatpush1.bf16.msra.mxu0 %v2384
    %3354 = vmatprep.subr.bf16.mxu0 %v2381
    %3355 = vmatpush1.bf16.msra.mxu0 %v2380
    %3356 = vmatprep.subr.bf16.mxu0 %v2377
    %3357 = vmatpush1.bf16.msra.mxu0 %v2376
    %3358 = vmatprep.subr.bf16.mxu0 %v2373
    %3359 = vmatpush1.bf16.msra.mxu0 %v2372
    %3360 = vmatprep.subr.bf16.mxu0 %v2369
    %3361 = vmatpush1.bf16.msra.mxu0 %v2368
    %3362 = vmatprep.subr.bf16.mxu0 %v2429
    %3363 = vmatpush2.bf16.msra.mxu0 %v2428
    %3364 = vmatprep.subr.bf16.mxu0 %v2425
    %3365 = vmatpush2.bf16.msra.mxu0 %v2424
    %3366 = vmatprep.subr.bf16.mxu0 %v2421
    %3367 = vmatpush2.bf16.msra.mxu0 %v2420
    %3368 = vmatprep.subr.bf16.mxu0 %v2417
    %3369 = vmatpush2.bf16.msra.mxu0 %v2416
    %3370 = vmatprep.subr.bf16.mxu0 %v2413
    %3371 = vmatpush2.bf16.msra.mxu0 %v2412
    %3372 = vmatprep.subr.bf16.mxu0 %v2409
    %3373 = vmatpush2.bf16.msra.mxu0 %v2408
    %3374 = vmatprep.subr.bf16.mxu0 %v2405
    %3375 = vmatpush2.bf16.msra.mxu0 %v2404
    %3376 = vmatprep.subr.bf16.mxu0 %v2401
    %3377 = vmatpush2.bf16.msra.mxu0 %v2400
    %3378 = vmatprep.mubr.bf16.mxu0 %v677
    %3379 = vmatmul.mubr.bf16.gmra.mxu0 %v676
    %v3380 = vpop.f32.mrf.mxu0
    %v3381 = vadd.f32 %v3340, %v3380
    %v3382 = vpop.f32.mrf.mxu0
    %v3383 = vadd.f32 %v3342, %v3382
    %v3384 = vpop.f32.mrf.mxu0
    %v3385 = vpop.f32.mrf.mxu0
    %3386 = vdwg.mxu0
    %3387 = vmatprep.subr.bf16.mxu0 %v2461
    %3388 = vmatpush1.bf16.msra.mxu0 %v2460
    %3389 = vmatprep.subr.bf16.mxu0 %v2457
    %3390 = vmatpush1.bf16.msra.mxu0 %v2456
    %3391 = vmatprep.subr.bf16.mxu0 %v2453
    %3392 = vmatpush1.bf16.msra.mxu0 %v2452
    %3393 = vmatprep.subr.bf16.mxu0 %v2449
    %3394 = vmatpush1.bf16.msra.mxu0 %v2448
    %3395 = vmatprep.subr.bf16.mxu0 %v2445
    %3396 = vmatpush1.bf16.msra.mxu0 %v2444
    %3397 = vmatprep.subr.bf16.mxu0 %v2441
    %3398 = vmatpush1.bf16.msra.mxu0 %v2440
    %3399 = vmatprep.subr.bf16.mxu0 %v2437
    %3400 = vmatpush1.bf16.msra.mxu0 %v2436
    %3401 = vmatprep.subr.bf16.mxu0 %v2433
    %3402 = vmatpush1.bf16.msra.mxu0 %v2432
    %3403 = vmatprep.subr.bf16.mxu0 %v2493
    %3404 = vmatpush2.bf16.msra.mxu0 %v2492
    %3405 = vmatprep.subr.bf16.mxu0 %v2489
    %3406 = vmatpush2.bf16.msra.mxu0 %v2488
    %3407 = vmatprep.subr.bf16.mxu0 %v2485
    %3408 = vmatpush2.bf16.msra.mxu0 %v2484
    %3409 = vmatprep.subr.bf16.mxu0 %v2481
    %3410 = vmatpush2.bf16.msra.mxu0 %v2480
    %3411 = vmatprep.subr.bf16.mxu0 %v2477
    %3412 = vmatpush2.bf16.msra.mxu0 %v2476
    %3413 = vmatprep.subr.bf16.mxu0 %v2473
    %3414 = vmatpush2.bf16.msra.mxu0 %v2472
    %3415 = vmatprep.subr.bf16.mxu0 %v2469
    %3416 = vmatpush2.bf16.msra.mxu0 %v2468
    %3417 = vmatprep.subr.bf16.mxu0 %v2465
    %3418 = vmatpush2.bf16.msra.mxu0 %v2464
    %3419 = vmatprep.mubr.bf16.mxu0 %v679
    %3420 = vmatmul.mubr.bf16.gmra.mxu0 %v678
    %v3421 = vpop.f32.mrf.mxu0
    %v3422 = vadd.f32 %v3381, %v3421
    %v3423 = vpop.f32.mrf.mxu0
    %v3424 = vadd.f32 %v3383, %v3423
    %v3425 = vpop.f32.mrf.mxu0
    %v3426 = vpop.f32.mrf.mxu0
    %3427 = vdwg.mxu0
    %3428 = vmatprep.subr.bf16.mxu0 %v2525
    %3429 = vmatpush1.bf16.msra.mxu0 %v2524
    %3430 = vmatprep.subr.bf16.mxu0 %v2521
    %3431 = vmatpush1.bf16.msra.mxu0 %v2520
    %3432 = vmatprep.subr.bf16.mxu0 %v2517
    %3433 = vmatpush1.bf16.msra.mxu0 %v2516
    %3434 = vmatprep.subr.bf16.mxu0 %v2513
    %3435 = vmatpush1.bf16.msra.mxu0 %v2512
    %3436 = vmatprep.subr.bf16.mxu0 %v2509
    %3437 = vmatpush1.bf16.msra.mxu0 %v2508
    %3438 = vmatprep.subr.bf16.mxu0 %v2505
    %3439 = vmatpush1.bf16.msra.mxu0 %v2504
    %3440 = vmatprep.subr.bf16.mxu0 %v2501
    %3441 = vmatpush1.bf16.msra.mxu0 %v2500
    %3442 = vmatprep.subr.bf16.mxu0 %v2497
    %3443 = vmatpush1.bf16.msra.mxu0 %v2496
    %3444 = vmatprep.subr.bf16.mxu0 %v2557
    %3445 = vmatpush2.bf16.msra.mxu0 %v2556
    %3446 = vmatprep.subr.bf16.mxu0 %v2553
    %3447 = vmatpush2.bf16.msra.mxu0 %v2552
    %3448 = vmatprep.subr.bf16.mxu0 %v2549
    %3449 = vmatpush2.bf16.msra.mxu0 %v2548
    %3450 = vmatprep.subr.bf16.mxu0 %v2545
    %3451 = vmatpush2.bf16.msra.mxu0 %v2544
    %3452 = vmatprep.subr.bf16.mxu0 %v2541
    %3453 = vmatpush2.bf16.msra.mxu0 %v2540
    %3454 = vmatprep.subr.bf16.mxu0 %v2537
    %3455 = vmatpush2.bf16.msra.mxu0 %v2536
    %3456 = vmatprep.subr.bf16.mxu0 %v2533
    %3457 = vmatpush2.bf16.msra.mxu0 %v2532
    %3458 = vmatprep.subr.bf16.mxu0 %v2529
    %3459 = vmatpush2.bf16.msra.mxu0 %v2528
    %3460 = vmatprep.mubr.bf16.mxu0 %v681
    %3461 = vmatmul.mubr.bf16.gmra.mxu0 %v680
    %v3462 = vpop.f32.mrf.mxu0
    %v3463 = vadd.f32 %v3422, %v3462
    %v3464 = vpop.f32.mrf.mxu0
    %v3465 = vadd.f32 %v3424, %v3464
    %v3466 = vpop.f32.mrf.mxu0
    %v3467 = vpop.f32.mrf.mxu0
    %3468 = vdwg.mxu0
    %3469 = vmatprep.subr.bf16.mxu0 %v2589
    %3470 = vmatpush1.bf16.msra.mxu0 %v2588
    %3471 = vmatprep.subr.bf16.mxu0 %v2585
    %3472 = vmatpush1.bf16.msra.mxu0 %v2584
    %3473 = vmatprep.subr.bf16.mxu0 %v2581
    %3474 = vmatpush1.bf16.msra.mxu0 %v2580
    %3475 = vmatprep.subr.bf16.mxu0 %v2577
    %3476 = vmatpush1.bf16.msra.mxu0 %v2576
    %3477 = vmatprep.subr.bf16.mxu0 %v2573
    %3478 = vmatpush1.bf16.msra.mxu0 %v2572
    %3479 = vmatprep.subr.bf16.mxu0 %v2569
    %3480 = vmatpush1.bf16.msra.mxu0 %v2568
    %3481 = vmatprep.subr.bf16.mxu0 %v2565
    %3482 = vmatpush1.bf16.msra.mxu0 %v2564
    %3483 = vmatprep.subr.bf16.mxu0 %v2561
    %3484 = vmatpush1.bf16.msra.mxu0 %v2560
    %3485 = vmatprep.subr.bf16.mxu0 %v2621
    %3486 = vmatpush2.bf16.msra.mxu0 %v2620
    %3487 = vmatprep.subr.bf16.mxu0 %v2617
    %3488 = vmatpush2.bf16.msra.mxu0 %v2616
    %3489 = vmatprep.subr.bf16.mxu0 %v2613
    %3490 = vmatpush2.bf16.msra.mxu0 %v2612
    %3491 = vmatprep.subr.bf16.mxu0 %v2609
    %3492 = vmatpush2.bf16.msra.mxu0 %v2608
    %3493 = vmatprep.subr.bf16.mxu0 %v2605
    %3494 = vmatpush2.bf16.msra.mxu0 %v2604
    %3495 = vmatprep.subr.bf16.mxu0 %v2601
    %3496 = vmatpush2.bf16.msra.mxu0 %v2600
    %3497 = vmatprep.subr.bf16.mxu0 %v2597
    %3498 = vmatpush2.bf16.msra.mxu0 %v2596
    %3499 = vmatprep.subr.bf16.mxu0 %v2593
    %3500 = vmatpush2.bf16.msra.mxu0 %v2592
    %3501 = vmatprep.mubr.bf16.mxu0 %v683
    %3502 = vmatmul.mubr.bf16.gmra.mxu0 %v682
    %v3503 = vpop.f32.mrf.mxu0
    %v3504 = vadd.f32 %v3463, %v3503
    %v3505 = vpop.f32.mrf.mxu0
    %v3506 = vadd.f32 %v3465, %v3505
    %v3507 = vpop.f32.mrf.mxu0
    %v3508 = vpop.f32.mrf.mxu0
    %3509 = vdwg.mxu0
    %3510 = vmatprep.subr.bf16.mxu0 %v2653
    %3511 = vmatpush1.bf16.msra.mxu0 %v2652
    %3512 = vmatprep.subr.bf16.mxu0 %v2649
    %3513 = vmatpush1.bf16.msra.mxu0 %v2648
    %3514 = vmatprep.subr.bf16.mxu0 %v2645
    %3515 = vmatpush1.bf16.msra.mxu0 %v2644
    %3516 = vmatprep.subr.bf16.mxu0 %v2641
    %3517 = vmatpush1.bf16.msra.mxu0 %v2640
    %3518 = vmatprep.subr.bf16.mxu0 %v2637
    %3519 = vmatpush1.bf16.msra.mxu0 %v2636
    %3520 = vmatprep.subr.bf16.mxu0 %v2633
    %3521 = vmatpush1.bf16.msra.mxu0 %v2632
    %3522 = vmatprep.subr.bf16.mxu0 %v2629
    %3523 = vmatpush1.bf16.msra.mxu0 %v2628
    %3524 = vmatprep.subr.bf16.mxu0 %v2625
    %3525 = vmatpush1.bf16.msra.mxu0 %v2624
    %3526 = vmatprep.subr.bf16.mxu0 %v2685
    %3527 = vmatpush2.bf16.msra.mxu0 %v2684
    %3528 = vmatprep.subr.bf16.mxu0 %v2681
    %3529 = vmatpush2.bf16.msra.mxu0 %v2680
    %3530 = vmatprep.subr.bf16.mxu0 %v2677
    %3531 = vmatpush2.bf16.msra.mxu0 %v2676
    %3532 = vmatprep.subr.bf16.mxu0 %v2673
    %3533 = vmatpush2.bf16.msra.mxu0 %v2672
    %3534 = vmatprep.subr.bf16.mxu0 %v2669
    %3535 = vmatpush2.bf16.msra.mxu0 %v2668
    %3536 = vmatprep.subr.bf16.mxu0 %v2665
    %3537 = vmatpush2.bf16.msra.mxu0 %v2664
    %3538 = vmatprep.subr.bf16.mxu0 %v2661
    %3539 = vmatpush2.bf16.msra.mxu0 %v2660
    %3540 = vmatprep.subr.bf16.mxu0 %v2657
    %3541 = vmatpush2.bf16.msra.mxu0 %v2656
    %3542 = vmatprep.mubr.bf16.mxu0 %v685
    %3543 = vmatmul.mubr.bf16.gmra.mxu0 %v684
    %v3544 = vpop.f32.mrf.mxu0
    %v3545 = vadd.f32 %v3504, %v3544
    %v3546 = vpop.f32.mrf.mxu0
    %v3547 = vadd.f32 %v3506, %v3546
    %v3548 = vpop.f32.mrf.mxu0
    %v3549 = vpop.f32.mrf.mxu0
    %3550 = vdwg.mxu0
    %3551 = vmatprep.subr.bf16.mxu0 %v2717
    %3552 = vmatpush1.bf16.msra.mxu0 %v2716
    %3553 = vmatprep.subr.bf16.mxu0 %v2713
    %3554 = vmatpush1.bf16.msra.mxu0 %v2712
    %3555 = vmatprep.subr.bf16.mxu0 %v2709
    %3556 = vmatpush1.bf16.msra.mxu0 %v2708
    %3557 = vmatprep.subr.bf16.mxu0 %v2705
    %3558 = vmatpush1.bf16.msra.mxu0 %v2704
    %3559 = vmatprep.subr.bf16.mxu0 %v2701
    %3560 = vmatpush1.bf16.msra.mxu0 %v2700
    %3561 = vmatprep.subr.bf16.mxu0 %v2697
    %3562 = vmatpush1.bf16.msra.mxu0 %v2696
    %3563 = vmatprep.subr.bf16.mxu0 %v2693
    %3564 = vmatpush1.bf16.msra.mxu0 %v2692
    %3565 = vmatprep.subr.bf16.mxu0 %v2689
    %3566 = vmatpush1.bf16.msra.mxu0 %v2688
    %3567 = vmatprep.subr.bf16.mxu0 %v2749
    %3568 = vmatpush2.bf16.msra.mxu0 %v2748
    %3569 = vmatprep.subr.bf16.mxu0 %v2745
    %3570 = vmatpush2.bf16.msra.mxu0 %v2744
    %3571 = vmatprep.subr.bf16.mxu0 %v2741
    %3572 = vmatpush2.bf16.msra.mxu0 %v2740
    %3573 = vmatprep.subr.bf16.mxu0 %v2737
    %3574 = vmatpush2.bf16.msra.mxu0 %v2736
    %3575 = vmatprep.subr.bf16.mxu0 %v2733
    %3576 = vmatpush2.bf16.msra.mxu0 %v2732
    %3577 = vmatprep.subr.bf16.mxu0 %v2729
    %3578 = vmatpush2.bf16.msra.mxu0 %v2728
    %3579 = vmatprep.subr.bf16.mxu0 %v2725
    %3580 = vmatpush2.bf16.msra.mxu0 %v2724
    %3581 = vmatprep.subr.bf16.mxu0 %v2721
    %3582 = vmatpush2.bf16.msra.mxu0 %v2720
    %3583 = vmatprep.mubr.bf16.mxu0 %v687
    %3584 = vmatmul.mubr.bf16.gmra.mxu0 %v686
    %v3585 = vpop.f32.mrf.mxu0
    %v3586 = vadd.f32 %v3545, %v3585
    %v3587 = vpop.f32.mrf.mxu0
    %v3588 = vadd.f32 %v3547, %v3587
    %v3589 = vpop.f32.mrf.mxu0
    %v3590 = vpop.f32.mrf.mxu0
    %3591 = vdwg.mxu0
    %3592 = vmatprep.subr.bf16.mxu0 %v2271
    %3593 = vmatpush1.bf16.msra.mxu0 %v2270
    %3594 = vmatprep.subr.bf16.mxu0 %v2267
    %3595 = vmatpush1.bf16.msra.mxu0 %v2266
    %3596 = vmatprep.subr.bf16.mxu0 %v2263
    %3597 = vmatpush1.bf16.msra.mxu0 %v2262
    %3598 = vmatprep.subr.bf16.mxu0 %v2259
    %3599 = vmatpush1.bf16.msra.mxu0 %v2258
    %3600 = vmatprep.subr.bf16.mxu0 %v2255
    %3601 = vmatpush1.bf16.msra.mxu0 %v2254
    %3602 = vmatprep.subr.bf16.mxu0 %v2251
    %3603 = vmatpush1.bf16.msra.mxu0 %v2250
    %3604 = vmatprep.subr.bf16.mxu0 %v2247
    %3605 = vmatpush1.bf16.msra.mxu0 %v2246
    %3606 = vmatprep.subr.bf16.mxu0 %v2243
    %3607 = vmatpush1.bf16.msra.mxu0 %v2242
    %3608 = vmatprep.subr.bf16.mxu0 %v2303
    %3609 = vmatpush2.bf16.msra.mxu0 %v2302
    %3610 = vmatprep.subr.bf16.mxu0 %v2299
    %3611 = vmatpush2.bf16.msra.mxu0 %v2298
    %3612 = vmatprep.subr.bf16.mxu0 %v2295
    %3613 = vmatpush2.bf16.msra.mxu0 %v2294
    %3614 = vmatprep.subr.bf16.mxu0 %v2291
    %3615 = vmatpush2.bf16.msra.mxu0 %v2290
    %3616 = vmatprep.subr.bf16.mxu0 %v2287
    %3617 = vmatpush2.bf16.msra.mxu0 %v2286
    %3618 = vmatprep.subr.bf16.mxu0 %v2283
    %3619 = vmatpush2.bf16.msra.mxu0 %v2282
    %3620 = vmatprep.subr.bf16.mxu0 %v2279
    %3621 = vmatpush2.bf16.msra.mxu0 %v2278
    %3622 = vmatprep.subr.bf16.mxu0 %v2275
    %3623 = vmatpush2.bf16.msra.mxu0 %v2274
    %3624 = vmatprep.mubr.bf16.mxu0 %v673
    %3625 = vmatmul.mubr.bf16.gmra.mxu0 %v672
    %v3626 = vpop.f32.mrf.mxu0
    %v3627 = vadd.f32 %v639, %v3626
    %v3628 = vpop.f32.mrf.mxu0
    %v3629 = vadd.f32 %v643, %v3628
    %v3630 = vpop.f32.mrf.mxu0
    %v3631 = vpop.f32.mrf.mxu0
    %3632 = vdwg.mxu0
    %3633 = vmatprep.subr.bf16.mxu0 %v2335
    %3634 = vmatpush1.bf16.msra.mxu0 %v2334
    %3635 = vmatprep.subr.bf16.mxu0 %v2331
    %3636 = vmatpush1.bf16.msra.mxu0 %v2330
    %3637 = vmatprep.subr.bf16.mxu0 %v2327
    %3638 = vmatpush1.bf16.msra.mxu0 %v2326
    %3639 = vmatprep.subr.bf16.mxu0 %v2323
    %3640 = vmatpush1.bf16.msra.mxu0 %v2322
    %3641 = vmatprep.subr.bf16.mxu0 %v2319
    %3642 = vmatpush1.bf16.msra.mxu0 %v2318
    %3643 = vmatprep.subr.bf16.mxu0 %v2315
    %3644 = vmatpush1.bf16.msra.mxu0 %v2314
    %3645 = vmatprep.subr.bf16.mxu0 %v2311
    %3646 = vmatpush1.bf16.msra.mxu0 %v2310
    %3647 = vmatprep.subr.bf16.mxu0 %v2307
    %3648 = vmatpush1.bf16.msra.mxu0 %v2306
    %3649 = vmatprep.subr.bf16.mxu0 %v2367
    %3650 = vmatpush2.bf16.msra.mxu0 %v2366
    %3651 = vmatprep.subr.bf16.mxu0 %v2363
    %3652 = vmatpush2.bf16.msra.mxu0 %v2362
    %3653 = vmatprep.subr.bf16.mxu0 %v2359
    %3654 = vmatpush2.bf16.msra.mxu0 %v2358
    %3655 = vmatprep.subr.bf16.mxu0 %v2355
    %3656 = vmatpush2.bf16.msra.mxu0 %v2354
    %3657 = vmatprep.subr.bf16.mxu0 %v2351
    %3658 = vmatpush2.bf16.msra.mxu0 %v2350
    %3659 = vmatprep.subr.bf16.mxu0 %v2347
    %3660 = vmatpush2.bf16.msra.mxu0 %v2346
    %3661 = vmatprep.subr.bf16.mxu0 %v2343
    %3662 = vmatpush2.bf16.msra.mxu0 %v2342
    %3663 = vmatprep.subr.bf16.mxu0 %v2339
    %3664 = vmatpush2.bf16.msra.mxu0 %v2338
    %3665 = vmatprep.mubr.bf16.mxu0 %v675
    %3666 = vmatmul.mubr.bf16.gmra.mxu0 %v674
    %v3667 = vpop.f32.mrf.mxu0
    %v3668 = vadd.f32 %v3627, %v3667
    %v3669 = vpop.f32.mrf.mxu0
    %v3670 = vadd.f32 %v3629, %v3669
    %v3671 = vpop.f32.mrf.mxu0
    %v3672 = vpop.f32.mrf.mxu0
    %3673 = vdwg.mxu0
    %3674 = vmatprep.subr.bf16.mxu0 %v2399
    %3675 = vmatpush1.bf16.msra.mxu0 %v2398
    %3676 = vmatprep.subr.bf16.mxu0 %v2395
    %3677 = vmatpush1.bf16.msra.mxu0 %v2394
    %3678 = vmatprep.subr.bf16.mxu0 %v2391
    %3679 = vmatpush1.bf16.msra.mxu0 %v2390
    %3680 = vmatprep.subr.bf16.mxu0 %v2387
    %3681 = vmatpush1.bf16.msra.mxu0 %v2386
    %3682 = vmatprep.subr.bf16.mxu0 %v2383
    %3683 = vmatpush1.bf16.msra.mxu0 %v2382
    %3684 = vmatprep.subr.bf16.mxu0 %v2379
    %3685 = vmatpush1.bf16.msra.mxu0 %v2378
    %3686 = vmatprep.subr.bf16.mxu0 %v2375
    %3687 = vmatpush1.bf16.msra.mxu0 %v2374
    %3688 = vmatprep.subr.bf16.mxu0 %v2371
    %3689 = vmatpush1.bf16.msra.mxu0 %v2370
    %3690 = vmatprep.subr.bf16.mxu0 %v2431
    %3691 = vmatpush2.bf16.msra.mxu0 %v2430
    %3692 = vmatprep.subr.bf16.mxu0 %v2427
    %3693 = vmatpush2.bf16.msra.mxu0 %v2426
    %3694 = vmatprep.subr.bf16.mxu0 %v2423
    %3695 = vmatpush2.bf16.msra.mxu0 %v2422
    %3696 = vmatprep.subr.bf16.mxu0 %v2419
    %3697 = vmatpush2.bf16.msra.mxu0 %v2418
    %3698 = vmatprep.subr.bf16.mxu0 %v2415
    %3699 = vmatpush2.bf16.msra.mxu0 %v2414
    %3700 = vmatprep.subr.bf16.mxu0 %v2411
    %3701 = vmatpush2.bf16.msra.mxu0 %v2410
    %3702 = vmatprep.subr.bf16.mxu0 %v2407
    %3703 = vmatpush2.bf16.msra.mxu0 %v2406
    %3704 = vmatprep.subr.bf16.mxu0 %v2403
    %3705 = vmatpush2.bf16.msra.mxu0 %v2402
    %3706 = vmatprep.mubr.bf16.mxu0 %v677
    %3707 = vmatmul.mubr.bf16.gmra.mxu0 %v676
    %v3708 = vpop.f32.mrf.mxu0
    %v3709 = vadd.f32 %v3668, %v3708
    %v3710 = vpop.f32.mrf.mxu0
    %v3711 = vadd.f32 %v3670, %v3710
    %v3712 = vpop.f32.mrf.mxu0
    %v3713 = vpop.f32.mrf.mxu0
    %3714 = vdwg.mxu0
    %3715 = vmatprep.subr.bf16.mxu0 %v2463
    %3716 = vmatpush1.bf16.msra.mxu0 %v2462
    %3717 = vmatprep.subr.bf16.mxu0 %v2459
    %3718 = vmatpush1.bf16.msra.mxu0 %v2458
    %3719 = vmatprep.subr.bf16.mxu0 %v2455
    %3720 = vmatpush1.bf16.msra.mxu0 %v2454
    %3721 = vmatprep.subr.bf16.mxu0 %v2451
    %3722 = vmatpush1.bf16.msra.mxu0 %v2450
    %3723 = vmatprep.subr.bf16.mxu0 %v2447
    %3724 = vmatpush1.bf16.msra.mxu0 %v2446
    %3725 = vmatprep.subr.bf16.mxu0 %v2443
    %3726 = vmatpush1.bf16.msra.mxu0 %v2442
    %3727 = vmatprep.subr.bf16.mxu0 %v2439
    %3728 = vmatpush1.bf16.msra.mxu0 %v2438
    %3729 = vmatprep.subr.bf16.mxu0 %v2435
    %3730 = vmatpush1.bf16.msra.mxu0 %v2434
    %3731 = vmatprep.subr.bf16.mxu0 %v2495
    %3732 = vmatpush2.bf16.msra.mxu0 %v2494
    %3733 = vmatprep.subr.bf16.mxu0 %v2491
    %3734 = vmatpush2.bf16.msra.mxu0 %v2490
    %3735 = vmatprep.subr.bf16.mxu0 %v2487
    %3736 = vmatpush2.bf16.msra.mxu0 %v2486
    %3737 = vmatprep.subr.bf16.mxu0 %v2483
    %3738 = vmatpush2.bf16.msra.mxu0 %v2482
    %3739 = vmatprep.subr.bf16.mxu0 %v2479
    %3740 = vmatpush2.bf16.msra.mxu0 %v2478
    %3741 = vmatprep.subr.bf16.mxu0 %v2475
    %3742 = vmatpush2.bf16.msra.mxu0 %v2474
    %3743 = vmatprep.subr.bf16.mxu0 %v2471
    %3744 = vmatpush2.bf16.msra.mxu0 %v2470
    %3745 = vmatprep.subr.bf16.mxu0 %v2467
    %3746 = vmatpush2.bf16.msra.mxu0 %v2466
    %3747 = vmatprep.mubr.bf16.mxu0 %v679
    %3748 = vmatmul.mubr.bf16.gmra.mxu0 %v678
    %v3749 = vpop.f32.mrf.mxu0
    %v3750 = vadd.f32 %v3709, %v3749
    %v3751 = vpop.f32.mrf.mxu0
    %v3752 = vadd.f32 %v3711, %v3751
    %v3753 = vpop.f32.mrf.mxu0
    %v3754 = vpop.f32.mrf.mxu0
    %3755 = vdwg.mxu0
    %3756 = vmatprep.subr.bf16.mxu0 %v2527
    %3757 = vmatpush1.bf16.msra.mxu0 %v2526
    %3758 = vmatprep.subr.bf16.mxu0 %v2523
    %3759 = vmatpush1.bf16.msra.mxu0 %v2522
    %3760 = vmatprep.subr.bf16.mxu0 %v2519
    %3761 = vmatpush1.bf16.msra.mxu0 %v2518
    %3762 = vmatprep.subr.bf16.mxu0 %v2515
    %3763 = vmatpush1.bf16.msra.mxu0 %v2514
    %3764 = vmatprep.subr.bf16.mxu0 %v2511
    %3765 = vmatpush1.bf16.msra.mxu0 %v2510
    %3766 = vmatprep.subr.bf16.mxu0 %v2507
    %3767 = vmatpush1.bf16.msra.mxu0 %v2506
    %3768 = vmatprep.subr.bf16.mxu0 %v2503
    %3769 = vmatpush1.bf16.msra.mxu0 %v2502
    %3770 = vmatprep.subr.bf16.mxu0 %v2499
    %3771 = vmatpush1.bf16.msra.mxu0 %v2498
    %3772 = vmatprep.subr.bf16.mxu0 %v2559
    %3773 = vmatpush2.bf16.msra.mxu0 %v2558
    %3774 = vmatprep.subr.bf16.mxu0 %v2555
    %3775 = vmatpush2.bf16.msra.mxu0 %v2554
    %3776 = vmatprep.subr.bf16.mxu0 %v2551
    %3777 = vmatpush2.bf16.msra.mxu0 %v2550
    %3778 = vmatprep.subr.bf16.mxu0 %v2547
    %3779 = vmatpush2.bf16.msra.mxu0 %v2546
    %3780 = vmatprep.subr.bf16.mxu0 %v2543
    %3781 = vmatpush2.bf16.msra.mxu0 %v2542
    %3782 = vmatprep.subr.bf16.mxu0 %v2539
    %3783 = vmatpush2.bf16.msra.mxu0 %v2538
    %3784 = vmatprep.subr.bf16.mxu0 %v2535
    %3785 = vmatpush2.bf16.msra.mxu0 %v2534
    %3786 = vmatprep.subr.bf16.mxu0 %v2531
    %3787 = vmatpush2.bf16.msra.mxu0 %v2530
    %3788 = vmatprep.mubr.bf16.mxu0 %v681
    %3789 = vmatmul.mubr.bf16.gmra.mxu0 %v680
    %v3790 = vpop.f32.mrf.mxu0
    %v3791 = vadd.f32 %v3750, %v3790
    %v3792 = vpop.f32.mrf.mxu0
    %v3793 = vadd.f32 %v3752, %v3792
    %v3794 = vpop.f32.mrf.mxu0
    %v3795 = vpop.f32.mrf.mxu0
    %3796 = vdwg.mxu0
    %3797 = vmatprep.subr.bf16.mxu0 %v2591
    %3798 = vmatpush1.bf16.msra.mxu0 %v2590
    %3799 = vmatprep.subr.bf16.mxu0 %v2587
    %3800 = vmatpush1.bf16.msra.mxu0 %v2586
    %3801 = vmatprep.subr.bf16.mxu0 %v2583
    %3802 = vmatpush1.bf16.msra.mxu0 %v2582
    %3803 = vmatprep.subr.bf16.mxu0 %v2579
    %3804 = vmatpush1.bf16.msra.mxu0 %v2578
    %3805 = vmatprep.subr.bf16.mxu0 %v2575
    %3806 = vmatpush1.bf16.msra.mxu0 %v2574
    %3807 = vmatprep.subr.bf16.mxu0 %v2571
    %3808 = vmatpush1.bf16.msra.mxu0 %v2570
    %3809 = vmatprep.subr.bf16.mxu0 %v2567
    %3810 = vmatpush1.bf16.msra.mxu0 %v2566
    %3811 = vmatprep.subr.bf16.mxu0 %v2563
    %3812 = vmatpush1.bf16.msra.mxu0 %v2562
    %3813 = vmatprep.subr.bf16.mxu0 %v2623
    %3814 = vmatpush2.bf16.msra.mxu0 %v2622
    %3815 = vmatprep.subr.bf16.mxu0 %v2619
    %3816 = vmatpush2.bf16.msra.mxu0 %v2618
    %3817 = vmatprep.subr.bf16.mxu0 %v2615
    %3818 = vmatpush2.bf16.msra.mxu0 %v2614
    %3819 = vmatprep.subr.bf16.mxu0 %v2611
    %3820 = vmatpush2.bf16.msra.mxu0 %v2610
    %3821 = vmatprep.subr.bf16.mxu0 %v2607
    %3822 = vmatpush2.bf16.msra.mxu0 %v2606
    %3823 = vmatprep.subr.bf16.mxu0 %v2603
    %3824 = vmatpush2.bf16.msra.mxu0 %v2602
    %3825 = vmatprep.subr.bf16.mxu0 %v2599
    %3826 = vmatpush2.bf16.msra.mxu0 %v2598
    %3827 = vmatprep.subr.bf16.mxu0 %v2595
    %3828 = vmatpush2.bf16.msra.mxu0 %v2594
    %3829 = vmatprep.mubr.bf16.mxu0 %v683
    %3830 = vmatmul.mubr.bf16.gmra.mxu0 %v682
    %v3831 = vpop.f32.mrf.mxu0
    %v3832 = vadd.f32 %v3791, %v3831
    %v3833 = vpop.f32.mrf.mxu0
    %v3834 = vadd.f32 %v3793, %v3833
    %v3835 = vpop.f32.mrf.mxu0
    %v3836 = vpop.f32.mrf.mxu0
    %3837 = vdwg.mxu0
    %3838 = vmatprep.subr.bf16.mxu0 %v2655
    %3839 = vmatpush1.bf16.msra.mxu0 %v2654
    %3840 = vmatprep.subr.bf16.mxu0 %v2651
    %3841 = vmatpush1.bf16.msra.mxu0 %v2650
    %3842 = vmatprep.subr.bf16.mxu0 %v2647
    %3843 = vmatpush1.bf16.msra.mxu0 %v2646
    %3844 = vmatprep.subr.bf16.mxu0 %v2643
    %3845 = vmatpush1.bf16.msra.mxu0 %v2642
    %3846 = vmatprep.subr.bf16.mxu0 %v2639
    %3847 = vmatpush1.bf16.msra.mxu0 %v2638
    %3848 = vmatprep.subr.bf16.mxu0 %v2635
    %3849 = vmatpush1.bf16.msra.mxu0 %v2634
    %3850 = vmatprep.subr.bf16.mxu0 %v2631
    %3851 = vmatpush1.bf16.msra.mxu0 %v2630
    %3852 = vmatprep.subr.bf16.mxu0 %v2627
    %3853 = vmatpush1.bf16.msra.mxu0 %v2626
    %3854 = vmatprep.subr.bf16.mxu0 %v2687
    %3855 = vmatpush2.bf16.msra.mxu0 %v2686
    %3856 = vmatprep.subr.bf16.mxu0 %v2683
    %3857 = vmatpush2.bf16.msra.mxu0 %v2682
    %3858 = vmatprep.subr.bf16.mxu0 %v2679
    %3859 = vmatpush2.bf16.msra.mxu0 %v2678
    %3860 = vmatprep.subr.bf16.mxu0 %v2675
    %3861 = vmatpush2.bf16.msra.mxu0 %v2674
    %3862 = vmatprep.subr.bf16.mxu0 %v2671
    %3863 = vmatpush2.bf16.msra.mxu0 %v2670
    %3864 = vmatprep.subr.bf16.mxu0 %v2667
    %3865 = vmatpush2.bf16.msra.mxu0 %v2666
    %3866 = vmatprep.subr.bf16.mxu0 %v2663
    %3867 = vmatpush2.bf16.msra.mxu0 %v2662
    %3868 = vmatprep.subr.bf16.mxu0 %v2659
    %3869 = vmatpush2.bf16.msra.mxu0 %v2658
    %3870 = vmatprep.mubr.bf16.mxu0 %v685
    %3871 = vmatmul.mubr.bf16.gmra.mxu0 %v684
    %v3872 = vpop.f32.mrf.mxu0
    %v3873 = vadd.f32 %v3832, %v3872
    %v3874 = vpop.f32.mrf.mxu0
    %v3875 = vadd.f32 %v3834, %v3874
    %v3876 = vpop.f32.mrf.mxu0
    %v3877 = vpop.f32.mrf.mxu0
    %3878 = vdwg.mxu0
    %3879 = vmatprep.subr.bf16.mxu0 %v2719
    %3880 = vmatpush1.bf16.msra.mxu0 %v2718
    %3881 = vmatprep.subr.bf16.mxu0 %v2715
    %3882 = vmatpush1.bf16.msra.mxu0 %v2714
    %3883 = vmatprep.subr.bf16.mxu0 %v2711
    %3884 = vmatpush1.bf16.msra.mxu0 %v2710
    %3885 = vmatprep.subr.bf16.mxu0 %v2707
    %3886 = vmatpush1.bf16.msra.mxu0 %v2706
    %3887 = vmatprep.subr.bf16.mxu0 %v2703
    %3888 = vmatpush1.bf16.msra.mxu0 %v2702
    %3889 = vmatprep.subr.bf16.mxu0 %v2699
    %3890 = vmatpush1.bf16.msra.mxu0 %v2698
    %3891 = vmatprep.subr.bf16.mxu0 %v2695
    %3892 = vmatpush1.bf16.msra.mxu0 %v2694
    %3893 = vmatprep.subr.bf16.mxu0 %v2691
    %3894 = vmatpush1.bf16.msra.mxu0 %v2690
    %3895 = vmatprep.subr.bf16.mxu0 %v2751
    %3896 = vmatpush2.bf16.msra.mxu0 %v2750
    %3897 = vmatprep.subr.bf16.mxu0 %v2747
    %3898 = vmatpush2.bf16.msra.mxu0 %v2746
    %3899 = vmatprep.subr.bf16.mxu0 %v2743
    %3900 = vmatpush2.bf16.msra.mxu0 %v2742
    %3901 = vmatprep.subr.bf16.mxu0 %v2739
    %3902 = vmatpush2.bf16.msra.mxu0 %v2738
    %3903 = vmatprep.subr.bf16.mxu0 %v2735
    %3904 = vmatpush2.bf16.msra.mxu0 %v2734
    %3905 = vmatprep.subr.bf16.mxu0 %v2731
    %3906 = vmatpush2.bf16.msra.mxu0 %v2730
    %3907 = vmatprep.subr.bf16.mxu0 %v2727
    %3908 = vmatpush2.bf16.msra.mxu0 %v2726
    %3909 = vmatprep.subr.bf16.mxu0 %v2723
    %3910 = vmatpush2.bf16.msra.mxu0 %v2722
    %3911 = vmatprep.mubr.bf16.mxu0 %v687
    %3912 = vmatmul.mubr.bf16.gmra.mxu0 %v686
    %v3913 = vpop.f32.mrf.mxu0
    %v3914 = vadd.f32 %v3873, %v3913
    %v3915 = vpop.f32.mrf.mxu0
    %v3916 = vadd.f32 %v3875, %v3915
    %v3917 = vpop.f32.mrf.mxu0
    %v3918 = vpop.f32.mrf.mxu0
    %3919 = vdwg.mxu0
    %v3920 = vmax.f32 %v3586, 0.0
    %v3921 = vmax.f32 %v3588, 0.0
    %v3922 = vmax.f32 %v3914, 0.0
    %v3923 = vmax.f32 %v3916, 0.0
    %v3924 = vpack.c.bf16 %v3920, %v3920
    %v3925 = vpack.c.bf16 %v3921, %v3921
    %v3926 = vpack.c.bf16 %v3922, %v3922
    %v3927 = vpack.c.bf16 %v3923, %v3923
    %v3928 = vld [vmem:[%s4] sm:$0xf]
    %v3929 = vld [vmem:[%s4 + $0x4] sm:$0xf]
    %v3930 = vld [vmem:[%s4 + $0x8] sm:$0xf]
    %v3931 = vld [vmem:[%s4 + $0xc] sm:$0xf]
    %v3932 = vld [vmem:[%s4 + $0x10] sm:$0xf]
    %v3933 = vld [vmem:[%s4 + $0x14] sm:$0xf]
    %v3934 = vld [vmem:[%s4 + $0x18] sm:$0xf]
    %v3935 = vld [vmem:[%s4 + $0x1c] sm:$0xf]
    %v3936 = vld [vmem:[%s4 + $0x20] sm:$0xf]
    %v3937 = vld [vmem:[%s4 + $0x24] sm:$0xf]
    %v3938 = vld [vmem:[%s4 + $0x28] sm:$0xf]
    %v3939 = vld [vmem:[%s4 + $0x2c] sm:$0xf]
    %v3940 = vld [vmem:[%s4 + $0x30] sm:$0xf]
    %v3941 = vld [vmem:[%s4 + $0x34] sm:$0xf]
    %v3942 = vld [vmem:[%s4 + $0x38] sm:$0xf]
    %v3943 = vld [vmem:[%s4 + $0x3c] sm:$0xf]
    %v3944 = vld [vmem:[%s4 + $0x40] sm:$0xf]
    %v3945 = vld [vmem:[%s4 + $0x44] sm:$0xf]
    %v3946 = vld [vmem:[%s4 + $0x48] sm:$0xf]
    %v3947 = vld [vmem:[%s4 + $0x4c] sm:$0xf]
    %v3948 = vld [vmem:[%s4 + $0x50] sm:$0xf]
    %v3949 = vld [vmem:[%s4 + $0x54] sm:$0xf]
    %v3950 = vld [vmem:[%s4 + $0x58] sm:$0xf]
    %v3951 = vld [vmem:[%s4 + $0x5c] sm:$0xf]
    %v3952 = vld [vmem:[%s4 + $0x60] sm:$0xf]
    %v3953 = vld [vmem:[%s4 + $0x64] sm:$0xf]
    %v3954 = vld [vmem:[%s4 + $0x68] sm:$0xf]
    %v3955 = vld [vmem:[%s4 + $0x6c] sm:$0xf]
    %v3956 = vld [vmem:[%s4 + $0x70] sm:$0xf]
    %v3957 = vld [vmem:[%s4 + $0x74] sm:$0xf]
    %v3958 = vld [vmem:[%s4 + $0x78] sm:$0xf]
    %v3959 = vld [vmem:[%s4 + $0x7c] sm:$0xf]
    %v3960 = vld [vmem:[%s4 + $0x80] sm:$0xf]
    %v3961 = vld [vmem:[%s4 + $0x84] sm:$0xf]
    %v3962 = vld [vmem:[%s4 + $0x88] sm:$0xf]
    %v3963 = vld [vmem:[%s4 + $0x8c] sm:$0xf]
    %v3964 = vld [vmem:[%s4 + $0x90] sm:$0xf]
    %v3965 = vld [vmem:[%s4 + $0x94] sm:$0xf]
    %v3966 = vld [vmem:[%s4 + $0x98] sm:$0xf]
    %v3967 = vld [vmem:[%s4 + $0x9c] sm:$0xf]
    %v3968 = vld [vmem:[%s4 + $0xa0] sm:$0xf]
    %v3969 = vld [vmem:[%s4 + $0xa4] sm:$0xf]
    %v3970 = vld [vmem:[%s4 + $0xa8] sm:$0xf]
    %v3971 = vld [vmem:[%s4 + $0xac] sm:$0xf]
    %v3972 = vld [vmem:[%s4 + $0xb0] sm:$0xf]
    %v3973 = vld [vmem:[%s4 + $0xb4] sm:$0xf]
    %v3974 = vld [vmem:[%s4 + $0xb8] sm:$0xf]
    %v3975 = vld [vmem:[%s4 + $0xbc] sm:$0xf]
    %v3976 = vld [vmem:[%s4 + $0xc0] sm:$0xf]
    %v3977 = vld [vmem:[%s4 + $0xc4] sm:$0xf]
    %v3978 = vld [vmem:[%s4 + $0xc8] sm:$0xf]
    %v3979 = vld [vmem:[%s4 + $0xcc] sm:$0xf]
    %v3980 = vld [vmem:[%s4 + $0xd0] sm:$0xf]
    %v3981 = vld [vmem:[%s4 + $0xd4] sm:$0xf]
    %v3982 = vld [vmem:[%s4 + $0xd8] sm:$0xf]
    %v3983 = vld [vmem:[%s4 + $0xdc] sm:$0xf]
    %v3984 = vld [vmem:[%s4 + $0xe0] sm:$0xf]
    %v3985 = vld [vmem:[%s4 + $0xe4] sm:$0xf]
    %v3986 = vld [vmem:[%s4 + $0xe8] sm:$0xf]
    %v3987 = vld [vmem:[%s4 + $0xec] sm:$0xf]
    %v3988 = vld [vmem:[%s4 + $0xf0] sm:$0xf]
    %v3989 = vld [vmem:[%s4 + $0xf4] sm:$0xf]
    %v3990 = vld [vmem:[%s4 + $0xf8] sm:$0xf]
    %v3991 = vld [vmem:[%s4 + $0xfc] sm:$0xf]
    %v3992 = vld [vmem:[%s5] sm:$0x1]
    %v3994 = vlaneseq
    %v3995 = vshrl.u32 %v3994, 7
    %v3996 = vsub.s32 0, %v3995
    %v3997 = vrot.slane %v3992, %v3996
    %v4063 = vunpack.c.l.b16 %v3928
    %v4064 = vunpack.c.l.b16 %v3929
    %v4065 = vunpack.c.l.b16 %v3930
    %v4066 = vunpack.c.l.b16 %v3931
    %v4067 = vunpack.c.l.b16 %v3932
    %v4068 = vunpack.c.l.b16 %v3933
    %v4069 = vunpack.c.l.b16 %v3934
    %v4070 = vunpack.c.l.b16 %v3935
    %v4071 = vunpack.c.l.b16 %v3936
    %v4072 = vunpack.c.l.b16 %v3937
    %v4073 = vunpack.c.l.b16 %v3938
    %v4074 = vunpack.c.l.b16 %v3939
    %v4075 = vunpack.c.l.b16 %v3940
    %v4076 = vunpack.c.l.b16 %v3941
    %v4077 = vunpack.c.l.b16 %v3942
    %v4078 = vunpack.c.l.b16 %v3943
    %v4079 = vunpack.c.l.b16 %v3944
    %v4080 = vunpack.c.l.b16 %v3945
    %v4081 = vunpack.c.l.b16 %v3946
    %v4082 = vunpack.c.l.b16 %v3947
    %v4083 = vunpack.c.l.b16 %v3948
    %v4084 = vunpack.c.l.b16 %v3949
    %v4085 = vunpack.c.l.b16 %v3950
    %v4086 = vunpack.c.l.b16 %v3951
    %v4087 = vunpack.c.l.b16 %v3952
    %v4088 = vunpack.c.l.b16 %v3953
    %v4089 = vunpack.c.l.b16 %v3954
    %v4090 = vunpack.c.l.b16 %v3955
    %v4091 = vunpack.c.l.b16 %v3956
    %v4092 = vunpack.c.l.b16 %v3957
    %v4093 = vunpack.c.l.b16 %v3958
    %v4094 = vunpack.c.l.b16 %v3959
    %v4095 = vunpack.c.l.b16 %v3960
    %v4096 = vunpack.c.l.b16 %v3961
    %v4097 = vunpack.c.l.b16 %v3962
    %v4098 = vunpack.c.l.b16 %v3963
    %v4099 = vunpack.c.l.b16 %v3964
    %v4100 = vunpack.c.l.b16 %v3965
    %v4101 = vunpack.c.l.b16 %v3966
    %v4102 = vunpack.c.l.b16 %v3967
    %v4103 = vunpack.c.l.b16 %v3968
    %v4104 = vunpack.c.l.b16 %v3969
    %v4105 = vunpack.c.l.b16 %v3970
    %v4106 = vunpack.c.l.b16 %v3971
    %v4107 = vunpack.c.l.b16 %v3972
    %v4108 = vunpack.c.l.b16 %v3973
    %v4109 = vunpack.c.l.b16 %v3974
    %v4110 = vunpack.c.l.b16 %v3975
    %v4111 = vunpack.c.l.b16 %v3976
    %v4112 = vunpack.c.l.b16 %v3977
    %v4113 = vunpack.c.l.b16 %v3978
    %v4114 = vunpack.c.l.b16 %v3979
    %v4115 = vunpack.c.l.b16 %v3980
    %v4116 = vunpack.c.l.b16 %v3981
    %v4117 = vunpack.c.l.b16 %v3982
    %v4118 = vunpack.c.l.b16 %v3983
    %v4119 = vunpack.c.l.b16 %v3984
    %v4120 = vunpack.c.l.b16 %v3985
    %v4121 = vunpack.c.l.b16 %v3986
    %v4122 = vunpack.c.l.b16 %v3987
    %v4123 = vunpack.c.l.b16 %v3988
    %v4124 = vunpack.c.l.b16 %v3989
    %v4125 = vunpack.c.l.b16 %v3990
    %v4126 = vunpack.c.l.b16 %v3991
    %v4127 = vpack.c.b16 %v4064, %v4063
    %v4128 = vpack.c.b16 %v4066, %v4065
    %v4129 = vpack.c.b16 %v4068, %v4067
    %v4130 = vpack.c.b16 %v4070, %v4069
    %v4131 = vpack.c.b16 %v4072, %v4071
    %v4132 = vpack.c.b16 %v4074, %v4073
    %v4133 = vpack.c.b16 %v4076, %v4075
    %v4134 = vpack.c.b16 %v4078, %v4077
    %v4135 = vpack.c.b16 %v4080, %v4079
    %v4136 = vpack.c.b16 %v4082, %v4081
    %v4137 = vpack.c.b16 %v4084, %v4083
    %v4138 = vpack.c.b16 %v4086, %v4085
    %v4139 = vpack.c.b16 %v4088, %v4087
    %v4140 = vpack.c.b16 %v4090, %v4089
    %v4141 = vpack.c.b16 %v4092, %v4091
    %v4142 = vpack.c.b16 %v4094, %v4093
    %v4143 = vpack.c.b16 %v4096, %v4095
    %v4144 = vpack.c.b16 %v4098, %v4097
    %v4145 = vpack.c.b16 %v4100, %v4099
    %v4146 = vpack.c.b16 %v4102, %v4101
    %v4147 = vpack.c.b16 %v4104, %v4103
    %v4148 = vpack.c.b16 %v4106, %v4105
    %v4149 = vpack.c.b16 %v4108, %v4107
    %v4150 = vpack.c.b16 %v4110, %v4109
    %v4151 = vpack.c.b16 %v4112, %v4111
    %v4152 = vpack.c.b16 %v4114, %v4113
    %v4153 = vpack.c.b16 %v4116, %v4115
    %v4154 = vpack.c.b16 %v4118, %v4117
    %v4155 = vpack.c.b16 %v4120, %v4119
    %v4156 = vpack.c.b16 %v4122, %v4121
    %v4157 = vpack.c.b16 %v4124, %v4123
    %v4158 = vpack.c.b16 %v4126, %v4125
    %4191 = vmatprep.subr.bf16.mxu0 0
    %4192 = vmatpush1.bf16.msra.mxu0 %v4134
    %4193 = vmatprep.subr.bf16.mxu0 0
    %4194 = vmatpush1.bf16.msra.mxu0 %v4133
    %4195 = vmatprep.subr.bf16.mxu0 0
    %4196 = vmatpush1.bf16.msra.mxu0 %v4132
    %4197 = vmatprep.subr.bf16.mxu0 0
    %4198 = vmatpush1.bf16.msra.mxu0 %v4131
    %4199 = vmatprep.subr.bf16.mxu0 0
    %4200 = vmatpush1.bf16.msra.mxu0 %v4130
    %4201 = vmatprep.subr.bf16.mxu0 0
    %4202 = vmatpush1.bf16.msra.mxu0 %v4129
    %4203 = vmatprep.subr.bf16.mxu0 0
    %4204 = vmatpush1.bf16.msra.mxu0 %v4128
    %4205 = vmatprep.subr.bf16.mxu0 0
    %4206 = vmatpush1.bf16.msra.mxu0 %v4127
    %4207 = vmatprep.subr.bf16.mxu0 0
    %4208 = vmatpush2.bf16.msra.mxu0 %v4142
    %4209 = vmatprep.subr.bf16.mxu0 0
    %4210 = vmatpush2.bf16.msra.mxu0 %v4141
    %4211 = vmatprep.subr.bf16.mxu0 0
    %4212 = vmatpush2.bf16.msra.mxu0 %v4140
    %4213 = vmatprep.subr.bf16.mxu0 0
    %4214 = vmatpush2.bf16.msra.mxu0 %v4139
    %4215 = vmatprep.subr.bf16.mxu0 0
    %4216 = vmatpush2.bf16.msra.mxu0 %v4138
    %4217 = vmatprep.subr.bf16.mxu0 0
    %4218 = vmatpush2.bf16.msra.mxu0 %v4137
    %4219 = vmatprep.subr.bf16.mxu0 0
    %4220 = vmatpush2.bf16.msra.mxu0 %v4136
    %4221 = vmatprep.subr.bf16.mxu0 0
    %4222 = vmatpush2.bf16.msra.mxu0 %v4135
    %4223 = vmatprep.mubr.bf16.mxu0 %v3925
    %4224 = vmatmul.mubr.bf16.gmra.mxu0 %v3924
    %v4225 = vpop.f32.mrf.mxu0
    %v4226 = vadd.f32 %v3997, %v4225
    %v4227 = vpop.f32.mrf.mxu0
    %v4228 = vpop.f32.mrf.mxu0
    %v4229 = vpop.f32.mrf.mxu0
    %4230 = vdwg.mxu0
    %4231 = vmatprep.subr.bf16.mxu0 0
    %4232 = vmatpush1.bf16.msra.mxu0 %v4150
    %4233 = vmatprep.subr.bf16.mxu0 0
    %4234 = vmatpush1.bf16.msra.mxu0 %v4149
    %4235 = vmatprep.subr.bf16.mxu0 0
    %4236 = vmatpush1.bf16.msra.mxu0 %v4148
    %4237 = vmatprep.subr.bf16.mxu0 0
    %4238 = vmatpush1.bf16.msra.mxu0 %v4147
    %4239 = vmatprep.subr.bf16.mxu0 0
    %4240 = vmatpush1.bf16.msra.mxu0 %v4146
    %4241 = vmatprep.subr.bf16.mxu0 0
    %4242 = vmatpush1.bf16.msra.mxu0 %v4145
    %4243 = vmatprep.subr.bf16.mxu0 0
    %4244 = vmatpush1.bf16.msra.mxu0 %v4144
    %4245 = vmatprep.subr.bf16.mxu0 0
    %4246 = vmatpush1.bf16.msra.mxu0 %v4143
    %4247 = vmatprep.subr.bf16.mxu0 0
    %4248 = vmatpush2.bf16.msra.mxu0 %v4158
    %4249 = vmatprep.subr.bf16.mxu0 0
    %4250 = vmatpush2.bf16.msra.mxu0 %v4157
    %4251 = vmatprep.subr.bf16.mxu0 0
    %4252 = vmatpush2.bf16.msra.mxu0 %v4156
    %4253 = vmatprep.subr.bf16.mxu0 0
    %4254 = vmatpush2.bf16.msra.mxu0 %v4155
    %4255 = vmatprep.subr.bf16.mxu0 0
    %4256 = vmatpush2.bf16.msra.mxu0 %v4154
    %4257 = vmatprep.subr.bf16.mxu0 0
    %4258 = vmatpush2.bf16.msra.mxu0 %v4153
    %4259 = vmatprep.subr.bf16.mxu0 0
    %4260 = vmatpush2.bf16.msra.mxu0 %v4152
    %4261 = vmatprep.subr.bf16.mxu0 0
    %4262 = vmatpush2.bf16.msra.mxu0 %v4151
    %4263 = vmatprep.mubr.bf16.mxu0 %v3927
    %4264 = vmatmul.mubr.bf16.gmra.mxu0 %v3926
    %v4265 = vpop.f32.mrf.mxu0
    %v4266 = vadd.f32 %v4226, %v4265
    %v4267 = vpop.f32.mrf.mxu0
    %v4268 = vpop.f32.mrf.mxu0
    %v4269 = vpop.f32.mrf.mxu0
    %4270 = vdwg.mxu0
    %v4271 = vld [vmem:[#allocation2] sm:$0xf]
    %v4272 = vld [vmem:[#allocation2 + $0x4] sm:$0xf]
    %v4273 = vld [vmem:[#allocation2 + $0x8] sm:$0xf]
    %v4274 = vld [vmem:[#allocation2 + $0xc] sm:$0xf]
    %v4275 = vld [vmem:[#allocation2 + $0x10] sm:$0xf]
    %v4276 = vld [vmem:[#allocation2 + $0x14] sm:$0xf]
    %v4277 = vld [vmem:[#allocation2 + $0x18] sm:$0xf]
    %v4278 = vld [vmem:[#allocation2 + $0x1c] sm:$0xf]
    %v4279 = vld [vmem:[#allocation2 + $0x20] sm:$0xf]
    %v4280 = vld [vmem:[#allocation2 + $0x24] sm:$0xf]
    %v4281 = vld [vmem:[#allocation2 + $0x28] sm:$0xf]
    %v4282 = vld [vmem:[#allocation2 + $0x2c] sm:$0xf]
    %v4283 = vld [vmem:[#allocation2 + $0x30] sm:$0xf]
    %v4284 = vld [vmem:[#allocation2 + $0x34] sm:$0xf]
    %v4285 = vld [vmem:[#allocation2 + $0x38] sm:$0xf]
    %v4286 = vld [vmem:[#allocation2 + $0x3c] sm:$0xf]
    %v4287 = vld [vmem:[#allocation2 + $0x40] sm:$0xf]
    %v4288 = vld [vmem:[#allocation2 + $0x44] sm:$0xf]
    %v4289 = vld [vmem:[#allocation2 + $0x48] sm:$0xf]
    %v4290 = vld [vmem:[#allocation2 + $0x4c] sm:$0xf]
    %v4291 = vld [vmem:[#allocation2 + $0x50] sm:$0xf]
    %v4292 = vld [vmem:[#allocation2 + $0x54] sm:$0xf]
    %v4293 = vld [vmem:[#allocation2 + $0x58] sm:$0xf]
    %v4294 = vld [vmem:[#allocation2 + $0x5c] sm:$0xf]
    %v4295 = vld [vmem:[#allocation2 + $0x60] sm:$0xf]
    %v4296 = vld [vmem:[#allocation2 + $0x64] sm:$0xf]
    %v4297 = vld [vmem:[#allocation2 + $0x68] sm:$0xf]
    %v4298 = vld [vmem:[#allocation2 + $0x6c] sm:$0xf]
    %v4299 = vld [vmem:[#allocation2 + $0x70] sm:$0xf]
    %v4300 = vld [vmem:[#allocation2 + $0x74] sm:$0xf]
    %v4301 = vld [vmem:[#allocation2 + $0x78] sm:$0xf]
    %v4302 = vld [vmem:[#allocation2 + $0x7c] sm:$0xf]
    %v4303 = vld [vmem:[#allocation2 + $0x80] sm:$0xf]
    %v4304 = vld [vmem:[#allocation2 + $0x84] sm:$0xf]
    %v4305 = vld [vmem:[#allocation2 + $0x88] sm:$0xf]
    %v4306 = vld [vmem:[#allocation2 + $0x8c] sm:$0xf]
    %v4307 = vld [vmem:[#allocation2 + $0x90] sm:$0xf]
    %v4308 = vld [vmem:[#allocation2 + $0x94] sm:$0xf]
    %v4309 = vld [vmem:[#allocation2 + $0x98] sm:$0xf]
    %v4310 = vld [vmem:[#allocation2 + $0x9c] sm:$0xf]
    %v4311 = vld [vmem:[#allocation2 + $0xa0] sm:$0xf]
    %v4312 = vld [vmem:[#allocation2 + $0xa4] sm:$0xf]
    %v4313 = vld [vmem:[#allocation2 + $0xa8] sm:$0xf]
    %v4314 = vld [vmem:[#allocation2 + $0xac] sm:$0xf]
    %v4315 = vld [vmem:[#allocation2 + $0xb0] sm:$0xf]
    %v4316 = vld [vmem:[#allocation2 + $0xb4] sm:$0xf]
    %v4317 = vld [vmem:[#allocation2 + $0xb8] sm:$0xf]
    %v4318 = vld [vmem:[#allocation2 + $0xbc] sm:$0xf]
    %v4319 = vld [vmem:[#allocation2 + $0xc0] sm:$0xf]
    %v4320 = vld [vmem:[#allocation2 + $0xc4] sm:$0xf]
    %v4321 = vld [vmem:[#allocation2 + $0xc8] sm:$0xf]
    %v4322 = vld [vmem:[#allocation2 + $0xcc] sm:$0xf]
    %v4323 = vld [vmem:[#allocation2 + $0xd0] sm:$0xf]
    %v4324 = vld [vmem:[#allocation2 + $0xd4] sm:$0xf]
    %v4325 = vld [vmem:[#allocation2 + $0xd8] sm:$0xf]
    %v4326 = vld [vmem:[#allocation2 + $0xdc] sm:$0xf]
    %v4327 = vld [vmem:[#allocation2 + $0xe0] sm:$0xf]
    %v4328 = vld [vmem:[#allocation2 + $0xe4] sm:$0xf]
    %v4329 = vld [vmem:[#allocation2 + $0xe8] sm:$0xf]
    %v4330 = vld [vmem:[#allocation2 + $0xec] sm:$0xf]
    %v4331 = vld [vmem:[#allocation2 + $0xf0] sm:$0xf]
    %v4332 = vld [vmem:[#allocation2 + $0xf4] sm:$0xf]
    %v4333 = vld [vmem:[#allocation2 + $0xf8] sm:$0xf]
    %v4334 = vld [vmem:[#allocation2 + $0xfc] sm:$0xf]
    %v4335 = vld [vmem:[%s7] sm:$0x1]
    %v4337 = vlaneseq
    %v4338 = vshrl.u32 %v4337, 7
    %v4339 = vsub.s32 0, %v4338
    %v4340 = vrot.slane %v4335, %v4339
    %v4406 = vunpack.c.l.b16 %v4271
    %v4407 = vunpack.c.l.b16 %v4272
    %v4408 = vunpack.c.l.b16 %v4273
    %v4409 = vunpack.c.l.b16 %v4274
    %v4410 = vunpack.c.l.b16 %v4275
    %v4411 = vunpack.c.l.b16 %v4276
    %v4412 = vunpack.c.l.b16 %v4277
    %v4413 = vunpack.c.l.b16 %v4278
    %v4414 = vunpack.c.l.b16 %v4279
    %v4415 = vunpack.c.l.b16 %v4280
    %v4416 = vunpack.c.l.b16 %v4281
    %v4417 = vunpack.c.l.b16 %v4282
    %v4418 = vunpack.c.l.b16 %v4283
    %v4419 = vunpack.c.l.b16 %v4284
    %v4420 = vunpack.c.l.b16 %v4285
    %v4421 = vunpack.c.l.b16 %v4286
    %v4422 = vunpack.c.l.b16 %v4287
    %v4423 = vunpack.c.l.b16 %v4288
    %v4424 = vunpack.c.l.b16 %v4289
    %v4425 = vunpack.c.l.b16 %v4290
    %v4426 = vunpack.c.l.b16 %v4291
    %v4427 = vunpack.c.l.b16 %v4292
    %v4428 = vunpack.c.l.b16 %v4293
    %v4429 = vunpack.c.l.b16 %v4294
    %v4430 = vunpack.c.l.b16 %v4295
    %v4431 = vunpack.c.l.b16 %v4296
    %v4432 = vunpack.c.l.b16 %v4297
    %v4433 = vunpack.c.l.b16 %v4298
    %v4434 = vunpack.c.l.b16 %v4299
    %v4435 = vunpack.c.l.b16 %v4300
    %v4436 = vunpack.c.l.b16 %v4301
    %v4437 = vunpack.c.l.b16 %v4302
    %v4438 = vunpack.c.l.b16 %v4303
    %v4439 = vunpack.c.l.b16 %v4304
    %v4440 = vunpack.c.l.b16 %v4305
    %v4441 = vunpack.c.l.b16 %v4306
    %v4442 = vunpack.c.l.b16 %v4307
    %v4443 = vunpack.c.l.b16 %v4308
    %v4444 = vunpack.c.l.b16 %v4309
    %v4445 = vunpack.c.l.b16 %v4310
    %v4446 = vunpack.c.l.b16 %v4311
    %v4447 = vunpack.c.l.b16 %v4312
    %v4448 = vunpack.c.l.b16 %v4313
    %v4449 = vunpack.c.l.b16 %v4314
    %v4450 = vunpack.c.l.b16 %v4315
    %v4451 = vunpack.c.l.b16 %v4316
    %v4452 = vunpack.c.l.b16 %v4317
    %v4453 = vunpack.c.l.b16 %v4318
    %v4454 = vunpack.c.l.b16 %v4319
    %v4455 = vunpack.c.l.b16 %v4320
    %v4456 = vunpack.c.l.b16 %v4321
    %v4457 = vunpack.c.l.b16 %v4322
    %v4458 = vunpack.c.l.b16 %v4323
    %v4459 = vunpack.c.l.b16 %v4324
    %v4460 = vunpack.c.l.b16 %v4325
    %v4461 = vunpack.c.l.b16 %v4326
    %v4462 = vunpack.c.l.b16 %v4327
    %v4463 = vunpack.c.l.b16 %v4328
    %v4464 = vunpack.c.l.b16 %v4329
    %v4465 = vunpack.c.l.b16 %v4330
    %v4466 = vunpack.c.l.b16 %v4331
    %v4467 = vunpack.c.l.b16 %v4332
    %v4468 = vunpack.c.l.b16 %v4333
    %v4469 = vunpack.c.l.b16 %v4334
    %v4470 = vpack.c.b16 %v4407, %v4406
    %v4471 = vpack.c.b16 %v4409, %v4408
    %v4472 = vpack.c.b16 %v4411, %v4410
    %v4473 = vpack.c.b16 %v4413, %v4412
    %v4474 = vpack.c.b16 %v4415, %v4414
    %v4475 = vpack.c.b16 %v4417, %v4416
    %v4476 = vpack.c.b16 %v4419, %v4418
    %v4477 = vpack.c.b16 %v4421, %v4420
    %v4478 = vpack.c.b16 %v4423, %v4422
    %v4479 = vpack.c.b16 %v4425, %v4424
    %v4480 = vpack.c.b16 %v4427, %v4426
    %v4481 = vpack.c.b16 %v4429, %v4428
    %v4482 = vpack.c.b16 %v4431, %v4430
    %v4483 = vpack.c.b16 %v4433, %v4432
    %v4484 = vpack.c.b16 %v4435, %v4434
    %v4485 = vpack.c.b16 %v4437, %v4436
    %v4486 = vpack.c.b16 %v4439, %v4438
    %v4487 = vpack.c.b16 %v4441, %v4440
    %v4488 = vpack.c.b16 %v4443, %v4442
    %v4489 = vpack.c.b16 %v4445, %v4444
    %v4490 = vpack.c.b16 %v4447, %v4446
    %v4491 = vpack.c.b16 %v4449, %v4448
    %v4492 = vpack.c.b16 %v4451, %v4450
    %v4493 = vpack.c.b16 %v4453, %v4452
    %v4494 = vpack.c.b16 %v4455, %v4454
    %v4495 = vpack.c.b16 %v4457, %v4456
    %v4496 = vpack.c.b16 %v4459, %v4458
    %v4497 = vpack.c.b16 %v4461, %v4460
    %v4498 = vpack.c.b16 %v4463, %v4462
    %v4499 = vpack.c.b16 %v4465, %v4464
    %v4500 = vpack.c.b16 %v4467, %v4466
    %v4501 = vpack.c.b16 %v4469, %v4468
    %4534 = vmatprep.subr.bf16.mxu0 0
    %4535 = vmatpush1.bf16.msra.mxu0 %v4477
    %4536 = vmatprep.subr.bf16.mxu0 0
    %4537 = vmatpush1.bf16.msra.mxu0 %v4476
    %4538 = vmatprep.subr.bf16.mxu0 0
    %4539 = vmatpush1.bf16.msra.mxu0 %v4475
    %4540 = vmatprep.subr.bf16.mxu0 0
    %4541 = vmatpush1.bf16.msra.mxu0 %v4474
    %4542 = vmatprep.subr.bf16.mxu0 0
    %4543 = vmatpush1.bf16.msra.mxu0 %v4473
    %4544 = vmatprep.subr.bf16.mxu0 0
    %4545 = vmatpush1.bf16.msra.mxu0 %v4472
    %4546 = vmatprep.subr.bf16.mxu0 0
    %4547 = vmatpush1.bf16.msra.mxu0 %v4471
    %4548 = vmatprep.subr.bf16.mxu0 0
    %4549 = vmatpush1.bf16.msra.mxu0 %v4470
    %4550 = vmatprep.subr.bf16.mxu0 0
    %4551 = vmatpush2.bf16.msra.mxu0 %v4485
    %4552 = vmatprep.subr.bf16.mxu0 0
    %4553 = vmatpush2.bf16.msra.mxu0 %v4484
    %4554 = vmatprep.subr.bf16.mxu0 0
    %4555 = vmatpush2.bf16.msra.mxu0 %v4483
    %4556 = vmatprep.subr.bf16.mxu0 0
    %4557 = vmatpush2.bf16.msra.mxu0 %v4482
    %4558 = vmatprep.subr.bf16.mxu0 0
    %4559 = vmatpush2.bf16.msra.mxu0 %v4481
    %4560 = vmatprep.subr.bf16.mxu0 0
    %4561 = vmatpush2.bf16.msra.mxu0 %v4480
    %4562 = vmatprep.subr.bf16.mxu0 0
    %4563 = vmatpush2.bf16.msra.mxu0 %v4479
    %4564 = vmatprep.subr.bf16.mxu0 0
    %4565 = vmatpush2.bf16.msra.mxu0 %v4478
    %4566 = vmatprep.mubr.bf16.mxu0 %v3925
    %4567 = vmatmul.mubr.bf16.gmra.mxu0 %v3924
    %v4568 = vpop.f32.mrf.mxu0
    %v4569 = vadd.f32 %v4340, %v4568
    %v4570 = vpop.f32.mrf.mxu0
    %v4571 = vpop.f32.mrf.mxu0
    %v4572 = vpop.f32.mrf.mxu0
    %4573 = vdwg.mxu0
    %4574 = vmatprep.subr.bf16.mxu0 0
    %4575 = vmatpush1.bf16.msra.mxu0 %v4493
    %4576 = vmatprep.subr.bf16.mxu0 0
    %4577 = vmatpush1.bf16.msra.mxu0 %v4492
    %4578 = vmatprep.subr.bf16.mxu0 0
    %4579 = vmatpush1.bf16.msra.mxu0 %v4491
    %4580 = vmatprep.subr.bf16.mxu0 0
    %4581 = vmatpush1.bf16.msra.mxu0 %v4490
    %4582 = vmatprep.subr.bf16.mxu0 0
    %4583 = vmatpush1.bf16.msra.mxu0 %v4489
    %4584 = vmatprep.subr.bf16.mxu0 0
    %4585 = vmatpush1.bf16.msra.mxu0 %v4488
    %4586 = vmatprep.subr.bf16.mxu0 0
    %4587 = vmatpush1.bf16.msra.mxu0 %v4487
    %4588 = vmatprep.subr.bf16.mxu0 0
    %4589 = vmatpush1.bf16.msra.mxu0 %v4486
    %4590 = vmatprep.subr.bf16.mxu0 0
    %4591 = vmatpush2.bf16.msra.mxu0 %v4501
    %4592 = vmatprep.subr.bf16.mxu0 0
    %4593 = vmatpush2.bf16.msra.mxu0 %v4500
    %4594 = vmatprep.subr.bf16.mxu0 0
    %4595 = vmatpush2.bf16.msra.mxu0 %v4499
    %4596 = vmatprep.subr.bf16.mxu0 0
    %4597 = vmatpush2.bf16.msra.mxu0 %v4498
    %4598 = vmatprep.subr.bf16.mxu0 0
    %4599 = vmatpush2.bf16.msra.mxu0 %v4497
    %4600 = vmatprep.subr.bf16.mxu0 0
    %4601 = vmatpush2.bf16.msra.mxu0 %v4496
    %4602 = vmatprep.subr.bf16.mxu0 0
    %4603 = vmatpush2.bf16.msra.mxu0 %v4495
    %4604 = vmatprep.subr.bf16.mxu0 0
    %4605 = vmatpush2.bf16.msra.mxu0 %v4494
    %4606 = vmatprep.mubr.bf16.mxu0 %v3927
    %4607 = vmatmul.mubr.bf16.gmra.mxu0 %v3926
    %v4608 = vpop.f32.mrf.mxu0
    %v4609 = vadd.f32 %v4569, %v4608
    %v4610 = vpop.f32.mrf.mxu0
    %v4611 = vpop.f32.mrf.mxu0
    %v4612 = vpop.f32.mrf.mxu0
    %4613 = vdwg.mxu0
    %4614 = vst [vmem:[%s14] sm:$0xff] %v4266
    %4615 = vst [vmem:[%s15] sm:$0xff] %v4609
    %v4616 = vld [vmem:[%s1] sm:$0xff]
    %v4617 = vmul.f32 %v4609, 0.5
    %v4618 = vmul.f32 %v4617, 1.442695
    %v4619 = vpow.pop %v4618
    %v4620 = vmul.f32 %v4616, %v4619
    %v4621 = vadd.f32 %v4266, %v4620
    %v4622 = vpack.c.bf16 %v4621, %v4621
    %v4623 = vld [vmem:[#allocation4] sm:$0xff]
    %v4624 = vld [vmem:[#allocation4 + $0x8] sm:$0xff]
    %v4625 = vld [vmem:[#allocation4 + $0x10] sm:$0xff]
    %v4626 = vld [vmem:[#allocation4 + $0x18] sm:$0xff]
    %v4627 = vld [vmem:[#allocation4 + $0x20] sm:$0xff]
    %v4628 = vld [vmem:[#allocation4 + $0x28] sm:$0xff]
    %v4629 = vld [vmem:[#allocation4 + $0x30] sm:$0xff]
    %v4630 = vld [vmem:[#allocation4 + $0x38] sm:$0xff]
    %v4631 = vld [vmem:[#allocation4 + $0x40] sm:$0xff]
    %v4632 = vld [vmem:[#allocation4 + $0x48] sm:$0xff]
    %v4633 = vld [vmem:[#allocation4 + $0x50] sm:$0xff]
    %v4634 = vld [vmem:[#allocation4 + $0x58] sm:$0xff]
    %v4635 = vld [vmem:[#allocation4 + $0x60] sm:$0xff]
    %v4636 = vld [vmem:[#allocation4 + $0x68] sm:$0xff]
    %v4637 = vld [vmem:[#allocation4 + $0x70] sm:$0xff]
    %v4638 = vld [vmem:[#allocation4 + $0x78] sm:$0xff]
    %v4639 = vld [vmem:[#allocation4 + $0x80] sm:$0xff]
    %v4640 = vld [vmem:[#allocation4 + $0x88] sm:$0xff]
    %v4641 = vld [vmem:[#allocation4 + $0x90] sm:$0xff]
    %v4642 = vld [vmem:[#allocation4 + $0x98] sm:$0xff]
    %v4643 = vld [vmem:[#allocation4 + $0xa0] sm:$0xff]
    %v4644 = vld [vmem:[#allocation4 + $0xa8] sm:$0xff]
    %v4645 = vld [vmem:[#allocation4 + $0xb0] sm:$0xff]
    %v4646 = vld [vmem:[#allocation4 + $0xb8] sm:$0xff]
    %v4647 = vld [vmem:[#allocation4 + $0xc0] sm:$0xff]
    %v4648 = vld [vmem:[#allocation4 + $0xc8] sm:$0xff]
    %v4649 = vld [vmem:[#allocation4 + $0xd0] sm:$0xff]
    %v4650 = vld [vmem:[#allocation4 + $0xd8] sm:$0xff]
    %v4651 = vld [vmem:[#allocation4 + $0xe0] sm:$0xff]
    %v4652 = vld [vmem:[#allocation4 + $0xe8] sm:$0xff]
    %v4653 = vld [vmem:[#allocation4 + $0xf0] sm:$0xff]
    %v4654 = vld [vmem:[#allocation4 + $0xf8] sm:$0xff]
    %v4655 = vld [vmem:[%s9] sm:$0xf]
    %v4657 = vlaneseq
    %v4658 = vshrl.u32 %v4657, 7
    %v4659 = vsub.s32 0, %v4658
    %v4660 = vrot.slane %v4655, %v4659
    %v4661 = vlaneseq
    %v4662 = vshrl.u32 %v4661, 7
    %v4663 = vsub.s32 1, %v4662
    %v4664 = vrot.slane %v4655, %v4663
    %v4665 = vlaneseq
    %v4666 = vshrl.u32 %v4665, 7
    %v4667 = vsub.s32 2, %v4666
    %v4668 = vrot.slane %v4655, %v4667
    %v4669 = vlaneseq
    %v4670 = vshrl.u32 %v4669, 7
    %v4671 = vsub.s32 3, %v4670
    %v4672 = vrot.slane %v4655, %v4671
    %v4709 = vunpack.c.l.b16 %v4623
    %v4710 = vunpack.c.h.b16 %v4623
    %v4711 = vunpack.c.l.b16 %v4624
    %v4712 = vunpack.c.h.b16 %v4624
    %v4713 = vunpack.c.l.b16 %v4625
    %v4714 = vunpack.c.h.b16 %v4625
    %v4715 = vunpack.c.l.b16 %v4626
    %v4716 = vunpack.c.h.b16 %v4626
    %v4717 = vunpack.c.l.b16 %v4627
    %v4718 = vunpack.c.h.b16 %v4627
    %v4719 = vunpack.c.l.b16 %v4628
    %v4720 = vunpack.c.h.b16 %v4628
    %v4721 = vunpack.c.l.b16 %v4629
    %v4722 = vunpack.c.h.b16 %v4629
    %v4723 = vunpack.c.l.b16 %v4630
    %v4724 = vunpack.c.h.b16 %v4630
    %v4725 = vunpack.c.l.b16 %v4631
    %v4726 = vunpack.c.h.b16 %v4631
    %v4727 = vunpack.c.l.b16 %v4632
    %v4728 = vunpack.c.h.b16 %v4632
    %v4729 = vunpack.c.l.b16 %v4633
    %v4730 = vunpack.c.h.b16 %v4633
    %v4731 = vunpack.c.l.b16 %v4634
    %v4732 = vunpack.c.h.b16 %v4634
    %v4733 = vunpack.c.l.b16 %v4635
    %v4734 = vunpack.c.h.b16 %v4635
    %v4735 = vunpack.c.l.b16 %v4636
    %v4736 = vunpack.c.h.b16 %v4636
    %v4737 = vunpack.c.l.b16 %v4637
    %v4738 = vunpack.c.h.b16 %v4637
    %v4739 = vunpack.c.l.b16 %v4638
    %v4740 = vunpack.c.h.b16 %v4638
    %v4741 = vunpack.c.l.b16 %v4639
    %v4742 = vunpack.c.h.b16 %v4639
    %v4743 = vunpack.c.l.b16 %v4640
    %v4744 = vunpack.c.h.b16 %v4640
    %v4745 = vunpack.c.l.b16 %v4641
    %v4746 = vunpack.c.h.b16 %v4641
    %v4747 = vunpack.c.l.b16 %v4642
    %v4748 = vunpack.c.h.b16 %v4642
    %v4749 = vunpack.c.l.b16 %v4643
    %v4750 = vunpack.c.h.b16 %v4643
    %v4751 = vunpack.c.l.b16 %v4644
    %v4752 = vunpack.c.h.b16 %v4644
    %v4753 = vunpack.c.l.b16 %v4645
    %v4754 = vunpack.c.h.b16 %v4645
    %v4755 = vunpack.c.l.b16 %v4646
    %v4756 = vunpack.c.h.b16 %v4646
    %v4757 = vunpack.c.l.b16 %v4647
    %v4758 = vunpack.c.h.b16 %v4647
    %v4759 = vunpack.c.l.b16 %v4648
    %v4760 = vunpack.c.h.b16 %v4648
    %v4761 = vunpack.c.l.b16 %v4649
    %v4762 = vunpack.c.h.b16 %v4649
    %v4763 = vunpack.c.l.b16 %v4650
    %v4764 = vunpack.c.h.b16 %v4650
    %v4765 = vunpack.c.l.b16 %v4651
    %v4766 = vunpack.c.h.b16 %v4651
    %v4767 = vunpack.c.l.b16 %v4652
    %v4768 = vunpack.c.h.b16 %v4652
    %v4769 = vunpack.c.l.b16 %v4653
    %v4770 = vunpack.c.h.b16 %v4653
    %v4771 = vunpack.c.l.b16 %v4654
    %v4772 = vunpack.c.h.b16 %v4654
    %v4773 = vpack.c.b16 %v4713, %v4709
    %v4774 = vpack.c.b16 %v4714, %v4710
    %v4775 = vpack.c.b16 %v4715, %v4711
    %v4776 = vpack.c.b16 %v4716, %v4712
    %v4777 = vpack.c.b16 %v4721, %v4717
    %v4778 = vpack.c.b16 %v4722, %v4718
    %v4779 = vpack.c.b16 %v4723, %v4719
    %v4780 = vpack.c.b16 %v4724, %v4720
    %v4781 = vpack.c.b16 %v4729, %v4725
    %v4782 = vpack.c.b16 %v4730, %v4726
    %v4783 = vpack.c.b16 %v4731, %v4727
    %v4784 = vpack.c.b16 %v4732, %v4728
    %v4785 = vpack.c.b16 %v4737, %v4733
    %v4786 = vpack.c.b16 %v4738, %v4734
    %v4787 = vpack.c.b16 %v4739, %v4735
    %v4788 = vpack.c.b16 %v4740, %v4736
    %v4789 = vpack.c.b16 %v4745, %v4741
    %v4790 = vpack.c.b16 %v4746, %v4742
    %v4791 = vpack.c.b16 %v4747, %v4743
    %v4792 = vpack.c.b16 %v4748, %v4744
    %v4793 = vpack.c.b16 %v4753, %v4749
    %v4794 = vpack.c.b16 %v4754, %v4750
    %v4795 = vpack.c.b16 %v4755, %v4751
    %v4796 = vpack.c.b16 %v4756, %v4752
    %v4797 = vpack.c.b16 %v4761, %v4757
    %v4798 = vpack.c.b16 %v4762, %v4758
    %v4799 = vpack.c.b16 %v4763, %v4759
    %v4800 = vpack.c.b16 %v4764, %v4760
    %v4801 = vpack.c.b16 %v4769, %v4765
    %v4802 = vpack.c.b16 %v4770, %v4766
    %v4803 = vpack.c.b16 %v4771, %v4767
    %v4804 = vpack.c.b16 %v4772, %v4768
    %4837 = vmatprep.subr.bf16.mxu0 %v4802
    %4838 = vmatpush1.bf16.msra.mxu0 %v4801
    %4839 = vmatprep.subr.bf16.mxu0 %v4798
    %4840 = vmatpush1.bf16.msra.mxu0 %v4797
    %4841 = vmatprep.subr.bf16.mxu0 %v4794
    %4842 = vmatpush1.bf16.msra.mxu0 %v4793
    %4843 = vmatprep.subr.bf16.mxu0 %v4790
    %4844 = vmatpush1.bf16.msra.mxu0 %v4789
    %4845 = vmatprep.subr.bf16.mxu0 %v4786
    %4846 = vmatpush1.bf16.msra.mxu0 %v4785
    %4847 = vmatprep.subr.bf16.mxu0 %v4782
    %4848 = vmatpush1.bf16.msra.mxu0 %v4781
    %4849 = vmatprep.subr.bf16.mxu0 %v4778
    %4850 = vmatpush1.bf16.msra.mxu0 %v4777
    %4851 = vmatprep.subr.bf16.mxu0 %v4774
    %4852 = vmatpush1.bf16.msra.mxu0 %v4773
    %4853 = vmatprep.subr.bf16.mxu0 0
    %4854 = vmatpush2.bf16.msra.mxu0 0
    %4855 = vmatprep.subr.bf16.mxu0 0
    %4856 = vmatpush2.bf16.msra.mxu0 0
    %4857 = vmatprep.subr.bf16.mxu0 0
    %4858 = vmatpush2.bf16.msra.mxu0 0
    %4859 = vmatprep.subr.bf16.mxu0 0
    %4860 = vmatpush2.bf16.msra.mxu0 0
    %4861 = vmatprep.subr.bf16.mxu0 0
    %4862 = vmatpush2.bf16.msra.mxu0 0
    %4863 = vmatprep.subr.bf16.mxu0 0
    %4864 = vmatpush2.bf16.msra.mxu0 0
    %4865 = vmatprep.subr.bf16.mxu0 0
    %4866 = vmatpush2.bf16.msra.mxu0 0
    %4867 = vmatprep.subr.bf16.mxu0 0
    %4868 = vmatpush2.bf16.msra.mxu0 0
    %4869 = vmatprep.mubr.bf16.mxu0 0
    %4870 = vmatmul.mubr.bf16.gmra.mxu0 %v4622
    %v4871 = vpop.f32.mrf.mxu0
    %v4872 = vadd.f32 %v4660, %v4871
    %v4873 = vpop.f32.mrf.mxu0
    %v4874 = vadd.f32 %v4664, %v4873
    %v4875 = vpop.f32.mrf.mxu0
    %v4876 = vpop.f32.mrf.mxu0
    %4877 = vdwg.mxu0
    %4878 = vmatprep.subr.bf16.mxu0 %v4804
    %4879 = vmatpush1.bf16.msra.mxu0 %v4803
    %4880 = vmatprep.subr.bf16.mxu0 %v4800
    %4881 = vmatpush1.bf16.msra.mxu0 %v4799
    %4882 = vmatprep.subr.bf16.mxu0 %v4796
    %4883 = vmatpush1.bf16.msra.mxu0 %v4795
    %4884 = vmatprep.subr.bf16.mxu0 %v4792
    %4885 = vmatpush1.bf16.msra.mxu0 %v4791
    %4886 = vmatprep.subr.bf16.mxu0 %v4788
    %4887 = vmatpush1.bf16.msra.mxu0 %v4787
    %4888 = vmatprep.subr.bf16.mxu0 %v4784
    %4889 = vmatpush1.bf16.msra.mxu0 %v4783
    %4890 = vmatprep.subr.bf16.mxu0 %v4780
    %4891 = vmatpush1.bf16.msra.mxu0 %v4779
    %4892 = vmatprep.subr.bf16.mxu0 %v4776
    %4893 = vmatpush1.bf16.msra.mxu0 %v4775
    %4894 = vmatprep.subr.bf16.mxu0 0
    %4895 = vmatpush2.bf16.msra.mxu0 0
    %4896 = vmatprep.subr.bf16.mxu0 0
    %4897 = vmatpush2.bf16.msra.mxu0 0
    %4898 = vmatprep.subr.bf16.mxu0 0
    %4899 = vmatpush2.bf16.msra.mxu0 0
    %4900 = vmatprep.subr.bf16.mxu0 0
    %4901 = vmatpush2.bf16.msra.mxu0 0
    %4902 = vmatprep.subr.bf16.mxu0 0
    %4903 = vmatpush2.bf16.msra.mxu0 0
    %4904 = vmatprep.subr.bf16.mxu0 0
    %4905 = vmatpush2.bf16.msra.mxu0 0
    %4906 = vmatprep.subr.bf16.mxu0 0
    %4907 = vmatpush2.bf16.msra.mxu0 0
    %4908 = vmatprep.subr.bf16.mxu0 0
    %4909 = vmatpush2.bf16.msra.mxu0 0
    %4910 = vmatprep.mubr.bf16.mxu0 0
    %4911 = vmatmul.mubr.bf16.gmra.mxu0 %v4622
    %v4912 = vpop.f32.mrf.mxu0
    %v4913 = vadd.f32 %v4668, %v4912
    %v4914 = vpop.f32.mrf.mxu0
    %v4915 = vadd.f32 %v4672, %v4914
    %v4916 = vpop.f32.mrf.mxu0
    %v4917 = vpop.f32.mrf.mxu0
    %4918 = vdwg.mxu0
    %v4919 = vmax.f32 %v4872, 0.0
    %v4920 = vmax.f32 %v4874, 0.0
    %v4921 = vmax.f32 %v4913, 0.0
    %v4922 = vmax.f32 %v4915, 0.0
    %v4923 = vpack.c.bf16 %v4919, %v4919
    %v4924 = vpack.c.bf16 %v4920, %v4920
    %v4925 = vpack.c.bf16 %v4921, %v4921
    %v4926 = vpack.c.bf16 %v4922, %v4922
    %v4927 = vld [vmem:[#allocation6] sm:$0xff]
    %v4928 = vld [vmem:[#allocation6 + $0x8] sm:$0xff]
    %v4929 = vld [vmem:[#allocation6 + $0x10] sm:$0xff]
    %v4930 = vld [vmem:[#allocation6 + $0x18] sm:$0xff]
    %v4931 = vld [vmem:[#allocation6 + $0x20] sm:$0xff]
    %v4932 = vld [vmem:[#allocation6 + $0x28] sm:$0xff]
    %v4933 = vld [vmem:[#allocation6 + $0x30] sm:$0xff]
    %v4934 = vld [vmem:[#allocation6 + $0x38] sm:$0xff]
    %v4935 = vld [vmem:[#allocation6 + $0x40] sm:$0xff]
    %v4936 = vld [vmem:[#allocation6 + $0x48] sm:$0xff]
    %v4937 = vld [vmem:[#allocation6 + $0x50] sm:$0xff]
    %v4938 = vld [vmem:[#allocation6 + $0x58] sm:$0xff]
    %v4939 = vld [vmem:[#allocation6 + $0x60] sm:$0xff]
    %v4940 = vld [vmem:[#allocation6 + $0x68] sm:$0xff]
    %v4941 = vld [vmem:[#allocation6 + $0x70] sm:$0xff]
    %v4942 = vld [vmem:[#allocation6 + $0x78] sm:$0xff]
    %v4943 = vld [vmem:[#allocation6 + $0x80] sm:$0xff]
    %v4944 = vld [vmem:[#allocation6 + $0x88] sm:$0xff]
    %v4945 = vld [vmem:[#allocation6 + $0x90] sm:$0xff]
    %v4946 = vld [vmem:[#allocation6 + $0x98] sm:$0xff]
    %v4947 = vld [vmem:[#allocation6 + $0xa0] sm:$0xff]
    %v4948 = vld [vmem:[#allocation6 + $0xa8] sm:$0xff]
    %v4949 = vld [vmem:[#allocation6 + $0xb0] sm:$0xff]
    %v4950 = vld [vmem:[#allocation6 + $0xb8] sm:$0xff]
    %v4951 = vld [vmem:[#allocation6 + $0xc0] sm:$0xff]
    %v4952 = vld [vmem:[#allocation6 + $0xc8] sm:$0xff]
    %v4953 = vld [vmem:[#allocation6 + $0xd0] sm:$0xff]
    %v4954 = vld [vmem:[#allocation6 + $0xd8] sm:$0xff]
    %v4955 = vld [vmem:[#allocation6 + $0xe0] sm:$0xff]
    %v4956 = vld [vmem:[#allocation6 + $0xe8] sm:$0xff]
    %v4957 = vld [vmem:[#allocation6 + $0xf0] sm:$0xff]
    %v4958 = vld [vmem:[#allocation6 + $0xf8] sm:$0xff]
    %v4959 = vld [vmem:[#allocation6 + $0x100] sm:$0xff]
    %v4960 = vld [vmem:[#allocation6 + $0x108] sm:$0xff]
    %v4961 = vld [vmem:[#allocation6 + $0x110] sm:$0xff]
    %v4962 = vld [vmem:[#allocation6 + $0x118] sm:$0xff]
    %v4963 = vld [vmem:[#allocation6 + $0x120] sm:$0xff]
    %v4964 = vld [vmem:[#allocation6 + $0x128] sm:$0xff]
    %v4965 = vld [vmem:[#allocation6 + $0x130] sm:$0xff]
    %v4966 = vld [vmem:[#allocation6 + $0x138] sm:$0xff]
    %v4967 = vld [vmem:[#allocation6 + $0x140] sm:$0xff]
    %v4968 = vld [vmem:[#allocation6 + $0x148] sm:$0xff]
    %v4969 = vld [vmem:[#allocation6 + $0x150] sm:$0xff]
    %v4970 = vld [vmem:[#allocation6 + $0x158] sm:$0xff]
    %v4971 = vld [vmem:[#allocation6 + $0x160] sm:$0xff]
    %v4972 = vld [vmem:[#allocation6 + $0x168] sm:$0xff]
    %v4973 = vld [vmem:[#allocation6 + $0x170] sm:$0xff]
    %v4974 = vld [vmem:[#allocation6 + $0x178] sm:$0xff]
    %v4975 = vld [vmem:[#allocation6 + $0x180] sm:$0xff]
    %v4976 = vld [vmem:[#allocation6 + $0x188] sm:$0xff]
    %v4977 = vld [vmem:[#allocation6 + $0x190] sm:$0xff]
    %v4978 = vld [vmem:[#allocation6 + $0x198] sm:$0xff]
    %v4979 = vld [vmem:[#allocation6 + $0x1a0] sm:$0xff]
    %v4980 = vld [vmem:[#allocation6 + $0x1a8] sm:$0xff]
    %v4981 = vld [vmem:[#allocation6 + $0x1b0] sm:$0xff]
    %v4982 = vld [vmem:[#allocation6 + $0x1b8] sm:$0xff]
    %v4983 = vld [vmem:[#allocation6 + $0x1c0] sm:$0xff]
    %v4984 = vld [vmem:[#allocation6 + $0x1c8] sm:$0xff]
    %v4985 = vld [vmem:[#allocation6 + $0x1d0] sm:$0xff]
    %v4986 = vld [vmem:[#allocation6 + $0x1d8] sm:$0xff]
    %v4987 = vld [vmem:[#allocation6 + $0x1e0] sm:$0xff]
    %v4988 = vld [vmem:[#allocation6 + $0x1e8] sm:$0xff]
    %v4989 = vld [vmem:[#allocation6 + $0x1f0] sm:$0xff]
    %v4990 = vld [vmem:[#allocation6 + $0x1f8] sm:$0xff]
    %v4991 = vld [vmem:[#allocation6 + $0x200] sm:$0xff]
    %v4992 = vld [vmem:[#allocation6 + $0x208] sm:$0xff]
    %v4993 = vld [vmem:[#allocation6 + $0x210] sm:$0xff]
    %v4994 = vld [vmem:[#allocation6 + $0x218] sm:$0xff]
    %v4995 = vld [vmem:[#allocation6 + $0x220] sm:$0xff]
    %v4996 = vld [vmem:[#allocation6 + $0x228] sm:$0xff]
    %v4997 = vld [vmem:[#allocation6 + $0x230] sm:$0xff]
    %v4998 = vld [vmem:[#allocation6 + $0x238] sm:$0xff]
    %v4999 = vld [vmem:[#allocation6 + $0x240] sm:$0xff]
    %v5000 = vld [vmem:[#allocation6 + $0x248] sm:$0xff]
    %v5001 = vld [vmem:[#allocation6 + $0x250] sm:$0xff]
    %v5002 = vld [vmem:[#allocation6 + $0x258] sm:$0xff]
    %v5003 = vld [vmem:[#allocation6 + $0x260] sm:$0xff]
    %v5004 = vld [vmem:[#allocation6 + $0x268] sm:$0xff]
    %v5005 = vld [vmem:[#allocation6 + $0x270] sm:$0xff]
    %v5006 = vld [vmem:[#allocation6 + $0x278] sm:$0xff]
    %v5007 = vld [vmem:[#allocation6 + $0x280] sm:$0xff]
    %v5008 = vld [vmem:[#allocation6 + $0x288] sm:$0xff]
    %v5009 = vld [vmem:[#allocation6 + $0x290] sm:$0xff]
    %v5010 = vld [vmem:[#allocation6 + $0x298] sm:$0xff]
    %v5011 = vld [vmem:[#allocation6 + $0x2a0] sm:$0xff]
    %v5012 = vld [vmem:[#allocation6 + $0x2a8] sm:$0xff]
    %v5013 = vld [vmem:[#allocation6 + $0x2b0] sm:$0xff]
    %v5014 = vld [vmem:[#allocation6 + $0x2b8] sm:$0xff]
    %v5015 = vld [vmem:[#allocation6 + $0x2c0] sm:$0xff]
    %v5016 = vld [vmem:[#allocation6 + $0x2c8] sm:$0xff]
    %v5017 = vld [vmem:[#allocation6 + $0x2d0] sm:$0xff]
    %v5018 = vld [vmem:[#allocation6 + $0x2d8] sm:$0xff]
    %v5019 = vld [vmem:[#allocation6 + $0x2e0] sm:$0xff]
    %v5020 = vld [vmem:[#allocation6 + $0x2e8] sm:$0xff]
    %v5021 = vld [vmem:[#allocation6 + $0x2f0] sm:$0xff]
    %v5022 = vld [vmem:[#allocation6 + $0x2f8] sm:$0xff]
    %v5023 = vld [vmem:[#allocation6 + $0x300] sm:$0xff]
    %v5024 = vld [vmem:[#allocation6 + $0x308] sm:$0xff]
    %v5025 = vld [vmem:[#allocation6 + $0x310] sm:$0xff]
    %v5026 = vld [vmem:[#allocation6 + $0x318] sm:$0xff]
    %v5027 = vld [vmem:[#allocation6 + $0x320] sm:$0xff]
    %v5028 = vld [vmem:[#allocation6 + $0x328] sm:$0xff]
    %v5029 = vld [vmem:[#allocation6 + $0x330] sm:$0xff]
    %v5030 = vld [vmem:[#allocation6 + $0x338] sm:$0xff]
    %v5031 = vld [vmem:[#allocation6 + $0x340] sm:$0xff]
    %v5032 = vld [vmem:[#allocation6 + $0x348] sm:$0xff]
    %v5033 = vld [vmem:[#allocation6 + $0x350] sm:$0xff]
    %v5034 = vld [vmem:[#allocation6 + $0x358] sm:$0xff]
    %v5035 = vld [vmem:[#allocation6 + $0x360] sm:$0xff]
    %v5036 = vld [vmem:[#allocation6 + $0x368] sm:$0xff]
    %v5037 = vld [vmem:[#allocation6 + $0x370] sm:$0xff]
    %v5038 = vld [vmem:[#allocation6 + $0x378] sm:$0xff]
    %v5039 = vld [vmem:[#allocation6 + $0x380] sm:$0xff]
    %v5040 = vld [vmem:[#allocation6 + $0x388] sm:$0xff]
    %v5041 = vld [vmem:[#allocation6 + $0x390] sm:$0xff]
    %v5042 = vld [vmem:[#allocation6 + $0x398] sm:$0xff]
    %v5043 = vld [vmem:[#allocation6 + $0x3a0] sm:$0xff]
    %v5044 = vld [vmem:[#allocation6 + $0x3a8] sm:$0xff]
    %v5045 = vld [vmem:[#allocation6 + $0x3b0] sm:$0xff]
    %v5046 = vld [vmem:[#allocation6 + $0x3b8] sm:$0xff]
    %v5047 = vld [vmem:[#allocation6 + $0x3c0] sm:$0xff]
    %v5048 = vld [vmem:[#allocation6 + $0x3c8] sm:$0xff]
    %v5049 = vld [vmem:[#allocation6 + $0x3d0] sm:$0xff]
    %v5050 = vld [vmem:[#allocation6 + $0x3d8] sm:$0xff]
    %v5051 = vld [vmem:[#allocation6 + $0x3e0] sm:$0xff]
    %v5052 = vld [vmem:[#allocation6 + $0x3e8] sm:$0xff]
    %v5053 = vld [vmem:[#allocation6 + $0x3f0] sm:$0xff]
    %v5054 = vld [vmem:[#allocation6 + $0x3f8] sm:$0xff]
    %v5055 = vld [vmem:[#allocation6 + $0x400] sm:$0xff]
    %v5056 = vld [vmem:[#allocation6 + $0x408] sm:$0xff]
    %v5057 = vld [vmem:[#allocation6 + $0x410] sm:$0xff]
    %v5058 = vld [vmem:[#allocation6 + $0x418] sm:$0xff]
    %v5059 = vld [vmem:[#allocation6 + $0x420] sm:$0xff]
    %v5060 = vld [vmem:[#allocation6 + $0x428] sm:$0xff]
    %v5061 = vld [vmem:[#allocation6 + $0x430] sm:$0xff]
    %v5062 = vld [vmem:[#allocation6 + $0x438] sm:$0xff]
    %v5063 = vld [vmem:[#allocation6 + $0x440] sm:$0xff]
    %v5064 = vld [vmem:[#allocation6 + $0x448] sm:$0xff]
    %v5065 = vld [vmem:[#allocation6 + $0x450] sm:$0xff]
    %v5066 = vld [vmem:[#allocation6 + $0x458] sm:$0xff]
    %v5067 = vld [vmem:[#allocation6 + $0x460] sm:$0xff]
    %v5068 = vld [vmem:[#allocation6 + $0x468] sm:$0xff]
    %v5069 = vld [vmem:[#allocation6 + $0x470] sm:$0xff]
    %v5070 = vld [vmem:[#allocation6 + $0x478] sm:$0xff]
    %v5071 = vld [vmem:[#allocation6 + $0x480] sm:$0xff]
    %v5072 = vld [vmem:[#allocation6 + $0x488] sm:$0xff]
    %v5073 = vld [vmem:[#allocation6 + $0x490] sm:$0xff]
    %v5074 = vld [vmem:[#allocation6 + $0x498] sm:$0xff]
    %v5075 = vld [vmem:[#allocation6 + $0x4a0] sm:$0xff]
    %v5076 = vld [vmem:[#allocation6 + $0x4a8] sm:$0xff]
    %v5077 = vld [vmem:[#allocation6 + $0x4b0] sm:$0xff]
    %v5078 = vld [vmem:[#allocation6 + $0x4b8] sm:$0xff]
    %v5079 = vld [vmem:[#allocation6 + $0x4c0] sm:$0xff]
    %v5080 = vld [vmem:[#allocation6 + $0x4c8] sm:$0xff]
    %v5081 = vld [vmem:[#allocation6 + $0x4d0] sm:$0xff]
    %v5082 = vld [vmem:[#allocation6 + $0x4d8] sm:$0xff]
    %v5083 = vld [vmem:[#allocation6 + $0x4e0] sm:$0xff]
    %v5084 = vld [vmem:[#allocation6 + $0x4e8] sm:$0xff]
    %v5085 = vld [vmem:[#allocation6 + $0x4f0] sm:$0xff]
    %v5086 = vld [vmem:[#allocation6 + $0x4f8] sm:$0xff]
    %v5087 = vld [vmem:[#allocation6 + $0x500] sm:$0xff]
    %v5088 = vld [vmem:[#allocation6 + $0x508] sm:$0xff]
    %v5089 = vld [vmem:[#allocation6 + $0x510] sm:$0xff]
    %v5090 = vld [vmem:[#allocation6 + $0x518] sm:$0xff]
    %v5091 = vld [vmem:[#allocation6 + $0x520] sm:$0xff]
    %v5092 = vld [vmem:[#allocation6 + $0x528] sm:$0xff]
    %v5093 = vld [vmem:[#allocation6 + $0x530] sm:$0xff]
    %v5094 = vld [vmem:[#allocation6 + $0x538] sm:$0xff]
    %v5095 = vld [vmem:[#allocation6 + $0x540] sm:$0xff]
    %v5096 = vld [vmem:[#allocation6 + $0x548] sm:$0xff]
    %v5097 = vld [vmem:[#allocation6 + $0x550] sm:$0xff]
    %v5098 = vld [vmem:[#allocation6 + $0x558] sm:$0xff]
    %v5099 = vld [vmem:[#allocation6 + $0x560] sm:$0xff]
    %v5100 = vld [vmem:[#allocation6 + $0x568] sm:$0xff]
    %v5101 = vld [vmem:[#allocation6 + $0x570] sm:$0xff]
    %v5102 = vld [vmem:[#allocation6 + $0x578] sm:$0xff]
    %v5103 = vld [vmem:[#allocation6 + $0x580] sm:$0xff]
    %v5104 = vld [vmem:[#allocation6 + $0x588] sm:$0xff]
    %v5105 = vld [vmem:[#allocation6 + $0x590] sm:$0xff]
    %v5106 = vld [vmem:[#allocation6 + $0x598] sm:$0xff]
    %v5107 = vld [vmem:[#allocation6 + $0x5a0] sm:$0xff]
    %v5108 = vld [vmem:[#allocation6 + $0x5a8] sm:$0xff]
    %v5109 = vld [vmem:[#allocation6 + $0x5b0] sm:$0xff]
    %v5110 = vld [vmem:[#allocation6 + $0x5b8] sm:$0xff]
    %v5111 = vld [vmem:[#allocation6 + $0x5c0] sm:$0xff]
    %v5112 = vld [vmem:[#allocation6 + $0x5c8] sm:$0xff]
    %v5113 = vld [vmem:[#allocation6 + $0x5d0] sm:$0xff]
    %v5114 = vld [vmem:[#allocation6 + $0x5d8] sm:$0xff]
    %v5115 = vld [vmem:[#allocation6 + $0x5e0] sm:$0xff]
    %v5116 = vld [vmem:[#allocation6 + $0x5e8] sm:$0xff]
    %v5117 = vld [vmem:[#allocation6 + $0x5f0] sm:$0xff]
    %v5118 = vld [vmem:[#allocation6 + $0x5f8] sm:$0xff]
    %v5119 = vld [vmem:[#allocation6 + $0x600] sm:$0xff]
    %v5120 = vld [vmem:[#allocation6 + $0x608] sm:$0xff]
    %v5121 = vld [vmem:[#allocation6 + $0x610] sm:$0xff]
    %v5122 = vld [vmem:[#allocation6 + $0x618] sm:$0xff]
    %v5123 = vld [vmem:[#allocation6 + $0x620] sm:$0xff]
    %v5124 = vld [vmem:[#allocation6 + $0x628] sm:$0xff]
    %v5125 = vld [vmem:[#allocation6 + $0x630] sm:$0xff]
    %v5126 = vld [vmem:[#allocation6 + $0x638] sm:$0xff]
    %v5127 = vld [vmem:[#allocation6 + $0x640] sm:$0xff]
    %v5128 = vld [vmem:[#allocation6 + $0x648] sm:$0xff]
    %v5129 = vld [vmem:[#allocation6 + $0x650] sm:$0xff]
    %v5130 = vld [vmem:[#allocation6 + $0x658] sm:$0xff]
    %v5131 = vld [vmem:[#allocation6 + $0x660] sm:$0xff]
    %v5132 = vld [vmem:[#allocation6 + $0x668] sm:$0xff]
    %v5133 = vld [vmem:[#allocation6 + $0x670] sm:$0xff]
    %v5134 = vld [vmem:[#allocation6 + $0x678] sm:$0xff]
    %v5135 = vld [vmem:[#allocation6 + $0x680] sm:$0xff]
    %v5136 = vld [vmem:[#allocation6 + $0x688] sm:$0xff]
    %v5137 = vld [vmem:[#allocation6 + $0x690] sm:$0xff]
    %v5138 = vld [vmem:[#allocation6 + $0x698] sm:$0xff]
    %v5139 = vld [vmem:[#allocation6 + $0x6a0] sm:$0xff]
    %v5140 = vld [vmem:[#allocation6 + $0x6a8] sm:$0xff]
    %v5141 = vld [vmem:[#allocation6 + $0x6b0] sm:$0xff]
    %v5142 = vld [vmem:[#allocation6 + $0x6b8] sm:$0xff]
    %v5143 = vld [vmem:[#allocation6 + $0x6c0] sm:$0xff]
    %v5144 = vld [vmem:[#allocation6 + $0x6c8] sm:$0xff]
    %v5145 = vld [vmem:[#allocation6 + $0x6d0] sm:$0xff]
    %v5146 = vld [vmem:[#allocation6 + $0x6d8] sm:$0xff]
    %v5147 = vld [vmem:[#allocation6 + $0x6e0] sm:$0xff]
    %v5148 = vld [vmem:[#allocation6 + $0x6e8] sm:$0xff]
    %v5149 = vld [vmem:[#allocation6 + $0x6f0] sm:$0xff]
    %v5150 = vld [vmem:[#allocation6 + $0x6f8] sm:$0xff]
    %v5151 = vld [vmem:[#allocation6 + $0x700] sm:$0xff]
    %v5152 = vld [vmem:[#allocation6 + $0x708] sm:$0xff]
    %v5153 = vld [vmem:[#allocation6 + $0x710] sm:$0xff]
    %v5154 = vld [vmem:[#allocation6 + $0x718] sm:$0xff]
    %v5155 = vld [vmem:[#allocation6 + $0x720] sm:$0xff]
    %v5156 = vld [vmem:[#allocation6 + $0x728] sm:$0xff]
    %v5157 = vld [vmem:[#allocation6 + $0x730] sm:$0xff]
    %v5158 = vld [vmem:[#allocation6 + $0x738] sm:$0xff]
    %v5159 = vld [vmem:[#allocation6 + $0x740] sm:$0xff]
    %v5160 = vld [vmem:[#allocation6 + $0x748] sm:$0xff]
    %v5161 = vld [vmem:[#allocation6 + $0x750] sm:$0xff]
    %v5162 = vld [vmem:[#allocation6 + $0x758] sm:$0xff]
    %v5163 = vld [vmem:[#allocation6 + $0x760] sm:$0xff]
    %v5164 = vld [vmem:[#allocation6 + $0x768] sm:$0xff]
    %v5165 = vld [vmem:[#allocation6 + $0x770] sm:$0xff]
    %v5166 = vld [vmem:[#allocation6 + $0x778] sm:$0xff]
    %v5167 = vld [vmem:[#allocation6 + $0x780] sm:$0xff]
    %v5168 = vld [vmem:[#allocation6 + $0x788] sm:$0xff]
    %v5169 = vld [vmem:[#allocation6 + $0x790] sm:$0xff]
    %v5170 = vld [vmem:[#allocation6 + $0x798] sm:$0xff]
    %v5171 = vld [vmem:[#allocation6 + $0x7a0] sm:$0xff]
    %v5172 = vld [vmem:[#allocation6 + $0x7a8] sm:$0xff]
    %v5173 = vld [vmem:[#allocation6 + $0x7b0] sm:$0xff]
    %v5174 = vld [vmem:[#allocation6 + $0x7b8] sm:$0xff]
    %v5175 = vld [vmem:[#allocation6 + $0x7c0] sm:$0xff]
    %v5176 = vld [vmem:[#allocation6 + $0x7c8] sm:$0xff]
    %v5177 = vld [vmem:[#allocation6 + $0x7d0] sm:$0xff]
    %v5178 = vld [vmem:[#allocation6 + $0x7d8] sm:$0xff]
    %v5179 = vld [vmem:[#allocation6 + $0x7e0] sm:$0xff]
    %v5180 = vld [vmem:[#allocation6 + $0x7e8] sm:$0xff]
    %v5181 = vld [vmem:[#allocation6 + $0x7f0] sm:$0xff]
    %v5182 = vld [vmem:[#allocation6 + $0x7f8] sm:$0xff]
    %v5183 = vld [vmem:[%s11] sm:$0xff]
    %v5185 = vlaneseq
    %v5186 = vshrl.u32 %v5185, 7
    %v5187 = vsub.s32 0, %v5186
    %v5188 = vrot.slane %v5183, %v5187
    %v5189 = vlaneseq
    %v5190 = vshrl.u32 %v5189, 7
    %v5191 = vsub.s32 1, %v5190
    %v5192 = vrot.slane %v5183, %v5191
    %v5193 = vlaneseq
    %v5194 = vshrl.u32 %v5193, 7
    %v5195 = vsub.s32 2, %v5194
    %v5196 = vrot.slane %v5183, %v5195
    %v5197 = vlaneseq
    %v5198 = vshrl.u32 %v5197, 7
    %v5199 = vsub.s32 3, %v5198
    %v5200 = vrot.slane %v5183, %v5199
    %v5201 = vlaneseq
    %v5202 = vshrl.u32 %v5201, 7
    %v5203 = vsub.s32 4, %v5202
    %v5204 = vrot.slane %v5183, %v5203
    %v5205 = vlaneseq
    %v5206 = vshrl.u32 %v5205, 7
    %v5207 = vsub.s32 5, %v5206
    %v5208 = vrot.slane %v5183, %v5207
    %v5209 = vlaneseq
    %v5210 = vshrl.u32 %v5209, 7
    %v5211 = vsub.s32 6, %v5210
    %v5212 = vrot.slane %v5183, %v5211
    %v5213 = vlaneseq
    %v5214 = vshrl.u32 %v5213, 7
    %v5215 = vsub.s32 7, %v5214
    %v5216 = vrot.slane %v5183, %v5215
    %v5481 = vunpack.c.l.b16 %v4927
    %v5482 = vunpack.c.h.b16 %v4927
    %v5483 = vunpack.c.l.b16 %v4928
    %v5484 = vunpack.c.h.b16 %v4928
    %v5485 = vunpack.c.l.b16 %v4929
    %v5486 = vunpack.c.h.b16 %v4929
    %v5487 = vunpack.c.l.b16 %v4930
    %v5488 = vunpack.c.h.b16 %v4930
    %v5489 = vunpack.c.l.b16 %v4931
    %v5490 = vunpack.c.h.b16 %v4931
    %v5491 = vunpack.c.l.b16 %v4932
    %v5492 = vunpack.c.h.b16 %v4932
    %v5493 = vunpack.c.l.b16 %v4933
    %v5494 = vunpack.c.h.b16 %v4933
    %v5495 = vunpack.c.l.b16 %v4934
    %v5496 = vunpack.c.h.b16 %v4934
    %v5497 = vunpack.c.l.b16 %v4935
    %v5498 = vunpack.c.h.b16 %v4935
    %v5499 = vunpack.c.l.b16 %v4936
    %v5500 = vunpack.c.h.b16 %v4936
    %v5501 = vunpack.c.l.b16 %v4937
    %v5502 = vunpack.c.h.b16 %v4937
    %v5503 = vunpack.c.l.b16 %v4938
    %v5504 = vunpack.c.h.b16 %v4938
    %v5505 = vunpack.c.l.b16 %v4939
    %v5506 = vunpack.c.h.b16 %v4939
    %v5507 = vunpack.c.l.b16 %v4940
    %v5508 = vunpack.c.h.b16 %v4940
    %v5509 = vunpack.c.l.b16 %v4941
    %v5510 = vunpack.c.h.b16 %v4941
    %v5511 = vunpack.c.l.b16 %v4942
    %v5512 = vunpack.c.h.b16 %v4942
    %v5513 = vunpack.c.l.b16 %v4943
    %v5514 = vunpack.c.h.b16 %v4943
    %v5515 = vunpack.c.l.b16 %v4944
    %v5516 = vunpack.c.h.b16 %v4944
    %v5517 = vunpack.c.l.b16 %v4945
    %v5518 = vunpack.c.h.b16 %v4945
    %v5519 = vunpack.c.l.b16 %v4946
    %v5520 = vunpack.c.h.b16 %v4946
    %v5521 = vunpack.c.l.b16 %v4947
    %v5522 = vunpack.c.h.b16 %v4947
    %v5523 = vunpack.c.l.b16 %v4948
    %v5524 = vunpack.c.h.b16 %v4948
    %v5525 = vunpack.c.l.b16 %v4949
    %v5526 = vunpack.c.h.b16 %v4949
    %v5527 = vunpack.c.l.b16 %v4950
    %v5528 = vunpack.c.h.b16 %v4950
    %v5529 = vunpack.c.l.b16 %v4951
    %v5530 = vunpack.c.h.b16 %v4951
    %v5531 = vunpack.c.l.b16 %v4952
    %v5532 = vunpack.c.h.b16 %v4952
    %v5533 = vunpack.c.l.b16 %v4953
    %v5534 = vunpack.c.h.b16 %v4953
    %v5535 = vunpack.c.l.b16 %v4954
    %v5536 = vunpack.c.h.b16 %v4954
    %v5537 = vunpack.c.l.b16 %v4955
    %v5538 = vunpack.c.h.b16 %v4955
    %v5539 = vunpack.c.l.b16 %v4956
    %v5540 = vunpack.c.h.b16 %v4956
    %v5541 = vunpack.c.l.b16 %v4957
    %v5542 = vunpack.c.h.b16 %v4957
    %v5543 = vunpack.c.l.b16 %v4958
    %v5544 = vunpack.c.h.b16 %v4958
    %v5545 = vunpack.c.l.b16 %v4959
    %v5546 = vunpack.c.h.b16 %v4959
    %v5547 = vunpack.c.l.b16 %v4960
    %v5548 = vunpack.c.h.b16 %v4960
    %v5549 = vunpack.c.l.b16 %v4961
    %v5550 = vunpack.c.h.b16 %v4961
    %v5551 = vunpack.c.l.b16 %v4962
    %v5552 = vunpack.c.h.b16 %v4962
    %v5553 = vunpack.c.l.b16 %v4963
    %v5554 = vunpack.c.h.b16 %v4963
    %v5555 = vunpack.c.l.b16 %v4964
    %v5556 = vunpack.c.h.b16 %v4964
    %v5557 = vunpack.c.l.b16 %v4965
    %v5558 = vunpack.c.h.b16 %v4965
    %v5559 = vunpack.c.l.b16 %v4966
    %v5560 = vunpack.c.h.b16 %v4966
    %v5561 = vunpack.c.l.b16 %v4967
    %v5562 = vunpack.c.h.b16 %v4967
    %v5563 = vunpack.c.l.b16 %v4968
    %v5564 = vunpack.c.h.b16 %v4968
    %v5565 = vunpack.c.l.b16 %v4969
    %v5566 = vunpack.c.h.b16 %v4969
    %v5567 = vunpack.c.l.b16 %v4970
    %v5568 = vunpack.c.h.b16 %v4970
    %v5569 = vunpack.c.l.b16 %v4971
    %v5570 = vunpack.c.h.b16 %v4971
    %v5571 = vunpack.c.l.b16 %v4972
    %v5572 = vunpack.c.h.b16 %v4972
    %v5573 = vunpack.c.l.b16 %v4973
    %v5574 = vunpack.c.h.b16 %v4973
    %v5575 = vunpack.c.l.b16 %v4974
    %v5576 = vunpack.c.h.b16 %v4974
    %v5577 = vunpack.c.l.b16 %v4975
    %v5578 = vunpack.c.h.b16 %v4975
    %v5579 = vunpack.c.l.b16 %v4976
    %v5580 = vunpack.c.h.b16 %v4976
    %v5581 = vunpack.c.l.b16 %v4977
    %v5582 = vunpack.c.h.b16 %v4977
    %v5583 = vunpack.c.l.b16 %v4978
    %v5584 = vunpack.c.h.b16 %v4978
    %v5585 = vunpack.c.l.b16 %v4979
    %v5586 = vunpack.c.h.b16 %v4979
    %v5587 = vunpack.c.l.b16 %v4980
    %v5588 = vunpack.c.h.b16 %v4980
    %v5589 = vunpack.c.l.b16 %v4981
    %v5590 = vunpack.c.h.b16 %v4981
    %v5591 = vunpack.c.l.b16 %v4982
    %v5592 = vunpack.c.h.b16 %v4982
    %v5593 = vunpack.c.l.b16 %v4983
    %v5594 = vunpack.c.h.b16 %v4983
    %v5595 = vunpack.c.l.b16 %v4984
    %v5596 = vunpack.c.h.b16 %v4984
    %v5597 = vunpack.c.l.b16 %v4985
    %v5598 = vunpack.c.h.b16 %v4985
    %v5599 = vunpack.c.l.b16 %v4986
    %v5600 = vunpack.c.h.b16 %v4986
    %v5601 = vunpack.c.l.b16 %v4987
    %v5602 = vunpack.c.h.b16 %v4987
    %v5603 = vunpack.c.l.b16 %v4988
    %v5604 = vunpack.c.h.b16 %v4988
    %v5605 = vunpack.c.l.b16 %v4989
    %v5606 = vunpack.c.h.b16 %v4989
    %v5607 = vunpack.c.l.b16 %v4990
    %v5608 = vunpack.c.h.b16 %v4990
    %v5609 = vunpack.c.l.b16 %v4991
    %v5610 = vunpack.c.h.b16 %v4991
    %v5611 = vunpack.c.l.b16 %v4992
    %v5612 = vunpack.c.h.b16 %v4992
    %v5613 = vunpack.c.l.b16 %v4993
    %v5614 = vunpack.c.h.b16 %v4993
    %v5615 = vunpack.c.l.b16 %v4994
    %v5616 = vunpack.c.h.b16 %v4994
    %v5617 = vunpack.c.l.b16 %v4995
    %v5618 = vunpack.c.h.b16 %v4995
    %v5619 = vunpack.c.l.b16 %v4996
    %v5620 = vunpack.c.h.b16 %v4996
    %v5621 = vunpack.c.l.b16 %v4997
    %v5622 = vunpack.c.h.b16 %v4997
    %v5623 = vunpack.c.l.b16 %v4998
    %v5624 = vunpack.c.h.b16 %v4998
    %v5625 = vunpack.c.l.b16 %v4999
    %v5626 = vunpack.c.h.b16 %v4999
    %v5627 = vunpack.c.l.b16 %v5000
    %v5628 = vunpack.c.h.b16 %v5000
    %v5629 = vunpack.c.l.b16 %v5001
    %v5630 = vunpack.c.h.b16 %v5001
    %v5631 = vunpack.c.l.b16 %v5002
    %v5632 = vunpack.c.h.b16 %v5002
    %v5633 = vunpack.c.l.b16 %v5003
    %v5634 = vunpack.c.h.b16 %v5003
    %v5635 = vunpack.c.l.b16 %v5004
    %v5636 = vunpack.c.h.b16 %v5004
    %v5637 = vunpack.c.l.b16 %v5005
    %v5638 = vunpack.c.h.b16 %v5005
    %v5639 = vunpack.c.l.b16 %v5006
    %v5640 = vunpack.c.h.b16 %v5006
    %v5641 = vunpack.c.l.b16 %v5007
    %v5642 = vunpack.c.h.b16 %v5007
    %v5643 = vunpack.c.l.b16 %v5008
    %v5644 = vunpack.c.h.b16 %v5008
    %v5645 = vunpack.c.l.b16 %v5009
    %v5646 = vunpack.c.h.b16 %v5009
    %v5647 = vunpack.c.l.b16 %v5010
    %v5648 = vunpack.c.h.b16 %v5010
    %v5649 = vunpack.c.l.b16 %v5011
    %v5650 = vunpack.c.h.b16 %v5011
    %v5651 = vunpack.c.l.b16 %v5012
    %v5652 = vunpack.c.h.b16 %v5012
    %v5653 = vunpack.c.l.b16 %v5013
    %v5654 = vunpack.c.h.b16 %v5013
    %v5655 = vunpack.c.l.b16 %v5014
    %v5656 = vunpack.c.h.b16 %v5014
    %v5657 = vunpack.c.l.b16 %v5015
    %v5658 = vunpack.c.h.b16 %v5015
    %v5659 = vunpack.c.l.b16 %v5016
    %v5660 = vunpack.c.h.b16 %v5016
    %v5661 = vunpack.c.l.b16 %v5017
    %v5662 = vunpack.c.h.b16 %v5017
    %v5663 = vunpack.c.l.b16 %v5018
    %v5664 = vunpack.c.h.b16 %v5018
    %v5665 = vunpack.c.l.b16 %v5019
    %v5666 = vunpack.c.h.b16 %v5019
    %v5667 = vunpack.c.l.b16 %v5020
    %v5668 = vunpack.c.h.b16 %v5020
    %v5669 = vunpack.c.l.b16 %v5021
    %v5670 = vunpack.c.h.b16 %v5021
    %v5671 = vunpack.c.l.b16 %v5022
    %v5672 = vunpack.c.h.b16 %v5022
    %v5673 = vunpack.c.l.b16 %v5023
    %v5674 = vunpack.c.h.b16 %v5023
    %v5675 = vunpack.c.l.b16 %v5024
    %v5676 = vunpack.c.h.b16 %v5024
    %v5677 = vunpack.c.l.b16 %v5025
    %v5678 = vunpack.c.h.b16 %v5025
    %v5679 = vunpack.c.l.b16 %v5026
    %v5680 = vunpack.c.h.b16 %v5026
    %v5681 = vunpack.c.l.b16 %v5027
    %v5682 = vunpack.c.h.b16 %v5027
    %v5683 = vunpack.c.l.b16 %v5028
    %v5684 = vunpack.c.h.b16 %v5028
    %v5685 = vunpack.c.l.b16 %v5029
    %v5686 = vunpack.c.h.b16 %v5029
    %v5687 = vunpack.c.l.b16 %v5030
    %v5688 = vunpack.c.h.b16 %v5030
    %v5689 = vunpack.c.l.b16 %v5031
    %v5690 = vunpack.c.h.b16 %v5031
    %v5691 = vunpack.c.l.b16 %v5032
    %v5692 = vunpack.c.h.b16 %v5032
    %v5693 = vunpack.c.l.b16 %v5033
    %v5694 = vunpack.c.h.b16 %v5033
    %v5695 = vunpack.c.l.b16 %v5034
    %v5696 = vunpack.c.h.b16 %v5034
    %v5697 = vunpack.c.l.b16 %v5035
    %v5698 = vunpack.c.h.b16 %v5035
    %v5699 = vunpack.c.l.b16 %v5036
    %v5700 = vunpack.c.h.b16 %v5036
    %v5701 = vunpack.c.l.b16 %v5037
    %v5702 = vunpack.c.h.b16 %v5037
    %v5703 = vunpack.c.l.b16 %v5038
    %v5704 = vunpack.c.h.b16 %v5038
    %v5705 = vunpack.c.l.b16 %v5039
    %v5706 = vunpack.c.h.b16 %v5039
    %v5707 = vunpack.c.l.b16 %v5040
    %v5708 = vunpack.c.h.b16 %v5040
    %v5709 = vunpack.c.l.b16 %v5041
    %v5710 = vunpack.c.h.b16 %v5041
    %v5711 = vunpack.c.l.b16 %v5042
    %v5712 = vunpack.c.h.b16 %v5042
    %v5713 = vunpack.c.l.b16 %v5043
    %v5714 = vunpack.c.h.b16 %v5043
    %v5715 = vunpack.c.l.b16 %v5044
    %v5716 = vunpack.c.h.b16 %v5044
    %v5717 = vunpack.c.l.b16 %v5045
    %v5718 = vunpack.c.h.b16 %v5045
    %v5719 = vunpack.c.l.b16 %v5046
    %v5720 = vunpack.c.h.b16 %v5046
    %v5721 = vunpack.c.l.b16 %v5047
    %v5722 = vunpack.c.h.b16 %v5047
    %v5723 = vunpack.c.l.b16 %v5048
    %v5724 = vunpack.c.h.b16 %v5048
    %v5725 = vunpack.c.l.b16 %v5049
    %v5726 = vunpack.c.h.b16 %v5049
    %v5727 = vunpack.c.l.b16 %v5050
    %v5728 = vunpack.c.h.b16 %v5050
    %v5729 = vunpack.c.l.b16 %v5051
    %v5730 = vunpack.c.h.b16 %v5051
    %v5731 = vunpack.c.l.b16 %v5052
    %v5732 = vunpack.c.h.b16 %v5052
    %v5733 = vunpack.c.l.b16 %v5053
    %v5734 = vunpack.c.h.b16 %v5053
    %v5735 = vunpack.c.l.b16 %v5054
    %v5736 = vunpack.c.h.b16 %v5054
    %v5737 = vunpack.c.l.b16 %v5055
    %v5738 = vunpack.c.h.b16 %v5055
    %v5739 = vunpack.c.l.b16 %v5056
    %v5740 = vunpack.c.h.b16 %v5056
    %v5741 = vunpack.c.l.b16 %v5057
    %v5742 = vunpack.c.h.b16 %v5057
    %v5743 = vunpack.c.l.b16 %v5058
    %v5744 = vunpack.c.h.b16 %v5058
    %v5745 = vunpack.c.l.b16 %v5059
    %v5746 = vunpack.c.h.b16 %v5059
    %v5747 = vunpack.c.l.b16 %v5060
    %v5748 = vunpack.c.h.b16 %v5060
    %v5749 = vunpack.c.l.b16 %v5061
    %v5750 = vunpack.c.h.b16 %v5061
    %v5751 = vunpack.c.l.b16 %v5062
    %v5752 = vunpack.c.h.b16 %v5062
    %v5753 = vunpack.c.l.b16 %v5063
    %v5754 = vunpack.c.h.b16 %v5063
    %v5755 = vunpack.c.l.b16 %v5064
    %v5756 = vunpack.c.h.b16 %v5064
    %v5757 = vunpack.c.l.b16 %v5065
    %v5758 = vunpack.c.h.b16 %v5065
    %v5759 = vunpack.c.l.b16 %v5066
    %v5760 = vunpack.c.h.b16 %v5066
    %v5761 = vunpack.c.l.b16 %v5067
    %v5762 = vunpack.c.h.b16 %v5067
    %v5763 = vunpack.c.l.b16 %v5068
    %v5764 = vunpack.c.h.b16 %v5068
    %v5765 = vunpack.c.l.b16 %v5069
    %v5766 = vunpack.c.h.b16 %v5069
    %v5767 = vunpack.c.l.b16 %v5070
    %v5768 = vunpack.c.h.b16 %v5070
    %v5769 = vunpack.c.l.b16 %v5071
    %v5770 = vunpack.c.h.b16 %v5071
    %v5771 = vunpack.c.l.b16 %v5072
    %v5772 = vunpack.c.h.b16 %v5072
    %v5773 = vunpack.c.l.b16 %v5073
    %v5774 = vunpack.c.h.b16 %v5073
    %v5775 = vunpack.c.l.b16 %v5074
    %v5776 = vunpack.c.h.b16 %v5074
    %v5777 = vunpack.c.l.b16 %v5075
    %v5778 = vunpack.c.h.b16 %v5075
    %v5779 = vunpack.c.l.b16 %v5076
    %v5780 = vunpack.c.h.b16 %v5076
    %v5781 = vunpack.c.l.b16 %v5077
    %v5782 = vunpack.c.h.b16 %v5077
    %v5783 = vunpack.c.l.b16 %v5078
    %v5784 = vunpack.c.h.b16 %v5078
    %v5785 = vunpack.c.l.b16 %v5079
    %v5786 = vunpack.c.h.b16 %v5079
    %v5787 = vunpack.c.l.b16 %v5080
    %v5788 = vunpack.c.h.b16 %v5080
    %v5789 = vunpack.c.l.b16 %v5081
    %v5790 = vunpack.c.h.b16 %v5081
    %v5791 = vunpack.c.l.b16 %v5082
    %v5792 = vunpack.c.h.b16 %v5082
    %v5793 = vunpack.c.l.b16 %v5083
    %v5794 = vunpack.c.h.b16 %v5083
    %v5795 = vunpack.c.l.b16 %v5084
    %v5796 = vunpack.c.h.b16 %v5084
    %v5797 = vunpack.c.l.b16 %v5085
    %v5798 = vunpack.c.h.b16 %v5085
    %v5799 = vunpack.c.l.b16 %v5086
    %v5800 = vunpack.c.h.b16 %v5086
    %v5801 = vunpack.c.l.b16 %v5087
    %v5802 = vunpack.c.h.b16 %v5087
    %v5803 = vunpack.c.l.b16 %v5088
    %v5804 = vunpack.c.h.b16 %v5088
    %v5805 = vunpack.c.l.b16 %v5089
    %v5806 = vunpack.c.h.b16 %v5089
    %v5807 = vunpack.c.l.b16 %v5090
    %v5808 = vunpack.c.h.b16 %v5090
    %v5809 = vunpack.c.l.b16 %v5091
    %v5810 = vunpack.c.h.b16 %v5091
    %v5811 = vunpack.c.l.b16 %v5092
    %v5812 = vunpack.c.h.b16 %v5092
    %v5813 = vunpack.c.l.b16 %v5093
    %v5814 = vunpack.c.h.b16 %v5093
    %v5815 = vunpack.c.l.b16 %v5094
    %v5816 = vunpack.c.h.b16 %v5094
    %v5817 = vunpack.c.l.b16 %v5095
    %v5818 = vunpack.c.h.b16 %v5095
    %v5819 = vunpack.c.l.b16 %v5096
    %v5820 = vunpack.c.h.b16 %v5096
    %v5821 = vunpack.c.l.b16 %v5097
    %v5822 = vunpack.c.h.b16 %v5097
    %v5823 = vunpack.c.l.b16 %v5098
    %v5824 = vunpack.c.h.b16 %v5098
    %v5825 = vunpack.c.l.b16 %v5099
    %v5826 = vunpack.c.h.b16 %v5099
    %v5827 = vunpack.c.l.b16 %v5100
    %v5828 = vunpack.c.h.b16 %v5100
    %v5829 = vunpack.c.l.b16 %v5101
    %v5830 = vunpack.c.h.b16 %v5101
    %v5831 = vunpack.c.l.b16 %v5102
    %v5832 = vunpack.c.h.b16 %v5102
    %v5833 = vunpack.c.l.b16 %v5103
    %v5834 = vunpack.c.h.b16 %v5103
    %v5835 = vunpack.c.l.b16 %v5104
    %v5836 = vunpack.c.h.b16 %v5104
    %v5837 = vunpack.c.l.b16 %v5105
    %v5838 = vunpack.c.h.b16 %v5105
    %v5839 = vunpack.c.l.b16 %v5106
    %v5840 = vunpack.c.h.b16 %v5106
    %v5841 = vunpack.c.l.b16 %v5107
    %v5842 = vunpack.c.h.b16 %v5107
    %v5843 = vunpack.c.l.b16 %v5108
    %v5844 = vunpack.c.h.b16 %v5108
    %v5845 = vunpack.c.l.b16 %v5109
    %v5846 = vunpack.c.h.b16 %v5109
    %v5847 = vunpack.c.l.b16 %v5110
    %v5848 = vunpack.c.h.b16 %v5110
    %v5849 = vunpack.c.l.b16 %v5111
    %v5850 = vunpack.c.h.b16 %v5111
    %v5851 = vunpack.c.l.b16 %v5112
    %v5852 = vunpack.c.h.b16 %v5112
    %v5853 = vunpack.c.l.b16 %v5113
    %v5854 = vunpack.c.h.b16 %v5113
    %v5855 = vunpack.c.l.b16 %v5114
    %v5856 = vunpack.c.h.b16 %v5114
    %v5857 = vunpack.c.l.b16 %v5115
    %v5858 = vunpack.c.h.b16 %v5115
    %v5859 = vunpack.c.l.b16 %v5116
    %v5860 = vunpack.c.h.b16 %v5116
    %v5861 = vunpack.c.l.b16 %v5117
    %v5862 = vunpack.c.h.b16 %v5117
    %v5863 = vunpack.c.l.b16 %v5118
    %v5864 = vunpack.c.h.b16 %v5118
    %v5865 = vunpack.c.l.b16 %v5119
    %v5866 = vunpack.c.h.b16 %v5119
    %v5867 = vunpack.c.l.b16 %v5120
    %v5868 = vunpack.c.h.b16 %v5120
    %v5869 = vunpack.c.l.b16 %v5121
    %v5870 = vunpack.c.h.b16 %v5121
    %v5871 = vunpack.c.l.b16 %v5122
    %v5872 = vunpack.c.h.b16 %v5122
    %v5873 = vunpack.c.l.b16 %v5123
    %v5874 = vunpack.c.h.b16 %v5123
    %v5875 = vunpack.c.l.b16 %v5124
    %v5876 = vunpack.c.h.b16 %v5124
    %v5877 = vunpack.c.l.b16 %v5125
    %v5878 = vunpack.c.h.b16 %v5125
    %v5879 = vunpack.c.l.b16 %v5126
    %v5880 = vunpack.c.h.b16 %v5126
    %v5881 = vunpack.c.l.b16 %v5127
    %v5882 = vunpack.c.h.b16 %v5127
    %v5883 = vunpack.c.l.b16 %v5128
    %v5884 = vunpack.c.h.b16 %v5128
    %v5885 = vunpack.c.l.b16 %v5129
    %v5886 = vunpack.c.h.b16 %v5129
    %v5887 = vunpack.c.l.b16 %v5130
    %v5888 = vunpack.c.h.b16 %v5130
    %v5889 = vunpack.c.l.b16 %v5131
    %v5890 = vunpack.c.h.b16 %v5131
    %v5891 = vunpack.c.l.b16 %v5132
    %v5892 = vunpack.c.h.b16 %v5132
    %v5893 = vunpack.c.l.b16 %v5133
    %v5894 = vunpack.c.h.b16 %v5133
    %v5895 = vunpack.c.l.b16 %v5134
    %v5896 = vunpack.c.h.b16 %v5134
    %v5897 = vunpack.c.l.b16 %v5135
    %v5898 = vunpack.c.h.b16 %v5135
    %v5899 = vunpack.c.l.b16 %v5136
    %v5900 = vunpack.c.h.b16 %v5136
    %v5901 = vunpack.c.l.b16 %v5137
    %v5902 = vunpack.c.h.b16 %v5137
    %v5903 = vunpack.c.l.b16 %v5138
    %v5904 = vunpack.c.h.b16 %v5138
    %v5905 = vunpack.c.l.b16 %v5139
    %v5906 = vunpack.c.h.b16 %v5139
    %v5907 = vunpack.c.l.b16 %v5140
    %v5908 = vunpack.c.h.b16 %v5140
    %v5909 = vunpack.c.l.b16 %v5141
    %v5910 = vunpack.c.h.b16 %v5141
    %v5911 = vunpack.c.l.b16 %v5142
    %v5912 = vunpack.c.h.b16 %v5142
    %v5913 = vunpack.c.l.b16 %v5143
    %v5914 = vunpack.c.h.b16 %v5143
    %v5915 = vunpack.c.l.b16 %v5144
    %v5916 = vunpack.c.h.b16 %v5144
    %v5917 = vunpack.c.l.b16 %v5145
    %v5918 = vunpack.c.h.b16 %v5145
    %v5919 = vunpack.c.l.b16 %v5146
    %v5920 = vunpack.c.h.b16 %v5146
    %v5921 = vunpack.c.l.b16 %v5147
    %v5922 = vunpack.c.h.b16 %v5147
    %v5923 = vunpack.c.l.b16 %v5148
    %v5924 = vunpack.c.h.b16 %v5148
    %v5925 = vunpack.c.l.b16 %v5149
    %v5926 = vunpack.c.h.b16 %v5149
    %v5927 = vunpack.c.l.b16 %v5150
    %v5928 = vunpack.c.h.b16 %v5150
    %v5929 = vunpack.c.l.b16 %v5151
    %v5930 = vunpack.c.h.b16 %v5151
    %v5931 = vunpack.c.l.b16 %v5152
    %v5932 = vunpack.c.h.b16 %v5152
    %v5933 = vunpack.c.l.b16 %v5153
    %v5934 = vunpack.c.h.b16 %v5153
    %v5935 = vunpack.c.l.b16 %v5154
    %v5936 = vunpack.c.h.b16 %v5154
    %v5937 = vunpack.c.l.b16 %v5155
    %v5938 = vunpack.c.h.b16 %v5155
    %v5939 = vunpack.c.l.b16 %v5156
    %v5940 = vunpack.c.h.b16 %v5156
    %v5941 = vunpack.c.l.b16 %v5157
    %v5942 = vunpack.c.h.b16 %v5157
    %v5943 = vunpack.c.l.b16 %v5158
    %v5944 = vunpack.c.h.b16 %v5158
    %v5945 = vunpack.c.l.b16 %v5159
    %v5946 = vunpack.c.h.b16 %v5159
    %v5947 = vunpack.c.l.b16 %v5160
    %v5948 = vunpack.c.h.b16 %v5160
    %v5949 = vunpack.c.l.b16 %v5161
    %v5950 = vunpack.c.h.b16 %v5161
    %v5951 = vunpack.c.l.b16 %v5162
    %v5952 = vunpack.c.h.b16 %v5162
    %v5953 = vunpack.c.l.b16 %v5163
    %v5954 = vunpack.c.h.b16 %v5163
    %v5955 = vunpack.c.l.b16 %v5164
    %v5956 = vunpack.c.h.b16 %v5164
    %v5957 = vunpack.c.l.b16 %v5165
    %v5958 = vunpack.c.h.b16 %v5165
    %v5959 = vunpack.c.l.b16 %v5166
    %v5960 = vunpack.c.h.b16 %v5166
    %v5961 = vunpack.c.l.b16 %v5167
    %v5962 = vunpack.c.h.b16 %v5167
    %v5963 = vunpack.c.l.b16 %v5168
    %v5964 = vunpack.c.h.b16 %v5168
    %v5965 = vunpack.c.l.b16 %v5169
    %v5966 = vunpack.c.h.b16 %v5169
    %v5967 = vunpack.c.l.b16 %v5170
    %v5968 = vunpack.c.h.b16 %v5170
    %v5969 = vunpack.c.l.b16 %v5171
    %v5970 = vunpack.c.h.b16 %v5171
    %v5971 = vunpack.c.l.b16 %v5172
    %v5972 = vunpack.c.h.b16 %v5172
    %v5973 = vunpack.c.l.b16 %v5173
    %v5974 = vunpack.c.h.b16 %v5173
    %v5975 = vunpack.c.l.b16 %v5174
    %v5976 = vunpack.c.h.b16 %v5174
    %v5977 = vunpack.c.l.b16 %v5175
    %v5978 = vunpack.c.h.b16 %v5175
    %v5979 = vunpack.c.l.b16 %v5176
    %v5980 = vunpack.c.h.b16 %v5176
    %v5981 = vunpack.c.l.b16 %v5177
    %v5982 = vunpack.c.h.b16 %v5177
    %v5983 = vunpack.c.l.b16 %v5178
    %v5984 = vunpack.c.h.b16 %v5178
    %v5985 = vunpack.c.l.b16 %v5179
    %v5986 = vunpack.c.h.b16 %v5179
    %v5987 = vunpack.c.l.b16 %v5180
    %v5988 = vunpack.c.h.b16 %v5180
    %v5989 = vunpack.c.l.b16 %v5181
    %v5990 = vunpack.c.h.b16 %v5181
    %v5991 = vunpack.c.l.b16 %v5182
    %v5992 = vunpack.c.h.b16 %v5182
    %v5993 = vpack.c.b16 %v5489, %v5481
    %v5994 = vpack.c.b16 %v5490, %v5482
    %v5995 = vpack.c.b16 %v5491, %v5483
    %v5996 = vpack.c.b16 %v5492, %v5484
    %v5997 = vpack.c.b16 %v5493, %v5485
    %v5998 = vpack.c.b16 %v5494, %v5486
    %v5999 = vpack.c.b16 %v5495, %v5487
    %v6000 = vpack.c.b16 %v5496, %v5488
    %v6001 = vpack.c.b16 %v5505, %v5497
    %v6002 = vpack.c.b16 %v5506, %v5498
    %v6003 = vpack.c.b16 %v5507, %v5499
    %v6004 = vpack.c.b16 %v5508, %v5500
    %v6005 = vpack.c.b16 %v5509, %v5501
    %v6006 = vpack.c.b16 %v5510, %v5502
    %v6007 = vpack.c.b16 %v5511, %v5503
    %v6008 = vpack.c.b16 %v5512, %v5504
    %v6009 = vpack.c.b16 %v5521, %v5513
    %v6010 = vpack.c.b16 %v5522, %v5514
    %v6011 = vpack.c.b16 %v5523, %v5515
    %v6012 = vpack.c.b16 %v5524, %v5516
    %v6013 = vpack.c.b16 %v5525, %v5517
    %v6014 = vpack.c.b16 %v5526, %v5518
    %v6015 = vpack.c.b16 %v5527, %v5519
    %v6016 = vpack.c.b16 %v5528, %v5520
    %v6017 = vpack.c.b16 %v5537, %v5529
    %v6018 = vpack.c.b16 %v5538, %v5530
    %v6019 = vpack.c.b16 %v5539, %v5531
    %v6020 = vpack.c.b16 %v5540, %v5532
    %v6021 = vpack.c.b16 %v5541, %v5533
    %v6022 = vpack.c.b16 %v5542, %v5534
    %v6023 = vpack.c.b16 %v5543, %v5535
    %v6024 = vpack.c.b16 %v5544, %v5536
    %v6025 = vpack.c.b16 %v5553, %v5545
    %v6026 = vpack.c.b16 %v5554, %v5546
    %v6027 = vpack.c.b16 %v5555, %v5547
    %v6028 = vpack.c.b16 %v5556, %v5548
    %v6029 = vpack.c.b16 %v5557, %v5549
    %v6030 = vpack.c.b16 %v5558, %v5550
    %v6031 = vpack.c.b16 %v5559, %v5551
    %v6032 = vpack.c.b16 %v5560, %v5552
    %v6033 = vpack.c.b16 %v5569, %v5561
    %v6034 = vpack.c.b16 %v5570, %v5562
    %v6035 = vpack.c.b16 %v5571, %v5563
    %v6036 = vpack.c.b16 %v5572, %v5564
    %v6037 = vpack.c.b16 %v5573, %v5565
    %v6038 = vpack.c.b16 %v5574, %v5566
    %v6039 = vpack.c.b16 %v5575, %v5567
    %v6040 = vpack.c.b16 %v5576, %v5568
    %v6041 = vpack.c.b16 %v5585, %v5577
    %v6042 = vpack.c.b16 %v5586, %v5578
    %v6043 = vpack.c.b16 %v5587, %v5579
    %v6044 = vpack.c.b16 %v5588, %v5580
    %v6045 = vpack.c.b16 %v5589, %v5581
    %v6046 = vpack.c.b16 %v5590, %v5582
    %v6047 = vpack.c.b16 %v5591, %v5583
    %v6048 = vpack.c.b16 %v5592, %v5584
    %v6049 = vpack.c.b16 %v5601, %v5593
    %v6050 = vpack.c.b16 %v5602, %v5594
    %v6051 = vpack.c.b16 %v5603, %v5595
    %v6052 = vpack.c.b16 %v5604, %v5596
    %v6053 = vpack.c.b16 %v5605, %v5597
    %v6054 = vpack.c.b16 %v5606, %v5598
    %v6055 = vpack.c.b16 %v5607, %v5599
    %v6056 = vpack.c.b16 %v5608, %v5600
    %v6057 = vpack.c.b16 %v5617, %v5609
    %v6058 = vpack.c.b16 %v5618, %v5610
    %v6059 = vpack.c.b16 %v5619, %v5611
    %v6060 = vpack.c.b16 %v5620, %v5612
    %v6061 = vpack.c.b16 %v5621, %v5613
    %v6062 = vpack.c.b16 %v5622, %v5614
    %v6063 = vpack.c.b16 %v5623, %v5615
    %v6064 = vpack.c.b16 %v5624, %v5616
    %v6065 = vpack.c.b16 %v5633, %v5625
    %v6066 = vpack.c.b16 %v5634, %v5626
    %v6067 = vpack.c.b16 %v5635, %v5627
    %v6068 = vpack.c.b16 %v5636, %v5628
    %v6069 = vpack.c.b16 %v5637, %v5629
    %v6070 = vpack.c.b16 %v5638, %v5630
    %v6071 = vpack.c.b16 %v5639, %v5631
    %v6072 = vpack.c.b16 %v5640, %v5632
    %v6073 = vpack.c.b16 %v5649, %v5641
    %v6074 = vpack.c.b16 %v5650, %v5642
    %v6075 = vpack.c.b16 %v5651, %v5643
    %v6076 = vpack.c.b16 %v5652, %v5644
    %v6077 = vpack.c.b16 %v5653, %v5645
    %v6078 = vpack.c.b16 %v5654, %v5646
    %v6079 = vpack.c.b16 %v5655, %v5647
    %v6080 = vpack.c.b16 %v5656, %v5648
    %v6081 = vpack.c.b16 %v5665, %v5657
    %v6082 = vpack.c.b16 %v5666, %v5658
    %v6083 = vpack.c.b16 %v5667, %v5659
    %v6084 = vpack.c.b16 %v5668, %v5660
    %v6085 = vpack.c.b16 %v5669, %v5661
    %v6086 = vpack.c.b16 %v5670, %v5662
    %v6087 = vpack.c.b16 %v5671, %v5663
    %v6088 = vpack.c.b16 %v5672, %v5664
    %v6089 = vpack.c.b16 %v5681, %v5673
    %v6090 = vpack.c.b16 %v5682, %v5674
    %v6091 = vpack.c.b16 %v5683, %v5675
    %v6092 = vpack.c.b16 %v5684, %v5676
    %v6093 = vpack.c.b16 %v5685, %v5677
    %v6094 = vpack.c.b16 %v5686, %v5678
    %v6095 = vpack.c.b16 %v5687, %v5679
    %v6096 = vpack.c.b16 %v5688, %v5680
    %v6097 = vpack.c.b16 %v5697, %v5689
    %v6098 = vpack.c.b16 %v5698, %v5690
    %v6099 = vpack.c.b16 %v5699, %v5691
    %v6100 = vpack.c.b16 %v5700, %v5692
    %v6101 = vpack.c.b16 %v5701, %v5693
    %v6102 = vpack.c.b16 %v5702, %v5694
    %v6103 = vpack.c.b16 %v5703, %v5695
    %v6104 = vpack.c.b16 %v5704, %v5696
    %v6105 = vpack.c.b16 %v5713, %v5705
    %v6106 = vpack.c.b16 %v5714, %v5706
    %v6107 = vpack.c.b16 %v5715, %v5707
    %v6108 = vpack.c.b16 %v5716, %v5708
    %v6109 = vpack.c.b16 %v5717, %v5709
    %v6110 = vpack.c.b16 %v5718, %v5710
    %v6111 = vpack.c.b16 %v5719, %v5711
    %v6112 = vpack.c.b16 %v5720, %v5712
    %v6113 = vpack.c.b16 %v5729, %v5721
    %v6114 = vpack.c.b16 %v5730, %v5722
    %v6115 = vpack.c.b16 %v5731, %v5723
    %v6116 = vpack.c.b16 %v5732, %v5724
    %v6117 = vpack.c.b16 %v5733, %v5725
    %v6118 = vpack.c.b16 %v5734, %v5726
    %v6119 = vpack.c.b16 %v5735, %v5727
    %v6120 = vpack.c.b16 %v5736, %v5728
    %v6121 = vpack.c.b16 %v5745, %v5737
    %v6122 = vpack.c.b16 %v5746, %v5738
    %v6123 = vpack.c.b16 %v5747, %v5739
    %v6124 = vpack.c.b16 %v5748, %v5740
    %v6125 = vpack.c.b16 %v5749, %v5741
    %v6126 = vpack.c.b16 %v5750, %v5742
    %v6127 = vpack.c.b16 %v5751, %v5743
    %v6128 = vpack.c.b16 %v5752, %v5744
    %v6129 = vpack.c.b16 %v5761, %v5753
    %v6130 = vpack.c.b16 %v5762, %v5754
    %v6131 = vpack.c.b16 %v5763, %v5755
    %v6132 = vpack.c.b16 %v5764, %v5756
    %v6133 = vpack.c.b16 %v5765, %v5757
    %v6134 = vpack.c.b16 %v5766, %v5758
    %v6135 = vpack.c.b16 %v5767, %v5759
    %v6136 = vpack.c.b16 %v5768, %v5760
    %v6137 = vpack.c.b16 %v5777, %v5769
    %v6138 = vpack.c.b16 %v5778, %v5770
    %v6139 = vpack.c.b16 %v5779, %v5771
    %v6140 = vpack.c.b16 %v5780, %v5772
    %v6141 = vpack.c.b16 %v5781, %v5773
    %v6142 = vpack.c.b16 %v5782, %v5774
    %v6143 = vpack.c.b16 %v5783, %v5775
    %v6144 = vpack.c.b16 %v5784, %v5776
    %v6145 = vpack.c.b16 %v5793, %v5785
    %v6146 = vpack.c.b16 %v5794, %v5786
    %v6147 = vpack.c.b16 %v5795, %v5787
    %v6148 = vpack.c.b16 %v5796, %v5788
    %v6149 = vpack.c.b16 %v5797, %v5789
    %v6150 = vpack.c.b16 %v5798, %v5790
    %v6151 = vpack.c.b16 %v5799, %v5791
    %v6152 = vpack.c.b16 %v5800, %v5792
    %v6153 = vpack.c.b16 %v5809, %v5801
    %v6154 = vpack.c.b16 %v5810, %v5802
    %v6155 = vpack.c.b16 %v5811, %v5803
    %v6156 = vpack.c.b16 %v5812, %v5804
    %v6157 = vpack.c.b16 %v5813, %v5805
    %v6158 = vpack.c.b16 %v5814, %v5806
    %v6159 = vpack.c.b16 %v5815, %v5807
    %v6160 = vpack.c.b16 %v5816, %v5808
    %v6161 = vpack.c.b16 %v5825, %v5817
    %v6162 = vpack.c.b16 %v5826, %v5818
    %v6163 = vpack.c.b16 %v5827, %v5819
    %v6164 = vpack.c.b16 %v5828, %v5820
    %v6165 = vpack.c.b16 %v5829, %v5821
    %v6166 = vpack.c.b16 %v5830, %v5822
    %v6167 = vpack.c.b16 %v5831, %v5823
    %v6168 = vpack.c.b16 %v5832, %v5824
    %v6169 = vpack.c.b16 %v5841, %v5833
    %v6170 = vpack.c.b16 %v5842, %v5834
    %v6171 = vpack.c.b16 %v5843, %v5835
    %v6172 = vpack.c.b16 %v5844, %v5836
    %v6173 = vpack.c.b16 %v5845, %v5837
    %v6174 = vpack.c.b16 %v5846, %v5838
    %v6175 = vpack.c.b16 %v5847, %v5839
    %v6176 = vpack.c.b16 %v5848, %v5840
    %v6177 = vpack.c.b16 %v5857, %v5849
    %v6178 = vpack.c.b16 %v5858, %v5850
    %v6179 = vpack.c.b16 %v5859, %v5851
    %v6180 = vpack.c.b16 %v5860, %v5852
    %v6181 = vpack.c.b16 %v5861, %v5853
    %v6182 = vpack.c.b16 %v5862, %v5854
    %v6183 = vpack.c.b16 %v5863, %v5855
    %v6184 = vpack.c.b16 %v5864, %v5856
    %v6185 = vpack.c.b16 %v5873, %v5865
    %v6186 = vpack.c.b16 %v5874, %v5866
    %v6187 = vpack.c.b16 %v5875, %v5867
    %v6188 = vpack.c.b16 %v5876, %v5868
    %v6189 = vpack.c.b16 %v5877, %v5869
    %v6190 = vpack.c.b16 %v5878, %v5870
    %v6191 = vpack.c.b16 %v5879, %v5871
    %v6192 = vpack.c.b16 %v5880, %v5872
    %v6193 = vpack.c.b16 %v5889, %v5881
    %v6194 = vpack.c.b16 %v5890, %v5882
    %v6195 = vpack.c.b16 %v5891, %v5883
    %v6196 = vpack.c.b16 %v5892, %v5884
    %v6197 = vpack.c.b16 %v5893, %v5885
    %v6198 = vpack.c.b16 %v5894, %v5886
    %v6199 = vpack.c.b16 %v5895, %v5887
    %v6200 = vpack.c.b16 %v5896, %v5888
    %v6201 = vpack.c.b16 %v5905, %v5897
    %v6202 = vpack.c.b16 %v5906, %v5898
    %v6203 = vpack.c.b16 %v5907, %v5899
    %v6204 = vpack.c.b16 %v5908, %v5900
    %v6205 = vpack.c.b16 %v5909, %v5901
    %v6206 = vpack.c.b16 %v5910, %v5902
    %v6207 = vpack.c.b16 %v5911, %v5903
    %v6208 = vpack.c.b16 %v5912, %v5904
    %v6209 = vpack.c.b16 %v5921, %v5913
    %v6210 = vpack.c.b16 %v5922, %v5914
    %v6211 = vpack.c.b16 %v5923, %v5915
    %v6212 = vpack.c.b16 %v5924, %v5916
    %v6213 = vpack.c.b16 %v5925, %v5917
    %v6214 = vpack.c.b16 %v5926, %v5918
    %v6215 = vpack.c.b16 %v5927, %v5919
    %v6216 = vpack.c.b16 %v5928, %v5920
    %v6217 = vpack.c.b16 %v5937, %v5929
    %v6218 = vpack.c.b16 %v5938, %v5930
    %v6219 = vpack.c.b16 %v5939, %v5931
    %v6220 = vpack.c.b16 %v5940, %v5932
    %v6221 = vpack.c.b16 %v5941, %v5933
    %v6222 = vpack.c.b16 %v5942, %v5934
    %v6223 = vpack.c.b16 %v5943, %v5935
    %v6224 = vpack.c.b16 %v5944, %v5936
    %v6225 = vpack.c.b16 %v5953, %v5945
    %v6226 = vpack.c.b16 %v5954, %v5946
    %v6227 = vpack.c.b16 %v5955, %v5947
    %v6228 = vpack.c.b16 %v5956, %v5948
    %v6229 = vpack.c.b16 %v5957, %v5949
    %v6230 = vpack.c.b16 %v5958, %v5950
    %v6231 = vpack.c.b16 %v5959, %v5951
    %v6232 = vpack.c.b16 %v5960, %v5952
    %v6233 = vpack.c.b16 %v5969, %v5961
    %v6234 = vpack.c.b16 %v5970, %v5962
    %v6235 = vpack.c.b16 %v5971, %v5963
    %v6236 = vpack.c.b16 %v5972, %v5964
    %v6237 = vpack.c.b16 %v5973, %v5965
    %v6238 = vpack.c.b16 %v5974, %v5966
    %v6239 = vpack.c.b16 %v5975, %v5967
    %v6240 = vpack.c.b16 %v5976, %v5968
    %v6241 = vpack.c.b16 %v5985, %v5977
    %v6242 = vpack.c.b16 %v5986, %v5978
    %v6243 = vpack.c.b16 %v5987, %v5979
    %v6244 = vpack.c.b16 %v5988, %v5980
    %v6245 = vpack.c.b16 %v5989, %v5981
    %v6246 = vpack.c.b16 %v5990, %v5982
    %v6247 = vpack.c.b16 %v5991, %v5983
    %v6248 = vpack.c.b16 %v5992, %v5984
    %6505 = vmatprep.subr.bf16.mxu0 %v6050
    %6506 = vmatpush1.bf16.msra.mxu0 %v6049
    %6507 = vmatprep.subr.bf16.mxu0 %v6042
    %6508 = vmatpush1.bf16.msra.mxu0 %v6041
    %6509 = vmatprep.subr.bf16.mxu0 %v6034
    %6510 = vmatpush1.bf16.msra.mxu0 %v6033
    %6511 = vmatprep.subr.bf16.mxu0 %v6026
    %6512 = vmatpush1.bf16.msra.mxu0 %v6025
    %6513 = vmatprep.subr.bf16.mxu0 %v6018
    %6514 = vmatpush1.bf16.msra.mxu0 %v6017
    %6515 = vmatprep.subr.bf16.mxu0 %v6010
    %6516 = vmatpush1.bf16.msra.mxu0 %v6009
    %6517 = vmatprep.subr.bf16.mxu0 %v6002
    %6518 = vmatpush1.bf16.msra.mxu0 %v6001
    %6519 = vmatprep.subr.bf16.mxu0 %v5994
    %6520 = vmatpush1.bf16.msra.mxu0 %v5993
    %6521 = vmatprep.subr.bf16.mxu0 %v6114
    %6522 = vmatpush2.bf16.msra.mxu0 %v6113
    %6523 = vmatprep.subr.bf16.mxu0 %v6106
    %6524 = vmatpush2.bf16.msra.mxu0 %v6105
    %6525 = vmatprep.subr.bf16.mxu0 %v6098
    %6526 = vmatpush2.bf16.msra.mxu0 %v6097
    %6527 = vmatprep.subr.bf16.mxu0 %v6090
    %6528 = vmatpush2.bf16.msra.mxu0 %v6089
    %6529 = vmatprep.subr.bf16.mxu0 %v6082
    %6530 = vmatpush2.bf16.msra.mxu0 %v6081
    %6531 = vmatprep.subr.bf16.mxu0 %v6074
    %6532 = vmatpush2.bf16.msra.mxu0 %v6073
    %6533 = vmatprep.subr.bf16.mxu0 %v6066
    %6534 = vmatpush2.bf16.msra.mxu0 %v6065
    %6535 = vmatprep.subr.bf16.mxu0 %v6058
    %6536 = vmatpush2.bf16.msra.mxu0 %v6057
    %6537 = vmatprep.mubr.bf16.mxu0 %v4924
    %6538 = vmatmul.mubr.bf16.gmra.mxu0 %v4923
    %v6539 = vpop.f32.mrf.mxu0
    %v6540 = vadd.f32 %v5188, %v6539
    %v6541 = vpop.f32.mrf.mxu0
    %v6542 = vadd.f32 %v5192, %v6541
    %v6543 = vpop.f32.mrf.mxu0
    %v6544 = vpop.f32.mrf.mxu0
    %6545 = vdwg.mxu0
    %6546 = vmatprep.subr.bf16.mxu0 %v6178
    %6547 = vmatpush1.bf16.msra.mxu0 %v6177
    %6548 = vmatprep.subr.bf16.mxu0 %v6170
    %6549 = vmatpush1.bf16.msra.mxu0 %v6169
    %6550 = vmatprep.subr.bf16.mxu0 %v6162
    %6551 = vmatpush1.bf16.msra.mxu0 %v6161
    %6552 = vmatprep.subr.bf16.mxu0 %v6154
    %6553 = vmatpush1.bf16.msra.mxu0 %v6153
    %6554 = vmatprep.subr.bf16.mxu0 %v6146
    %6555 = vmatpush1.bf16.msra.mxu0 %v6145
    %6556 = vmatprep.subr.bf16.mxu0 %v6138
    %6557 = vmatpush1.bf16.msra.mxu0 %v6137
    %6558 = vmatprep.subr.bf16.mxu0 %v6130
    %6559 = vmatpush1.bf16.msra.mxu0 %v6129
    %6560 = vmatprep.subr.bf16.mxu0 %v6122
    %6561 = vmatpush1.bf16.msra.mxu0 %v6121
    %6562 = vmatprep.subr.bf16.mxu0 %v6242
    %6563 = vmatpush2.bf16.msra.mxu0 %v6241
    %6564 = vmatprep.subr.bf16.mxu0 %v6234
    %6565 = vmatpush2.bf16.msra.mxu0 %v6233
    %6566 = vmatprep.subr.bf16.mxu0 %v6226
    %6567 = vmatpush2.bf16.msra.mxu0 %v6225
    %6568 = vmatprep.subr.bf16.mxu0 %v6218
    %6569 = vmatpush2.bf16.msra.mxu0 %v6217
    %6570 = vmatprep.subr.bf16.mxu0 %v6210
    %6571 = vmatpush2.bf16.msra.mxu0 %v6209
    %6572 = vmatprep.subr.bf16.mxu0 %v6202
    %6573 = vmatpush2.bf16.msra.mxu0 %v6201
    %6574 = vmatprep.subr.bf16.mxu0 %v6194
    %6575 = vmatpush2.bf16.msra.mxu0 %v6193
    %6576 = vmatprep.subr.bf16.mxu0 %v6186
    %6577 = vmatpush2.bf16.msra.mxu0 %v6185
    %6578 = vmatprep.mubr.bf16.mxu0 %v4926
    %6579 = vmatmul.mubr.bf16.gmra.mxu0 %v4925
    %v6580 = vpop.f32.mrf.mxu0
    %v6581 = vadd.f32 %v6540, %v6580
    %v6582 = vpop.f32.mrf.mxu0
    %v6583 = vadd.f32 %v6542, %v6582
    %v6584 = vpop.f32.mrf.mxu0
    %v6585 = vpop.f32.mrf.mxu0
    %6586 = vdwg.mxu0
    %6587 = vmatprep.subr.bf16.mxu0 %v6052
    %6588 = vmatpush1.bf16.msra.mxu0 %v6051
    %6589 = vmatprep.subr.bf16.mxu0 %v6044
    %6590 = vmatpush1.bf16.msra.mxu0 %v6043
    %6591 = vmatprep.subr.bf16.mxu0 %v6036
    %6592 = vmatpush1.bf16.msra.mxu0 %v6035
    %6593 = vmatprep.subr.bf16.mxu0 %v6028
    %6594 = vmatpush1.bf16.msra.mxu0 %v6027
    %6595 = vmatprep.subr.bf16.mxu0 %v6020
    %6596 = vmatpush1.bf16.msra.mxu0 %v6019
    %6597 = vmatprep.subr.bf16.mxu0 %v6012
    %6598 = vmatpush1.bf16.msra.mxu0 %v6011
    %6599 = vmatprep.subr.bf16.mxu0 %v6004
    %6600 = vmatpush1.bf16.msra.mxu0 %v6003
    %6601 = vmatprep.subr.bf16.mxu0 %v5996
    %6602 = vmatpush1.bf16.msra.mxu0 %v5995
    %6603 = vmatprep.subr.bf16.mxu0 %v6116
    %6604 = vmatpush2.bf16.msra.mxu0 %v6115
    %6605 = vmatprep.subr.bf16.mxu0 %v6108
    %6606 = vmatpush2.bf16.msra.mxu0 %v6107
    %6607 = vmatprep.subr.bf16.mxu0 %v6100
    %6608 = vmatpush2.bf16.msra.mxu0 %v6099
    %6609 = vmatprep.subr.bf16.mxu0 %v6092
    %6610 = vmatpush2.bf16.msra.mxu0 %v6091
    %6611 = vmatprep.subr.bf16.mxu0 %v6084
    %6612 = vmatpush2.bf16.msra.mxu0 %v6083
    %6613 = vmatprep.subr.bf16.mxu0 %v6076
    %6614 = vmatpush2.bf16.msra.mxu0 %v6075
    %6615 = vmatprep.subr.bf16.mxu0 %v6068
    %6616 = vmatpush2.bf16.msra.mxu0 %v6067
    %6617 = vmatprep.subr.bf16.mxu0 %v6060
    %6618 = vmatpush2.bf16.msra.mxu0 %v6059
    %6619 = vmatprep.mubr.bf16.mxu0 %v4924
    %6620 = vmatmul.mubr.bf16.gmra.mxu0 %v4923
    %v6621 = vpop.f32.mrf.mxu0
    %v6622 = vadd.f32 %v5196, %v6621
    %v6623 = vpop.f32.mrf.mxu0
    %v6624 = vadd.f32 %v5200, %v6623
    %v6625 = vpop.f32.mrf.mxu0
    %v6626 = vpop.f32.mrf.mxu0
    %6627 = vdwg.mxu0
    %6628 = vmatprep.subr.bf16.mxu0 %v6180
    %6629 = vmatpush1.bf16.msra.mxu0 %v6179
    %6630 = vmatprep.subr.bf16.mxu0 %v6172
    %6631 = vmatpush1.bf16.msra.mxu0 %v6171
    %6632 = vmatprep.subr.bf16.mxu0 %v6164
    %6633 = vmatpush1.bf16.msra.mxu0 %v6163
    %6634 = vmatprep.subr.bf16.mxu0 %v6156
    %6635 = vmatpush1.bf16.msra.mxu0 %v6155
    %6636 = vmatprep.subr.bf16.mxu0 %v6148
    %6637 = vmatpush1.bf16.msra.mxu0 %v6147
    %6638 = vmatprep.subr.bf16.mxu0 %v6140
    %6639 = vmatpush1.bf16.msra.mxu0 %v6139
    %6640 = vmatprep.subr.bf16.mxu0 %v6132
    %6641 = vmatpush1.bf16.msra.mxu0 %v6131
    %6642 = vmatprep.subr.bf16.mxu0 %v6124
    %6643 = vmatpush1.bf16.msra.mxu0 %v6123
    %6644 = vmatprep.subr.bf16.mxu0 %v6244
    %6645 = vmatpush2.bf16.msra.mxu0 %v6243
    %6646 = vmatprep.subr.bf16.mxu0 %v6236
    %6647 = vmatpush2.bf16.msra.mxu0 %v6235
    %6648 = vmatprep.subr.bf16.mxu0 %v6228
    %6649 = vmatpush2.bf16.msra.mxu0 %v6227
    %6650 = vmatprep.subr.bf16.mxu0 %v6220
    %6651 = vmatpush2.bf16.msra.mxu0 %v6219
    %6652 = vmatprep.subr.bf16.mxu0 %v6212
    %6653 = vmatpush2.bf16.msra.mxu0 %v6211
    %6654 = vmatprep.subr.bf16.mxu0 %v6204
    %6655 = vmatpush2.bf16.msra.mxu0 %v6203
    %6656 = vmatprep.subr.bf16.mxu0 %v6196
    %6657 = vmatpush2.bf16.msra.mxu0 %v6195
    %6658 = vmatprep.subr.bf16.mxu0 %v6188
    %6659 = vmatpush2.bf16.msra.mxu0 %v6187
    %6660 = vmatprep.mubr.bf16.mxu0 %v4926
    %6661 = vmatmul.mubr.bf16.gmra.mxu0 %v4925
    %v6662 = vpop.f32.mrf.mxu0
    %v6663 = vadd.f32 %v6622, %v6662
    %v6664 = vpop.f32.mrf.mxu0
    %v6665 = vadd.f32 %v6624, %v6664
    %v6666 = vpop.f32.mrf.mxu0
    %v6667 = vpop.f32.mrf.mxu0
    %6668 = vdwg.mxu0
    %6669 = vmatprep.subr.bf16.mxu0 %v6054
    %6670 = vmatpush1.bf16.msra.mxu0 %v6053
    %6671 = vmatprep.subr.bf16.mxu0 %v6046
    %6672 = vmatpush1.bf16.msra.mxu0 %v6045
    %6673 = vmatprep.subr.bf16.mxu0 %v6038
    %6674 = vmatpush1.bf16.msra.mxu0 %v6037
    %6675 = vmatprep.subr.bf16.mxu0 %v6030
    %6676 = vmatpush1.bf16.msra.mxu0 %v6029
    %6677 = vmatprep.subr.bf16.mxu0 %v6022
    %6678 = vmatpush1.bf16.msra.mxu0 %v6021
    %6679 = vmatprep.subr.bf16.mxu0 %v6014
    %6680 = vmatpush1.bf16.msra.mxu0 %v6013
    %6681 = vmatprep.subr.bf16.mxu0 %v6006
    %6682 = vmatpush1.bf16.msra.mxu0 %v6005
    %6683 = vmatprep.subr.bf16.mxu0 %v5998
    %6684 = vmatpush1.bf16.msra.mxu0 %v5997
    %6685 = vmatprep.subr.bf16.mxu0 %v6118
    %6686 = vmatpush2.bf16.msra.mxu0 %v6117
    %6687 = vmatprep.subr.bf16.mxu0 %v6110
    %6688 = vmatpush2.bf16.msra.mxu0 %v6109
    %6689 = vmatprep.subr.bf16.mxu0 %v6102
    %6690 = vmatpush2.bf16.msra.mxu0 %v6101
    %6691 = vmatprep.subr.bf16.mxu0 %v6094
    %6692 = vmatpush2.bf16.msra.mxu0 %v6093
    %6693 = vmatprep.subr.bf16.mxu0 %v6086
    %6694 = vmatpush2.bf16.msra.mxu0 %v6085
    %6695 = vmatprep.subr.bf16.mxu0 %v6078
    %6696 = vmatpush2.bf16.msra.mxu0 %v6077
    %6697 = vmatprep.subr.bf16.mxu0 %v6070
    %6698 = vmatpush2.bf16.msra.mxu0 %v6069
    %6699 = vmatprep.subr.bf16.mxu0 %v6062
    %6700 = vmatpush2.bf16.msra.mxu0 %v6061
    %6701 = vmatprep.mubr.bf16.mxu0 %v4924
    %6702 = vmatmul.mubr.bf16.gmra.mxu0 %v4923
    %v6703 = vpop.f32.mrf.mxu0
    %v6704 = vadd.f32 %v5204, %v6703
    %v6705 = vpop.f32.mrf.mxu0
    %v6706 = vadd.f32 %v5208, %v6705
    %v6707 = vpop.f32.mrf.mxu0
    %v6708 = vpop.f32.mrf.mxu0
    %6709 = vdwg.mxu0
    %6710 = vmatprep.subr.bf16.mxu0 %v6182
    %6711 = vmatpush1.bf16.msra.mxu0 %v6181
    %6712 = vmatprep.subr.bf16.mxu0 %v6174
    %6713 = vmatpush1.bf16.msra.mxu0 %v6173
    %6714 = vmatprep.subr.bf16.mxu0 %v6166
    %6715 = vmatpush1.bf16.msra.mxu0 %v6165
    %6716 = vmatprep.subr.bf16.mxu0 %v6158
    %6717 = vmatpush1.bf16.msra.mxu0 %v6157
    %6718 = vmatprep.subr.bf16.mxu0 %v6150
    %6719 = vmatpush1.bf16.msra.mxu0 %v6149
    %6720 = vmatprep.subr.bf16.mxu0 %v6142
    %6721 = vmatpush1.bf16.msra.mxu0 %v6141
    %6722 = vmatprep.subr.bf16.mxu0 %v6134
    %6723 = vmatpush1.bf16.msra.mxu0 %v6133
    %6724 = vmatprep.subr.bf16.mxu0 %v6126
    %6725 = vmatpush1.bf16.msra.mxu0 %v6125
    %6726 = vmatprep.subr.bf16.mxu0 %v6246
    %6727 = vmatpush2.bf16.msra.mxu0 %v6245
    %6728 = vmatprep.subr.bf16.mxu0 %v6238
    %6729 = vmatpush2.bf16.msra.mxu0 %v6237
    %6730 = vmatprep.subr.bf16.mxu0 %v6230
    %6731 = vmatpush2.bf16.msra.mxu0 %v6229
    %6732 = vmatprep.subr.bf16.mxu0 %v6222
    %6733 = vmatpush2.bf16.msra.mxu0 %v6221
    %6734 = vmatprep.subr.bf16.mxu0 %v6214
    %6735 = vmatpush2.bf16.msra.mxu0 %v6213
    %6736 = vmatprep.subr.bf16.mxu0 %v6206
    %6737 = vmatpush2.bf16.msra.mxu0 %v6205
    %6738 = vmatprep.subr.bf16.mxu0 %v6198
    %6739 = vmatpush2.bf16.msra.mxu0 %v6197
    %6740 = vmatprep.subr.bf16.mxu0 %v6190
    %6741 = vmatpush2.bf16.msra.mxu0 %v6189
    %6742 = vmatprep.mubr.bf16.mxu0 %v4926
    %6743 = vmatmul.mubr.bf16.gmra.mxu0 %v4925
    %v6744 = vpop.f32.mrf.mxu0
    %v6745 = vadd.f32 %v6704, %v6744
    %v6746 = vpop.f32.mrf.mxu0
    %v6747 = vadd.f32 %v6706, %v6746
    %v6748 = vpop.f32.mrf.mxu0
    %v6749 = vpop.f32.mrf.mxu0
    %6750 = vdwg.mxu0
    %6751 = vmatprep.subr.bf16.mxu0 %v6056
    %6752 = vmatpush1.bf16.msra.mxu0 %v6055
    %6753 = vmatprep.subr.bf16.mxu0 %v6048
    %6754 = vmatpush1.bf16.msra.mxu0 %v6047
    %6755 = vmatprep.subr.bf16.mxu0 %v6040
    %6756 = vmatpush1.bf16.msra.mxu0 %v6039
    %6757 = vmatprep.subr.bf16.mxu0 %v6032
    %6758 = vmatpush1.bf16.msra.mxu0 %v6031
    %6759 = vmatprep.subr.bf16.mxu0 %v6024
    %6760 = vmatpush1.bf16.msra.mxu0 %v6023
    %6761 = vmatprep.subr.bf16.mxu0 %v6016
    %6762 = vmatpush1.bf16.msra.mxu0 %v6015
    %6763 = vmatprep.subr.bf16.mxu0 %v6008
    %6764 = vmatpush1.bf16.msra.mxu0 %v6007
    %6765 = vmatprep.subr.bf16.mxu0 %v6000
    %6766 = vmatpush1.bf16.msra.mxu0 %v5999
    %6767 = vmatprep.subr.bf16.mxu0 %v6120
    %6768 = vmatpush2.bf16.msra.mxu0 %v6119
    %6769 = vmatprep.subr.bf16.mxu0 %v6112
    %6770 = vmatpush2.bf16.msra.mxu0 %v6111
    %6771 = vmatprep.subr.bf16.mxu0 %v6104
    %6772 = vmatpush2.bf16.msra.mxu0 %v6103
    %6773 = vmatprep.subr.bf16.mxu0 %v6096
    %6774 = vmatpush2.bf16.msra.mxu0 %v6095
    %6775 = vmatprep.subr.bf16.mxu0 %v6088
    %6776 = vmatpush2.bf16.msra.mxu0 %v6087
    %6777 = vmatprep.subr.bf16.mxu0 %v6080
    %6778 = vmatpush2.bf16.msra.mxu0 %v6079
    %6779 = vmatprep.subr.bf16.mxu0 %v6072
    %6780 = vmatpush2.bf16.msra.mxu0 %v6071
    %6781 = vmatprep.subr.bf16.mxu0 %v6064
    %6782 = vmatpush2.bf16.msra.mxu0 %v6063
    %6783 = vmatprep.mubr.bf16.mxu0 %v4924
    %6784 = vmatmul.mubr.bf16.gmra.mxu0 %v4923
    %v6785 = vpop.f32.mrf.mxu0
    %v6786 = vadd.f32 %v5212, %v6785
    %v6787 = vpop.f32.mrf.mxu0
    %v6788 = vadd.f32 %v5216, %v6787
    %v6789 = vpop.f32.mrf.mxu0
    %v6790 = vpop.f32.mrf.mxu0
    %6791 = vdwg.mxu0
    %6792 = vmatprep.subr.bf16.mxu0 %v6184
    %6793 = vmatpush1.bf16.msra.mxu0 %v6183
    %6794 = vmatprep.subr.bf16.mxu0 %v6176
    %6795 = vmatpush1.bf16.msra.mxu0 %v6175
    %6796 = vmatprep.subr.bf16.mxu0 %v6168
    %6797 = vmatpush1.bf16.msra.mxu0 %v6167
    %6798 = vmatprep.subr.bf16.mxu0 %v6160
    %6799 = vmatpush1.bf16.msra.mxu0 %v6159
    %6800 = vmatprep.subr.bf16.mxu0 %v6152
    %6801 = vmatpush1.bf16.msra.mxu0 %v6151
    %6802 = vmatprep.subr.bf16.mxu0 %v6144
    %6803 = vmatpush1.bf16.msra.mxu0 %v6143
    %6804 = vmatprep.subr.bf16.mxu0 %v6136
    %6805 = vmatpush1.bf16.msra.mxu0 %v6135
    %6806 = vmatprep.subr.bf16.mxu0 %v6128
    %6807 = vmatpush1.bf16.msra.mxu0 %v6127
    %6808 = vmatprep.subr.bf16.mxu0 %v6248
    %6809 = vmatpush2.bf16.msra.mxu0 %v6247
    %6810 = vmatprep.subr.bf16.mxu0 %v6240
    %6811 = vmatpush2.bf16.msra.mxu0 %v6239
    %6812 = vmatprep.subr.bf16.mxu0 %v6232
    %6813 = vmatpush2.bf16.msra.mxu0 %v6231
    %6814 = vmatprep.subr.bf16.mxu0 %v6224
    %6815 = vmatpush2.bf16.msra.mxu0 %v6223
    %6816 = vmatprep.subr.bf16.mxu0 %v6216
    %6817 = vmatpush2.bf16.msra.mxu0 %v6215
    %6818 = vmatprep.subr.bf16.mxu0 %v6208
    %6819 = vmatpush2.bf16.msra.mxu0 %v6207
    %6820 = vmatprep.subr.bf16.mxu0 %v6200
    %6821 = vmatpush2.bf16.msra.mxu0 %v6199
    %6822 = vmatprep.subr.bf16.mxu0 %v6192
    %6823 = vmatpush2.bf16.msra.mxu0 %v6191
    %6824 = vmatprep.mubr.bf16.mxu0 %v4926
    %6825 = vmatmul.mubr.bf16.gmra.mxu0 %v4925
    %v6826 = vpop.f32.mrf.mxu0
    %v6827 = vadd.f32 %v6786, %v6826
    %v6828 = vpop.f32.mrf.mxu0
    %v6829 = vadd.f32 %v6788, %v6828
    %v6830 = vpop.f32.mrf.mxu0
    %v6831 = vpop.f32.mrf.mxu0
    %6832 = vdwg.mxu0
    %v6833 = vmax.f32 %v6581, 0.0
    %v6834 = vmax.f32 %v6583, 0.0
    %v6835 = vmax.f32 %v6663, 0.0
    %v6836 = vmax.f32 %v6665, 0.0
    %v6837 = vmax.f32 %v6745, 0.0
    %v6838 = vmax.f32 %v6747, 0.0
    %v6839 = vmax.f32 %v6827, 0.0
    %v6840 = vmax.f32 %v6829, 0.0
    %v6841 = vpack.c.bf16 %v6833, %v6833
    %v6842 = vpack.c.bf16 %v6834, %v6834
    %v6843 = vpack.c.bf16 %v6835, %v6835
    %v6844 = vpack.c.bf16 %v6836, %v6836
    %v6845 = vpack.c.bf16 %v6837, %v6837
    %v6846 = vpack.c.bf16 %v6838, %v6838
    %v6847 = vpack.c.bf16 %v6839, %v6839
    %v6848 = vpack.c.bf16 %v6840, %v6840
    %v6849 = vld [vmem:[#allocation7] sm:$0xff]
    %v6850 = vld [vmem:[#allocation7 + $0x8] sm:$0xff]
    %v6851 = vld [vmem:[#allocation7 + $0x10] sm:$0xff]
    %v6852 = vld [vmem:[#allocation7 + $0x18] sm:$0xf]
    %v6853 = vld [vmem:[#allocation7 + $0x1c] sm:$0xff]
    %v6854 = vld [vmem:[#allocation7 + $0x24] sm:$0xff]
    %v6855 = vld [vmem:[#allocation7 + $0x2c] sm:$0xff]
    %v6856 = vld [vmem:[#allocation7 + $0x34] sm:$0xf]
    %v6857 = vld [vmem:[#allocation7 + $0x38] sm:$0xff]
    %v6858 = vld [vmem:[#allocation7 + $0x40] sm:$0xff]
    %v6859 = vld [vmem:[#allocation7 + $0x48] sm:$0xff]
    %v6860 = vld [vmem:[#allocation7 + $0x50] sm:$0xf]
    %v6861 = vld [vmem:[#allocation7 + $0x54] sm:$0xff]
    %v6862 = vld [vmem:[#allocation7 + $0x5c] sm:$0xff]
    %v6863 = vld [vmem:[#allocation7 + $0x64] sm:$0xff]
    %v6864 = vld [vmem:[#allocation7 + $0x6c] sm:$0xf]
    %v6865 = vld [vmem:[#allocation7 + $0x70] sm:$0xff]
    %v6866 = vld [vmem:[#allocation7 + $0x78] sm:$0xff]
    %v6867 = vld [vmem:[#allocation7 + $0x80] sm:$0xff]
    %v6868 = vld [vmem:[#allocation7 + $0x88] sm:$0xf]
    %v6869 = vld [vmem:[#allocation7 + $0x8c] sm:$0xff]
    %v6870 = vld [vmem:[#allocation7 + $0x94] sm:$0xff]
    %v6871 = vld [vmem:[#allocation7 + $0x9c] sm:$0xff]
    %v6872 = vld [vmem:[#allocation7 + $0xa4] sm:$0xf]
    %v6873 = vld [vmem:[#allocation7 + $0xa8] sm:$0xff]
    %v6874 = vld [vmem:[#allocation7 + $0xb0] sm:$0xff]
    %v6875 = vld [vmem:[#allocation7 + $0xb8] sm:$0xff]
    %v6876 = vld [vmem:[#allocation7 + $0xc0] sm:$0xf]
    %v6877 = vld [vmem:[#allocation7 + $0xc4] sm:$0xff]
    %v6878 = vld [vmem:[#allocation7 + $0xcc] sm:$0xff]
    %v6879 = vld [vmem:[#allocation7 + $0xd4] sm:$0xff]
    %v6880 = vld [vmem:[#allocation7 + $0xdc] sm:$0xf]
    %v6881 = vld [vmem:[#allocation7 + $0xe0] sm:$0xff]
    %v6882 = vld [vmem:[#allocation7 + $0xe8] sm:$0xff]
    %v6883 = vld [vmem:[#allocation7 + $0xf0] sm:$0xff]
    %v6884 = vld [vmem:[#allocation7 + $0xf8] sm:$0xf]
    %v6885 = vld [vmem:[#allocation7 + $0xfc] sm:$0xff]
    %v6886 = vld [vmem:[#allocation7 + $0x104] sm:$0xff]
    %v6887 = vld [vmem:[#allocation7 + $0x10c] sm:$0xff]
    %v6888 = vld [vmem:[#allocation7 + $0x114] sm:$0xf]
    %v6889 = vld [vmem:[#allocation7 + $0x118] sm:$0xff]
    %v6890 = vld [vmem:[#allocation7 + $0x120] sm:$0xff]
    %v6891 = vld [vmem:[#allocation7 + $0x128] sm:$0xff]
    %v6892 = vld [vmem:[#allocation7 + $0x130] sm:$0xf]
    %v6893 = vld [vmem:[#allocation7 + $0x134] sm:$0xff]
    %v6894 = vld [vmem:[#allocation7 + $0x13c] sm:$0xff]
    %v6895 = vld [vmem:[#allocation7 + $0x144] sm:$0xff]
    %v6896 = vld [vmem:[#allocation7 + $0x14c] sm:$0xf]
    %v6897 = vld [vmem:[#allocation7 + $0x150] sm:$0xff]
    %v6898 = vld [vmem:[#allocation7 + $0x158] sm:$0xff]
    %v6899 = vld [vmem:[#allocation7 + $0x160] sm:$0xff]
    %v6900 = vld [vmem:[#allocation7 + $0x168] sm:$0xf]
    %v6901 = vld [vmem:[#allocation7 + $0x16c] sm:$0xff]
    %v6902 = vld [vmem:[#allocation7 + $0x174] sm:$0xff]
    %v6903 = vld [vmem:[#allocation7 + $0x17c] sm:$0xff]
    %v6904 = vld [vmem:[#allocation7 + $0x184] sm:$0xf]
    %v6905 = vld [vmem:[#allocation7 + $0x188] sm:$0xff]
    %v6906 = vld [vmem:[#allocation7 + $0x190] sm:$0xff]
    %v6907 = vld [vmem:[#allocation7 + $0x198] sm:$0xff]
    %v6908 = vld [vmem:[#allocation7 + $0x1a0] sm:$0xf]
    %v6909 = vld [vmem:[#allocation7 + $0x1a4] sm:$0xff]
    %v6910 = vld [vmem:[#allocation7 + $0x1ac] sm:$0xff]
    %v6911 = vld [vmem:[#allocation7 + $0x1b4] sm:$0xff]
    %v6912 = vld [vmem:[#allocation7 + $0x1bc] sm:$0xf]
    %v6913 = vld [vmem:[#allocation7 + $0x1c0] sm:$0xff]
    %v6914 = vld [vmem:[#allocation7 + $0x1c8] sm:$0xff]
    %v6915 = vld [vmem:[#allocation7 + $0x1d0] sm:$0xff]
    %v6916 = vld [vmem:[#allocation7 + $0x1d8] sm:$0xf]
    %v6917 = vld [vmem:[#allocation7 + $0x1dc] sm:$0xff]
    %v6918 = vld [vmem:[#allocation7 + $0x1e4] sm:$0xff]
    %v6919 = vld [vmem:[#allocation7 + $0x1ec] sm:$0xff]
    %v6920 = vld [vmem:[#allocation7 + $0x1f4] sm:$0xf]
    %v6921 = vld [vmem:[#allocation7 + $0x1f8] sm:$0xff]
    %v6922 = vld [vmem:[#allocation7 + $0x200] sm:$0xff]
    %v6923 = vld [vmem:[#allocation7 + $0x208] sm:$0xff]
    %v6924 = vld [vmem:[#allocation7 + $0x210] sm:$0xf]
    %v6925 = vld [vmem:[#allocation7 + $0x214] sm:$0xff]
    %v6926 = vld [vmem:[#allocation7 + $0x21c] sm:$0xff]
    %v6927 = vld [vmem:[#allocation7 + $0x224] sm:$0xff]
    %v6928 = vld [vmem:[#allocation7 + $0x22c] sm:$0xf]
    %v6929 = vld [vmem:[#allocation7 + $0x230] sm:$0xff]
    %v6930 = vld [vmem:[#allocation7 + $0x238] sm:$0xff]
    %v6931 = vld [vmem:[#allocation7 + $0x240] sm:$0xff]
    %v6932 = vld [vmem:[#allocation7 + $0x248] sm:$0xf]
    %v6933 = vld [vmem:[#allocation7 + $0x24c] sm:$0xff]
    %v6934 = vld [vmem:[#allocation7 + $0x254] sm:$0xff]
    %v6935 = vld [vmem:[#allocation7 + $0x25c] sm:$0xff]
    %v6936 = vld [vmem:[#allocation7 + $0x264] sm:$0xf]
    %v6937 = vld [vmem:[#allocation7 + $0x268] sm:$0xff]
    %v6938 = vld [vmem:[#allocation7 + $0x270] sm:$0xff]
    %v6939 = vld [vmem:[#allocation7 + $0x278] sm:$0xff]
    %v6940 = vld [vmem:[#allocation7 + $0x280] sm:$0xf]
    %v6941 = vld [vmem:[#allocation7 + $0x284] sm:$0xff]
    %v6942 = vld [vmem:[#allocation7 + $0x28c] sm:$0xff]
    %v6943 = vld [vmem:[#allocation7 + $0x294] sm:$0xff]
    %v6944 = vld [vmem:[#allocation7 + $0x29c] sm:$0xf]
    %v6945 = vld [vmem:[#allocation7 + $0x2a0] sm:$0xff]
    %v6946 = vld [vmem:[#allocation7 + $0x2a8] sm:$0xff]
    %v6947 = vld [vmem:[#allocation7 + $0x2b0] sm:$0xff]
    %v6948 = vld [vmem:[#allocation7 + $0x2b8] sm:$0xf]
    %v6949 = vld [vmem:[#allocation7 + $0x2bc] sm:$0xff]
    %v6950 = vld [vmem:[#allocation7 + $0x2c4] sm:$0xff]
    %v6951 = vld [vmem:[#allocation7 + $0x2cc] sm:$0xff]
    %v6952 = vld [vmem:[#allocation7 + $0x2d4] sm:$0xf]
    %v6953 = vld [vmem:[#allocation7 + $0x2d8] sm:$0xff]
    %v6954 = vld [vmem:[#allocation7 + $0x2e0] sm:$0xff]
    %v6955 = vld [vmem:[#allocation7 + $0x2e8] sm:$0xff]
    %v6956 = vld [vmem:[#allocation7 + $0x2f0] sm:$0xf]
    %v6957 = vld [vmem:[#allocation7 + $0x2f4] sm:$0xff]
    %v6958 = vld [vmem:[#allocation7 + $0x2fc] sm:$0xff]
    %v6959 = vld [vmem:[#allocation7 + $0x304] sm:$0xff]
    %v6960 = vld [vmem:[#allocation7 + $0x30c] sm:$0xf]
    %v6961 = vld [vmem:[#allocation7 + $0x310] sm:$0xff]
    %v6962 = vld [vmem:[#allocation7 + $0x318] sm:$0xff]
    %v6963 = vld [vmem:[#allocation7 + $0x320] sm:$0xff]
    %v6964 = vld [vmem:[#allocation7 + $0x328] sm:$0xf]
    %v6965 = vld [vmem:[#allocation7 + $0x32c] sm:$0xff]
    %v6966 = vld [vmem:[#allocation7 + $0x334] sm:$0xff]
    %v6967 = vld [vmem:[#allocation7 + $0x33c] sm:$0xff]
    %v6968 = vld [vmem:[#allocation7 + $0x344] sm:$0xf]
    %v6969 = vld [vmem:[#allocation7 + $0x348] sm:$0xff]
    %v6970 = vld [vmem:[#allocation7 + $0x350] sm:$0xff]
    %v6971 = vld [vmem:[#allocation7 + $0x358] sm:$0xff]
    %v6972 = vld [vmem:[#allocation7 + $0x360] sm:$0xf]
    %v6973 = vld [vmem:[#allocation7 + $0x364] sm:$0xff]
    %v6974 = vld [vmem:[#allocation7 + $0x36c] sm:$0xff]
    %v6975 = vld [vmem:[#allocation7 + $0x374] sm:$0xff]
    %v6976 = vld [vmem:[#allocation7 + $0x37c] sm:$0xf]
    %v6977 = vld [vmem:[#allocation7 + $0x380] sm:$0xff]
    %v6978 = vld [vmem:[#allocation7 + $0x388] sm:$0xff]
    %v6979 = vld [vmem:[#allocation7 + $0x390] sm:$0xff]
    %v6980 = vld [vmem:[#allocation7 + $0x398] sm:$0xf]
    %v6981 = vld [vmem:[#allocation7 + $0x39c] sm:$0xff]
    %v6982 = vld [vmem:[#allocation7 + $0x3a4] sm:$0xff]
    %v6983 = vld [vmem:[#allocation7 + $0x3ac] sm:$0xff]
    %v6984 = vld [vmem:[#allocation7 + $0x3b4] sm:$0xf]
    %v6985 = vld [vmem:[#allocation7 + $0x3b8] sm:$0xff]
    %v6986 = vld [vmem:[#allocation7 + $0x3c0] sm:$0xff]
    %v6987 = vld [vmem:[#allocation7 + $0x3c8] sm:$0xff]
    %v6988 = vld [vmem:[#allocation7 + $0x3d0] sm:$0xf]
    %v6989 = vld [vmem:[#allocation7 + $0x3d4] sm:$0xff]
    %v6990 = vld [vmem:[#allocation7 + $0x3dc] sm:$0xff]
    %v6991 = vld [vmem:[#allocation7 + $0x3e4] sm:$0xff]
    %v6992 = vld [vmem:[#allocation7 + $0x3ec] sm:$0xf]
    %v6993 = vld [vmem:[#allocation7 + $0x3f0] sm:$0xff]
    %v6994 = vld [vmem:[#allocation7 + $0x3f8] sm:$0xff]
    %v6995 = vld [vmem:[#allocation7 + $0x400] sm:$0xff]
    %v6996 = vld [vmem:[#allocation7 + $0x408] sm:$0xf]
    %v6997 = vld [vmem:[#allocation7 + $0x40c] sm:$0xff]
    %v6998 = vld [vmem:[#allocation7 + $0x414] sm:$0xff]
    %v6999 = vld [vmem:[#allocation7 + $0x41c] sm:$0xff]
    %v7000 = vld [vmem:[#allocation7 + $0x424] sm:$0xf]
    %v7001 = vld [vmem:[#allocation7 + $0x428] sm:$0xff]
    %v7002 = vld [vmem:[#allocation7 + $0x430] sm:$0xff]
    %v7003 = vld [vmem:[#allocation7 + $0x438] sm:$0xff]
    %v7004 = vld [vmem:[#allocation7 + $0x440] sm:$0xf]
    %v7005 = vld [vmem:[#allocation7 + $0x444] sm:$0xff]
    %v7006 = vld [vmem:[#allocation7 + $0x44c] sm:$0xff]
    %v7007 = vld [vmem:[#allocation7 + $0x454] sm:$0xff]
    %v7008 = vld [vmem:[#allocation7 + $0x45c] sm:$0xf]
    %v7009 = vld [vmem:[#allocation7 + $0x460] sm:$0xff]
    %v7010 = vld [vmem:[#allocation7 + $0x468] sm:$0xff]
    %v7011 = vld [vmem:[#allocation7 + $0x470] sm:$0xff]
    %v7012 = vld [vmem:[#allocation7 + $0x478] sm:$0xf]
    %v7013 = vld [vmem:[#allocation7 + $0x47c] sm:$0xff]
    %v7014 = vld [vmem:[#allocation7 + $0x484] sm:$0xff]
    %v7015 = vld [vmem:[#allocation7 + $0x48c] sm:$0xff]
    %v7016 = vld [vmem:[#allocation7 + $0x494] sm:$0xf]
    %v7017 = vld [vmem:[#allocation7 + $0x498] sm:$0xff]
    %v7018 = vld [vmem:[#allocation7 + $0x4a0] sm:$0xff]
    %v7019 = vld [vmem:[#allocation7 + $0x4a8] sm:$0xff]
    %v7020 = vld [vmem:[#allocation7 + $0x4b0] sm:$0xf]
    %v7021 = vld [vmem:[#allocation7 + $0x4b4] sm:$0xff]
    %v7022 = vld [vmem:[#allocation7 + $0x4bc] sm:$0xff]
    %v7023 = vld [vmem:[#allocation7 + $0x4c4] sm:$0xff]
    %v7024 = vld [vmem:[#allocation7 + $0x4cc] sm:$0xf]
    %v7025 = vld [vmem:[#allocation7 + $0x4d0] sm:$0xff]
    %v7026 = vld [vmem:[#allocation7 + $0x4d8] sm:$0xff]
    %v7027 = vld [vmem:[#allocation7 + $0x4e0] sm:$0xff]
    %v7028 = vld [vmem:[#allocation7 + $0x4e8] sm:$0xf]
    %v7029 = vld [vmem:[#allocation7 + $0x4ec] sm:$0xff]
    %v7030 = vld [vmem:[#allocation7 + $0x4f4] sm:$0xff]
    %v7031 = vld [vmem:[#allocation7 + $0x4fc] sm:$0xff]
    %v7032 = vld [vmem:[#allocation7 + $0x504] sm:$0xf]
    %v7033 = vld [vmem:[#allocation7 + $0x508] sm:$0xff]
    %v7034 = vld [vmem:[#allocation7 + $0x510] sm:$0xff]
    %v7035 = vld [vmem:[#allocation7 + $0x518] sm:$0xff]
    %v7036 = vld [vmem:[#allocation7 + $0x520] sm:$0xf]
    %v7037 = vld [vmem:[#allocation7 + $0x524] sm:$0xff]
    %v7038 = vld [vmem:[#allocation7 + $0x52c] sm:$0xff]
    %v7039 = vld [vmem:[#allocation7 + $0x534] sm:$0xff]
    %v7040 = vld [vmem:[#allocation7 + $0x53c] sm:$0xf]
    %v7041 = vld [vmem:[#allocation7 + $0x540] sm:$0xff]
    %v7042 = vld [vmem:[#allocation7 + $0x548] sm:$0xff]
    %v7043 = vld [vmem:[#allocation7 + $0x550] sm:$0xff]
    %v7044 = vld [vmem:[#allocation7 + $0x558] sm:$0xf]
    %v7045 = vld [vmem:[#allocation7 + $0x55c] sm:$0xff]
    %v7046 = vld [vmem:[#allocation7 + $0x564] sm:$0xff]
    %v7047 = vld [vmem:[#allocation7 + $0x56c] sm:$0xff]
    %v7048 = vld [vmem:[#allocation7 + $0x574] sm:$0xf]
    %v7049 = vld [vmem:[#allocation7 + $0x578] sm:$0xff]
    %v7050 = vld [vmem:[#allocation7 + $0x580] sm:$0xff]
    %v7051 = vld [vmem:[#allocation7 + $0x588] sm:$0xff]
    %v7052 = vld [vmem:[#allocation7 + $0x590] sm:$0xf]
    %v7053 = vld [vmem:[#allocation7 + $0x594] sm:$0xff]
    %v7054 = vld [vmem:[#allocation7 + $0x59c] sm:$0xff]
    %v7055 = vld [vmem:[#allocation7 + $0x5a4] sm:$0xff]
    %v7056 = vld [vmem:[#allocation7 + $0x5ac] sm:$0xf]
    %v7057 = vld [vmem:[#allocation7 + $0x5b0] sm:$0xff]
    %v7058 = vld [vmem:[#allocation7 + $0x5b8] sm:$0xff]
    %v7059 = vld [vmem:[#allocation7 + $0x5c0] sm:$0xff]
    %v7060 = vld [vmem:[#allocation7 + $0x5c8] sm:$0xf]
    %v7061 = vld [vmem:[#allocation7 + $0x5cc] sm:$0xff]
    %v7062 = vld [vmem:[#allocation7 + $0x5d4] sm:$0xff]
    %v7063 = vld [vmem:[#allocation7 + $0x5dc] sm:$0xff]
    %v7064 = vld [vmem:[#allocation7 + $0x5e4] sm:$0xf]
    %v7065 = vld [vmem:[#allocation7 + $0x5e8] sm:$0xff]
    %v7066 = vld [vmem:[#allocation7 + $0x5f0] sm:$0xff]
    %v7067 = vld [vmem:[#allocation7 + $0x5f8] sm:$0xff]
    %v7068 = vld [vmem:[#allocation7 + $0x600] sm:$0xf]
    %v7069 = vld [vmem:[#allocation7 + $0x604] sm:$0xff]
    %v7070 = vld [vmem:[#allocation7 + $0x60c] sm:$0xff]
    %v7071 = vld [vmem:[#allocation7 + $0x614] sm:$0xff]
    %v7072 = vld [vmem:[#allocation7 + $0x61c] sm:$0xf]
    %v7073 = vld [vmem:[#allocation7 + $0x620] sm:$0xff]
    %v7074 = vld [vmem:[#allocation7 + $0x628] sm:$0xff]
    %v7075 = vld [vmem:[#allocation7 + $0x630] sm:$0xff]
    %v7076 = vld [vmem:[#allocation7 + $0x638] sm:$0xf]
    %v7077 = vld [vmem:[#allocation7 + $0x63c] sm:$0xff]
    %v7078 = vld [vmem:[#allocation7 + $0x644] sm:$0xff]
    %v7079 = vld [vmem:[#allocation7 + $0x64c] sm:$0xff]
    %v7080 = vld [vmem:[#allocation7 + $0x654] sm:$0xf]
    %v7081 = vld [vmem:[#allocation7 + $0x658] sm:$0xff]
    %v7082 = vld [vmem:[#allocation7 + $0x660] sm:$0xff]
    %v7083 = vld [vmem:[#allocation7 + $0x668] sm:$0xff]
    %v7084 = vld [vmem:[#allocation7 + $0x670] sm:$0xf]
    %v7085 = vld [vmem:[#allocation7 + $0x674] sm:$0xff]
    %v7086 = vld [vmem:[#allocation7 + $0x67c] sm:$0xff]
    %v7087 = vld [vmem:[#allocation7 + $0x684] sm:$0xff]
    %v7088 = vld [vmem:[#allocation7 + $0x68c] sm:$0xf]
    %v7089 = vld [vmem:[#allocation7 + $0x690] sm:$0xff]
    %v7090 = vld [vmem:[#allocation7 + $0x698] sm:$0xff]
    %v7091 = vld [vmem:[#allocation7 + $0x6a0] sm:$0xff]
    %v7092 = vld [vmem:[#allocation7 + $0x6a8] sm:$0xf]
    %v7093 = vld [vmem:[#allocation7 + $0x6ac] sm:$0xff]
    %v7094 = vld [vmem:[#allocation7 + $0x6b4] sm:$0xff]
    %v7095 = vld [vmem:[#allocation7 + $0x6bc] sm:$0xff]
    %v7096 = vld [vmem:[#allocation7 + $0x6c4] sm:$0xf]
    %v7097 = vld [vmem:[#allocation7 + $0x6c8] sm:$0xff]
    %v7098 = vld [vmem:[#allocation7 + $0x6d0] sm:$0xff]
    %v7099 = vld [vmem:[#allocation7 + $0x6d8] sm:$0xff]
    %v7100 = vld [vmem:[#allocation7 + $0x6e0] sm:$0xf]
    %v7101 = vld [vmem:[#allocation7 + $0x6e4] sm:$0xff]
    %v7102 = vld [vmem:[#allocation7 + $0x6ec] sm:$0xff]
    %v7103 = vld [vmem:[#allocation7 + $0x6f4] sm:$0xff]
    %v7104 = vld [vmem:[#allocation7 + $0x6fc] sm:$0xf]
    %v7105 = vld [vmem:[#allocation7 + $0x700] sm:$0xff]
    %v7106 = vld [vmem:[#allocation7 + $0x708] sm:$0xff]
    %v7107 = vld [vmem:[#allocation7 + $0x710] sm:$0xff]
    %v7108 = vld [vmem:[#allocation7 + $0x718] sm:$0xf]
    %v7109 = vld [vmem:[#allocation7 + $0x71c] sm:$0xff]
    %v7110 = vld [vmem:[#allocation7 + $0x724] sm:$0xff]
    %v7111 = vld [vmem:[#allocation7 + $0x72c] sm:$0xff]
    %v7112 = vld [vmem:[#allocation7 + $0x734] sm:$0xf]
    %v7113 = vld [vmem:[#allocation7 + $0x738] sm:$0xff]
    %v7114 = vld [vmem:[#allocation7 + $0x740] sm:$0xff]
    %v7115 = vld [vmem:[#allocation7 + $0x748] sm:$0xff]
    %v7116 = vld [vmem:[#allocation7 + $0x750] sm:$0xf]
    %v7117 = vld [vmem:[#allocation7 + $0x754] sm:$0xff]
    %v7118 = vld [vmem:[#allocation7 + $0x75c] sm:$0xff]
    %v7119 = vld [vmem:[#allocation7 + $0x764] sm:$0xff]
    %v7120 = vld [vmem:[#allocation7 + $0x76c] sm:$0xf]
    %v7121 = vld [vmem:[#allocation7 + $0x770] sm:$0xff]
    %v7122 = vld [vmem:[#allocation7 + $0x778] sm:$0xff]
    %v7123 = vld [vmem:[#allocation7 + $0x780] sm:$0xff]
    %v7124 = vld [vmem:[#allocation7 + $0x788] sm:$0xf]
    %v7125 = vld [vmem:[#allocation7 + $0x78c] sm:$0xff]
    %v7126 = vld [vmem:[#allocation7 + $0x794] sm:$0xff]
    %v7127 = vld [vmem:[#allocation7 + $0x79c] sm:$0xff]
    %v7128 = vld [vmem:[#allocation7 + $0x7a4] sm:$0xf]
    %v7129 = vld [vmem:[#allocation7 + $0x7a8] sm:$0xff]
    %v7130 = vld [vmem:[#allocation7 + $0x7b0] sm:$0xff]
    %v7131 = vld [vmem:[#allocation7 + $0x7b8] sm:$0xff]
    %v7132 = vld [vmem:[#allocation7 + $0x7c0] sm:$0xf]
    %v7133 = vld [vmem:[#allocation7 + $0x7c4] sm:$0xff]
    %v7134 = vld [vmem:[#allocation7 + $0x7cc] sm:$0xff]
    %v7135 = vld [vmem:[#allocation7 + $0x7d4] sm:$0xff]
    %v7136 = vld [vmem:[#allocation7 + $0x7dc] sm:$0xf]
    %v7137 = vld [vmem:[#allocation7 + $0x7e0] sm:$0xff]
    %v7138 = vld [vmem:[#allocation7 + $0x7e8] sm:$0xff]
    %v7139 = vld [vmem:[#allocation7 + $0x7f0] sm:$0xff]
    %v7140 = vld [vmem:[#allocation7 + $0x7f8] sm:$0xf]
    %v7141 = vld [vmem:[#allocation7 + $0x7fc] sm:$0xff]
    %v7142 = vld [vmem:[#allocation7 + $0x804] sm:$0xff]
    %v7143 = vld [vmem:[#allocation7 + $0x80c] sm:$0xff]
    %v7144 = vld [vmem:[#allocation7 + $0x814] sm:$0xf]
    %v7145 = vld [vmem:[#allocation7 + $0x818] sm:$0xff]
    %v7146 = vld [vmem:[#allocation7 + $0x820] sm:$0xff]
    %v7147 = vld [vmem:[#allocation7 + $0x828] sm:$0xff]
    %v7148 = vld [vmem:[#allocation7 + $0x830] sm:$0xf]
    %v7149 = vld [vmem:[#allocation7 + $0x834] sm:$0xff]
    %v7150 = vld [vmem:[#allocation7 + $0x83c] sm:$0xff]
    %v7151 = vld [vmem:[#allocation7 + $0x844] sm:$0xff]
    %v7152 = vld [vmem:[#allocation7 + $0x84c] sm:$0xf]
    %v7153 = vld [vmem:[#allocation7 + $0x850] sm:$0xff]
    %v7154 = vld [vmem:[#allocation7 + $0x858] sm:$0xff]
    %v7155 = vld [vmem:[#allocation7 + $0x860] sm:$0xff]
    %v7156 = vld [vmem:[#allocation7 + $0x868] sm:$0xf]
    %v7157 = vld [vmem:[#allocation7 + $0x86c] sm:$0xff]
    %v7158 = vld [vmem:[#allocation7 + $0x874] sm:$0xff]
    %v7159 = vld [vmem:[#allocation7 + $0x87c] sm:$0xff]
    %v7160 = vld [vmem:[#allocation7 + $0x884] sm:$0xf]
    %v7161 = vld [vmem:[#allocation7 + $0x888] sm:$0xff]
    %v7162 = vld [vmem:[#allocation7 + $0x890] sm:$0xff]
    %v7163 = vld [vmem:[#allocation7 + $0x898] sm:$0xff]
    %v7164 = vld [vmem:[#allocation7 + $0x8a0] sm:$0xf]
    %v7165 = vld [vmem:[#allocation7 + $0x8a4] sm:$0xff]
    %v7166 = vld [vmem:[#allocation7 + $0x8ac] sm:$0xff]
    %v7167 = vld [vmem:[#allocation7 + $0x8b4] sm:$0xff]
    %v7168 = vld [vmem:[#allocation7 + $0x8bc] sm:$0xf]
    %v7169 = vld [vmem:[#allocation7 + $0x8c0] sm:$0xff]
    %v7170 = vld [vmem:[#allocation7 + $0x8c8] sm:$0xff]
    %v7171 = vld [vmem:[#allocation7 + $0x8d0] sm:$0xff]
    %v7172 = vld [vmem:[#allocation7 + $0x8d8] sm:$0xf]
    %v7173 = vld [vmem:[#allocation7 + $0x8dc] sm:$0xff]
    %v7174 = vld [vmem:[#allocation7 + $0x8e4] sm:$0xff]
    %v7175 = vld [vmem:[#allocation7 + $0x8ec] sm:$0xff]
    %v7176 = vld [vmem:[#allocation7 + $0x8f4] sm:$0xf]
    %v7177 = vld [vmem:[#allocation7 + $0x8f8] sm:$0xff]
    %v7178 = vld [vmem:[#allocation7 + $0x900] sm:$0xff]
    %v7179 = vld [vmem:[#allocation7 + $0x908] sm:$0xff]
    %v7180 = vld [vmem:[#allocation7 + $0x910] sm:$0xf]
    %v7181 = vld [vmem:[#allocation7 + $0x914] sm:$0xff]
    %v7182 = vld [vmem:[#allocation7 + $0x91c] sm:$0xff]
    %v7183 = vld [vmem:[#allocation7 + $0x924] sm:$0xff]
    %v7184 = vld [vmem:[#allocation7 + $0x92c] sm:$0xf]
    %v7185 = vld [vmem:[#allocation7 + $0x930] sm:$0xff]
    %v7186 = vld [vmem:[#allocation7 + $0x938] sm:$0xff]
    %v7187 = vld [vmem:[#allocation7 + $0x940] sm:$0xff]
    %v7188 = vld [vmem:[#allocation7 + $0x948] sm:$0xf]
    %v7189 = vld [vmem:[#allocation7 + $0x94c] sm:$0xff]
    %v7190 = vld [vmem:[#allocation7 + $0x954] sm:$0xff]
    %v7191 = vld [vmem:[#allocation7 + $0x95c] sm:$0xff]
    %v7192 = vld [vmem:[#allocation7 + $0x964] sm:$0xf]
    %v7193 = vld [vmem:[#allocation7 + $0x968] sm:$0xff]
    %v7194 = vld [vmem:[#allocation7 + $0x970] sm:$0xff]
    %v7195 = vld [vmem:[#allocation7 + $0x978] sm:$0xff]
    %v7196 = vld [vmem:[#allocation7 + $0x980] sm:$0xf]
    %v7197 = vld [vmem:[#allocation7 + $0x984] sm:$0xff]
    %v7198 = vld [vmem:[#allocation7 + $0x98c] sm:$0xff]
    %v7199 = vld [vmem:[#allocation7 + $0x994] sm:$0xff]
    %v7200 = vld [vmem:[#allocation7 + $0x99c] sm:$0xf]
    %v7201 = vld [vmem:[#allocation7 + $0x9a0] sm:$0xff]
    %v7202 = vld [vmem:[#allocation7 + $0x9a8] sm:$0xff]
    %v7203 = vld [vmem:[#allocation7 + $0x9b0] sm:$0xff]
    %v7204 = vld [vmem:[#allocation7 + $0x9b8] sm:$0xf]
    %v7205 = vld [vmem:[#allocation7 + $0x9bc] sm:$0xff]
    %v7206 = vld [vmem:[#allocation7 + $0x9c4] sm:$0xff]
    %v7207 = vld [vmem:[#allocation7 + $0x9cc] sm:$0xff]
    %v7208 = vld [vmem:[#allocation7 + $0x9d4] sm:$0xf]
    %v7209 = vld [vmem:[#allocation7 + $0x9d8] sm:$0xff]
    %v7210 = vld [vmem:[#allocation7 + $0x9e0] sm:$0xff]
    %v7211 = vld [vmem:[#allocation7 + $0x9e8] sm:$0xff]
    %v7212 = vld [vmem:[#allocation7 + $0x9f0] sm:$0xf]
    %v7213 = vld [vmem:[#allocation7 + $0x9f4] sm:$0xff]
    %v7214 = vld [vmem:[#allocation7 + $0x9fc] sm:$0xff]
    %v7215 = vld [vmem:[#allocation7 + $0xa04] sm:$0xff]
    %v7216 = vld [vmem:[#allocation7 + $0xa0c] sm:$0xf]
    %v7217 = vld [vmem:[#allocation7 + $0xa10] sm:$0xff]
    %v7218 = vld [vmem:[#allocation7 + $0xa18] sm:$0xff]
    %v7219 = vld [vmem:[#allocation7 + $0xa20] sm:$0xff]
    %v7220 = vld [vmem:[#allocation7 + $0xa28] sm:$0xf]
    %v7221 = vld [vmem:[#allocation7 + $0xa2c] sm:$0xff]
    %v7222 = vld [vmem:[#allocation7 + $0xa34] sm:$0xff]
    %v7223 = vld [vmem:[#allocation7 + $0xa3c] sm:$0xff]
    %v7224 = vld [vmem:[#allocation7 + $0xa44] sm:$0xf]
    %v7225 = vld [vmem:[#allocation7 + $0xa48] sm:$0xff]
    %v7226 = vld [vmem:[#allocation7 + $0xa50] sm:$0xff]
    %v7227 = vld [vmem:[#allocation7 + $0xa58] sm:$0xff]
    %v7228 = vld [vmem:[#allocation7 + $0xa60] sm:$0xf]
    %v7229 = vld [vmem:[#allocation7 + $0xa64] sm:$0xff]
    %v7230 = vld [vmem:[#allocation7 + $0xa6c] sm:$0xff]
    %v7231 = vld [vmem:[#allocation7 + $0xa74] sm:$0xff]
    %v7232 = vld [vmem:[#allocation7 + $0xa7c] sm:$0xf]
    %v7233 = vld [vmem:[#allocation7 + $0xa80] sm:$0xff]
    %v7234 = vld [vmem:[#allocation7 + $0xa88] sm:$0xff]
    %v7235 = vld [vmem:[#allocation7 + $0xa90] sm:$0xff]
    %v7236 = vld [vmem:[#allocation7 + $0xa98] sm:$0xf]
    %v7237 = vld [vmem:[#allocation7 + $0xa9c] sm:$0xff]
    %v7238 = vld [vmem:[#allocation7 + $0xaa4] sm:$0xff]
    %v7239 = vld [vmem:[#allocation7 + $0xaac] sm:$0xff]
    %v7240 = vld [vmem:[#allocation7 + $0xab4] sm:$0xf]
    %v7241 = vld [vmem:[#allocation7 + $0xab8] sm:$0xff]
    %v7242 = vld [vmem:[#allocation7 + $0xac0] sm:$0xff]
    %v7243 = vld [vmem:[#allocation7 + $0xac8] sm:$0xff]
    %v7244 = vld [vmem:[#allocation7 + $0xad0] sm:$0xf]
    %v7245 = vld [vmem:[#allocation7 + $0xad4] sm:$0xff]
    %v7246 = vld [vmem:[#allocation7 + $0xadc] sm:$0xff]
    %v7247 = vld [vmem:[#allocation7 + $0xae4] sm:$0xff]
    %v7248 = vld [vmem:[#allocation7 + $0xaec] sm:$0xf]
    %v7249 = vld [vmem:[#allocation7 + $0xaf0] sm:$0xff]
    %v7250 = vld [vmem:[#allocation7 + $0xaf8] sm:$0xff]
    %v7251 = vld [vmem:[#allocation7 + $0xb00] sm:$0xff]
    %v7252 = vld [vmem:[#allocation7 + $0xb08] sm:$0xf]
    %v7253 = vld [vmem:[#allocation7 + $0xb0c] sm:$0xff]
    %v7254 = vld [vmem:[#allocation7 + $0xb14] sm:$0xff]
    %v7255 = vld [vmem:[#allocation7 + $0xb1c] sm:$0xff]
    %v7256 = vld [vmem:[#allocation7 + $0xb24] sm:$0xf]
    %v7257 = vld [vmem:[#allocation7 + $0xb28] sm:$0xff]
    %v7258 = vld [vmem:[#allocation7 + $0xb30] sm:$0xff]
    %v7259 = vld [vmem:[#allocation7 + $0xb38] sm:$0xff]
    %v7260 = vld [vmem:[#allocation7 + $0xb40] sm:$0xf]
    %v7261 = vld [vmem:[#allocation7 + $0xb44] sm:$0xff]
    %v7262 = vld [vmem:[#allocation7 + $0xb4c] sm:$0xff]
    %v7263 = vld [vmem:[#allocation7 + $0xb54] sm:$0xff]
    %v7264 = vld [vmem:[#allocation7 + $0xb5c] sm:$0xf]
    %v7265 = vld [vmem:[#allocation7 + $0xb60] sm:$0xff]
    %v7266 = vld [vmem:[#allocation7 + $0xb68] sm:$0xff]
    %v7267 = vld [vmem:[#allocation7 + $0xb70] sm:$0xff]
    %v7268 = vld [vmem:[#allocation7 + $0xb78] sm:$0xf]
    %v7269 = vld [vmem:[#allocation7 + $0xb7c] sm:$0xff]
    %v7270 = vld [vmem:[#allocation7 + $0xb84] sm:$0xff]
    %v7271 = vld [vmem:[#allocation7 + $0xb8c] sm:$0xff]
    %v7272 = vld [vmem:[#allocation7 + $0xb94] sm:$0xf]
    %v7273 = vld [vmem:[#allocation7 + $0xb98] sm:$0xff]
    %v7274 = vld [vmem:[#allocation7 + $0xba0] sm:$0xff]
    %v7275 = vld [vmem:[#allocation7 + $0xba8] sm:$0xff]
    %v7276 = vld [vmem:[#allocation7 + $0xbb0] sm:$0xf]
    %v7277 = vld [vmem:[#allocation7 + $0xbb4] sm:$0xff]
    %v7278 = vld [vmem:[#allocation7 + $0xbbc] sm:$0xff]
    %v7279 = vld [vmem:[#allocation7 + $0xbc4] sm:$0xff]
    %v7280 = vld [vmem:[#allocation7 + $0xbcc] sm:$0xf]
    %v7281 = vld [vmem:[#allocation7 + $0xbd0] sm:$0xff]
    %v7282 = vld [vmem:[#allocation7 + $0xbd8] sm:$0xff]
    %v7283 = vld [vmem:[#allocation7 + $0xbe0] sm:$0xff]
    %v7284 = vld [vmem:[#allocation7 + $0xbe8] sm:$0xf]
    %v7285 = vld [vmem:[#allocation7 + $0xbec] sm:$0xff]
    %v7286 = vld [vmem:[#allocation7 + $0xbf4] sm:$0xff]
    %v7287 = vld [vmem:[#allocation7 + $0xbfc] sm:$0xff]
    %v7288 = vld [vmem:[#allocation7 + $0xc04] sm:$0xf]
    %v7289 = vld [vmem:[#allocation7 + $0xc08] sm:$0xff]
    %v7290 = vld [vmem:[#allocation7 + $0xc10] sm:$0xff]
    %v7291 = vld [vmem:[#allocation7 + $0xc18] sm:$0xff]
    %v7292 = vld [vmem:[#allocation7 + $0xc20] sm:$0xf]
    %v7293 = vld [vmem:[#allocation7 + $0xc24] sm:$0xff]
    %v7294 = vld [vmem:[#allocation7 + $0xc2c] sm:$0xff]
    %v7295 = vld [vmem:[#allocation7 + $0xc34] sm:$0xff]
    %v7296 = vld [vmem:[#allocation7 + $0xc3c] sm:$0xf]
    %v7297 = vld [vmem:[#allocation7 + $0xc40] sm:$0xff]
    %v7298 = vld [vmem:[#allocation7 + $0xc48] sm:$0xff]
    %v7299 = vld [vmem:[#allocation7 + $0xc50] sm:$0xff]
    %v7300 = vld [vmem:[#allocation7 + $0xc58] sm:$0xf]
    %v7301 = vld [vmem:[#allocation7 + $0xc5c] sm:$0xff]
    %v7302 = vld [vmem:[#allocation7 + $0xc64] sm:$0xff]
    %v7303 = vld [vmem:[#allocation7 + $0xc6c] sm:$0xff]
    %v7304 = vld [vmem:[#allocation7 + $0xc74] sm:$0xf]
    %v7305 = vld [vmem:[#allocation7 + $0xc78] sm:$0xff]
    %v7306 = vld [vmem:[#allocation7 + $0xc80] sm:$0xff]
    %v7307 = vld [vmem:[#allocation7 + $0xc88] sm:$0xff]
    %v7308 = vld [vmem:[#allocation7 + $0xc90] sm:$0xf]
    %v7309 = vld [vmem:[#allocation7 + $0xc94] sm:$0xff]
    %v7310 = vld [vmem:[#allocation7 + $0xc9c] sm:$0xff]
    %v7311 = vld [vmem:[#allocation7 + $0xca4] sm:$0xff]
    %v7312 = vld [vmem:[#allocation7 + $0xcac] sm:$0xf]
    %v7313 = vld [vmem:[#allocation7 + $0xcb0] sm:$0xff]
    %v7314 = vld [vmem:[#allocation7 + $0xcb8] sm:$0xff]
    %v7315 = vld [vmem:[#allocation7 + $0xcc0] sm:$0xff]
    %v7316 = vld [vmem:[#allocation7 + $0xcc8] sm:$0xf]
    %v7317 = vld [vmem:[#allocation7 + $0xccc] sm:$0xff]
    %v7318 = vld [vmem:[#allocation7 + $0xcd4] sm:$0xff]
    %v7319 = vld [vmem:[#allocation7 + $0xcdc] sm:$0xff]
    %v7320 = vld [vmem:[#allocation7 + $0xce4] sm:$0xf]
    %v7321 = vld [vmem:[#allocation7 + $0xce8] sm:$0xff]
    %v7322 = vld [vmem:[#allocation7 + $0xcf0] sm:$0xff]
    %v7323 = vld [vmem:[#allocation7 + $0xcf8] sm:$0xff]
    %v7324 = vld [vmem:[#allocation7 + $0xd00] sm:$0xf]
    %v7325 = vld [vmem:[#allocation7 + $0xd04] sm:$0xff]
    %v7326 = vld [vmem:[#allocation7 + $0xd0c] sm:$0xff]
    %v7327 = vld [vmem:[#allocation7 + $0xd14] sm:$0xff]
    %v7328 = vld [vmem:[#allocation7 + $0xd1c] sm:$0xf]
    %v7329 = vld [vmem:[#allocation7 + $0xd20] sm:$0xff]
    %v7330 = vld [vmem:[#allocation7 + $0xd28] sm:$0xff]
    %v7331 = vld [vmem:[#allocation7 + $0xd30] sm:$0xff]
    %v7332 = vld [vmem:[#allocation7 + $0xd38] sm:$0xf]
    %v7333 = vld [vmem:[#allocation7 + $0xd3c] sm:$0xff]
    %v7334 = vld [vmem:[#allocation7 + $0xd44] sm:$0xff]
    %v7335 = vld [vmem:[#allocation7 + $0xd4c] sm:$0xff]
    %v7336 = vld [vmem:[#allocation7 + $0xd54] sm:$0xf]
    %v7337 = vld [vmem:[#allocation7 + $0xd58] sm:$0xff]
    %v7338 = vld [vmem:[#allocation7 + $0xd60] sm:$0xff]
    %v7339 = vld [vmem:[#allocation7 + $0xd68] sm:$0xff]
    %v7340 = vld [vmem:[#allocation7 + $0xd70] sm:$0xf]
    %v7341 = vld [vmem:[#allocation7 + $0xd74] sm:$0xff]
    %v7342 = vld [vmem:[#allocation7 + $0xd7c] sm:$0xff]
    %v7343 = vld [vmem:[#allocation7 + $0xd84] sm:$0xff]
    %v7344 = vld [vmem:[#allocation7 + $0xd8c] sm:$0xf]
    %v7345 = vld [vmem:[#allocation7 + $0xd90] sm:$0xff]
    %v7346 = vld [vmem:[#allocation7 + $0xd98] sm:$0xff]
    %v7347 = vld [vmem:[#allocation7 + $0xda0] sm:$0xff]
    %v7348 = vld [vmem:[#allocation7 + $0xda8] sm:$0xf]
    %v7349 = vld [vmem:[#allocation7 + $0xdac] sm:$0xff]
    %v7350 = vld [vmem:[#allocation7 + $0xdb4] sm:$0xff]
    %v7351 = vld [vmem:[#allocation7 + $0xdbc] sm:$0xff]
    %v7352 = vld [vmem:[#allocation7 + $0xdc4] sm:$0xf]
    %v7353 = vld [vmem:[#allocation7 + $0xdc8] sm:$0xff]
    %v7354 = vld [vmem:[#allocation7 + $0xdd0] sm:$0xff]
    %v7355 = vld [vmem:[#allocation7 + $0xdd8] sm:$0xff]
    %v7356 = vld [vmem:[#allocation7 + $0xde0] sm:$0xf]
    %v7357 = vld [vmem:[#allocation7 + $0xde4] sm:$0xff]
    %v7358 = vld [vmem:[#allocation7 + $0xdec] sm:$0xff]
    %v7359 = vld [vmem:[#allocation7 + $0xdf4] sm:$0xff]
    %v7360 = vld [vmem:[#allocation7 + $0xdfc] sm:$0xf]
    %v7361 = vld [vmem:[%s13] sm:$0xff]
    %v7363 = vlaneseq
    %v7364 = vshrl.u32 %v7363, 7
    %v7365 = vsub.s32 0, %v7364
    %v7366 = vrot.slane %v7361, %v7365
    %v7367 = vlaneseq
    %v7368 = vshrl.u32 %v7367, 7
    %v7369 = vsub.s32 1, %v7368
    %v7370 = vrot.slane %v7361, %v7369
    %v7371 = vlaneseq
    %v7372 = vshrl.u32 %v7371, 7
    %v7373 = vsub.s32 2, %v7372
    %v7374 = vrot.slane %v7361, %v7373
    %v7375 = vlaneseq
    %v7376 = vshrl.u32 %v7375, 7
    %v7377 = vsub.s32 3, %v7376
    %v7378 = vrot.slane %v7361, %v7377
    %v7379 = vlaneseq
    %v7380 = vshrl.u32 %v7379, 7
    %v7381 = vsub.s32 4, %v7380
    %v7382 = vrot.slane %v7361, %v7381
    %v7383 = vlaneseq
    %v7384 = vshrl.u32 %v7383, 7
    %v7385 = vsub.s32 5, %v7384
    %v7386 = vrot.slane %v7361, %v7385
    %v7387 = vlaneseq
    %v7388 = vshrl.u32 %v7387, 7
    %v7389 = vsub.s32 6, %v7388
    %v7390 = vrot.slane %v7361, %v7389
    %v7910 = vunpack.c.l.b16 %v6849
    %v7911 = vunpack.c.h.b16 %v6849
    %v7912 = vunpack.c.l.b16 %v6850
    %v7913 = vunpack.c.h.b16 %v6850
    %v7914 = vunpack.c.l.b16 %v6851
    %v7915 = vunpack.c.h.b16 %v6851
    %v7916 = vunpack.c.l.b16 %v6852
    %v7917 = vunpack.c.l.b16 %v6853
    %v7918 = vunpack.c.h.b16 %v6853
    %v7919 = vunpack.c.l.b16 %v6854
    %v7920 = vunpack.c.h.b16 %v6854
    %v7921 = vunpack.c.l.b16 %v6855
    %v7922 = vunpack.c.h.b16 %v6855
    %v7923 = vunpack.c.l.b16 %v6856
    %v7924 = vunpack.c.l.b16 %v6857
    %v7925 = vunpack.c.h.b16 %v6857
    %v7926 = vunpack.c.l.b16 %v6858
    %v7927 = vunpack.c.h.b16 %v6858
    %v7928 = vunpack.c.l.b16 %v6859
    %v7929 = vunpack.c.h.b16 %v6859
    %v7930 = vunpack.c.l.b16 %v6860
    %v7931 = vunpack.c.l.b16 %v6861
    %v7932 = vunpack.c.h.b16 %v6861
    %v7933 = vunpack.c.l.b16 %v6862
    %v7934 = vunpack.c.h.b16 %v6862
    %v7935 = vunpack.c.l.b16 %v6863
    %v7936 = vunpack.c.h.b16 %v6863
    %v7937 = vunpack.c.l.b16 %v6864
    %v7938 = vunpack.c.l.b16 %v6865
    %v7939 = vunpack.c.h.b16 %v6865
    %v7940 = vunpack.c.l.b16 %v6866
    %v7941 = vunpack.c.h.b16 %v6866
    %v7942 = vunpack.c.l.b16 %v6867
    %v7943 = vunpack.c.h.b16 %v6867
    %v7944 = vunpack.c.l.b16 %v6868
    %v7945 = vunpack.c.l.b16 %v6869
    %v7946 = vunpack.c.h.b16 %v6869
    %v7947 = vunpack.c.l.b16 %v6870
    %v7948 = vunpack.c.h.b16 %v6870
    %v7949 = vunpack.c.l.b16 %v6871
    %v7950 = vunpack.c.h.b16 %v6871
    %v7951 = vunpack.c.l.b16 %v6872
    %v7952 = vunpack.c.l.b16 %v6873
    %v7953 = vunpack.c.h.b16 %v6873
    %v7954 = vunpack.c.l.b16 %v6874
    %v7955 = vunpack.c.h.b16 %v6874
    %v7956 = vunpack.c.l.b16 %v6875
    %v7957 = vunpack.c.h.b16 %v6875
    %v7958 = vunpack.c.l.b16 %v6876
    %v7959 = vunpack.c.l.b16 %v6877
    %v7960 = vunpack.c.h.b16 %v6877
    %v7961 = vunpack.c.l.b16 %v6878
    %v7962 = vunpack.c.h.b16 %v6878
    %v7963 = vunpack.c.l.b16 %v6879
    %v7964 = vunpack.c.h.b16 %v6879
    %v7965 = vunpack.c.l.b16 %v6880
    %v7966 = vunpack.c.l.b16 %v6881
    %v7967 = vunpack.c.h.b16 %v6881
    %v7968 = vunpack.c.l.b16 %v6882
    %v7969 = vunpack.c.h.b16 %v6882
    %v7970 = vunpack.c.l.b16 %v6883
    %v7971 = vunpack.c.h.b16 %v6883
    %v7972 = vunpack.c.l.b16 %v6884
    %v7973 = vunpack.c.l.b16 %v6885
    %v7974 = vunpack.c.h.b16 %v6885
    %v7975 = vunpack.c.l.b16 %v6886
    %v7976 = vunpack.c.h.b16 %v6886
    %v7977 = vunpack.c.l.b16 %v6887
    %v7978 = vunpack.c.h.b16 %v6887
    %v7979 = vunpack.c.l.b16 %v6888
    %v7980 = vunpack.c.l.b16 %v6889
    %v7981 = vunpack.c.h.b16 %v6889
    %v7982 = vunpack.c.l.b16 %v6890
    %v7983 = vunpack.c.h.b16 %v6890
    %v7984 = vunpack.c.l.b16 %v6891
    %v7985 = vunpack.c.h.b16 %v6891
    %v7986 = vunpack.c.l.b16 %v6892
    %v7987 = vunpack.c.l.b16 %v6893
    %v7988 = vunpack.c.h.b16 %v6893
    %v7989 = vunpack.c.l.b16 %v6894
    %v7990 = vunpack.c.h.b16 %v6894
    %v7991 = vunpack.c.l.b16 %v6895
    %v7992 = vunpack.c.h.b16 %v6895
    %v7993 = vunpack.c.l.b16 %v6896
    %v7994 = vunpack.c.l.b16 %v6897
    %v7995 = vunpack.c.h.b16 %v6897
    %v7996 = vunpack.c.l.b16 %v6898
    %v7997 = vunpack.c.h.b16 %v6898
    %v7998 = vunpack.c.l.b16 %v6899
    %v7999 = vunpack.c.h.b16 %v6899
    %v8000 = vunpack.c.l.b16 %v6900
    %v8001 = vunpack.c.l.b16 %v6901
    %v8002 = vunpack.c.h.b16 %v6901
    %v8003 = vunpack.c.l.b16 %v6902
    %v8004 = vunpack.c.h.b16 %v6902
    %v8005 = vunpack.c.l.b16 %v6903
    %v8006 = vunpack.c.h.b16 %v6903
    %v8007 = vunpack.c.l.b16 %v6904
    %v8008 = vunpack.c.l.b16 %v6905
    %v8009 = vunpack.c.h.b16 %v6905
    %v8010 = vunpack.c.l.b16 %v6906
    %v8011 = vunpack.c.h.b16 %v6906
    %v8012 = vunpack.c.l.b16 %v6907
    %v8013 = vunpack.c.h.b16 %v6907
    %v8014 = vunpack.c.l.b16 %v6908
    %v8015 = vunpack.c.l.b16 %v6909
    %v8016 = vunpack.c.h.b16 %v6909
    %v8017 = vunpack.c.l.b16 %v6910
    %v8018 = vunpack.c.h.b16 %v6910
    %v8019 = vunpack.c.l.b16 %v6911
    %v8020 = vunpack.c.h.b16 %v6911
    %v8021 = vunpack.c.l.b16 %v6912
    %v8022 = vunpack.c.l.b16 %v6913
    %v8023 = vunpack.c.h.b16 %v6913
    %v8024 = vunpack.c.l.b16 %v6914
    %v8025 = vunpack.c.h.b16 %v6914
    %v8026 = vunpack.c.l.b16 %v6915
    %v8027 = vunpack.c.h.b16 %v6915
    %v8028 = vunpack.c.l.b16 %v6916
    %v8029 = vunpack.c.l.b16 %v6917
    %v8030 = vunpack.c.h.b16 %v6917
    %v8031 = vunpack.c.l.b16 %v6918
    %v8032 = vunpack.c.h.b16 %v6918
    %v8033 = vunpack.c.l.b16 %v6919
    %v8034 = vunpack.c.h.b16 %v6919
    %v8035 = vunpack.c.l.b16 %v6920
    %v8036 = vunpack.c.l.b16 %v6921
    %v8037 = vunpack.c.h.b16 %v6921
    %v8038 = vunpack.c.l.b16 %v6922
    %v8039 = vunpack.c.h.b16 %v6922
    %v8040 = vunpack.c.l.b16 %v6923
    %v8041 = vunpack.c.h.b16 %v6923
    %v8042 = vunpack.c.l.b16 %v6924
    %v8043 = vunpack.c.l.b16 %v6925
    %v8044 = vunpack.c.h.b16 %v6925
    %v8045 = vunpack.c.l.b16 %v6926
    %v8046 = vunpack.c.h.b16 %v6926
    %v8047 = vunpack.c.l.b16 %v6927
    %v8048 = vunpack.c.h.b16 %v6927
    %v8049 = vunpack.c.l.b16 %v6928
    %v8050 = vunpack.c.l.b16 %v6929
    %v8051 = vunpack.c.h.b16 %v6929
    %v8052 = vunpack.c.l.b16 %v6930
    %v8053 = vunpack.c.h.b16 %v6930
    %v8054 = vunpack.c.l.b16 %v6931
    %v8055 = vunpack.c.h.b16 %v6931
    %v8056 = vunpack.c.l.b16 %v6932
    %v8057 = vunpack.c.l.b16 %v6933
    %v8058 = vunpack.c.h.b16 %v6933
    %v8059 = vunpack.c.l.b16 %v6934
    %v8060 = vunpack.c.h.b16 %v6934
    %v8061 = vunpack.c.l.b16 %v6935
    %v8062 = vunpack.c.h.b16 %v6935
    %v8063 = vunpack.c.l.b16 %v6936
    %v8064 = vunpack.c.l.b16 %v6937
    %v8065 = vunpack.c.h.b16 %v6937
    %v8066 = vunpack.c.l.b16 %v6938
    %v8067 = vunpack.c.h.b16 %v6938
    %v8068 = vunpack.c.l.b16 %v6939
    %v8069 = vunpack.c.h.b16 %v6939
    %v8070 = vunpack.c.l.b16 %v6940
    %v8071 = vunpack.c.l.b16 %v6941
    %v8072 = vunpack.c.h.b16 %v6941
    %v8073 = vunpack.c.l.b16 %v6942
    %v8074 = vunpack.c.h.b16 %v6942
    %v8075 = vunpack.c.l.b16 %v6943
    %v8076 = vunpack.c.h.b16 %v6943
    %v8077 = vunpack.c.l.b16 %v6944
    %v8078 = vunpack.c.l.b16 %v6945
    %v8079 = vunpack.c.h.b16 %v6945
    %v8080 = vunpack.c.l.b16 %v6946
    %v8081 = vunpack.c.h.b16 %v6946
    %v8082 = vunpack.c.l.b16 %v6947
    %v8083 = vunpack.c.h.b16 %v6947
    %v8084 = vunpack.c.l.b16 %v6948
    %v8085 = vunpack.c.l.b16 %v6949
    %v8086 = vunpack.c.h.b16 %v6949
    %v8087 = vunpack.c.l.b16 %v6950
    %v8088 = vunpack.c.h.b16 %v6950
    %v8089 = vunpack.c.l.b16 %v6951
    %v8090 = vunpack.c.h.b16 %v6951
    %v8091 = vunpack.c.l.b16 %v6952
    %v8092 = vunpack.c.l.b16 %v6953
    %v8093 = vunpack.c.h.b16 %v6953
    %v8094 = vunpack.c.l.b16 %v6954
    %v8095 = vunpack.c.h.b16 %v6954
    %v8096 = vunpack.c.l.b16 %v6955
    %v8097 = vunpack.c.h.b16 %v6955
    %v8098 = vunpack.c.l.b16 %v6956
    %v8099 = vunpack.c.l.b16 %v6957
    %v8100 = vunpack.c.h.b16 %v6957
    %v8101 = vunpack.c.l.b16 %v6958
    %v8102 = vunpack.c.h.b16 %v6958
    %v8103 = vunpack.c.l.b16 %v6959
    %v8104 = vunpack.c.h.b16 %v6959
    %v8105 = vunpack.c.l.b16 %v6960
    %v8106 = vunpack.c.l.b16 %v6961
    %v8107 = vunpack.c.h.b16 %v6961
    %v8108 = vunpack.c.l.b16 %v6962
    %v8109 = vunpack.c.h.b16 %v6962
    %v8110 = vunpack.c.l.b16 %v6963
    %v8111 = vunpack.c.h.b16 %v6963
    %v8112 = vunpack.c.l.b16 %v6964
    %v8113 = vunpack.c.l.b16 %v6965
    %v8114 = vunpack.c.h.b16 %v6965
    %v8115 = vunpack.c.l.b16 %v6966
    %v8116 = vunpack.c.h.b16 %v6966
    %v8117 = vunpack.c.l.b16 %v6967
    %v8118 = vunpack.c.h.b16 %v6967
    %v8119 = vunpack.c.l.b16 %v6968
    %v8120 = vunpack.c.l.b16 %v6969
    %v8121 = vunpack.c.h.b16 %v6969
    %v8122 = vunpack.c.l.b16 %v6970
    %v8123 = vunpack.c.h.b16 %v6970
    %v8124 = vunpack.c.l.b16 %v6971
    %v8125 = vunpack.c.h.b16 %v6971
    %v8126 = vunpack.c.l.b16 %v6972
    %v8127 = vunpack.c.l.b16 %v6973
    %v8128 = vunpack.c.h.b16 %v6973
    %v8129 = vunpack.c.l.b16 %v6974
    %v8130 = vunpack.c.h.b16 %v6974
    %v8131 = vunpack.c.l.b16 %v6975
    %v8132 = vunpack.c.h.b16 %v6975
    %v8133 = vunpack.c.l.b16 %v6976
    %v8134 = vunpack.c.l.b16 %v6977
    %v8135 = vunpack.c.h.b16 %v6977
    %v8136 = vunpack.c.l.b16 %v6978
    %v8137 = vunpack.c.h.b16 %v6978
    %v8138 = vunpack.c.l.b16 %v6979
    %v8139 = vunpack.c.h.b16 %v6979
    %v8140 = vunpack.c.l.b16 %v6980
    %v8141 = vunpack.c.l.b16 %v6981
    %v8142 = vunpack.c.h.b16 %v6981
    %v8143 = vunpack.c.l.b16 %v6982
    %v8144 = vunpack.c.h.b16 %v6982
    %v8145 = vunpack.c.l.b16 %v6983
    %v8146 = vunpack.c.h.b16 %v6983
    %v8147 = vunpack.c.l.b16 %v6984
    %v8148 = vunpack.c.l.b16 %v6985
    %v8149 = vunpack.c.h.b16 %v6985
    %v8150 = vunpack.c.l.b16 %v6986
    %v8151 = vunpack.c.h.b16 %v6986
    %v8152 = vunpack.c.l.b16 %v6987
    %v8153 = vunpack.c.h.b16 %v6987
    %v8154 = vunpack.c.l.b16 %v6988
    %v8155 = vunpack.c.l.b16 %v6989
    %v8156 = vunpack.c.h.b16 %v6989
    %v8157 = vunpack.c.l.b16 %v6990
    %v8158 = vunpack.c.h.b16 %v6990
    %v8159 = vunpack.c.l.b16 %v6991
    %v8160 = vunpack.c.h.b16 %v6991
    %v8161 = vunpack.c.l.b16 %v6992
    %v8162 = vunpack.c.l.b16 %v6993
    %v8163 = vunpack.c.h.b16 %v6993
    %v8164 = vunpack.c.l.b16 %v6994
    %v8165 = vunpack.c.h.b16 %v6994
    %v8166 = vunpack.c.l.b16 %v6995
    %v8167 = vunpack.c.h.b16 %v6995
    %v8168 = vunpack.c.l.b16 %v6996
    %v8169 = vunpack.c.l.b16 %v6997
    %v8170 = vunpack.c.h.b16 %v6997
    %v8171 = vunpack.c.l.b16 %v6998
    %v8172 = vunpack.c.h.b16 %v6998
    %v8173 = vunpack.c.l.b16 %v6999
    %v8174 = vunpack.c.h.b16 %v6999
    %v8175 = vunpack.c.l.b16 %v7000
    %v8176 = vunpack.c.l.b16 %v7001
    %v8177 = vunpack.c.h.b16 %v7001
    %v8178 = vunpack.c.l.b16 %v7002
    %v8179 = vunpack.c.h.b16 %v7002
    %v8180 = vunpack.c.l.b16 %v7003
    %v8181 = vunpack.c.h.b16 %v7003
    %v8182 = vunpack.c.l.b16 %v7004
    %v8183 = vunpack.c.l.b16 %v7005
    %v8184 = vunpack.c.h.b16 %v7005
    %v8185 = vunpack.c.l.b16 %v7006
    %v8186 = vunpack.c.h.b16 %v7006
    %v8187 = vunpack.c.l.b16 %v7007
    %v8188 = vunpack.c.h.b16 %v7007
    %v8189 = vunpack.c.l.b16 %v7008
    %v8190 = vunpack.c.l.b16 %v7009
    %v8191 = vunpack.c.h.b16 %v7009
    %v8192 = vunpack.c.l.b16 %v7010
    %v8193 = vunpack.c.h.b16 %v7010
    %v8194 = vunpack.c.l.b16 %v7011
    %v8195 = vunpack.c.h.b16 %v7011
    %v8196 = vunpack.c.l.b16 %v7012
    %v8197 = vunpack.c.l.b16 %v7013
    %v8198 = vunpack.c.h.b16 %v7013
    %v8199 = vunpack.c.l.b16 %v7014
    %v8200 = vunpack.c.h.b16 %v7014
    %v8201 = vunpack.c.l.b16 %v7015
    %v8202 = vunpack.c.h.b16 %v7015
    %v8203 = vunpack.c.l.b16 %v7016
    %v8204 = vunpack.c.l.b16 %v7017
    %v8205 = vunpack.c.h.b16 %v7017
    %v8206 = vunpack.c.l.b16 %v7018
    %v8207 = vunpack.c.h.b16 %v7018
    %v8208 = vunpack.c.l.b16 %v7019
    %v8209 = vunpack.c.h.b16 %v7019
    %v8210 = vunpack.c.l.b16 %v7020
    %v8211 = vunpack.c.l.b16 %v7021
    %v8212 = vunpack.c.h.b16 %v7021
    %v8213 = vunpack.c.l.b16 %v7022
    %v8214 = vunpack.c.h.b16 %v7022
    %v8215 = vunpack.c.l.b16 %v7023
    %v8216 = vunpack.c.h.b16 %v7023
    %v8217 = vunpack.c.l.b16 %v7024
    %v8218 = vunpack.c.l.b16 %v7025
    %v8219 = vunpack.c.h.b16 %v7025
    %v8220 = vunpack.c.l.b16 %v7026
    %v8221 = vunpack.c.h.b16 %v7026
    %v8222 = vunpack.c.l.b16 %v7027
    %v8223 = vunpack.c.h.b16 %v7027
    %v8224 = vunpack.c.l.b16 %v7028
    %v8225 = vunpack.c.l.b16 %v7029
    %v8226 = vunpack.c.h.b16 %v7029
    %v8227 = vunpack.c.l.b16 %v7030
    %v8228 = vunpack.c.h.b16 %v7030
    %v8229 = vunpack.c.l.b16 %v7031
    %v8230 = vunpack.c.h.b16 %v7031
    %v8231 = vunpack.c.l.b16 %v7032
    %v8232 = vunpack.c.l.b16 %v7033
    %v8233 = vunpack.c.h.b16 %v7033
    %v8234 = vunpack.c.l.b16 %v7034
    %v8235 = vunpack.c.h.b16 %v7034
    %v8236 = vunpack.c.l.b16 %v7035
    %v8237 = vunpack.c.h.b16 %v7035
    %v8238 = vunpack.c.l.b16 %v7036
    %v8239 = vunpack.c.l.b16 %v7037
    %v8240 = vunpack.c.h.b16 %v7037
    %v8241 = vunpack.c.l.b16 %v7038
    %v8242 = vunpack.c.h.b16 %v7038
    %v8243 = vunpack.c.l.b16 %v7039
    %v8244 = vunpack.c.h.b16 %v7039
    %v8245 = vunpack.c.l.b16 %v7040
    %v8246 = vunpack.c.l.b16 %v7041
    %v8247 = vunpack.c.h.b16 %v7041
    %v8248 = vunpack.c.l.b16 %v7042
    %v8249 = vunpack.c.h.b16 %v7042
    %v8250 = vunpack.c.l.b16 %v7043
    %v8251 = vunpack.c.h.b16 %v7043
    %v8252 = vunpack.c.l.b16 %v7044
    %v8253 = vunpack.c.l.b16 %v7045
    %v8254 = vunpack.c.h.b16 %v7045
    %v8255 = vunpack.c.l.b16 %v7046
    %v8256 = vunpack.c.h.b16 %v7046
    %v8257 = vunpack.c.l.b16 %v7047
    %v8258 = vunpack.c.h.b16 %v7047
    %v8259 = vunpack.c.l.b16 %v7048
    %v8260 = vunpack.c.l.b16 %v7049
    %v8261 = vunpack.c.h.b16 %v7049
    %v8262 = vunpack.c.l.b16 %v7050
    %v8263 = vunpack.c.h.b16 %v7050
    %v8264 = vunpack.c.l.b16 %v7051
    %v8265 = vunpack.c.h.b16 %v7051
    %v8266 = vunpack.c.l.b16 %v7052
    %v8267 = vunpack.c.l.b16 %v7053
    %v8268 = vunpack.c.h.b16 %v7053
    %v8269 = vunpack.c.l.b16 %v7054
    %v8270 = vunpack.c.h.b16 %v7054
    %v8271 = vunpack.c.l.b16 %v7055
    %v8272 = vunpack.c.h.b16 %v7055
    %v8273 = vunpack.c.l.b16 %v7056
    %v8274 = vunpack.c.l.b16 %v7057
    %v8275 = vunpack.c.h.b16 %v7057
    %v8276 = vunpack.c.l.b16 %v7058
    %v8277 = vunpack.c.h.b16 %v7058
    %v8278 = vunpack.c.l.b16 %v7059
    %v8279 = vunpack.c.h.b16 %v7059
    %v8280 = vunpack.c.l.b16 %v7060
    %v8281 = vunpack.c.l.b16 %v7061
    %v8282 = vunpack.c.h.b16 %v7061
    %v8283 = vunpack.c.l.b16 %v7062
    %v8284 = vunpack.c.h.b16 %v7062
    %v8285 = vunpack.c.l.b16 %v7063
    %v8286 = vunpack.c.h.b16 %v7063
    %v8287 = vunpack.c.l.b16 %v7064
    %v8288 = vunpack.c.l.b16 %v7065
    %v8289 = vunpack.c.h.b16 %v7065
    %v8290 = vunpack.c.l.b16 %v7066
    %v8291 = vunpack.c.h.b16 %v7066
    %v8292 = vunpack.c.l.b16 %v7067
    %v8293 = vunpack.c.h.b16 %v7067
    %v8294 = vunpack.c.l.b16 %v7068
    %v8295 = vunpack.c.l.b16 %v7069
    %v8296 = vunpack.c.h.b16 %v7069
    %v8297 = vunpack.c.l.b16 %v7070
    %v8298 = vunpack.c.h.b16 %v7070
    %v8299 = vunpack.c.l.b16 %v7071
    %v8300 = vunpack.c.h.b16 %v7071
    %v8301 = vunpack.c.l.b16 %v7072
    %v8302 = vunpack.c.l.b16 %v7073
    %v8303 = vunpack.c.h.b16 %v7073
    %v8304 = vunpack.c.l.b16 %v7074
    %v8305 = vunpack.c.h.b16 %v7074
    %v8306 = vunpack.c.l.b16 %v7075
    %v8307 = vunpack.c.h.b16 %v7075
    %v8308 = vunpack.c.l.b16 %v7076
    %v8309 = vunpack.c.l.b16 %v7077
    %v8310 = vunpack.c.h.b16 %v7077
    %v8311 = vunpack.c.l.b16 %v7078
    %v8312 = vunpack.c.h.b16 %v7078
    %v8313 = vunpack.c.l.b16 %v7079
    %v8314 = vunpack.c.h.b16 %v7079
    %v8315 = vunpack.c.l.b16 %v7080
    %v8316 = vunpack.c.l.b16 %v7081
    %v8317 = vunpack.c.h.b16 %v7081
    %v8318 = vunpack.c.l.b16 %v7082
    %v8319 = vunpack.c.h.b16 %v7082
    %v8320 = vunpack.c.l.b16 %v7083
    %v8321 = vunpack.c.h.b16 %v7083
    %v8322 = vunpack.c.l.b16 %v7084
    %v8323 = vunpack.c.l.b16 %v7085
    %v8324 = vunpack.c.h.b16 %v7085
    %v8325 = vunpack.c.l.b16 %v7086
    %v8326 = vunpack.c.h.b16 %v7086
    %v8327 = vunpack.c.l.b16 %v7087
    %v8328 = vunpack.c.h.b16 %v7087
    %v8329 = vunpack.c.l.b16 %v7088
    %v8330 = vunpack.c.l.b16 %v7089
    %v8331 = vunpack.c.h.b16 %v7089
    %v8332 = vunpack.c.l.b16 %v7090
    %v8333 = vunpack.c.h.b16 %v7090
    %v8334 = vunpack.c.l.b16 %v7091
    %v8335 = vunpack.c.h.b16 %v7091
    %v8336 = vunpack.c.l.b16 %v7092
    %v8337 = vunpack.c.l.b16 %v7093
    %v8338 = vunpack.c.h.b16 %v7093
    %v8339 = vunpack.c.l.b16 %v7094
    %v8340 = vunpack.c.h.b16 %v7094
    %v8341 = vunpack.c.l.b16 %v7095
    %v8342 = vunpack.c.h.b16 %v7095
    %v8343 = vunpack.c.l.b16 %v7096
    %v8344 = vunpack.c.l.b16 %v7097
    %v8345 = vunpack.c.h.b16 %v7097
    %v8346 = vunpack.c.l.b16 %v7098
    %v8347 = vunpack.c.h.b16 %v7098
    %v8348 = vunpack.c.l.b16 %v7099
    %v8349 = vunpack.c.h.b16 %v7099
    %v8350 = vunpack.c.l.b16 %v7100
    %v8351 = vunpack.c.l.b16 %v7101
    %v8352 = vunpack.c.h.b16 %v7101
    %v8353 = vunpack.c.l.b16 %v7102
    %v8354 = vunpack.c.h.b16 %v7102
    %v8355 = vunpack.c.l.b16 %v7103
    %v8356 = vunpack.c.h.b16 %v7103
    %v8357 = vunpack.c.l.b16 %v7104
    %v8358 = vunpack.c.l.b16 %v7105
    %v8359 = vunpack.c.h.b16 %v7105
    %v8360 = vunpack.c.l.b16 %v7106
    %v8361 = vunpack.c.h.b16 %v7106
    %v8362 = vunpack.c.l.b16 %v7107
    %v8363 = vunpack.c.h.b16 %v7107
    %v8364 = vunpack.c.l.b16 %v7108
    %v8365 = vunpack.c.l.b16 %v7109
    %v8366 = vunpack.c.h.b16 %v7109
    %v8367 = vunpack.c.l.b16 %v7110
    %v8368 = vunpack.c.h.b16 %v7110
    %v8369 = vunpack.c.l.b16 %v7111
    %v8370 = vunpack.c.h.b16 %v7111
    %v8371 = vunpack.c.l.b16 %v7112
    %v8372 = vunpack.c.l.b16 %v7113
    %v8373 = vunpack.c.h.b16 %v7113
    %v8374 = vunpack.c.l.b16 %v7114
    %v8375 = vunpack.c.h.b16 %v7114
    %v8376 = vunpack.c.l.b16 %v7115
    %v8377 = vunpack.c.h.b16 %v7115
    %v8378 = vunpack.c.l.b16 %v7116
    %v8379 = vunpack.c.l.b16 %v7117
    %v8380 = vunpack.c.h.b16 %v7117
    %v8381 = vunpack.c.l.b16 %v7118
    %v8382 = vunpack.c.h.b16 %v7118
    %v8383 = vunpack.c.l.b16 %v7119
    %v8384 = vunpack.c.h.b16 %v7119
    %v8385 = vunpack.c.l.b16 %v7120
    %v8386 = vunpack.c.l.b16 %v7121
    %v8387 = vunpack.c.h.b16 %v7121
    %v8388 = vunpack.c.l.b16 %v7122
    %v8389 = vunpack.c.h.b16 %v7122
    %v8390 = vunpack.c.l.b16 %v7123
    %v8391 = vunpack.c.h.b16 %v7123
    %v8392 = vunpack.c.l.b16 %v7124
    %v8393 = vunpack.c.l.b16 %v7125
    %v8394 = vunpack.c.h.b16 %v7125
    %v8395 = vunpack.c.l.b16 %v7126
    %v8396 = vunpack.c.h.b16 %v7126
    %v8397 = vunpack.c.l.b16 %v7127
    %v8398 = vunpack.c.h.b16 %v7127
    %v8399 = vunpack.c.l.b16 %v7128
    %v8400 = vunpack.c.l.b16 %v7129
    %v8401 = vunpack.c.h.b16 %v7129
    %v8402 = vunpack.c.l.b16 %v7130
    %v8403 = vunpack.c.h.b16 %v7130
    %v8404 = vunpack.c.l.b16 %v7131
    %v8405 = vunpack.c.h.b16 %v7131
    %v8406 = vunpack.c.l.b16 %v7132
    %v8407 = vunpack.c.l.b16 %v7133
    %v8408 = vunpack.c.h.b16 %v7133
    %v8409 = vunpack.c.l.b16 %v7134
    %v8410 = vunpack.c.h.b16 %v7134
    %v8411 = vunpack.c.l.b16 %v7135
    %v8412 = vunpack.c.h.b16 %v7135
    %v8413 = vunpack.c.l.b16 %v7136
    %v8414 = vunpack.c.l.b16 %v7137
    %v8415 = vunpack.c.h.b16 %v7137
    %v8416 = vunpack.c.l.b16 %v7138
    %v8417 = vunpack.c.h.b16 %v7138
    %v8418 = vunpack.c.l.b16 %v7139
    %v8419 = vunpack.c.h.b16 %v7139
    %v8420 = vunpack.c.l.b16 %v7140
    %v8421 = vunpack.c.l.b16 %v7141
    %v8422 = vunpack.c.h.b16 %v7141
    %v8423 = vunpack.c.l.b16 %v7142
    %v8424 = vunpack.c.h.b16 %v7142
    %v8425 = vunpack.c.l.b16 %v7143
    %v8426 = vunpack.c.h.b16 %v7143
    %v8427 = vunpack.c.l.b16 %v7144
    %v8428 = vunpack.c.l.b16 %v7145
    %v8429 = vunpack.c.h.b16 %v7145
    %v8430 = vunpack.c.l.b16 %v7146
    %v8431 = vunpack.c.h.b16 %v7146
    %v8432 = vunpack.c.l.b16 %v7147
    %v8433 = vunpack.c.h.b16 %v7147
    %v8434 = vunpack.c.l.b16 %v7148
    %v8435 = vunpack.c.l.b16 %v7149
    %v8436 = vunpack.c.h.b16 %v7149
    %v8437 = vunpack.c.l.b16 %v7150
    %v8438 = vunpack.c.h.b16 %v7150
    %v8439 = vunpack.c.l.b16 %v7151
    %v8440 = vunpack.c.h.b16 %v7151
    %v8441 = vunpack.c.l.b16 %v7152
    %v8442 = vunpack.c.l.b16 %v7153
    %v8443 = vunpack.c.h.b16 %v7153
    %v8444 = vunpack.c.l.b16 %v7154
    %v8445 = vunpack.c.h.b16 %v7154
    %v8446 = vunpack.c.l.b16 %v7155
    %v8447 = vunpack.c.h.b16 %v7155
    %v8448 = vunpack.c.l.b16 %v7156
    %v8449 = vunpack.c.l.b16 %v7157
    %v8450 = vunpack.c.h.b16 %v7157
    %v8451 = vunpack.c.l.b16 %v7158
    %v8452 = vunpack.c.h.b16 %v7158
    %v8453 = vunpack.c.l.b16 %v7159
    %v8454 = vunpack.c.h.b16 %v7159
    %v8455 = vunpack.c.l.b16 %v7160
    %v8456 = vunpack.c.l.b16 %v7161
    %v8457 = vunpack.c.h.b16 %v7161
    %v8458 = vunpack.c.l.b16 %v7162
    %v8459 = vunpack.c.h.b16 %v7162
    %v8460 = vunpack.c.l.b16 %v7163
    %v8461 = vunpack.c.h.b16 %v7163
    %v8462 = vunpack.c.l.b16 %v7164
    %v8463 = vunpack.c.l.b16 %v7165
    %v8464 = vunpack.c.h.b16 %v7165
    %v8465 = vunpack.c.l.b16 %v7166
    %v8466 = vunpack.c.h.b16 %v7166
    %v8467 = vunpack.c.l.b16 %v7167
    %v8468 = vunpack.c.h.b16 %v7167
    %v8469 = vunpack.c.l.b16 %v7168
    %v8470 = vunpack.c.l.b16 %v7169
    %v8471 = vunpack.c.h.b16 %v7169
    %v8472 = vunpack.c.l.b16 %v7170
    %v8473 = vunpack.c.h.b16 %v7170
    %v8474 = vunpack.c.l.b16 %v7171
    %v8475 = vunpack.c.h.b16 %v7171
    %v8476 = vunpack.c.l.b16 %v7172
    %v8477 = vunpack.c.l.b16 %v7173
    %v8478 = vunpack.c.h.b16 %v7173
    %v8479 = vunpack.c.l.b16 %v7174
    %v8480 = vunpack.c.h.b16 %v7174
    %v8481 = vunpack.c.l.b16 %v7175
    %v8482 = vunpack.c.h.b16 %v7175
    %v8483 = vunpack.c.l.b16 %v7176
    %v8484 = vunpack.c.l.b16 %v7177
    %v8485 = vunpack.c.h.b16 %v7177
    %v8486 = vunpack.c.l.b16 %v7178
    %v8487 = vunpack.c.h.b16 %v7178
    %v8488 = vunpack.c.l.b16 %v7179
    %v8489 = vunpack.c.h.b16 %v7179
    %v8490 = vunpack.c.l.b16 %v7180
    %v8491 = vunpack.c.l.b16 %v7181
    %v8492 = vunpack.c.h.b16 %v7181
    %v8493 = vunpack.c.l.b16 %v7182
    %v8494 = vunpack.c.h.b16 %v7182
    %v8495 = vunpack.c.l.b16 %v7183
    %v8496 = vunpack.c.h.b16 %v7183
    %v8497 = vunpack.c.l.b16 %v7184
    %v8498 = vunpack.c.l.b16 %v7185
    %v8499 = vunpack.c.h.b16 %v7185
    %v8500 = vunpack.c.l.b16 %v7186
    %v8501 = vunpack.c.h.b16 %v7186
    %v8502 = vunpack.c.l.b16 %v7187
    %v8503 = vunpack.c.h.b16 %v7187
    %v8504 = vunpack.c.l.b16 %v7188
    %v8505 = vunpack.c.l.b16 %v7189
    %v8506 = vunpack.c.h.b16 %v7189
    %v8507 = vunpack.c.l.b16 %v7190
    %v8508 = vunpack.c.h.b16 %v7190
    %v8509 = vunpack.c.l.b16 %v7191
    %v8510 = vunpack.c.h.b16 %v7191
    %v8511 = vunpack.c.l.b16 %v7192
    %v8512 = vunpack.c.l.b16 %v7193
    %v8513 = vunpack.c.h.b16 %v7193
    %v8514 = vunpack.c.l.b16 %v7194
    %v8515 = vunpack.c.h.b16 %v7194
    %v8516 = vunpack.c.l.b16 %v7195
    %v8517 = vunpack.c.h.b16 %v7195
    %v8518 = vunpack.c.l.b16 %v7196
    %v8519 = vunpack.c.l.b16 %v7197
    %v8520 = vunpack.c.h.b16 %v7197
    %v8521 = vunpack.c.l.b16 %v7198
    %v8522 = vunpack.c.h.b16 %v7198
    %v8523 = vunpack.c.l.b16 %v7199
    %v8524 = vunpack.c.h.b16 %v7199
    %v8525 = vunpack.c.l.b16 %v7200
    %v8526 = vunpack.c.l.b16 %v7201
    %v8527 = vunpack.c.h.b16 %v7201
    %v8528 = vunpack.c.l.b16 %v7202
    %v8529 = vunpack.c.h.b16 %v7202
    %v8530 = vunpack.c.l.b16 %v7203
    %v8531 = vunpack.c.h.b16 %v7203
    %v8532 = vunpack.c.l.b16 %v7204
    %v8533 = vunpack.c.l.b16 %v7205
    %v8534 = vunpack.c.h.b16 %v7205
    %v8535 = vunpack.c.l.b16 %v7206
    %v8536 = vunpack.c.h.b16 %v7206
    %v8537 = vunpack.c.l.b16 %v7207
    %v8538 = vunpack.c.h.b16 %v7207
    %v8539 = vunpack.c.l.b16 %v7208
    %v8540 = vunpack.c.l.b16 %v7209
    %v8541 = vunpack.c.h.b16 %v7209
    %v8542 = vunpack.c.l.b16 %v7210
    %v8543 = vunpack.c.h.b16 %v7210
    %v8544 = vunpack.c.l.b16 %v7211
    %v8545 = vunpack.c.h.b16 %v7211
    %v8546 = vunpack.c.l.b16 %v7212
    %v8547 = vunpack.c.l.b16 %v7213
    %v8548 = vunpack.c.h.b16 %v7213
    %v8549 = vunpack.c.l.b16 %v7214
    %v8550 = vunpack.c.h.b16 %v7214
    %v8551 = vunpack.c.l.b16 %v7215
    %v8552 = vunpack.c.h.b16 %v7215
    %v8553 = vunpack.c.l.b16 %v7216
    %v8554 = vunpack.c.l.b16 %v7217
    %v8555 = vunpack.c.h.b16 %v7217
    %v8556 = vunpack.c.l.b16 %v7218
    %v8557 = vunpack.c.h.b16 %v7218
    %v8558 = vunpack.c.l.b16 %v7219
    %v8559 = vunpack.c.h.b16 %v7219
    %v8560 = vunpack.c.l.b16 %v7220
    %v8561 = vunpack.c.l.b16 %v7221
    %v8562 = vunpack.c.h.b16 %v7221
    %v8563 = vunpack.c.l.b16 %v7222
    %v8564 = vunpack.c.h.b16 %v7222
    %v8565 = vunpack.c.l.b16 %v7223
    %v8566 = vunpack.c.h.b16 %v7223
    %v8567 = vunpack.c.l.b16 %v7224
    %v8568 = vunpack.c.l.b16 %v7225
    %v8569 = vunpack.c.h.b16 %v7225
    %v8570 = vunpack.c.l.b16 %v7226
    %v8571 = vunpack.c.h.b16 %v7226
    %v8572 = vunpack.c.l.b16 %v7227
    %v8573 = vunpack.c.h.b16 %v7227
    %v8574 = vunpack.c.l.b16 %v7228
    %v8575 = vunpack.c.l.b16 %v7229
    %v8576 = vunpack.c.h.b16 %v7229
    %v8577 = vunpack.c.l.b16 %v7230
    %v8578 = vunpack.c.h.b16 %v7230
    %v8579 = vunpack.c.l.b16 %v7231
    %v8580 = vunpack.c.h.b16 %v7231
    %v8581 = vunpack.c.l.b16 %v7232
    %v8582 = vunpack.c.l.b16 %v7233
    %v8583 = vunpack.c.h.b16 %v7233
    %v8584 = vunpack.c.l.b16 %v7234
    %v8585 = vunpack.c.h.b16 %v7234
    %v8586 = vunpack.c.l.b16 %v7235
    %v8587 = vunpack.c.h.b16 %v7235
    %v8588 = vunpack.c.l.b16 %v7236
    %v8589 = vunpack.c.l.b16 %v7237
    %v8590 = vunpack.c.h.b16 %v7237
    %v8591 = vunpack.c.l.b16 %v7238
    %v8592 = vunpack.c.h.b16 %v7238
    %v8593 = vunpack.c.l.b16 %v7239
    %v8594 = vunpack.c.h.b16 %v7239
    %v8595 = vunpack.c.l.b16 %v7240
    %v8596 = vunpack.c.l.b16 %v7241
    %v8597 = vunpack.c.h.b16 %v7241
    %v8598 = vunpack.c.l.b16 %v7242
    %v8599 = vunpack.c.h.b16 %v7242
    %v8600 = vunpack.c.l.b16 %v7243
    %v8601 = vunpack.c.h.b16 %v7243
    %v8602 = vunpack.c.l.b16 %v7244
    %v8603 = vunpack.c.l.b16 %v7245
    %v8604 = vunpack.c.h.b16 %v7245
    %v8605 = vunpack.c.l.b16 %v7246
    %v8606 = vunpack.c.h.b16 %v7246
    %v8607 = vunpack.c.l.b16 %v7247
    %v8608 = vunpack.c.h.b16 %v7247
    %v8609 = vunpack.c.l.b16 %v7248
    %v8610 = vunpack.c.l.b16 %v7249
    %v8611 = vunpack.c.h.b16 %v7249
    %v8612 = vunpack.c.l.b16 %v7250
    %v8613 = vunpack.c.h.b16 %v7250
    %v8614 = vunpack.c.l.b16 %v7251
    %v8615 = vunpack.c.h.b16 %v7251
    %v8616 = vunpack.c.l.b16 %v7252
    %v8617 = vunpack.c.l.b16 %v7253
    %v8618 = vunpack.c.h.b16 %v7253
    %v8619 = vunpack.c.l.b16 %v7254
    %v8620 = vunpack.c.h.b16 %v7254
    %v8621 = vunpack.c.l.b16 %v7255
    %v8622 = vunpack.c.h.b16 %v7255
    %v8623 = vunpack.c.l.b16 %v7256
    %v8624 = vunpack.c.l.b16 %v7257
    %v8625 = vunpack.c.h.b16 %v7257
    %v8626 = vunpack.c.l.b16 %v7258
    %v8627 = vunpack.c.h.b16 %v7258
    %v8628 = vunpack.c.l.b16 %v7259
    %v8629 = vunpack.c.h.b16 %v7259
    %v8630 = vunpack.c.l.b16 %v7260
    %v8631 = vunpack.c.l.b16 %v7261
    %v8632 = vunpack.c.h.b16 %v7261
    %v8633 = vunpack.c.l.b16 %v7262
    %v8634 = vunpack.c.h.b16 %v7262
    %v8635 = vunpack.c.l.b16 %v7263
    %v8636 = vunpack.c.h.b16 %v7263
    %v8637 = vunpack.c.l.b16 %v7264
    %v8638 = vunpack.c.l.b16 %v7265
    %v8639 = vunpack.c.h.b16 %v7265
    %v8640 = vunpack.c.l.b16 %v7266
    %v8641 = vunpack.c.h.b16 %v7266
    %v8642 = vunpack.c.l.b16 %v7267
    %v8643 = vunpack.c.h.b16 %v7267
    %v8644 = vunpack.c.l.b16 %v7268
    %v8645 = vunpack.c.l.b16 %v7269
    %v8646 = vunpack.c.h.b16 %v7269
    %v8647 = vunpack.c.l.b16 %v7270
    %v8648 = vunpack.c.h.b16 %v7270
    %v8649 = vunpack.c.l.b16 %v7271
    %v8650 = vunpack.c.h.b16 %v7271
    %v8651 = vunpack.c.l.b16 %v7272
    %v8652 = vunpack.c.l.b16 %v7273
    %v8653 = vunpack.c.h.b16 %v7273
    %v8654 = vunpack.c.l.b16 %v7274
    %v8655 = vunpack.c.h.b16 %v7274
    %v8656 = vunpack.c.l.b16 %v7275
    %v8657 = vunpack.c.h.b16 %v7275
    %v8658 = vunpack.c.l.b16 %v7276
    %v8659 = vunpack.c.l.b16 %v7277
    %v8660 = vunpack.c.h.b16 %v7277
    %v8661 = vunpack.c.l.b16 %v7278
    %v8662 = vunpack.c.h.b16 %v7278
    %v8663 = vunpack.c.l.b16 %v7279
    %v8664 = vunpack.c.h.b16 %v7279
    %v8665 = vunpack.c.l.b16 %v7280
    %v8666 = vunpack.c.l.b16 %v7281
    %v8667 = vunpack.c.h.b16 %v7281
    %v8668 = vunpack.c.l.b16 %v7282
    %v8669 = vunpack.c.h.b16 %v7282
    %v8670 = vunpack.c.l.b16 %v7283
    %v8671 = vunpack.c.h.b16 %v7283
    %v8672 = vunpack.c.l.b16 %v7284
    %v8673 = vunpack.c.l.b16 %v7285
    %v8674 = vunpack.c.h.b16 %v7285
    %v8675 = vunpack.c.l.b16 %v7286
    %v8676 = vunpack.c.h.b16 %v7286
    %v8677 = vunpack.c.l.b16 %v7287
    %v8678 = vunpack.c.h.b16 %v7287
    %v8679 = vunpack.c.l.b16 %v7288
    %v8680 = vunpack.c.l.b16 %v7289
    %v8681 = vunpack.c.h.b16 %v7289
    %v8682 = vunpack.c.l.b16 %v7290
    %v8683 = vunpack.c.h.b16 %v7290
    %v8684 = vunpack.c.l.b16 %v7291
    %v8685 = vunpack.c.h.b16 %v7291
    %v8686 = vunpack.c.l.b16 %v7292
    %v8687 = vunpack.c.l.b16 %v7293
    %v8688 = vunpack.c.h.b16 %v7293
    %v8689 = vunpack.c.l.b16 %v7294
    %v8690 = vunpack.c.h.b16 %v7294
    %v8691 = vunpack.c.l.b16 %v7295
    %v8692 = vunpack.c.h.b16 %v7295
    %v8693 = vunpack.c.l.b16 %v7296
    %v8694 = vunpack.c.l.b16 %v7297
    %v8695 = vunpack.c.h.b16 %v7297
    %v8696 = vunpack.c.l.b16 %v7298
    %v8697 = vunpack.c.h.b16 %v7298
    %v8698 = vunpack.c.l.b16 %v7299
    %v8699 = vunpack.c.h.b16 %v7299
    %v8700 = vunpack.c.l.b16 %v7300
    %v8701 = vunpack.c.l.b16 %v7301
    %v8702 = vunpack.c.h.b16 %v7301
    %v8703 = vunpack.c.l.b16 %v7302
    %v8704 = vunpack.c.h.b16 %v7302
    %v8705 = vunpack.c.l.b16 %v7303
    %v8706 = vunpack.c.h.b16 %v7303
    %v8707 = vunpack.c.l.b16 %v7304
    %v8708 = vunpack.c.l.b16 %v7305
    %v8709 = vunpack.c.h.b16 %v7305
    %v8710 = vunpack.c.l.b16 %v7306
    %v8711 = vunpack.c.h.b16 %v7306
    %v8712 = vunpack.c.l.b16 %v7307
    %v8713 = vunpack.c.h.b16 %v7307
    %v8714 = vunpack.c.l.b16 %v7308
    %v8715 = vunpack.c.l.b16 %v7309
    %v8716 = vunpack.c.h.b16 %v7309
    %v8717 = vunpack.c.l.b16 %v7310
    %v8718 = vunpack.c.h.b16 %v7310
    %v8719 = vunpack.c.l.b16 %v7311
    %v8720 = vunpack.c.h.b16 %v7311
    %v8721 = vunpack.c.l.b16 %v7312
    %v8722 = vunpack.c.l.b16 %v7313
    %v8723 = vunpack.c.h.b16 %v7313
    %v8724 = vunpack.c.l.b16 %v7314
    %v8725 = vunpack.c.h.b16 %v7314
    %v8726 = vunpack.c.l.b16 %v7315
    %v8727 = vunpack.c.h.b16 %v7315
    %v8728 = vunpack.c.l.b16 %v7316
    %v8729 = vunpack.c.l.b16 %v7317
    %v8730 = vunpack.c.h.b16 %v7317
    %v8731 = vunpack.c.l.b16 %v7318
    %v8732 = vunpack.c.h.b16 %v7318
    %v8733 = vunpack.c.l.b16 %v7319
    %v8734 = vunpack.c.h.b16 %v7319
    %v8735 = vunpack.c.l.b16 %v7320
    %v8736 = vunpack.c.l.b16 %v7321
    %v8737 = vunpack.c.h.b16 %v7321
    %v8738 = vunpack.c.l.b16 %v7322
    %v8739 = vunpack.c.h.b16 %v7322
    %v8740 = vunpack.c.l.b16 %v7323
    %v8741 = vunpack.c.h.b16 %v7323
    %v8742 = vunpack.c.l.b16 %v7324
    %v8743 = vunpack.c.l.b16 %v7325
    %v8744 = vunpack.c.h.b16 %v7325
    %v8745 = vunpack.c.l.b16 %v7326
    %v8746 = vunpack.c.h.b16 %v7326
    %v8747 = vunpack.c.l.b16 %v7327
    %v8748 = vunpack.c.h.b16 %v7327
    %v8749 = vunpack.c.l.b16 %v7328
    %v8750 = vunpack.c.l.b16 %v7329
    %v8751 = vunpack.c.h.b16 %v7329
    %v8752 = vunpack.c.l.b16 %v7330
    %v8753 = vunpack.c.h.b16 %v7330
    %v8754 = vunpack.c.l.b16 %v7331
    %v8755 = vunpack.c.h.b16 %v7331
    %v8756 = vunpack.c.l.b16 %v7332
    %v8757 = vunpack.c.l.b16 %v7333
    %v8758 = vunpack.c.h.b16 %v7333
    %v8759 = vunpack.c.l.b16 %v7334
    %v8760 = vunpack.c.h.b16 %v7334
    %v8761 = vunpack.c.l.b16 %v7335
    %v8762 = vunpack.c.h.b16 %v7335
    %v8763 = vunpack.c.l.b16 %v7336
    %v8764 = vunpack.c.l.b16 %v7337
    %v8765 = vunpack.c.h.b16 %v7337
    %v8766 = vunpack.c.l.b16 %v7338
    %v8767 = vunpack.c.h.b16 %v7338
    %v8768 = vunpack.c.l.b16 %v7339
    %v8769 = vunpack.c.h.b16 %v7339
    %v8770 = vunpack.c.l.b16 %v7340
    %v8771 = vunpack.c.l.b16 %v7341
    %v8772 = vunpack.c.h.b16 %v7341
    %v8773 = vunpack.c.l.b16 %v7342
    %v8774 = vunpack.c.h.b16 %v7342
    %v8775 = vunpack.c.l.b16 %v7343
    %v8776 = vunpack.c.h.b16 %v7343
    %v8777 = vunpack.c.l.b16 %v7344
    %v8778 = vunpack.c.l.b16 %v7345
    %v8779 = vunpack.c.h.b16 %v7345
    %v8780 = vunpack.c.l.b16 %v7346
    %v8781 = vunpack.c.h.b16 %v7346
    %v8782 = vunpack.c.l.b16 %v7347
    %v8783 = vunpack.c.h.b16 %v7347
    %v8784 = vunpack.c.l.b16 %v7348
    %v8785 = vunpack.c.l.b16 %v7349
    %v8786 = vunpack.c.h.b16 %v7349
    %v8787 = vunpack.c.l.b16 %v7350
    %v8788 = vunpack.c.h.b16 %v7350
    %v8789 = vunpack.c.l.b16 %v7351
    %v8790 = vunpack.c.h.b16 %v7351
    %v8791 = vunpack.c.l.b16 %v7352
    %v8792 = vunpack.c.l.b16 %v7353
    %v8793 = vunpack.c.h.b16 %v7353
    %v8794 = vunpack.c.l.b16 %v7354
    %v8795 = vunpack.c.h.b16 %v7354
    %v8796 = vunpack.c.l.b16 %v7355
    %v8797 = vunpack.c.h.b16 %v7355
    %v8798 = vunpack.c.l.b16 %v7356
    %v8799 = vunpack.c.l.b16 %v7357
    %v8800 = vunpack.c.h.b16 %v7357
    %v8801 = vunpack.c.l.b16 %v7358
    %v8802 = vunpack.c.h.b16 %v7358
    %v8803 = vunpack.c.l.b16 %v7359
    %v8804 = vunpack.c.h.b16 %v7359
    %v8805 = vunpack.c.l.b16 %v7360
    %v8806 = vpack.c.b16 %v7917, %v7910
    %v8807 = vpack.c.b16 %v7918, %v7911
    %v8808 = vpack.c.b16 %v7919, %v7912
    %v8809 = vpack.c.b16 %v7920, %v7913
    %v8810 = vpack.c.b16 %v7921, %v7914
    %v8811 = vpack.c.b16 %v7922, %v7915
    %v8812 = vpack.c.b16 %v7923, %v7916
    %v8813 = vpack.c.b16 %v7931, %v7924
    %v8814 = vpack.c.b16 %v7932, %v7925
    %v8815 = vpack.c.b16 %v7933, %v7926
    %v8816 = vpack.c.b16 %v7934, %v7927
    %v8817 = vpack.c.b16 %v7935, %v7928
    %v8818 = vpack.c.b16 %v7936, %v7929
    %v8819 = vpack.c.b16 %v7937, %v7930
    %v8820 = vpack.c.b16 %v7945, %v7938
    %v8821 = vpack.c.b16 %v7946, %v7939
    %v8822 = vpack.c.b16 %v7947, %v7940
    %v8823 = vpack.c.b16 %v7948, %v7941
    %v8824 = vpack.c.b16 %v7949, %v7942
    %v8825 = vpack.c.b16 %v7950, %v7943
    %v8826 = vpack.c.b16 %v7951, %v7944
    %v8827 = vpack.c.b16 %v7959, %v7952
    %v8828 = vpack.c.b16 %v7960, %v7953
    %v8829 = vpack.c.b16 %v7961, %v7954
    %v8830 = vpack.c.b16 %v7962, %v7955
    %v8831 = vpack.c.b16 %v7963, %v7956
    %v8832 = vpack.c.b16 %v7964, %v7957
    %v8833 = vpack.c.b16 %v7965, %v7958
    %v8834 = vpack.c.b16 %v7973, %v7966
    %v8835 = vpack.c.b16 %v7974, %v7967
    %v8836 = vpack.c.b16 %v7975, %v7968
    %v8837 = vpack.c.b16 %v7976, %v7969
    %v8838 = vpack.c.b16 %v7977, %v7970
    %v8839 = vpack.c.b16 %v7978, %v7971
    %v8840 = vpack.c.b16 %v7979, %v7972
    %v8841 = vpack.c.b16 %v7987, %v7980
    %v8842 = vpack.c.b16 %v7988, %v7981
    %v8843 = vpack.c.b16 %v7989, %v7982
    %v8844 = vpack.c.b16 %v7990, %v7983
    %v8845 = vpack.c.b16 %v7991, %v7984
    %v8846 = vpack.c.b16 %v7992, %v7985
    %v8847 = vpack.c.b16 %v7993, %v7986
    %v8848 = vpack.c.b16 %v8001, %v7994
    %v8849 = vpack.c.b16 %v8002, %v7995
    %v8850 = vpack.c.b16 %v8003, %v7996
    %v8851 = vpack.c.b16 %v8004, %v7997
    %v8852 = vpack.c.b16 %v8005, %v7998
    %v8853 = vpack.c.b16 %v8006, %v7999
    %v8854 = vpack.c.b16 %v8007, %v8000
    %v8855 = vpack.c.b16 %v8015, %v8008
    %v8856 = vpack.c.b16 %v8016, %v8009
    %v8857 = vpack.c.b16 %v8017, %v8010
    %v8858 = vpack.c.b16 %v8018, %v8011
    %v8859 = vpack.c.b16 %v8019, %v8012
    %v8860 = vpack.c.b16 %v8020, %v8013
    %v8861 = vpack.c.b16 %v8021, %v8014
    %v8862 = vpack.c.b16 %v8029, %v8022
    %v8863 = vpack.c.b16 %v8030, %v8023
    %v8864 = vpack.c.b16 %v8031, %v8024
    %v8865 = vpack.c.b16 %v8032, %v8025
    %v8866 = vpack.c.b16 %v8033, %v8026
    %v8867 = vpack.c.b16 %v8034, %v8027
    %v8868 = vpack.c.b16 %v8035, %v8028
    %v8869 = vpack.c.b16 %v8043, %v8036
    %v8870 = vpack.c.b16 %v8044, %v8037
    %v8871 = vpack.c.b16 %v8045, %v8038
    %v8872 = vpack.c.b16 %v8046, %v8039
    %v8873 = vpack.c.b16 %v8047, %v8040
    %v8874 = vpack.c.b16 %v8048, %v8041
    %v8875 = vpack.c.b16 %v8049, %v8042
    %v8876 = vpack.c.b16 %v8057, %v8050
    %v8877 = vpack.c.b16 %v8058, %v8051
    %v8878 = vpack.c.b16 %v8059, %v8052
    %v8879 = vpack.c.b16 %v8060, %v8053
    %v8880 = vpack.c.b16 %v8061, %v8054
    %v8881 = vpack.c.b16 %v8062, %v8055
    %v8882 = vpack.c.b16 %v8063, %v8056
    %v8883 = vpack.c.b16 %v8071, %v8064
    %v8884 = vpack.c.b16 %v8072, %v8065
    %v8885 = vpack.c.b16 %v8073, %v8066
    %v8886 = vpack.c.b16 %v8074, %v8067
    %v8887 = vpack.c.b16 %v8075, %v8068
    %v8888 = vpack.c.b16 %v8076, %v8069
    %v8889 = vpack.c.b16 %v8077, %v8070
    %v8890 = vpack.c.b16 %v8085, %v8078
    %v8891 = vpack.c.b16 %v8086, %v8079
    %v8892 = vpack.c.b16 %v8087, %v8080
    %v8893 = vpack.c.b16 %v8088, %v8081
    %v8894 = vpack.c.b16 %v8089, %v8082
    %v8895 = vpack.c.b16 %v8090, %v8083
    %v8896 = vpack.c.b16 %v8091, %v8084
    %v8897 = vpack.c.b16 %v8099, %v8092
    %v8898 = vpack.c.b16 %v8100, %v8093
    %v8899 = vpack.c.b16 %v8101, %v8094
    %v8900 = vpack.c.b16 %v8102, %v8095
    %v8901 = vpack.c.b16 %v8103, %v8096
    %v8902 = vpack.c.b16 %v8104, %v8097
    %v8903 = vpack.c.b16 %v8105, %v8098
    %v8904 = vpack.c.b16 %v8113, %v8106
    %v8905 = vpack.c.b16 %v8114, %v8107
    %v8906 = vpack.c.b16 %v8115, %v8108
    %v8907 = vpack.c.b16 %v8116, %v8109
    %v8908 = vpack.c.b16 %v8117, %v8110
    %v8909 = vpack.c.b16 %v8118, %v8111
    %v8910 = vpack.c.b16 %v8119, %v8112
    %v8911 = vpack.c.b16 %v8127, %v8120
    %v8912 = vpack.c.b16 %v8128, %v8121
    %v8913 = vpack.c.b16 %v8129, %v8122
    %v8914 = vpack.c.b16 %v8130, %v8123
    %v8915 = vpack.c.b16 %v8131, %v8124
    %v8916 = vpack.c.b16 %v8132, %v8125
    %v8917 = vpack.c.b16 %v8133, %v8126
    %v8918 = vpack.c.b16 %v8141, %v8134
    %v8919 = vpack.c.b16 %v8142, %v8135
    %v8920 = vpack.c.b16 %v8143, %v8136
    %v8921 = vpack.c.b16 %v8144, %v8137
    %v8922 = vpack.c.b16 %v8145, %v8138
    %v8923 = vpack.c.b16 %v8146, %v8139
    %v8924 = vpack.c.b16 %v8147, %v8140
    %v8925 = vpack.c.b16 %v8155, %v8148
    %v8926 = vpack.c.b16 %v8156, %v8149
    %v8927 = vpack.c.b16 %v8157, %v8150
    %v8928 = vpack.c.b16 %v8158, %v8151
    %v8929 = vpack.c.b16 %v8159, %v8152
    %v8930 = vpack.c.b16 %v8160, %v8153
    %v8931 = vpack.c.b16 %v8161, %v8154
    %v8932 = vpack.c.b16 %v8169, %v8162
    %v8933 = vpack.c.b16 %v8170, %v8163
    %v8934 = vpack.c.b16 %v8171, %v8164
    %v8935 = vpack.c.b16 %v8172, %v8165
    %v8936 = vpack.c.b16 %v8173, %v8166
    %v8937 = vpack.c.b16 %v8174, %v8167
    %v8938 = vpack.c.b16 %v8175, %v8168
    %v8939 = vpack.c.b16 %v8183, %v8176
    %v8940 = vpack.c.b16 %v8184, %v8177
    %v8941 = vpack.c.b16 %v8185, %v8178
    %v8942 = vpack.c.b16 %v8186, %v8179
    %v8943 = vpack.c.b16 %v8187, %v8180
    %v8944 = vpack.c.b16 %v8188, %v8181
    %v8945 = vpack.c.b16 %v8189, %v8182
    %v8946 = vpack.c.b16 %v8197, %v8190
    %v8947 = vpack.c.b16 %v8198, %v8191
    %v8948 = vpack.c.b16 %v8199, %v8192
    %v8949 = vpack.c.b16 %v8200, %v8193
    %v8950 = vpack.c.b16 %v8201, %v8194
    %v8951 = vpack.c.b16 %v8202, %v8195
    %v8952 = vpack.c.b16 %v8203, %v8196
    %v8953 = vpack.c.b16 %v8211, %v8204
    %v8954 = vpack.c.b16 %v8212, %v8205
    %v8955 = vpack.c.b16 %v8213, %v8206
    %v8956 = vpack.c.b16 %v8214, %v8207
    %v8957 = vpack.c.b16 %v8215, %v8208
    %v8958 = vpack.c.b16 %v8216, %v8209
    %v8959 = vpack.c.b16 %v8217, %v8210
    %v8960 = vpack.c.b16 %v8225, %v8218
    %v8961 = vpack.c.b16 %v8226, %v8219
    %v8962 = vpack.c.b16 %v8227, %v8220
    %v8963 = vpack.c.b16 %v8228, %v8221
    %v8964 = vpack.c.b16 %v8229, %v8222
    %v8965 = vpack.c.b16 %v8230, %v8223
    %v8966 = vpack.c.b16 %v8231, %v8224
    %v8967 = vpack.c.b16 %v8239, %v8232
    %v8968 = vpack.c.b16 %v8240, %v8233
    %v8969 = vpack.c.b16 %v8241, %v8234
    %v8970 = vpack.c.b16 %v8242, %v8235
    %v8971 = vpack.c.b16 %v8243, %v8236
    %v8972 = vpack.c.b16 %v8244, %v8237
    %v8973 = vpack.c.b16 %v8245, %v8238
    %v8974 = vpack.c.b16 %v8253, %v8246
    %v8975 = vpack.c.b16 %v8254, %v8247
    %v8976 = vpack.c.b16 %v8255, %v8248
    %v8977 = vpack.c.b16 %v8256, %v8249
    %v8978 = vpack.c.b16 %v8257, %v8250
    %v8979 = vpack.c.b16 %v8258, %v8251
    %v8980 = vpack.c.b16 %v8259, %v8252
    %v8981 = vpack.c.b16 %v8267, %v8260
    %v8982 = vpack.c.b16 %v8268, %v8261
    %v8983 = vpack.c.b16 %v8269, %v8262
    %v8984 = vpack.c.b16 %v8270, %v8263
    %v8985 = vpack.c.b16 %v8271, %v8264
    %v8986 = vpack.c.b16 %v8272, %v8265
    %v8987 = vpack.c.b16 %v8273, %v8266
    %v8988 = vpack.c.b16 %v8281, %v8274
    %v8989 = vpack.c.b16 %v8282, %v8275
    %v8990 = vpack.c.b16 %v8283, %v8276
    %v8991 = vpack.c.b16 %v8284, %v8277
    %v8992 = vpack.c.b16 %v8285, %v8278
    %v8993 = vpack.c.b16 %v8286, %v8279
    %v8994 = vpack.c.b16 %v8287, %v8280
    %v8995 = vpack.c.b16 %v8295, %v8288
    %v8996 = vpack.c.b16 %v8296, %v8289
    %v8997 = vpack.c.b16 %v8297, %v8290
    %v8998 = vpack.c.b16 %v8298, %v8291
    %v8999 = vpack.c.b16 %v8299, %v8292
    %v9000 = vpack.c.b16 %v8300, %v8293
    %v9001 = vpack.c.b16 %v8301, %v8294
    %v9002 = vpack.c.b16 %v8309, %v8302
    %v9003 = vpack.c.b16 %v8310, %v8303
    %v9004 = vpack.c.b16 %v8311, %v8304
    %v9005 = vpack.c.b16 %v8312, %v8305
    %v9006 = vpack.c.b16 %v8313, %v8306
    %v9007 = vpack.c.b16 %v8314, %v8307
    %v9008 = vpack.c.b16 %v8315, %v8308
    %v9009 = vpack.c.b16 %v8323, %v8316
    %v9010 = vpack.c.b16 %v8324, %v8317
    %v9011 = vpack.c.b16 %v8325, %v8318
    %v9012 = vpack.c.b16 %v8326, %v8319
    %v9013 = vpack.c.b16 %v8327, %v8320
    %v9014 = vpack.c.b16 %v8328, %v8321
    %v9015 = vpack.c.b16 %v8329, %v8322
    %v9016 = vpack.c.b16 %v8337, %v8330
    %v9017 = vpack.c.b16 %v8338, %v8331
    %v9018 = vpack.c.b16 %v8339, %v8332
    %v9019 = vpack.c.b16 %v8340, %v8333
    %v9020 = vpack.c.b16 %v8341, %v8334
    %v9021 = vpack.c.b16 %v8342, %v8335
    %v9022 = vpack.c.b16 %v8343, %v8336
    %v9023 = vpack.c.b16 %v8351, %v8344
    %v9024 = vpack.c.b16 %v8352, %v8345
    %v9025 = vpack.c.b16 %v8353, %v8346
    %v9026 = vpack.c.b16 %v8354, %v8347
    %v9027 = vpack.c.b16 %v8355, %v8348
    %v9028 = vpack.c.b16 %v8356, %v8349
    %v9029 = vpack.c.b16 %v8357, %v8350
    %v9030 = vpack.c.b16 %v8365, %v8358
    %v9031 = vpack.c.b16 %v8366, %v8359
    %v9032 = vpack.c.b16 %v8367, %v8360
    %v9033 = vpack.c.b16 %v8368, %v8361
    %v9034 = vpack.c.b16 %v8369, %v8362
    %v9035 = vpack.c.b16 %v8370, %v8363
    %v9036 = vpack.c.b16 %v8371, %v8364
    %v9037 = vpack.c.b16 %v8379, %v8372
    %v9038 = vpack.c.b16 %v8380, %v8373
    %v9039 = vpack.c.b16 %v8381, %v8374
    %v9040 = vpack.c.b16 %v8382, %v8375
    %v9041 = vpack.c.b16 %v8383, %v8376
    %v9042 = vpack.c.b16 %v8384, %v8377
    %v9043 = vpack.c.b16 %v8385, %v8378
    %v9044 = vpack.c.b16 %v8393, %v8386
    %v9045 = vpack.c.b16 %v8394, %v8387
    %v9046 = vpack.c.b16 %v8395, %v8388
    %v9047 = vpack.c.b16 %v8396, %v8389
    %v9048 = vpack.c.b16 %v8397, %v8390
    %v9049 = vpack.c.b16 %v8398, %v8391
    %v9050 = vpack.c.b16 %v8399, %v8392
    %v9051 = vpack.c.b16 %v8407, %v8400
    %v9052 = vpack.c.b16 %v8408, %v8401
    %v9053 = vpack.c.b16 %v8409, %v8402
    %v9054 = vpack.c.b16 %v8410, %v8403
    %v9055 = vpack.c.b16 %v8411, %v8404
    %v9056 = vpack.c.b16 %v8412, %v8405
    %v9057 = vpack.c.b16 %v8413, %v8406
    %v9058 = vpack.c.b16 %v8421, %v8414
    %v9059 = vpack.c.b16 %v8422, %v8415
    %v9060 = vpack.c.b16 %v8423, %v8416
    %v9061 = vpack.c.b16 %v8424, %v8417
    %v9062 = vpack.c.b16 %v8425, %v8418
    %v9063 = vpack.c.b16 %v8426, %v8419
    %v9064 = vpack.c.b16 %v8427, %v8420
    %v9065 = vpack.c.b16 %v8435, %v8428
    %v9066 = vpack.c.b16 %v8436, %v8429
    %v9067 = vpack.c.b16 %v8437, %v8430
    %v9068 = vpack.c.b16 %v8438, %v8431
    %v9069 = vpack.c.b16 %v8439, %v8432
    %v9070 = vpack.c.b16 %v8440, %v8433
    %v9071 = vpack.c.b16 %v8441, %v8434
    %v9072 = vpack.c.b16 %v8449, %v8442
    %v9073 = vpack.c.b16 %v8450, %v8443
    %v9074 = vpack.c.b16 %v8451, %v8444
    %v9075 = vpack.c.b16 %v8452, %v8445
    %v9076 = vpack.c.b16 %v8453, %v8446
    %v9077 = vpack.c.b16 %v8454, %v8447
    %v9078 = vpack.c.b16 %v8455, %v8448
    %v9079 = vpack.c.b16 %v8463, %v8456
    %v9080 = vpack.c.b16 %v8464, %v8457
    %v9081 = vpack.c.b16 %v8465, %v8458
    %v9082 = vpack.c.b16 %v8466, %v8459
    %v9083 = vpack.c.b16 %v8467, %v8460
    %v9084 = vpack.c.b16 %v8468, %v8461
    %v9085 = vpack.c.b16 %v8469, %v8462
    %v9086 = vpack.c.b16 %v8477, %v8470
    %v9087 = vpack.c.b16 %v8478, %v8471
    %v9088 = vpack.c.b16 %v8479, %v8472
    %v9089 = vpack.c.b16 %v8480, %v8473
    %v9090 = vpack.c.b16 %v8481, %v8474
    %v9091 = vpack.c.b16 %v8482, %v8475
    %v9092 = vpack.c.b16 %v8483, %v8476
    %v9093 = vpack.c.b16 %v8491, %v8484
    %v9094 = vpack.c.b16 %v8492, %v8485
    %v9095 = vpack.c.b16 %v8493, %v8486
    %v9096 = vpack.c.b16 %v8494, %v8487
    %v9097 = vpack.c.b16 %v8495, %v8488
    %v9098 = vpack.c.b16 %v8496, %v8489
    %v9099 = vpack.c.b16 %v8497, %v8490
    %v9100 = vpack.c.b16 %v8505, %v8498
    %v9101 = vpack.c.b16 %v8506, %v8499
    %v9102 = vpack.c.b16 %v8507, %v8500
    %v9103 = vpack.c.b16 %v8508, %v8501
    %v9104 = vpack.c.b16 %v8509, %v8502
    %v9105 = vpack.c.b16 %v8510, %v8503
    %v9106 = vpack.c.b16 %v8511, %v8504
    %v9107 = vpack.c.b16 %v8519, %v8512
    %v9108 = vpack.c.b16 %v8520, %v8513
    %v9109 = vpack.c.b16 %v8521, %v8514
    %v9110 = vpack.c.b16 %v8522, %v8515
    %v9111 = vpack.c.b16 %v8523, %v8516
    %v9112 = vpack.c.b16 %v8524, %v8517
    %v9113 = vpack.c.b16 %v8525, %v8518
    %v9114 = vpack.c.b16 %v8533, %v8526
    %v9115 = vpack.c.b16 %v8534, %v8527
    %v9116 = vpack.c.b16 %v8535, %v8528
    %v9117 = vpack.c.b16 %v8536, %v8529
    %v9118 = vpack.c.b16 %v8537, %v8530
    %v9119 = vpack.c.b16 %v8538, %v8531
    %v9120 = vpack.c.b16 %v8539, %v8532
    %v9121 = vpack.c.b16 %v8547, %v8540
    %v9122 = vpack.c.b16 %v8548, %v8541
    %v9123 = vpack.c.b16 %v8549, %v8542
    %v9124 = vpack.c.b16 %v8550, %v8543
    %v9125 = vpack.c.b16 %v8551, %v8544
    %v9126 = vpack.c.b16 %v8552, %v8545
    %v9127 = vpack.c.b16 %v8553, %v8546
    %v9128 = vpack.c.b16 %v8561, %v8554
    %v9129 = vpack.c.b16 %v8562, %v8555
    %v9130 = vpack.c.b16 %v8563, %v8556
    %v9131 = vpack.c.b16 %v8564, %v8557
    %v9132 = vpack.c.b16 %v8565, %v8558
    %v9133 = vpack.c.b16 %v8566, %v8559
    %v9134 = vpack.c.b16 %v8567, %v8560
    %v9135 = vpack.c.b16 %v8575, %v8568
    %v9136 = vpack.c.b16 %v8576, %v8569
    %v9137 = vpack.c.b16 %v8577, %v8570
    %v9138 = vpack.c.b16 %v8578, %v8571
    %v9139 = vpack.c.b16 %v8579, %v8572
    %v9140 = vpack.c.b16 %v8580, %v8573
    %v9141 = vpack.c.b16 %v8581, %v8574
    %v9142 = vpack.c.b16 %v8589, %v8582
    %v9143 = vpack.c.b16 %v8590, %v8583
    %v9144 = vpack.c.b16 %v8591, %v8584
    %v9145 = vpack.c.b16 %v8592, %v8585
    %v9146 = vpack.c.b16 %v8593, %v8586
    %v9147 = vpack.c.b16 %v8594, %v8587
    %v9148 = vpack.c.b16 %v8595, %v8588
    %v9149 = vpack.c.b16 %v8603, %v8596
    %v9150 = vpack.c.b16 %v8604, %v8597
    %v9151 = vpack.c.b16 %v8605, %v8598
    %v9152 = vpack.c.b16 %v8606, %v8599
    %v9153 = vpack.c.b16 %v8607, %v8600
    %v9154 = vpack.c.b16 %v8608, %v8601
    %v9155 = vpack.c.b16 %v8609, %v8602
    %v9156 = vpack.c.b16 %v8617, %v8610
    %v9157 = vpack.c.b16 %v8618, %v8611
    %v9158 = vpack.c.b16 %v8619, %v8612
    %v9159 = vpack.c.b16 %v8620, %v8613
    %v9160 = vpack.c.b16 %v8621, %v8614
    %v9161 = vpack.c.b16 %v8622, %v8615
    %v9162 = vpack.c.b16 %v8623, %v8616
    %v9163 = vpack.c.b16 %v8631, %v8624
    %v9164 = vpack.c.b16 %v8632, %v8625
    %v9165 = vpack.c.b16 %v8633, %v8626
    %v9166 = vpack.c.b16 %v8634, %v8627
    %v9167 = vpack.c.b16 %v8635, %v8628
    %v9168 = vpack.c.b16 %v8636, %v8629
    %v9169 = vpack.c.b16 %v8637, %v8630
    %v9170 = vpack.c.b16 %v8645, %v8638
    %v9171 = vpack.c.b16 %v8646, %v8639
    %v9172 = vpack.c.b16 %v8647, %v8640
    %v9173 = vpack.c.b16 %v8648, %v8641
    %v9174 = vpack.c.b16 %v8649, %v8642
    %v9175 = vpack.c.b16 %v8650, %v8643
    %v9176 = vpack.c.b16 %v8651, %v8644
    %v9177 = vpack.c.b16 %v8659, %v8652
    %v9178 = vpack.c.b16 %v8660, %v8653
    %v9179 = vpack.c.b16 %v8661, %v8654
    %v9180 = vpack.c.b16 %v8662, %v8655
    %v9181 = vpack.c.b16 %v8663, %v8656
    %v9182 = vpack.c.b16 %v8664, %v8657
    %v9183 = vpack.c.b16 %v8665, %v8658
    %v9184 = vpack.c.b16 %v8673, %v8666
    %v9185 = vpack.c.b16 %v8674, %v8667
    %v9186 = vpack.c.b16 %v8675, %v8668
    %v9187 = vpack.c.b16 %v8676, %v8669
    %v9188 = vpack.c.b16 %v8677, %v8670
    %v9189 = vpack.c.b16 %v8678, %v8671
    %v9190 = vpack.c.b16 %v8679, %v8672
    %v9191 = vpack.c.b16 %v8687, %v8680
    %v9192 = vpack.c.b16 %v8688, %v8681
    %v9193 = vpack.c.b16 %v8689, %v8682
    %v9194 = vpack.c.b16 %v8690, %v8683
    %v9195 = vpack.c.b16 %v8691, %v8684
    %v9196 = vpack.c.b16 %v8692, %v8685
    %v9197 = vpack.c.b16 %v8693, %v8686
    %v9198 = vpack.c.b16 %v8701, %v8694
    %v9199 = vpack.c.b16 %v8702, %v8695
    %v9200 = vpack.c.b16 %v8703, %v8696
    %v9201 = vpack.c.b16 %v8704, %v8697
    %v9202 = vpack.c.b16 %v8705, %v8698
    %v9203 = vpack.c.b16 %v8706, %v8699
    %v9204 = vpack.c.b16 %v8707, %v8700
    %v9205 = vpack.c.b16 %v8715, %v8708
    %v9206 = vpack.c.b16 %v8716, %v8709
    %v9207 = vpack.c.b16 %v8717, %v8710
    %v9208 = vpack.c.b16 %v8718, %v8711
    %v9209 = vpack.c.b16 %v8719, %v8712
    %v9210 = vpack.c.b16 %v8720, %v8713
    %v9211 = vpack.c.b16 %v8721, %v8714
    %v9212 = vpack.c.b16 %v8729, %v8722
    %v9213 = vpack.c.b16 %v8730, %v8723
    %v9214 = vpack.c.b16 %v8731, %v8724
    %v9215 = vpack.c.b16 %v8732, %v8725
    %v9216 = vpack.c.b16 %v8733, %v8726
    %v9217 = vpack.c.b16 %v8734, %v8727
    %v9218 = vpack.c.b16 %v8735, %v8728
    %v9219 = vpack.c.b16 %v8743, %v8736
    %v9220 = vpack.c.b16 %v8744, %v8737
    %v9221 = vpack.c.b16 %v8745, %v8738
    %v9222 = vpack.c.b16 %v8746, %v8739
    %v9223 = vpack.c.b16 %v8747, %v8740
    %v9224 = vpack.c.b16 %v8748, %v8741
    %v9225 = vpack.c.b16 %v8749, %v8742
    %v9226 = vpack.c.b16 %v8757, %v8750
    %v9227 = vpack.c.b16 %v8758, %v8751
    %v9228 = vpack.c.b16 %v8759, %v8752
    %v9229 = vpack.c.b16 %v8760, %v8753
    %v9230 = vpack.c.b16 %v8761, %v8754
    %v9231 = vpack.c.b16 %v8762, %v8755
    %v9232 = vpack.c.b16 %v8763, %v8756
    %v9233 = vpack.c.b16 %v8771, %v8764
    %v9234 = vpack.c.b16 %v8772, %v8765
    %v9235 = vpack.c.b16 %v8773, %v8766
    %v9236 = vpack.c.b16 %v8774, %v8767
    %v9237 = vpack.c.b16 %v8775, %v8768
    %v9238 = vpack.c.b16 %v8776, %v8769
    %v9239 = vpack.c.b16 %v8777, %v8770
    %v9240 = vpack.c.b16 %v8785, %v8778
    %v9241 = vpack.c.b16 %v8786, %v8779
    %v9242 = vpack.c.b16 %v8787, %v8780
    %v9243 = vpack.c.b16 %v8788, %v8781
    %v9244 = vpack.c.b16 %v8789, %v8782
    %v9245 = vpack.c.b16 %v8790, %v8783
    %v9246 = vpack.c.b16 %v8791, %v8784
    %v9247 = vpack.c.b16 %v8799, %v8792
    %v9248 = vpack.c.b16 %v8800, %v8793
    %v9249 = vpack.c.b16 %v8801, %v8794
    %v9250 = vpack.c.b16 %v8802, %v8795
    %v9251 = vpack.c.b16 %v8803, %v8796
    %v9252 = vpack.c.b16 %v8804, %v8797
    %v9253 = vpack.c.b16 %v8805, %v8798
    %9702 = vmatprep.subr.bf16.mxu0 %v8856
    %9703 = vmatpush1.bf16.msra.mxu0 %v8855
    %9704 = vmatprep.subr.bf16.mxu0 %v8849
    %9705 = vmatpush1.bf16.msra.mxu0 %v8848
    %9706 = vmatprep.subr.bf16.mxu0 %v8842
    %9707 = vmatpush1.bf16.msra.mxu0 %v8841
    %9708 = vmatprep.subr.bf16.mxu0 %v8835
    %9709 = vmatpush1.bf16.msra.mxu0 %v8834
    %9710 = vmatprep.subr.bf16.mxu0 %v8828
    %9711 = vmatpush1.bf16.msra.mxu0 %v8827
    %9712 = vmatprep.subr.bf16.mxu0 %v8821
    %9713 = vmatpush1.bf16.msra.mxu0 %v8820
    %9714 = vmatprep.subr.bf16.mxu0 %v8814
    %9715 = vmatpush1.bf16.msra.mxu0 %v8813
    %9716 = vmatprep.subr.bf16.mxu0 %v8807
    %9717 = vmatpush1.bf16.msra.mxu0 %v8806
    %9718 = vmatprep.subr.bf16.mxu0 %v8912
    %9719 = vmatpush2.bf16.msra.mxu0 %v8911
    %9720 = vmatprep.subr.bf16.mxu0 %v8905
    %9721 = vmatpush2.bf16.msra.mxu0 %v8904
    %9722 = vmatprep.subr.bf16.mxu0 %v8898
    %9723 = vmatpush2.bf16.msra.mxu0 %v8897
    %9724 = vmatprep.subr.bf16.mxu0 %v8891
    %9725 = vmatpush2.bf16.msra.mxu0 %v8890
    %9726 = vmatprep.subr.bf16.mxu0 %v8884
    %9727 = vmatpush2.bf16.msra.mxu0 %v8883
    %9728 = vmatprep.subr.bf16.mxu0 %v8877
    %9729 = vmatpush2.bf16.msra.mxu0 %v8876
    %9730 = vmatprep.subr.bf16.mxu0 %v8870
    %9731 = vmatpush2.bf16.msra.mxu0 %v8869
    %9732 = vmatprep.subr.bf16.mxu0 %v8863
    %9733 = vmatpush2.bf16.msra.mxu0 %v8862
    %9734 = vmatprep.mubr.bf16.mxu0 %v6842
    %9735 = vmatmul.mubr.bf16.gmra.mxu0 %v6841
    %v9736 = vpop.f32.mrf.mxu0
    %v9737 = vadd.f32 %v7366, %v9736
    %v9738 = vpop.f32.mrf.mxu0
    %v9739 = vadd.f32 %v7370, %v9738
    %v9740 = vpop.f32.mrf.mxu0
    %v9741 = vpop.f32.mrf.mxu0
    %9742 = vdwg.mxu0
    %9743 = vmatprep.subr.bf16.mxu0 %v8968
    %9744 = vmatpush1.bf16.msra.mxu0 %v8967
    %9745 = vmatprep.subr.bf16.mxu0 %v8961
    %9746 = vmatpush1.bf16.msra.mxu0 %v8960
    %9747 = vmatprep.subr.bf16.mxu0 %v8954
    %9748 = vmatpush1.bf16.msra.mxu0 %v8953
    %9749 = vmatprep.subr.bf16.mxu0 %v8947
    %9750 = vmatpush1.bf16.msra.mxu0 %v8946
    %9751 = vmatprep.subr.bf16.mxu0 %v8940
    %9752 = vmatpush1.bf16.msra.mxu0 %v8939
    %9753 = vmatprep.subr.bf16.mxu0 %v8933
    %9754 = vmatpush1.bf16.msra.mxu0 %v8932
    %9755 = vmatprep.subr.bf16.mxu0 %v8926
    %9756 = vmatpush1.bf16.msra.mxu0 %v8925
    %9757 = vmatprep.subr.bf16.mxu0 %v8919
    %9758 = vmatpush1.bf16.msra.mxu0 %v8918
    %9759 = vmatprep.subr.bf16.mxu0 %v9024
    %9760 = vmatpush2.bf16.msra.mxu0 %v9023
    %9761 = vmatprep.subr.bf16.mxu0 %v9017
    %9762 = vmatpush2.bf16.msra.mxu0 %v9016
    %9763 = vmatprep.subr.bf16.mxu0 %v9010
    %9764 = vmatpush2.bf16.msra.mxu0 %v9009
    %9765 = vmatprep.subr.bf16.mxu0 %v9003
    %9766 = vmatpush2.bf16.msra.mxu0 %v9002
    %9767 = vmatprep.subr.bf16.mxu0 %v8996
    %9768 = vmatpush2.bf16.msra.mxu0 %v8995
    %9769 = vmatprep.subr.bf16.mxu0 %v8989
    %9770 = vmatpush2.bf16.msra.mxu0 %v8988
    %9771 = vmatprep.subr.bf16.mxu0 %v8982
    %9772 = vmatpush2.bf16.msra.mxu0 %v8981
    %9773 = vmatprep.subr.bf16.mxu0 %v8975
    %9774 = vmatpush2.bf16.msra.mxu0 %v8974
    %9775 = vmatprep.mubr.bf16.mxu0 %v6844
    %9776 = vmatmul.mubr.bf16.gmra.mxu0 %v6843
    %v9777 = vpop.f32.mrf.mxu0
    %v9778 = vadd.f32 %v9737, %v9777
    %v9779 = vpop.f32.mrf.mxu0
    %v9780 = vadd.f32 %v9739, %v9779
    %v9781 = vpop.f32.mrf.mxu0
    %v9782 = vpop.f32.mrf.mxu0
    %9783 = vdwg.mxu0
    %9784 = vmatprep.subr.bf16.mxu0 %v9080
    %9785 = vmatpush1.bf16.msra.mxu0 %v9079
    %9786 = vmatprep.subr.bf16.mxu0 %v9073
    %9787 = vmatpush1.bf16.msra.mxu0 %v9072
    %9788 = vmatprep.subr.bf16.mxu0 %v9066
    %9789 = vmatpush1.bf16.msra.mxu0 %v9065
    %9790 = vmatprep.subr.bf16.mxu0 %v9059
    %9791 = vmatpush1.bf16.msra.mxu0 %v9058
    %9792 = vmatprep.subr.bf16.mxu0 %v9052
    %9793 = vmatpush1.bf16.msra.mxu0 %v9051
    %9794 = vmatprep.subr.bf16.mxu0 %v9045
    %9795 = vmatpush1.bf16.msra.mxu0 %v9044
    %9796 = vmatprep.subr.bf16.mxu0 %v9038
    %9797 = vmatpush1.bf16.msra.mxu0 %v9037
    %9798 = vmatprep.subr.bf16.mxu0 %v9031
    %9799 = vmatpush1.bf16.msra.mxu0 %v9030
    %9800 = vmatprep.subr.bf16.mxu0 %v9136
    %9801 = vmatpush2.bf16.msra.mxu0 %v9135
    %9802 = vmatprep.subr.bf16.mxu0 %v9129
    %9803 = vmatpush2.bf16.msra.mxu0 %v9128
    %9804 = vmatprep.subr.bf16.mxu0 %v9122
    %9805 = vmatpush2.bf16.msra.mxu0 %v9121
    %9806 = vmatprep.subr.bf16.mxu0 %v9115
    %9807 = vmatpush2.bf16.msra.mxu0 %v9114
    %9808 = vmatprep.subr.bf16.mxu0 %v9108
    %9809 = vmatpush2.bf16.msra.mxu0 %v9107
    %9810 = vmatprep.subr.bf16.mxu0 %v9101
    %9811 = vmatpush2.bf16.msra.mxu0 %v9100
    %9812 = vmatprep.subr.bf16.mxu0 %v9094
    %9813 = vmatpush2.bf16.msra.mxu0 %v9093
    %9814 = vmatprep.subr.bf16.mxu0 %v9087
    %9815 = vmatpush2.bf16.msra.mxu0 %v9086
    %9816 = vmatprep.mubr.bf16.mxu0 %v6846
    %9817 = vmatmul.mubr.bf16.gmra.mxu0 %v6845
    %v9818 = vpop.f32.mrf.mxu0
    %v9819 = vadd.f32 %v9778, %v9818
    %v9820 = vpop.f32.mrf.mxu0
    %v9821 = vadd.f32 %v9780, %v9820
    %v9822 = vpop.f32.mrf.mxu0
    %v9823 = vpop.f32.mrf.mxu0
    %9824 = vdwg.mxu0
    %9825 = vmatprep.subr.bf16.mxu0 %v9192
    %9826 = vmatpush1.bf16.msra.mxu0 %v9191
    %9827 = vmatprep.subr.bf16.mxu0 %v9185
    %9828 = vmatpush1.bf16.msra.mxu0 %v9184
    %9829 = vmatprep.subr.bf16.mxu0 %v9178
    %9830 = vmatpush1.bf16.msra.mxu0 %v9177
    %9831 = vmatprep.subr.bf16.mxu0 %v9171
    %9832 = vmatpush1.bf16.msra.mxu0 %v9170
    %9833 = vmatprep.subr.bf16.mxu0 %v9164
    %9834 = vmatpush1.bf16.msra.mxu0 %v9163
    %9835 = vmatprep.subr.bf16.mxu0 %v9157
    %9836 = vmatpush1.bf16.msra.mxu0 %v9156
    %9837 = vmatprep.subr.bf16.mxu0 %v9150
    %9838 = vmatpush1.bf16.msra.mxu0 %v9149
    %9839 = vmatprep.subr.bf16.mxu0 %v9143
    %9840 = vmatpush1.bf16.msra.mxu0 %v9142
    %9841 = vmatprep.subr.bf16.mxu0 %v9248
    %9842 = vmatpush2.bf16.msra.mxu0 %v9247
    %9843 = vmatprep.subr.bf16.mxu0 %v9241
    %9844 = vmatpush2.bf16.msra.mxu0 %v9240
    %9845 = vmatprep.subr.bf16.mxu0 %v9234
    %9846 = vmatpush2.bf16.msra.mxu0 %v9233
    %9847 = vmatprep.subr.bf16.mxu0 %v9227
    %9848 = vmatpush2.bf16.msra.mxu0 %v9226
    %9849 = vmatprep.subr.bf16.mxu0 %v9220
    %9850 = vmatpush2.bf16.msra.mxu0 %v9219
    %9851 = vmatprep.subr.bf16.mxu0 %v9213
    %9852 = vmatpush2.bf16.msra.mxu0 %v9212
    %9853 = vmatprep.subr.bf16.mxu0 %v9206
    %9854 = vmatpush2.bf16.msra.mxu0 %v9205
    %9855 = vmatprep.subr.bf16.mxu0 %v9199
    %9856 = vmatpush2.bf16.msra.mxu0 %v9198
    %9857 = vmatprep.mubr.bf16.mxu0 %v6848
    %9858 = vmatmul.mubr.bf16.gmra.mxu0 %v6847
    %v9859 = vpop.f32.mrf.mxu0
    %v9860 = vadd.f32 %v9819, %v9859
    %v9861 = vpop.f32.mrf.mxu0
    %v9862 = vadd.f32 %v9821, %v9861
    %v9863 = vpop.f32.mrf.mxu0
    %v9864 = vpop.f32.mrf.mxu0
    %9865 = vdwg.mxu0
    %9866 = vmatprep.subr.bf16.mxu0 %v8858
    %9867 = vmatpush1.bf16.msra.mxu0 %v8857
    %9868 = vmatprep.subr.bf16.mxu0 %v8851
    %9869 = vmatpush1.bf16.msra.mxu0 %v8850
    %9870 = vmatprep.subr.bf16.mxu0 %v8844
    %9871 = vmatpush1.bf16.msra.mxu0 %v8843
    %9872 = vmatprep.subr.bf16.mxu0 %v8837
    %9873 = vmatpush1.bf16.msra.mxu0 %v8836
    %9874 = vmatprep.subr.bf16.mxu0 %v8830
    %9875 = vmatpush1.bf16.msra.mxu0 %v8829
    %9876 = vmatprep.subr.bf16.mxu0 %v8823
    %9877 = vmatpush1.bf16.msra.mxu0 %v8822
    %9878 = vmatprep.subr.bf16.mxu0 %v8816
    %9879 = vmatpush1.bf16.msra.mxu0 %v8815
    %9880 = vmatprep.subr.bf16.mxu0 %v8809
    %9881 = vmatpush1.bf16.msra.mxu0 %v8808
    %9882 = vmatprep.subr.bf16.mxu0 %v8914
    %9883 = vmatpush2.bf16.msra.mxu0 %v8913
    %9884 = vmatprep.subr.bf16.mxu0 %v8907
    %9885 = vmatpush2.bf16.msra.mxu0 %v8906
    %9886 = vmatprep.subr.bf16.mxu0 %v8900
    %9887 = vmatpush2.bf16.msra.mxu0 %v8899
    %9888 = vmatprep.subr.bf16.mxu0 %v8893
    %9889 = vmatpush2.bf16.msra.mxu0 %v8892
    %9890 = vmatprep.subr.bf16.mxu0 %v8886
    %9891 = vmatpush2.bf16.msra.mxu0 %v8885
    %9892 = vmatprep.subr.bf16.mxu0 %v8879
    %9893 = vmatpush2.bf16.msra.mxu0 %v8878
    %9894 = vmatprep.subr.bf16.mxu0 %v8872
    %9895 = vmatpush2.bf16.msra.mxu0 %v8871
    %9896 = vmatprep.subr.bf16.mxu0 %v8865
    %9897 = vmatpush2.bf16.msra.mxu0 %v8864
    %9898 = vmatprep.mubr.bf16.mxu0 %v6842
    %9899 = vmatmul.mubr.bf16.gmra.mxu0 %v6841
    %v9900 = vpop.f32.mrf.mxu0
    %v9901 = vadd.f32 %v7374, %v9900
    %v9902 = vpop.f32.mrf.mxu0
    %v9903 = vadd.f32 %v7378, %v9902
    %v9904 = vpop.f32.mrf.mxu0
    %v9905 = vpop.f32.mrf.mxu0
    %9906 = vdwg.mxu0
    %9907 = vmatprep.subr.bf16.mxu0 %v8970
    %9908 = vmatpush1.bf16.msra.mxu0 %v8969
    %9909 = vmatprep.subr.bf16.mxu0 %v8963
    %9910 = vmatpush1.bf16.msra.mxu0 %v8962
    %9911 = vmatprep.subr.bf16.mxu0 %v8956
    %9912 = vmatpush1.bf16.msra.mxu0 %v8955
    %9913 = vmatprep.subr.bf16.mxu0 %v8949
    %9914 = vmatpush1.bf16.msra.mxu0 %v8948
    %9915 = vmatprep.subr.bf16.mxu0 %v8942
    %9916 = vmatpush1.bf16.msra.mxu0 %v8941
    %9917 = vmatprep.subr.bf16.mxu0 %v8935
    %9918 = vmatpush1.bf16.msra.mxu0 %v8934
    %9919 = vmatprep.subr.bf16.mxu0 %v8928
    %9920 = vmatpush1.bf16.msra.mxu0 %v8927
    %9921 = vmatprep.subr.bf16.mxu0 %v8921
    %9922 = vmatpush1.bf16.msra.mxu0 %v8920
    %9923 = vmatprep.subr.bf16.mxu0 %v9026
    %9924 = vmatpush2.bf16.msra.mxu0 %v9025
    %9925 = vmatprep.subr.bf16.mxu0 %v9019
    %9926 = vmatpush2.bf16.msra.mxu0 %v9018
    %9927 = vmatprep.subr.bf16.mxu0 %v9012
    %9928 = vmatpush2.bf16.msra.mxu0 %v9011
    %9929 = vmatprep.subr.bf16.mxu0 %v9005
    %9930 = vmatpush2.bf16.msra.mxu0 %v9004
    %9931 = vmatprep.subr.bf16.mxu0 %v8998
    %9932 = vmatpush2.bf16.msra.mxu0 %v8997
    %9933 = vmatprep.subr.bf16.mxu0 %v8991
    %9934 = vmatpush2.bf16.msra.mxu0 %v8990
    %9935 = vmatprep.subr.bf16.mxu0 %v8984
    %9936 = vmatpush2.bf16.msra.mxu0 %v8983
    %9937 = vmatprep.subr.bf16.mxu0 %v8977
    %9938 = vmatpush2.bf16.msra.mxu0 %v8976
    %9939 = vmatprep.mubr.bf16.mxu0 %v6844
    %9940 = vmatmul.mubr.bf16.gmra.mxu0 %v6843
    %v9941 = vpop.f32.mrf.mxu0
    %v9942 = vadd.f32 %v9901, %v9941
    %v9943 = vpop.f32.mrf.mxu0
    %v9944 = vadd.f32 %v9903, %v9943
    %v9945 = vpop.f32.mrf.mxu0
    %v9946 = vpop.f32.mrf.mxu0
    %9947 = vdwg.mxu0
    %9948 = vmatprep.subr.bf16.mxu0 %v9082
    %9949 = vmatpush1.bf16.msra.mxu0 %v9081
    %9950 = vmatprep.subr.bf16.mxu0 %v9075
    %9951 = vmatpush1.bf16.msra.mxu0 %v9074
    %9952 = vmatprep.subr.bf16.mxu0 %v9068
    %9953 = vmatpush1.bf16.msra.mxu0 %v9067
    %9954 = vmatprep.subr.bf16.mxu0 %v9061
    %9955 = vmatpush1.bf16.msra.mxu0 %v9060
    %9956 = vmatprep.subr.bf16.mxu0 %v9054
    %9957 = vmatpush1.bf16.msra.mxu0 %v9053
    %9958 = vmatprep.subr.bf16.mxu0 %v9047
    %9959 = vmatpush1.bf16.msra.mxu0 %v9046
    %9960 = vmatprep.subr.bf16.mxu0 %v9040
    %9961 = vmatpush1.bf16.msra.mxu0 %v9039
    %9962 = vmatprep.subr.bf16.mxu0 %v9033
    %9963 = vmatpush1.bf16.msra.mxu0 %v9032
    %9964 = vmatprep.subr.bf16.mxu0 %v9138
    %9965 = vmatpush2.bf16.msra.mxu0 %v9137
    %9966 = vmatprep.subr.bf16.mxu0 %v9131
    %9967 = vmatpush2.bf16.msra.mxu0 %v9130
    %9968 = vmatprep.subr.bf16.mxu0 %v9124
    %9969 = vmatpush2.bf16.msra.mxu0 %v9123
    %9970 = vmatprep.subr.bf16.mxu0 %v9117
    %9971 = vmatpush2.bf16.msra.mxu0 %v9116
    %9972 = vmatprep.subr.bf16.mxu0 %v9110
    %9973 = vmatpush2.bf16.msra.mxu0 %v9109
    %9974 = vmatprep.subr.bf16.mxu0 %v9103
    %9975 = vmatpush2.bf16.msra.mxu0 %v9102
    %9976 = vmatprep.subr.bf16.mxu0 %v9096
    %9977 = vmatpush2.bf16.msra.mxu0 %v9095
    %9978 = vmatprep.subr.bf16.mxu0 %v9089
    %9979 = vmatpush2.bf16.msra.mxu0 %v9088
    %9980 = vmatprep.mubr.bf16.mxu0 %v6846
    %9981 = vmatmul.mubr.bf16.gmra.mxu0 %v6845
    %v9982 = vpop.f32.mrf.mxu0
    %v9983 = vadd.f32 %v9942, %v9982
    %v9984 = vpop.f32.mrf.mxu0
    %v9985 = vadd.f32 %v9944, %v9984
    %v9986 = vpop.f32.mrf.mxu0
    %v9987 = vpop.f32.mrf.mxu0
    %9988 = vdwg.mxu0
    %9989 = vmatprep.subr.bf16.mxu0 %v9194
    %9990 = vmatpush1.bf16.msra.mxu0 %v9193
    %9991 = vmatprep.subr.bf16.mxu0 %v9187
    %9992 = vmatpush1.bf16.msra.mxu0 %v9186
    %9993 = vmatprep.subr.bf16.mxu0 %v9180
    %9994 = vmatpush1.bf16.msra.mxu0 %v9179
    %9995 = vmatprep.subr.bf16.mxu0 %v9173
    %9996 = vmatpush1.bf16.msra.mxu0 %v9172
    %9997 = vmatprep.subr.bf16.mxu0 %v9166
    %9998 = vmatpush1.bf16.msra.mxu0 %v9165
    %9999 = vmatprep.subr.bf16.mxu0 %v9159
    %10000 = vmatpush1.bf16.msra.mxu0 %v9158
    %10001 = vmatprep.subr.bf16.mxu0 %v9152
    %10002 = vmatpush1.bf16.msra.mxu0 %v9151
    %10003 = vmatprep.subr.bf16.mxu0 %v9145
    %10004 = vmatpush1.bf16.msra.mxu0 %v9144
    %10005 = vmatprep.subr.bf16.mxu0 %v9250
    %10006 = vmatpush2.bf16.msra.mxu0 %v9249
    %10007 = vmatprep.subr.bf16.mxu0 %v9243
    %10008 = vmatpush2.bf16.msra.mxu0 %v9242
    %10009 = vmatprep.subr.bf16.mxu0 %v9236
    %10010 = vmatpush2.bf16.msra.mxu0 %v9235
    %10011 = vmatprep.subr.bf16.mxu0 %v9229
    %10012 = vmatpush2.bf16.msra.mxu0 %v9228
    %10013 = vmatprep.subr.bf16.mxu0 %v9222
    %10014 = vmatpush2.bf16.msra.mxu0 %v9221
    %10015 = vmatprep.subr.bf16.mxu0 %v9215
    %10016 = vmatpush2.bf16.msra.mxu0 %v9214
    %10017 = vmatprep.subr.bf16.mxu0 %v9208
    %10018 = vmatpush2.bf16.msra.mxu0 %v9207
    %10019 = vmatprep.subr.bf16.mxu0 %v9201
    %10020 = vmatpush2.bf16.msra.mxu0 %v9200
    %10021 = vmatprep.mubr.bf16.mxu0 %v6848
    %10022 = vmatmul.mubr.bf16.gmra.mxu0 %v6847
    %v10023 = vpop.f32.mrf.mxu0
    %v10024 = vadd.f32 %v9983, %v10023
    %v10025 = vpop.f32.mrf.mxu0
    %v10026 = vadd.f32 %v9985, %v10025
    %v10027 = vpop.f32.mrf.mxu0
    %v10028 = vpop.f32.mrf.mxu0
    %10029 = vdwg.mxu0
    %10030 = vmatprep.subr.bf16.mxu0 %v8860
    %10031 = vmatpush1.bf16.msra.mxu0 %v8859
    %10032 = vmatprep.subr.bf16.mxu0 %v8853
    %10033 = vmatpush1.bf16.msra.mxu0 %v8852
    %10034 = vmatprep.subr.bf16.mxu0 %v8846
    %10035 = vmatpush1.bf16.msra.mxu0 %v8845
    %10036 = vmatprep.subr.bf16.mxu0 %v8839
    %10037 = vmatpush1.bf16.msra.mxu0 %v8838
    %10038 = vmatprep.subr.bf16.mxu0 %v8832
    %10039 = vmatpush1.bf16.msra.mxu0 %v8831
    %10040 = vmatprep.subr.bf16.mxu0 %v8825
    %10041 = vmatpush1.bf16.msra.mxu0 %v8824
    %10042 = vmatprep.subr.bf16.mxu0 %v8818
    %10043 = vmatpush1.bf16.msra.mxu0 %v8817
    %10044 = vmatprep.subr.bf16.mxu0 %v8811
    %10045 = vmatpush1.bf16.msra.mxu0 %v8810
    %10046 = vmatprep.subr.bf16.mxu0 %v8916
    %10047 = vmatpush2.bf16.msra.mxu0 %v8915
    %10048 = vmatprep.subr.bf16.mxu0 %v8909
    %10049 = vmatpush2.bf16.msra.mxu0 %v8908
    %10050 = vmatprep.subr.bf16.mxu0 %v8902
    %10051 = vmatpush2.bf16.msra.mxu0 %v8901
    %10052 = vmatprep.subr.bf16.mxu0 %v8895
    %10053 = vmatpush2.bf16.msra.mxu0 %v8894
    %10054 = vmatprep.subr.bf16.mxu0 %v8888
    %10055 = vmatpush2.bf16.msra.mxu0 %v8887
    %10056 = vmatprep.subr.bf16.mxu0 %v8881
    %10057 = vmatpush2.bf16.msra.mxu0 %v8880
    %10058 = vmatprep.subr.bf16.mxu0 %v8874
    %10059 = vmatpush2.bf16.msra.mxu0 %v8873
    %10060 = vmatprep.subr.bf16.mxu0 %v8867
    %10061 = vmatpush2.bf16.msra.mxu0 %v8866
    %10062 = vmatprep.mubr.bf16.mxu0 %v6842
    %10063 = vmatmul.mubr.bf16.gmra.mxu0 %v6841
    %v10064 = vpop.f32.mrf.mxu0
    %v10065 = vadd.f32 %v7382, %v10064
    %v10066 = vpop.f32.mrf.mxu0
    %v10067 = vadd.f32 %v7386, %v10066
    %v10068 = vpop.f32.mrf.mxu0
    %v10069 = vpop.f32.mrf.mxu0
    %10070 = vdwg.mxu0
    %10071 = vmatprep.subr.bf16.mxu0 %v8972
    %10072 = vmatpush1.bf16.msra.mxu0 %v8971
    %10073 = vmatprep.subr.bf16.mxu0 %v8965
    %10074 = vmatpush1.bf16.msra.mxu0 %v8964
    %10075 = vmatprep.subr.bf16.mxu0 %v8958
    %10076 = vmatpush1.bf16.msra.mxu0 %v8957
    %10077 = vmatprep.subr.bf16.mxu0 %v8951
    %10078 = vmatpush1.bf16.msra.mxu0 %v8950
    %10079 = vmatprep.subr.bf16.mxu0 %v8944
    %10080 = vmatpush1.bf16.msra.mxu0 %v8943
    %10081 = vmatprep.subr.bf16.mxu0 %v8937
    %10082 = vmatpush1.bf16.msra.mxu0 %v8936
    %10083 = vmatprep.subr.bf16.mxu0 %v8930
    %10084 = vmatpush1.bf16.msra.mxu0 %v8929
    %10085 = vmatprep.subr.bf16.mxu0 %v8923
    %10086 = vmatpush1.bf16.msra.mxu0 %v8922
    %10087 = vmatprep.subr.bf16.mxu0 %v9028
    %10088 = vmatpush2.bf16.msra.mxu0 %v9027
    %10089 = vmatprep.subr.bf16.mxu0 %v9021
    %10090 = vmatpush2.bf16.msra.mxu0 %v9020
    %10091 = vmatprep.subr.bf16.mxu0 %v9014
    %10092 = vmatpush2.bf16.msra.mxu0 %v9013
    %10093 = vmatprep.subr.bf16.mxu0 %v9007
    %10094 = vmatpush2.bf16.msra.mxu0 %v9006
    %10095 = vmatprep.subr.bf16.mxu0 %v9000
    %10096 = vmatpush2.bf16.msra.mxu0 %v8999
    %10097 = vmatprep.subr.bf16.mxu0 %v8993
    %10098 = vmatpush2.bf16.msra.mxu0 %v8992
    %10099 = vmatprep.subr.bf16.mxu0 %v8986
    %10100 = vmatpush2.bf16.msra.mxu0 %v8985
    %10101 = vmatprep.subr.bf16.mxu0 %v8979
    %10102 = vmatpush2.bf16.msra.mxu0 %v8978
    %10103 = vmatprep.mubr.bf16.mxu0 %v6844
    %10104 = vmatmul.mubr.bf16.gmra.mxu0 %v6843
    %v10105 = vpop.f32.mrf.mxu0
    %v10106 = vadd.f32 %v10065, %v10105
    %v10107 = vpop.f32.mrf.mxu0
    %v10108 = vadd.f32 %v10067, %v10107
    %v10109 = vpop.f32.mrf.mxu0
    %v10110 = vpop.f32.mrf.mxu0
    %10111 = vdwg.mxu0
    %10112 = vmatprep.subr.bf16.mxu0 %v9084
    %10113 = vmatpush1.bf16.msra.mxu0 %v9083
    %10114 = vmatprep.subr.bf16.mxu0 %v9077
    %10115 = vmatpush1.bf16.msra.mxu0 %v9076
    %10116 = vmatprep.subr.bf16.mxu0 %v9070
    %10117 = vmatpush1.bf16.msra.mxu0 %v9069
    %10118 = vmatprep.subr.bf16.mxu0 %v9063
    %10119 = vmatpush1.bf16.msra.mxu0 %v9062
    %10120 = vmatprep.subr.bf16.mxu0 %v9056
    %10121 = vmatpush1.bf16.msra.mxu0 %v9055
    %10122 = vmatprep.subr.bf16.mxu0 %v9049
    %10123 = vmatpush1.bf16.msra.mxu0 %v9048
    %10124 = vmatprep.subr.bf16.mxu0 %v9042
    %10125 = vmatpush1.bf16.msra.mxu0 %v9041
    %10126 = vmatprep.subr.bf16.mxu0 %v9035
    %10127 = vmatpush1.bf16.msra.mxu0 %v9034
    %10128 = vmatprep.subr.bf16.mxu0 %v9140
    %10129 = vmatpush2.bf16.msra.mxu0 %v9139
    %10130 = vmatprep.subr.bf16.mxu0 %v9133
    %10131 = vmatpush2.bf16.msra.mxu0 %v9132
    %10132 = vmatprep.subr.bf16.mxu0 %v9126
    %10133 = vmatpush2.bf16.msra.mxu0 %v9125
    %10134 = vmatprep.subr.bf16.mxu0 %v9119
    %10135 = vmatpush2.bf16.msra.mxu0 %v9118
    %10136 = vmatprep.subr.bf16.mxu0 %v9112
    %10137 = vmatpush2.bf16.msra.mxu0 %v9111
    %10138 = vmatprep.subr.bf16.mxu0 %v9105
    %10139 = vmatpush2.bf16.msra.mxu0 %v9104
    %10140 = vmatprep.subr.bf16.mxu0 %v9098
    %10141 = vmatpush2.bf16.msra.mxu0 %v9097
    %10142 = vmatprep.subr.bf16.mxu0 %v9091
    %10143 = vmatpush2.bf16.msra.mxu0 %v9090
    %10144 = vmatprep.mubr.bf16.mxu0 %v6846
    %10145 = vmatmul.mubr.bf16.gmra.mxu0 %v6845
    %v10146 = vpop.f32.mrf.mxu0
    %v10147 = vadd.f32 %v10106, %v10146
    %v10148 = vpop.f32.mrf.mxu0
    %v10149 = vadd.f32 %v10108, %v10148
    %v10150 = vpop.f32.mrf.mxu0
    %v10151 = vpop.f32.mrf.mxu0
    %10152 = vdwg.mxu0
    %10153 = vmatprep.subr.bf16.mxu0 %v9196
    %10154 = vmatpush1.bf16.msra.mxu0 %v9195
    %10155 = vmatprep.subr.bf16.mxu0 %v9189
    %10156 = vmatpush1.bf16.msra.mxu0 %v9188
    %10157 = vmatprep.subr.bf16.mxu0 %v9182
    %10158 = vmatpush1.bf16.msra.mxu0 %v9181
    %10159 = vmatprep.subr.bf16.mxu0 %v9175
    %10160 = vmatpush1.bf16.msra.mxu0 %v9174
    %10161 = vmatprep.subr.bf16.mxu0 %v9168
    %10162 = vmatpush1.bf16.msra.mxu0 %v9167
    %10163 = vmatprep.subr.bf16.mxu0 %v9161
    %10164 = vmatpush1.bf16.msra.mxu0 %v9160
    %10165 = vmatprep.subr.bf16.mxu0 %v9154
    %10166 = vmatpush1.bf16.msra.mxu0 %v9153
    %10167 = vmatprep.subr.bf16.mxu0 %v9147
    %10168 = vmatpush1.bf16.msra.mxu0 %v9146
    %10169 = vmatprep.subr.bf16.mxu0 %v9252
    %10170 = vmatpush2.bf16.msra.mxu0 %v9251
    %10171 = vmatprep.subr.bf16.mxu0 %v9245
    %10172 = vmatpush2.bf16.msra.mxu0 %v9244
    %10173 = vmatprep.subr.bf16.mxu0 %v9238
    %10174 = vmatpush2.bf16.msra.mxu0 %v9237
    %10175 = vmatprep.subr.bf16.mxu0 %v9231
    %10176 = vmatpush2.bf16.msra.mxu0 %v9230
    %10177 = vmatprep.subr.bf16.mxu0 %v9224
    %10178 = vmatpush2.bf16.msra.mxu0 %v9223
    %10179 = vmatprep.subr.bf16.mxu0 %v9217
    %10180 = vmatpush2.bf16.msra.mxu0 %v9216
    %10181 = vmatprep.subr.bf16.mxu0 %v9210
    %10182 = vmatpush2.bf16.msra.mxu0 %v9209
    %10183 = vmatprep.subr.bf16.mxu0 %v9203
    %10184 = vmatpush2.bf16.msra.mxu0 %v9202
    %10185 = vmatprep.mubr.bf16.mxu0 %v6848
    %10186 = vmatmul.mubr.bf16.gmra.mxu0 %v6847
    %v10187 = vpop.f32.mrf.mxu0
    %v10188 = vadd.f32 %v10147, %v10187
    %v10189 = vpop.f32.mrf.mxu0
    %v10190 = vadd.f32 %v10149, %v10189
    %v10191 = vpop.f32.mrf.mxu0
    %v10192 = vpop.f32.mrf.mxu0
    %10193 = vdwg.mxu0
    %10194 = vmatprep.subr.bf16.mxu0 0
    %10195 = vmatpush1.bf16.msra.mxu0 %v8861
    %10196 = vmatprep.subr.bf16.mxu0 0
    %10197 = vmatpush1.bf16.msra.mxu0 %v8854
    %10198 = vmatprep.subr.bf16.mxu0 0
    %10199 = vmatpush1.bf16.msra.mxu0 %v8847
    %10200 = vmatprep.subr.bf16.mxu0 0
    %10201 = vmatpush1.bf16.msra.mxu0 %v8840
    %10202 = vmatprep.subr.bf16.mxu0 0
    %10203 = vmatpush1.bf16.msra.mxu0 %v8833
    %10204 = vmatprep.subr.bf16.mxu0 0
    %10205 = vmatpush1.bf16.msra.mxu0 %v8826
    %10206 = vmatprep.subr.bf16.mxu0 0
    %10207 = vmatpush1.bf16.msra.mxu0 %v8819
    %10208 = vmatprep.subr.bf16.mxu0 0
    %10209 = vmatpush1.bf16.msra.mxu0 %v8812
    %10210 = vmatprep.subr.bf16.mxu0 0
    %10211 = vmatpush2.bf16.msra.mxu0 %v8917
    %10212 = vmatprep.subr.bf16.mxu0 0
    %10213 = vmatpush2.bf16.msra.mxu0 %v8910
    %10214 = vmatprep.subr.bf16.mxu0 0
    %10215 = vmatpush2.bf16.msra.mxu0 %v8903
    %10216 = vmatprep.subr.bf16.mxu0 0
    %10217 = vmatpush2.bf16.msra.mxu0 %v8896
    %10218 = vmatprep.subr.bf16.mxu0 0
    %10219 = vmatpush2.bf16.msra.mxu0 %v8889
    %10220 = vmatprep.subr.bf16.mxu0 0
    %10221 = vmatpush2.bf16.msra.mxu0 %v8882
    %10222 = vmatprep.subr.bf16.mxu0 0
    %10223 = vmatpush2.bf16.msra.mxu0 %v8875
    %10224 = vmatprep.subr.bf16.mxu0 0
    %10225 = vmatpush2.bf16.msra.mxu0 %v8868
    %10226 = vmatprep.mubr.bf16.mxu0 %v6842
    %10227 = vmatmul.mubr.bf16.gmra.mxu0 %v6841
    %v10228 = vpop.f32.mrf.mxu0
    %v10229 = vadd.f32 %v7390, %v10228
    %v10230 = vpop.f32.mrf.mxu0
    %v10231 = vpop.f32.mrf.mxu0
    %v10232 = vpop.f32.mrf.mxu0
    %10233 = vdwg.mxu0
    %10234 = vmatprep.subr.bf16.mxu0 0
    %10235 = vmatpush1.bf16.msra.mxu0 %v8973
    %10236 = vmatprep.subr.bf16.mxu0 0
    %10237 = vmatpush1.bf16.msra.mxu0 %v8966
    %10238 = vmatprep.subr.bf16.mxu0 0
    %10239 = vmatpush1.bf16.msra.mxu0 %v8959
    %10240 = vmatprep.subr.bf16.mxu0 0
    %10241 = vmatpush1.bf16.msra.mxu0 %v8952
    %10242 = vmatprep.subr.bf16.mxu0 0
    %10243 = vmatpush1.bf16.msra.mxu0 %v8945
    %10244 = vmatprep.subr.bf16.mxu0 0
    %10245 = vmatpush1.bf16.msra.mxu0 %v8938
    %10246 = vmatprep.subr.bf16.mxu0 0
    %10247 = vmatpush1.bf16.msra.mxu0 %v8931
    %10248 = vmatprep.subr.bf16.mxu0 0
    %10249 = vmatpush1.bf16.msra.mxu0 %v8924
    %10250 = vmatprep.subr.bf16.mxu0 0
    %10251 = vmatpush2.bf16.msra.mxu0 %v9029
    %10252 = vmatprep.subr.bf16.mxu0 0
    %10253 = vmatpush2.bf16.msra.mxu0 %v9022
    %10254 = vmatprep.subr.bf16.mxu0 0
    %10255 = vmatpush2.bf16.msra.mxu0 %v9015
    %10256 = vmatprep.subr.bf16.mxu0 0
    %10257 = vmatpush2.bf16.msra.mxu0 %v9008
    %10258 = vmatprep.subr.bf16.mxu0 0
    %10259 = vmatpush2.bf16.msra.mxu0 %v9001
    %10260 = vmatprep.subr.bf16.mxu0 0
    %10261 = vmatpush2.bf16.msra.mxu0 %v8994
    %10262 = vmatprep.subr.bf16.mxu0 0
    %10263 = vmatpush2.bf16.msra.mxu0 %v8987
    %10264 = vmatprep.subr.bf16.mxu0 0
    %10265 = vmatpush2.bf16.msra.mxu0 %v8980
    %10266 = vmatprep.mubr.bf16.mxu0 %v6844
    %10267 = vmatmul.mubr.bf16.gmra.mxu0 %v6843
    %v10268 = vpop.f32.mrf.mxu0
    %v10269 = vadd.f32 %v10229, %v10268
    %v10270 = vpop.f32.mrf.mxu0
    %v10271 = vpop.f32.mrf.mxu0
    %v10272 = vpop.f32.mrf.mxu0
    %10273 = vdwg.mxu0
    %10274 = vmatprep.subr.bf16.mxu0 0
    %10275 = vmatpush1.bf16.msra.mxu0 %v9085
    %10276 = vmatprep.subr.bf16.mxu0 0
    %10277 = vmatpush1.bf16.msra.mxu0 %v9078
    %10278 = vmatprep.subr.bf16.mxu0 0
    %10279 = vmatpush1.bf16.msra.mxu0 %v9071
    %10280 = vmatprep.subr.bf16.mxu0 0
    %10281 = vmatpush1.bf16.msra.mxu0 %v9064
    %10282 = vmatprep.subr.bf16.mxu0 0
    %10283 = vmatpush1.bf16.msra.mxu0 %v9057
    %10284 = vmatprep.subr.bf16.mxu0 0
    %10285 = vmatpush1.bf16.msra.mxu0 %v9050
    %10286 = vmatprep.subr.bf16.mxu0 0
    %10287 = vmatpush1.bf16.msra.mxu0 %v9043
    %10288 = vmatprep.subr.bf16.mxu0 0
    %10289 = vmatpush1.bf16.msra.mxu0 %v9036
    %10290 = vmatprep.subr.bf16.mxu0 0
    %10291 = vmatpush2.bf16.msra.mxu0 %v9141
    %10292 = vmatprep.subr.bf16.mxu0 0
    %10293 = vmatpush2.bf16.msra.mxu0 %v9134
    %10294 = vmatprep.subr.bf16.mxu0 0
    %10295 = vmatpush2.bf16.msra.mxu0 %v9127
    %10296 = vmatprep.subr.bf16.mxu0 0
    %10297 = vmatpush2.bf16.msra.mxu0 %v9120
    %10298 = vmatprep.subr.bf16.mxu0 0
    %10299 = vmatpush2.bf16.msra.mxu0 %v9113
    %10300 = vmatprep.subr.bf16.mxu0 0
    %10301 = vmatpush2.bf16.msra.mxu0 %v9106
    %10302 = vmatprep.subr.bf16.mxu0 0
    %10303 = vmatpush2.bf16.msra.mxu0 %v9099
    %10304 = vmatprep.subr.bf16.mxu0 0
    %10305 = vmatpush2.bf16.msra.mxu0 %v9092
    %10306 = vmatprep.mubr.bf16.mxu0 %v6846
    %10307 = vmatmul.mubr.bf16.gmra.mxu0 %v6845
    %v10308 = vpop.f32.mrf.mxu0
    %v10309 = vadd.f32 %v10269, %v10308
    %v10310 = vpop.f32.mrf.mxu0
    %v10311 = vpop.f32.mrf.mxu0
    %v10312 = vpop.f32.mrf.mxu0
    %10313 = vdwg.mxu0
    %10314 = vmatprep.subr.bf16.mxu0 0
    %10315 = vmatpush1.bf16.msra.mxu0 %v9197
    %10316 = vmatprep.subr.bf16.mxu0 0
    %10317 = vmatpush1.bf16.msra.mxu0 %v9190
    %10318 = vmatprep.subr.bf16.mxu0 0
    %10319 = vmatpush1.bf16.msra.mxu0 %v9183
    %10320 = vmatprep.subr.bf16.mxu0 0
    %10321 = vmatpush1.bf16.msra.mxu0 %v9176
    %10322 = vmatprep.subr.bf16.mxu0 0
    %10323 = vmatpush1.bf16.msra.mxu0 %v9169
    %10324 = vmatprep.subr.bf16.mxu0 0
    %10325 = vmatpush1.bf16.msra.mxu0 %v9162
    %10326 = vmatprep.subr.bf16.mxu0 0
    %10327 = vmatpush1.bf16.msra.mxu0 %v9155
    %10328 = vmatprep.subr.bf16.mxu0 0
    %10329 = vmatpush1.bf16.msra.mxu0 %v9148
    %10330 = vmatprep.subr.bf16.mxu0 0
    %10331 = vmatpush2.bf16.msra.mxu0 %v9253
    %10332 = vmatprep.subr.bf16.mxu0 0
    %10333 = vmatpush2.bf16.msra.mxu0 %v9246
    %10334 = vmatprep.subr.bf16.mxu0 0
    %10335 = vmatpush2.bf16.msra.mxu0 %v9239
    %10336 = vmatprep.subr.bf16.mxu0 0
    %10337 = vmatpush2.bf16.msra.mxu0 %v9232
    %10338 = vmatprep.subr.bf16.mxu0 0
    %10339 = vmatpush2.bf16.msra.mxu0 %v9225
    %10340 = vmatprep.subr.bf16.mxu0 0
    %10341 = vmatpush2.bf16.msra.mxu0 %v9218
    %10342 = vmatprep.subr.bf16.mxu0 0
    %10343 = vmatpush2.bf16.msra.mxu0 %v9211
    %10344 = vmatprep.subr.bf16.mxu0 0
    %10345 = vmatpush2.bf16.msra.mxu0 %v9204
    %10346 = vmatprep.mubr.bf16.mxu0 %v6848
    %10347 = vmatmul.mubr.bf16.gmra.mxu0 %v6847
    %v10348 = vpop.f32.mrf.mxu0
    %v10349 = vadd.f32 %v10309, %v10348
    %v10350 = vpop.f32.mrf.mxu0
    %v10351 = vpop.f32.mrf.mxu0
    %v10352 = vpop.f32.mrf.mxu0
    %10353 = vdwg.mxu0
    %v10354 = vxor.u32 %v9860, 2147483648
    %v10355 = vxor.u32 %v9862, 2147483648
    %v10356 = vxor.u32 %v10024, 2147483648
    %v10357 = vxor.u32 %v10026, 2147483648
    %v10358 = vxor.u32 %v10188, 2147483648
    %v10359 = vxor.u32 %v10190, 2147483648
    %v10360 = vxor.u32 %v10349, 2147483648
    %v10361 = vmul.f32 %v10354, 1.442695
    %v10362 = vpow.pop %v10361
    %v10363 = vmul.f32 %v10355, 1.442695
    %v10364 = vpow.pop %v10363
    %v10365 = vmul.f32 %v10356, 1.442695
    %v10366 = vpow.pop %v10365
    %v10367 = vmul.f32 %v10357, 1.442695
    %v10368 = vpow.pop %v10367
    %v10369 = vmul.f32 %v10358, 1.442695
    %v10370 = vpow.pop %v10369
    %v10371 = vmul.f32 %v10359, 1.442695
    %v10372 = vpow.pop %v10371
    %v10373 = vmul.f32 %v10360, 1.442695
    %v10374 = vpow.pop %v10373
    %v10375 = vadd.f32 %v10362, 1.0
    %v10376 = vadd.f32 %v10364, 1.0
    %v10377 = vadd.f32 %v10366, 1.0
    %v10378 = vadd.f32 %v10368, 1.0
    %v10379 = vadd.f32 %v10370, 1.0
    %v10380 = vadd.f32 %v10372, 1.0
    %v10381 = vadd.f32 %v10374, 1.0
    %v10382 = vrcp.pop %v10375
    %v10383 = vmul.f32 1.0, %v10382
    %v10384 = vrcp.pop %v10376
    %v10385 = vmul.f32 1.0, %v10384
    %v10386 = vrcp.pop %v10377
    %v10387 = vmul.f32 1.0, %v10386
    %v10388 = vrcp.pop %v10378
    %v10389 = vmul.f32 1.0, %v10388
    %v10390 = vrcp.pop %v10379
    %v10391 = vmul.f32 1.0, %v10390
    %v10392 = vrcp.pop %v10380
    %v10393 = vmul.f32 1.0, %v10392
    %v10394 = vrcp.pop %v10381
    %v10395 = vmul.f32 1.0, %v10394
    %10396 = vst [vmem:[%s16] sm:$0xff] %v10383
    %10397 = vst [vmem:[%s16 + $0x8] sm:$0xff] %v10385
    %10398 = vst [vmem:[%s16 + $0x10] sm:$0xff] %v10387
    %10399 = vst [vmem:[%s16 + $0x18] sm:$0xff] %v10389
    %10400 = vst [vmem:[%s16 + $0x20] sm:$0xff] %v10391
    %10401 = vst [vmem:[%s16 + $0x28] sm:$0xff] %v10393
    %10402 = vst [vmem:[%s16 + $0x30] sm:$0xff] %v10395
    // Predicated region
    $region74: #{eeg_image_vae_forward.3} parent=1 // pred_check
      _
    $region75: #{eeg_image_vae_forward.3} parent=1 // pred_check_branch
      %10404 = sbr.rel (0) target = $region77
    $region76: #{eeg_image_vae_forward.3} parent=1 // pred_region
      _
    $region77: #{eeg_image_vae_forward.3} parent=1 // pred_fallthru
      _
    // Predicated region
    $region78: #{eeg_image_vae_forward.3} parent=1 // pred_check
      _
    $region79: #{eeg_image_vae_forward.3} parent=1 // pred_check_branch
      %10406 = sbr.rel (0) target = $region81
    $region80: #{eeg_image_vae_forward.3} parent=1 // pred_region
      _
    $region81: #{eeg_image_vae_forward.3} parent=1 // pred_fallthru
      _
    // Predicated region
    $region82: #{eeg_image_vae_forward.3} parent=1 // pred_check
      _
    $region83: #{eeg_image_vae_forward.3} parent=1 // pred_check_branch
      %10408 = sbr.rel (0) target = $region85
    $region84: #{eeg_image_vae_forward.3} parent=1 // pred_region
      _
    $region85: #{eeg_image_vae_forward.3} parent=1 // pred_fallthru
      _
    // Predicated region
    $region86: #{eeg_image_vae_forward.3} parent=1 // pred_check
      _
    $region87: #{eeg_image_vae_forward.3} parent=1 // pred_check_branch
      %10410 = sbr.rel (0) target = $region89
    $region88: #{eeg_image_vae_forward.3} parent=1 // pred_region
      _
    $region89: #{eeg_image_vae_forward.3} parent=1 // pred_fallthru
      _
    // Predicated region
    $region90: #{eeg_image_vae_forward.3} parent=1 // pred_check
      _
    $region91: #{eeg_image_vae_forward.3} parent=1 // pred_check_branch
      %10412 = sbr.rel (0) target = $region93
    $region92: #{eeg_image_vae_forward.3} parent=1 // pred_region
      _
    $region93: #{eeg_image_vae_forward.3} parent=1 // pred_fallthru
      _
    // Predicated region
    $region94: #{eeg_image_vae_forward.3} parent=1 // pred_check
      _
    $region95: #{eeg_image_vae_forward.3} parent=1 // pred_check_branch
      %10414 = sbr.rel (0) target = $region97
    $region96: #{eeg_image_vae_forward.3} parent=1 // pred_region
      _
    $region97: #{eeg_image_vae_forward.3} parent=1 // pred_fallthru
      _
    %10415 = vsyncpa [#allocation3], 1
    %10416 = vsyncpa [#allocation5], 1
    %10417 = vsyncpa [#allocation8], 1

</llo_original>
